<compile_context>
chip_gen: v7x
topology: tpu7x:2x2x1
jax: 0.10.0
libtpu: 0.0.40
codegen_flags: <defaults>
</compile_context>

<pallas_src>
import functools

import numpy as np
import jax
import jax.numpy as jnp
from jax import lax
from jax.experimental import pallas as pl
from jax.experimental.pallas import tpu as pltpu

KH = KW = 7
STRIDE = 2
PAD = 3
VMEM_LIMIT = 32 * 1024 * 1024  # safe on v5e/v6e (128 MiB) and v7x (64 MiB)


def _round_up(x, m):
    return ((x + m - 1) // m) * m


# ----------------------------- Pallas kernels ------------------------------

def _fused_conv_cls_kernel(xph_ref, w1_ref, w2_ref, b2_ref, out_ref, patch_ref,
                           *, cin, tile_ho, wo):
    """conv1 (7x7, stride 2) + ReLU + 1x1 classifier (+bias), fused.

    xph_ref  : (4, HP2, WP2, CIN)   bf16  phase-split padded input (one batch)
    w1_ref   : (KPAD, 64)           bf16  im2col conv1 weight (K zero-padded)
    w2_ref   : (64, CPAD)           bf16  classifier weight (classes padded to 128)
    b2_ref   : (1, CPAD)            f32   classifier bias
    out_ref  : (tile_ho*wo, CPAD)   f32   logits tile (lane-dense)
    patch_ref: (tile_ho, wo, KPAD)  bf16  VMEM scratch -- im2col built on-chip
    """
    j = pl.program_id(1)
    row0 = pl.multiple_of(j * tile_ho, tile_ho)

    # Zero so the K-padding columns contribute nothing (uninitialized VMEM
    # could hold NaNs; the matching w1 rows are zero as well).
    patch_ref[...] = jnp.zeros_like(patch_ref)

    # Build the im2col patch tile in VMEM.  The stride-2 conv taps become
    # unit-stride reads of the phase-split input: tap (kh, kw) lives in phase
    # p = (kh % 2) * 2 + (kw % 2) at offset (kh // 2, kw // 2).
    for kh in range(KH):
        ph, kh2 = kh % 2, kh // 2
        for kw in range(KW):
            pw, kw2 = kw % 2, kw // 2
            p = ph * 2 + pw
            col = (kh * KW + kw) * cin
            patch_ref[:, :, col:col + cin] = xph_ref[
                p, pl.ds(row0 + kh2, tile_ho), pl.ds(kw2, wo), :]

    # Single K=KPAD GEMM for the conv, fused ReLU, then the classifier GEMM.
    patches = patch_ref[...].reshape(tile_ho * wo, patch_ref.shape[-1])
    feat = jnp.maximum(
        jnp.dot(patches, w1_ref[...], preferred_element_type=jnp.float32), 0.0)
    out_ref[...] = (
        jnp.dot(feat.astype(jnp.bfloat16), w2_ref[...],
                preferred_element_type=jnp.float32) + b2_ref[...])


def _interp_kernel(a_ref, x_ref, o_ref):
    # One separable bilinear pass: o[b] = A @ x[b] along a single spatial axis.
    o_ref[...] = jnp.dot(a_ref[...], x_ref[...],
                         preferred_element_type=jnp.float32)


# --------------------------- pallas_call wrappers ---------------------------

def _pick_tile_ho(ho, wo, target_rows=512):
    """Largest divisor of `ho` keeping the M tile (tile_ho*wo) <= target_rows."""
    best = 1
    for t in range(1, ho + 1):
        if ho % t == 0 and t * wo <= target_rows:
            best = t
    return best


def conv1_relu_classifier(xph, w1, w2, b2, *, ho, wo, cin, tile_ho):
    n, _, hp2, wp2, _ = xph.shape
    kpad = w1.shape[0]
    cpad = w2.shape[1]
    m_tile = tile_ho * wo
    kernel = functools.partial(_fused_conv_cls_kernel,
                               cin=cin, tile_ho=tile_ho, wo=wo)
    # TODO(synk): for large images the per-batch input block should be tiled
    # along H with an explicit halo instead of keeping the whole image resident.
    return pl.pallas_call(
        kernel,
        out_shape=jax.ShapeDtypeStruct((n, ho * wo, cpad), jnp.float32),
        grid=(n, ho // tile_ho),
        in_specs=[
            # phase-split padded image: same block for every row tile (stays resident)
            pl.BlockSpec((pl.Squeezed(), 4, hp2, wp2, cin),
                         lambda b, j: (b, 0, 0, 0, 0)),
            pl.BlockSpec((kpad, 64), lambda b, j: (0, 0)),
            pl.BlockSpec((64, cpad), lambda b, j: (0, 0)),
            pl.BlockSpec((1, cpad), lambda b, j: (0, 0)),
        ],
        out_specs=pl.BlockSpec((pl.Squeezed(), m_tile, cpad),
                               lambda b, j: (b, j, 0)),
        scratch_shapes=[pltpu.VMEM((tile_ho, wo, kpad), jnp.bfloat16)],
        compiler_params=pltpu.CompilerParams(
            dimension_semantics=("parallel", "parallel"),
            vmem_limit_bytes=VMEM_LIMIT),
    )(xph, w1, w2, b2)


def _pick_d_tile(d, max_td=2048):
    if d <= max_td:
        return d
    best = d
    t = 128
    while t <= max_td:
        if d % t == 0:
            best = t
        t += 128
    return best


def interp_apply(a, x):
    """out[b] = a @ x[b] for every batch row b.  a: (P, Q) f32, x: (B, Q, D)."""
    nb, q, d = x.shape
    p = a.shape[0]
    td = _pick_d_tile(d)
    return pl.pallas_call(
        _interp_kernel,
        out_shape=jax.ShapeDtypeStruct((nb, p, d), jnp.float32),
        grid=(nb, d // td),
        in_specs=[
            pl.BlockSpec((p, q), lambda b, k: (0, 0)),
            pl.BlockSpec((pl.Squeezed(), q, td), lambda b, k: (b, 0, k)),
        ],
        out_specs=pl.BlockSpec((pl.Squeezed(), p, td), lambda b, k: (b, 0, k)),
        compiler_params=pltpu.CompilerParams(
            dimension_semantics=("parallel", "parallel"),
            vmem_limit_bytes=VMEM_LIMIT),
    )(a, x)


# ------------------------------ glue (plain JAX) ----------------------------

def _bilinear_matrix(out_size, in_size):
    """PyTorch F.interpolate(mode='bilinear', align_corners=False) weights."""
    scale = in_size / out_size
    i = np.arange(out_size, dtype=np.float64)
    src = np.clip((i + 0.5) * scale - 0.5, 0.0, in_size - 1)
    i0 = np.floor(src).astype(np.int64)
    i1 = np.minimum(i0 + 1, in_size - 1)
    w1 = src - i0
    m = np.zeros((out_size, in_size), dtype=np.float64)
    m[np.arange(out_size), i0] += 1.0 - w1
    m[np.arange(out_size), i1] += w1
    return m.astype(np.float32)


def init_params(key, in_channels, num_classes):
    k1, k2, k3 = jax.random.split(key, 3)
    # backbone.conv1: Conv2d(in_channels, 64, 7, stride=2, pad=3, bias=False)
    conv1_w = 0.05 * jax.random.normal(
        k1, (64, in_channels, KH, KW), dtype=jnp.float32)   # PyTorch OIHW
    # classifier head: Conv2d(64, num_classes, 1) with bias
    cls_w = 0.05 * jax.random.normal(
        k2, (num_classes, 64, 1, 1), dtype=jnp.float32)     # PyTorch OIHW
    cls_b = 0.05 * jax.random.normal(k3, (num_classes,), dtype=jnp.float32)
    return {"conv1_w": conv1_w, "cls_w": cls_w, "cls_b": cls_b}


def deeplab_wrapper_forward(params, x_nchw):
    """Equivalent of DeepLabWrapper(m).forward(X) -> m(X)['out'], NCHW."""
    n, c_in, h, w = x_nchw.shape
    num_classes = params["cls_b"].shape[0]
    ho = (h + 2 * PAD - KH) // STRIDE + 1
    wo = (w + 2 * PAD - KW) // STRIDE + 1

    # --- phase-split (space-to-depth by the conv stride) of the padded input.
    # One cheap relayout (~1x input bytes) so the kernel can build im2col
    # patches in VMEM with unit-stride slices: no 49x patches array in HBM.
    x_nhwc = jnp.transpose(x_nchw, (0, 2, 3, 1))
    hp, wp = h + 2 * PAD, w + 2 * PAD
    hpe, wpe = hp + hp % 2, wp + wp % 2
    xp = jnp.pad(x_nhwc, ((0, 0), (PAD, PAD + hpe - hp),
                          (PAD, PAD + wpe - wp), (0, 0)))
    xph = xp.reshape(n, hpe // 2, 2, wpe // 2, 2, c_in)
    xph = jnp.transpose(xph, (0, 2, 4, 1, 3, 5))        # (n, ph, pw, i, j, ci)
    xph = xph.reshape(n, 4, hpe // 2, wpe // 2, c_in).astype(jnp.bfloat16)

    # --- MXU-friendly weights: bf16 inputs / f32 accumulation; conv K padded
    # to a multiple of 128; classes padded 21 -> 128 so stores are lane-dense.
    k_real = KH * KW * c_in
    kpad = _round_up(k_real, 128)
    cpad = _round_up(num_classes, 128)
    w1 = jnp.transpose(params["conv1_w"], (2, 3, 1, 0)).reshape(k_real, 64)
    w1 = jnp.pad(w1, ((0, kpad - k_real), (0, 0))).astype(jnp.bfloat16)
    w2 = jnp.pad(params["cls_w"].reshape(num_classes, 64).T,
                 ((0, 0), (0, cpad - num_classes))).astype(jnp.bfloat16)
    b2 = jnp.pad(params["cls_b"], (0, cpad - num_classes)).reshape(1, cpad)
    b2 = b2.astype(jnp.float32)

    # --- fused conv1 + ReLU + 1x1 classifier (feat never leaves VMEM)
    tile_ho = _pick_tile_ho(ho, wo)
    logits = conv1_relu_classifier(xph, w1, w2, b2, ho=ho, wo=wo,
                                   cin=c_in, tile_ho=tile_ho)  # (n, ho*wo, cpad)

    # --- separable bilinear upsample (align_corners=False): W pass then H pass
    a_w = jnp.asarray(_bilinear_matrix(w, wo))          # (W, WO)
    a_h = jnp.asarray(_bilinear_matrix(h, ho))          # (H, HO)
    up_w = interp_apply(a_w, logits.reshape(n * ho, wo, cpad))  # (n*ho, W, cpad)
    up_hw = interp_apply(a_h, up_w.reshape(n, ho, w * cpad))    # (n, H, W*cpad)

    out = up_hw.reshape(n, h, w, cpad)[..., :num_classes]
    return jnp.transpose(out, (0, 3, 1, 2))             # NCHW 'out'


# ----------------------------- plain-JAX reference ---------------------------

def reference_forward(params, x_nchw):
    """Reference with the same bf16-input / f32-accumulate quantization."""
    n, c_in, h, w = x_nchw.shape
    num_classes = params["cls_b"].shape[0]
    x_nhwc = jnp.transpose(x_nchw, (0, 2, 3, 1)).astype(jnp.bfloat16)
    w_hwio = jnp.transpose(params["conv1_w"], (2, 3, 1, 0)).astype(jnp.bfloat16)
    feat = lax.conv_general_dilated(
        x_nhwc, w_hwio, window_strides=(STRIDE, STRIDE),
        padding=((PAD, PAD), (PAD, PAD)),
        dimension_numbers=("NHWC", "HWIO", "NHWC"),
        preferred_element_type=jnp.float32)
    feat = jnp.maximum(feat, 0.0)
    cls_w = params["cls_w"].reshape(num_classes, 64).T.astype(jnp.bfloat16)
    logits = jnp.einsum("nhwc,ck->nhwk", feat.astype(jnp.bfloat16), cls_w,
                        preferred_element_type=jnp.float32) + params["cls_b"]
    ho, wo = feat.shape[1], feat.shape[2]
    a_h = jnp.asarray(_bilinear_matrix(h, ho))
    a_w = jnp.asarray(_bilinear_matrix(w, wo))
    out = jnp.einsum("Hh,Ww,nhwk->nHWk", a_h, a_w, logits)
    return jnp.transpose(out, (0, 3, 1, 2))


# ----------------------------------- main -----------------------------------

if __name__ == "__main__":
    key = jax.random.PRNGKey(0)
    k_x, k_p = jax.random.split(key)

    N, C_IN, H, W = 2, 4, 16, 16          # in_channels != 3 -> conv1 replaced
    NUM_CLASSES = 21

    x = jax.random.normal(k_x, (N, C_IN, H, W), dtype=jnp.float32)
    params = init_params(k_p, C_IN, NUM_CLASSES)

    out = jax.block_until_ready(jax.jit(deeplab_wrapper_forward)(params, x))

    assert out.shape == (N, NUM_CLASSES, H, W), out.shape
    assert out.dtype == jnp.float32

    ref = jax.block_until_ready(reference_forward(params, x))
    np.testing.assert_allclose(np.asarray(out), np.asarray(ref),
                               rtol=2e-2, atol=2e-2)
    print("KERNEL_OK")
</pallas_src>

<mosaic_0001>
module attributes {stable_mosaic.version = 11 : i64} {
  func.func @_interp_kernel(%arg0: i32, %arg1: i32, %arg2: memref<16x8xf32, #tpu.memory_space<vmem>>, %arg3: memref<1x8x128xf32, #tpu.memory_space<vmem>>, %arg4: memref<1x16x128xf32, #tpu.memory_space<vmem>>) attributes {dimension_semantics = [#tpu.dimension_semantics<parallel>, #tpu.dimension_semantics<parallel>], iteration_bounds = array<i64: 16, 1>, scalar_prefetch = 0 : i64, scratch_operands = 0 : i64, tpu.core_type = #tpu.core_type<tc>, window_params = [{pipeline_mode = #tpu.pipeline_mode<synchronous>, transform_indices = @transform_0, window_bounds = array<i64: 16, 8>}, {transform_indices = @transform_1, window_bounds = array<i64: 1, 8, 128>}, {transform_indices = @transform_2, window_bounds = array<i64: 1, 16, 128>}]} {
    %c0 = arith.constant 0 : index
    %c0_0 = arith.constant 0 : index
    %0 = vector.load %arg2[%c0, %c0_0] : memref<16x8xf32, #tpu.memory_space<vmem>>, vector<16x8xf32>
    %c0_1 = arith.constant 0 : index
    %c0_2 = arith.constant 0 : index
    %c0_3 = arith.constant 0 : index
    %1 = vector.load %arg3[%c0_1, %c0_2, %c0_3] : memref<1x8x128xf32, #tpu.memory_space<vmem>>, vector<1x8x128xf32>
    %2 = vector.shape_cast %1 : vector<1x8x128xf32> to vector<8x128xf32>
    %cst = arith.constant dense<0.000000e+00> : vector<16x128xf32>
    %3 = tpu.matmul %0, %2, %cst {dimension_numbers = #tpu.dot_dimension_numbers<[1], [0], [0], [1], [0, 0, 1, 1], [], []>} : vector<16x8xf32>, vector<8x128xf32>, vector<16x128xf32> -> vector<16x128xf32>
    %c0_4 = arith.constant 0 : index
    %c0_5 = arith.constant 0 : index
    %c0_6 = arith.constant 0 : index
    %4 = vector.load %arg4[%c0_4, %c0_5, %c0_6] : memref<1x16x128xf32, #tpu.memory_space<vmem>>, vector<1x16x128xf32>
    %5 = vector.shape_cast %4 : vector<1x16x128xf32> to vector<16x128xf32>
    %6 = vector.shape_cast %3 : vector<16x128xf32> to vector<1x16x128xf32>
    tpu.vector_store %arg4[%c0_4, %c0_5, %c0_6], %6 {strides = array<i32>} : memref<1x16x128xf32, #tpu.memory_space<vmem>>, vector<1x16x128xf32>,
    return
  }
  func.func @transform_0(%arg0: i32, %arg1: i32) -> (i32, i32) {
    %c0_i32 = arith.constant 0 : i32
    %c0_i32_0 = arith.constant 0 : i32
    %c0_i32_1 = arith.constant 0 : i32
    return %c0_i32, %c0_i32_0 : i32, i32
  }
  func.func @transform_1(%arg0: i32, %arg1: i32) -> (i32, i32, i32) {
    %c0_i32 = arith.constant 0 : i32
    %c0_i32_0 = arith.constant 0 : i32
    return %arg0, %c0_i32, %arg1 : i32, i32, i32
  }
  func.func @transform_2(%arg0: i32, %arg1: i32) -> (i32, i32, i32) {
    %c0_i32 = arith.constant 0 : i32
    %c0_i32_0 = arith.constant 0 : i32
    return %arg0, %c0_i32, %arg1 : i32, i32, i32
  }
}

module attributes {stable_mosaic.version = 11 : i64} {
  func.func @_interp_kernel(%arg0: i32, %arg1: i32, %arg2: memref<16x8xf32, #tpu.memory_space<vmem>>, %arg3: memref<1x8x2048xf32, #tpu.memory_space<vmem>>, %arg4: memref<1x16x2048xf32, #tpu.memory_space<vmem>>) attributes {dimension_semantics = [#tpu.dimension_semantics<parallel>, #tpu.dimension_semantics<parallel>], iteration_bounds = array<i64: 2, 1>, scalar_prefetch = 0 : i64, scratch_operands = 0 : i64, tpu.core_type = #tpu.core_type<tc>, window_params = [{pipeline_mode = #tpu.pipeline_mode<synchronous>, transform_indices = @transform_0, window_bounds = array<i64: 16, 8>}, {transform_indices = @transform_1, window_bounds = array<i64: 1, 8, 2048>}, {transform_indices = @transform_2, window_bounds = array<i64: 1, 16, 2048>}]} {
    %c0 = arith.constant 0 : index
    %c0_0 = arith.constant 0 : index
    %0 = vector.load %arg2[%c0, %c0_0] : memref<16x8xf32, #tpu.memory_space<vmem>>, vector<16x8xf32>
    %c0_1 = arith.constant 0 : index
    %c0_2 = arith.constant 0 : index
    %c0_3 = arith.constant 0 : index
    %1 = vector.load %arg3[%c0_1, %c0_2, %c0_3] : memref<1x8x2048xf32, #tpu.memory_space<vmem>>, vector<1x8x2048xf32>
    %2 = vector.shape_cast %1 : vector<1x8x2048xf32> to vector<8x2048xf32>
    %cst = arith.constant dense<0.000000e+00> : vector<16x2048xf32>
    %3 = tpu.matmul %0, %2, %cst {dimension_numbers = #tpu.dot_dimension_numbers<[1], [0], [0], [1], [0, 0, 1, 1], [], []>} : vector<16x8xf32>, vector<8x2048xf32>, vector<16x2048xf32> -> vector<16x2048xf32>
    %c0_4 = arith.constant 0 : index
    %c0_5 = arith.constant 0 : index
    %c0_6 = arith.constant 0 : index
    %4 = vector.load %arg4[%c0_4, %c0_5, %c0_6] : memref<1x16x2048xf32, #tpu.memory_space<vmem>>, vector<1x16x2048xf32>
    %5 = vector.shape_cast %4 : vector<1x16x2048xf32> to vector<16x2048xf32>
    %6 = vector.shape_cast %3 : vector<16x2048xf32> to vector<1x16x2048xf32>
    tpu.vector_store %arg4[%c0_4, %c0_5, %c0_6], %6 {strides = array<i32>} : memref<1x16x2048xf32, #tpu.memory_space<vmem>>, vector<1x16x2048xf32>,
    return
  }
  func.func @transform_0(%arg0: i32, %arg1: i32) -> (i32, i32) {
    %c0_i32 = arith.constant 0 : i32
    %c0_i32_0 = arith.constant 0 : i32
    %c0_i32_1 = arith.constant 0 : i32
    return %c0_i32, %c0_i32_0 : i32, i32
  }
  func.func @transform_1(%arg0: i32, %arg1: i32) -> (i32, i32, i32) {
    %c0_i32 = arith.constant 0 : i32
    %c0_i32_0 = arith.constant 0 : i32
    return %arg0, %c0_i32, %arg1 : i32, i32, i32
  }
  func.func @transform_2(%arg0: i32, %arg1: i32) -> (i32, i32, i32) {
    %c0_i32 = arith.constant 0 : i32
    %c0_i32_0 = arith.constant 0 : i32
    return %arg0, %c0_i32, %arg1 : i32, i32, i32
  }
}

module attributes {stable_mosaic.version = 11 : i64} {
  func.func @_fused_conv_cls_kernel(%arg0: i32, %arg1: i32, %arg2: memref<1x4x11x11x4xbf16, #tpu.memory_space<vmem>>, %arg3: memref<256x64xbf16, #tpu.memory_space<vmem>>, %arg4: memref<64x128xbf16, #tpu.memory_space<vmem>>, %arg5: memref<1x128xf32, #tpu.memory_space<vmem>>, %arg6: memref<1x64x128xf32, #tpu.memory_space<vmem>>, %arg7: memref<8x8x256xbf16, #tpu.memory_space<vmem>>) attributes {dimension_semantics = [#tpu.dimension_semantics<parallel>, #tpu.dimension_semantics<parallel>], iteration_bounds = array<i64: 2, 1>, scalar_prefetch = 0 : i64, scratch_operands = 1 : i64, tpu.core_type = #tpu.core_type<tc>, window_params = [{transform_indices = @transform_0, window_bounds = array<i64: 1, 4, 11, 11, 4>}, {pipeline_mode = #tpu.pipeline_mode<synchronous>, transform_indices = @transform_1, window_bounds = array<i64: 256, 64>}, {pipeline_mode = #tpu.pipeline_mode<synchronous>, transform_indices = @transform_2, window_bounds = array<i64: 64, 128>}, {pipeline_mode = #tpu.pipeline_mode<synchronous>, transform_indices = @transform_3, window_bounds = array<i64: 1, 128>}, {transform_indices = @transform_4, window_bounds = array<i64: 1, 64, 128>}]} {
    %c8_i32 = arith.constant 8 : i32
    %0 = arith.muli %arg1, %c8_i32 : i32
    %1 = tpu.assume_multiple %0, 8 : i32
    %cst = arith.constant 0.000000e+00 : bf16
    %2 = vector.broadcast %cst : bf16 to vector<8x8x256xbf16>
    %c0 = arith.constant 0 : index
    %c0_0 = arith.constant 0 : index
    %c0_1 = arith.constant 0 : index
    %3 = vector.load %arg7[%c0, %c0_0, %c0_1] : memref<8x8x256xbf16, #tpu.memory_space<vmem>>, vector<8x8x256xbf16>
    tpu.vector_store %arg7[%c0, %c0_0, %c0_1], %2 {strides = array<i32>} : memref<8x8x256xbf16, #tpu.memory_space<vmem>>, vector<8x8x256xbf16>,
    %c0_i32 = arith.constant 0 : i32
    %4 = arith.addi %1, %c0_i32 : i32
    %c0_2 = arith.constant 0 : index
    %c0_3 = arith.constant 0 : index
    %5 = arith.index_cast %4 : i32 to index
    %c0_4 = arith.constant 0 : index
    %c0_5 = arith.constant 0 : index
    %6 = vector.load %arg2[%c0_2, %c0_3, %5, %c0_4, %c0_5] : memref<1x4x11x11x4xbf16, #tpu.memory_space<vmem>>, vector<1x1x8x8x4xbf16>
    %7 = vector.shape_cast %6 : vector<1x1x8x8x4xbf16> to vector<8x8x4xbf16>
    %c0_6 = arith.constant 0 : index
    %c0_7 = arith.constant 0 : index
    %c0_8 = arith.constant 0 : index
    %8 = vector.load %arg7[%c0_6, %c0_7, %c0_8] : memref<8x8x256xbf16, #tpu.memory_space<vmem>>, vector<8x8x4xbf16>
    tpu.vector_store %arg7[%c0_6, %c0_7, %c0_8], %7 {strides = array<i32>} : memref<8x8x256xbf16, #tpu.memory_space<vmem>>, vector<8x8x4xbf16>,
    %c0_i32_9 = arith.constant 0 : i32
    %9 = arith.addi %1, %c0_i32_9 : i32
    %c0_10 = arith.constant 0 : index
    %c1 = arith.constant 1 : index
    %10 = arith.index_cast %9 : i32 to index
    %c0_11 = arith.constant 0 : index
    %c0_12 = arith.constant 0 : index
    %11 = vector.load %arg2[%c0_10, %c1, %10, %c0_11, %c0_12] : memref<1x4x11x11x4xbf16, #tpu.memory_space<vmem>>, vector<1x1x8x8x4xbf16>
    %12 = vector.shape_cast %11 : vector<1x1x8x8x4xbf16> to vector<8x8x4xbf16>
    %c0_13 = arith.constant 0 : index
    %c0_14 = arith.constant 0 : index
    %c4 = arith.constant 4 : index
    %13 = vector.load %arg7[%c0_13, %c0_14, %c4] : memref<8x8x256xbf16, #tpu.memory_space<vmem>>, vector<8x8x4xbf16>
    tpu.vector_store %arg7[%c0_13, %c0_14, %c4], %12 {strides = array<i32>} : memref<8x8x256xbf16, #tpu.memory_space<vmem>>, vector<8x8x4xbf16>,
    %c0_i32_15 = arith.constant 0 : i32
    %14 = arith.addi %1, %c0_i32_15 : i32
    %c0_16 = arith.constant 0 : index
    %c0_17 = arith.constant 0 : index
    %15 = arith.index_cast %14 : i32 to index
    %c1_18 = arith.constant 1 : index
    %c0_19 = arith.constant 0 : index
    %16 = vector.load %arg2[%c0_16, %c0_17, %15, %c1_18, %c0_19] : memref<1x4x11x11x4xbf16, #tpu.memory_space<vmem>>, vector<1x1x8x8x4xbf16>
    %17 = vector.shape_cast %16 : vector<1x1x8x8x4xbf16> to vector<8x8x4xbf16>
    %c0_20 = arith.constant 0 : index
    %c0_21 = arith.constant 0 : index
    %c8 = arith.constant 8 : index
    %18 = vector.load %arg7[%c0_20, %c0_21, %c8] : memref<8x8x256xbf16, #tpu.memory_space<vmem>>, vector<8x8x4xbf16>
    tpu.vector_store %arg7[%c0_20, %c0_21, %c8], %17 {strides = array<i32>} : memref<8x8x256xbf16, #tpu.memory_space<vmem>>, vector<8x8x4xbf16>,
    %c0_i32_22 = arith.constant 0 : i32
    %19 = arith.addi %1, %c0_i32_22 : i32
    %c0_23 = arith.constant 0 : index
    %c1_24 = arith.constant 1 : index
    %20 = arith.index_cast %19 : i32 to index
    %c1_25 = arith.constant 1 : index
    %c0_26 = arith.constant 0 : index
    %21 = vector.load %arg2[%c0_23, %c1_24, %20, %c1_25, %c0_26] : memref<1x4x11x11x4xbf16, #tpu.memory_space<vmem>>, vector<1x1x8x8x4xbf16>
    %22 = vector.shape_cast %21 : vector<1x1x8x8x4xbf16> to vector<8x8x4xbf16>
    %c0_27 = arith.constant 0 : index
    %c0_28 = arith.constant 0 : index
    %c12 = arith.constant 12 : index
    %23 = vector.load %arg7[%c0_27, %c0_28, %c12] : memref<8x8x256xbf16, #tpu.memory_space<vmem>>, vector<8x8x4xbf16>
    tpu.vector_store %arg7[%c0_27, %c0_28, %c12], %22 {strides = array<i32>} : memref<8x8x256xbf16, #tpu.memory_space<vmem>>, vector<8x8x4xbf16>,
    %c0_i32_29 = arith.constant 0 : i32
    %24 = arith.addi %1, %c0_i32_29 : i32
    %c0_30 = arith.constant 0 : index
    %c0_31 = arith.constant 0 : index
    %25 = arith.index_cast %24 : i32 to index
    %c2 = arith.constant 2 : index
    %c0_32 = arith.constant 0 : index
    %26 = vector.load %arg2[%c0_30, %c0_31, %25, %c2, %c0_32] : memref<1x4x11x11x4xbf16, #tpu.memory_space<vmem>>, vector<1x1x8x8x4xbf16>
    %27 = vector.shape_cast %26 : vector<1x1x8x8x4xbf16> to vector<8x8x4xbf16>
    %c0_33 = arith.constant 0 : index
    %c0_34 = arith.constant 0 : index
    %c16 = arith.constant 16 : index
    %28 = vector.load %arg7[%c0_33, %c0_34, %c16] : memref<8x8x256xbf16, #tpu.memory_space<vmem>>, vector<8x8x4xbf16>
    tpu.vector_store %arg7[%c0_33, %c0_34, %c16], %27 {strides = array<i32>} : memref<8x8x256xbf16, #tpu.memory_space<vmem>>, vector<8x8x4xbf16>,
    %c0_i32_35 = arith.constant 0 : i32
    %29 = arith.addi %1, %c0_i32_35 : i32
    %c0_36 = arith.constant 0 : index
    %c1_37 = arith.constant 1 : index
    %30 = arith.index_cast %29 : i32 to index
    %c2_38 = arith.constant 2 : index
    %c0_39 = arith.constant 0 : index
    %31 = vector.load %arg2[%c0_36, %c1_37, %30, %c2_38, %c0_39] : memref<1x4x11x11x4xbf16, #tpu.memory_space<vmem>>, vector<1x1x8x8x4xbf16>
    %32 = vector.shape_cast %31 : vector<1x1x8x8x4xbf16> to vector<8x8x4xbf16>
    %c0_40 = arith.constant 0 : index
    %c0_41 = arith.constant 0 : index
    %c20 = arith.constant 20 : index
    %33 = vector.load %arg7[%c0_40, %c0_41, %c20] : memref<8x8x256xbf16, #tpu.memory_space<vmem>>, vector<8x8x4xbf16>
    tpu.vector_store %arg7[%c0_40, %c0_41, %c20], %32 {strides = array<i32>} : memref<8x8x256xbf16, #tpu.memory_space<vmem>>, vector<8x8x4xbf16>,
    %c0_i32_42 = arith.constant 0 : i32
    %34 = arith.addi %1, %c0_i32_42 : i32
    %c0_43 = arith.constant 0 : index
    %c0_44 = arith.constant 0 : index
    %35 = arith.index_cast %34 : i32 to index
    %c3 = arith.constant 3 : index
    %c0_45 = arith.constant 0 : index
    %36 = vector.load %arg2[%c0_43, %c0_44, %35, %c3, %c0_45] : memref<1x4x11x11x4xbf16, #tpu.memory_space<vmem>>, vector<1x1x8x8x4xbf16>
    %37 = vector.shape_cast %36 : vector<1x1x8x8x4xbf16> to vector<8x8x4xbf16>
    %c0_46 = arith.constant 0 : index
    %c0_47 = arith.constant 0 : index
    %c24 = arith.constant 24 : index
    %38 = vector.load %arg7[%c0_46, %c0_47, %c24] : memref<8x8x256xbf16, #tpu.memory_space<vmem>>, vector<8x8x4xbf16>
    tpu.vector_store %arg7[%c0_46, %c0_47, %c24], %37 {strides = array<i32>} : memref<8x8x256xbf16, #tpu.memory_space<vmem>>, vector<8x8x4xbf16>,
    %c0_i32_48 = arith.constant 0 : i32
    %39 = arith.addi %1, %c0_i32_48 : i32
    %c0_49 = arith.constant 0 : index
    %c2_50 = arith.constant 2 : index
    %40 = arith.index_cast %39 : i32 to index
    %c0_51 = arith.constant 0 : index
    %c0_52 = arith.constant 0 : index
    %41 = vector.load %arg2[%c0_49, %c2_50, %40, %c0_51, %c0_52] : memref<1x4x11x11x4xbf16, #tpu.memory_space<vmem>>, vector<1x1x8x8x4xbf16>
    %42 = vector.shape_cast %41 : vector<1x1x8x8x4xbf16> to vector<8x8x4xbf16>
    %c0_53 = arith.constant 0 : index
    %c0_54 = arith.constant 0 : index
    %c28 = arith.constant 28 : index
    %43 = vector.load %arg7[%c0_53, %c0_54, %c28] : memref<8x8x256xbf16, #tpu.memory_space<vmem>>, vector<8x8x4xbf16>
    tpu.vector_store %arg7[%c0_53, %c0_54, %c28], %42 {strides = array<i32>} : memref<8x8x256xbf16, #tpu.memory_space<vmem>>, vector<8x8x4xbf16>,
    %c0_i32_55 = arith.constant 0 : i32
    %44 = arith.addi %1, %c0_i32_55 : i32
    %c0_56 = arith.constant 0 : index
    %c3_57 = arith.constant 3 : index
    %45 = arith.index_cast %44 : i32 to index
    %c0_58 = arith.constant 0 : index
    %c0_59 = arith.constant 0 : index
    %46 = vector.load %arg2[%c0_56, %c3_57, %45, %c0_58, %c0_59] : memref<1x4x11x11x4xbf16, #tpu.memory_space<vmem>>, vector<1x1x8x8x4xbf16>
    %47 = vector.shape_cast %46 : vector<1x1x8x8x4xbf16> to vector<8x8x4xbf16>
    %c0_60 = arith.constant 0 : index
    %c0_61 = arith.constant 0 : index
    %c32 = arith.constant 32 : index
    %48 = vector.load %arg7[%c0_60, %c0_61, %c32] : memref<8x8x256xbf16, #tpu.memory_space<vmem>>, vector<8x8x4xbf16>
    tpu.vector_store %arg7[%c0_60, %c0_61, %c32], %47 {strides = array<i32>} : memref<8x8x256xbf16, #tpu.memory_space<vmem>>, vector<8x8x4xbf16>,
    %c0_i32_62 = arith.constant 0 : i32
    %49 = arith.addi %1, %c0_i32_62 : i32
    %c0_63 = arith.constant 0 : index
    %c2_64 = arith.constant 2 : index
    %50 = arith.index_cast %49 : i32 to index
    %c1_65 = arith.constant 1 : index
    %c0_66 = arith.constant 0 : index
    %51 = vector.load %arg2[%c0_63, %c2_64, %50, %c1_65, %c0_66] : memref<1x4x11x11x4xbf16, #tpu.memory_space<vmem>>, vector<1x1x8x8x4xbf16>
    %52 = vector.shape_cast %51 : vector<1x1x8x8x4xbf16> to vector<8x8x4xbf16>
    %c0_67 = arith.constant 0 : index
    %c0_68 = arith.constant 0 : index
    %c36 = arith.constant 36 : index
    %53 = vector.load %arg7[%c0_67, %c0_68, %c36] : memref<8x8x256xbf16, #tpu.memory_space<vmem>>, vector<8x8x4xbf16>
    tpu.vector_store %arg7[%c0_67, %c0_68, %c36], %52 {strides = array<i32>} : memref<8x8x256xbf16, #tpu.memory_space<vmem>>, vector<8x8x4xbf16>,
    %c0_i32_69 = arith.constant 0 : i32
    %54 = arith.addi %1, %c0_i32_69 : i32
    %c0_70 = arith.constant 0 : index
    %c3_71 = arith.constant 3 : index
    %55 = arith.index_cast %54 : i32 to index
    %c1_72 = arith.constant 1 : index
    %c0_73 = arith.constant 0 : index
    %56 = vector.load %arg2[%c0_70, %c3_71, %55, %c1_72, %c0_73] : memref<1x4x11x11x4xbf16, #tpu.memory_space<vmem>>, vector<1x1x8x8x4xbf16>
    %57 = vector.shape_cast %56 : vector<1x1x8x8x4xbf16> to vector<8x8x4xbf16>
    %c0_74 = arith.constant 0 : index
    %c0_75 = arith.constant 0 : index
    %c40 = arith.constant 40 : index
    %58 = vector.load %arg7[%c0_74, %c0_75, %c40] : memref<8x8x256xbf16, #tpu.memory_space<vmem>>, vector<8x8x4xbf16>
    tpu.vector_store %arg7[%c0_74, %c0_75, %c40], %57 {strides = array<i32>} : memref<8x8x256xbf16, #tpu.memory_space<vmem>>, vector<8x8x4xbf16>,
    %c0_i32_76 = arith.constant 0 : i32
    %59 = arith.addi %1, %c0_i32_76 : i32
    %c0_77 = arith.constant 0 : index
    %c2_78 = arith.constant 2 : index
    %60 = arith.index_cast %59 : i32 to index
    %c2_79 = arith.constant 2 : index
    %c0_80 = arith.constant 0 : index
    %61 = vector.load %arg2[%c0_77, %c2_78, %60, %c2_79, %c0_80] : memref<1x4x11x11x4xbf16, #tpu.memory_space<vmem>>, vector<1x1x8x8x4xbf16>
    %62 = vector.shape_cast %61 : vector<1x1x8x8x4xbf16> to vector<8x8x4xbf16>
    %c0_81 = arith.constant 0 : index
    %c0_82 = arith.constant 0 : index
    %c44 = arith.constant 44 : index
    %63 = vector.load %arg7[%c0_81, %c0_82, %c44] : memref<8x8x256xbf16, #tpu.memory_space<vmem>>, vector<8x8x4xbf16>
    tpu.vector_store %arg7[%c0_81, %c0_82, %c44], %62 {strides = array<i32>} : memref<8x8x256xbf16, #tpu.memory_space<vmem>>, vector<8x8x4xbf16>,
    %c0_i32_83 = arith.constant 0 : i32
    %64 = arith.addi %1, %c0_i32_83 : i32
    %c0_84 = arith.constant 0 : index
    %c3_85 = arith.constant 3 : index
    %65 = arith.index_cast %64 : i32 to index
    %c2_86 = arith.constant 2 : index
    %c0_87 = arith.constant 0 : index
    %66 = vector.load %arg2[%c0_84, %c3_85, %65, %c2_86, %c0_87] : memref<1x4x11x11x4xbf16, #tpu.memory_space<vmem>>, vector<1x1x8x8x4xbf16>
    %67 = vector.shape_cast %66 : vector<1x1x8x8x4xbf16> to vector<8x8x4xbf16>
    %c0_88 = arith.constant 0 : index
    %c0_89 = arith.constant 0 : index
    %c48 = arith.constant 48 : index
    %68 = vector.load %arg7[%c0_88, %c0_89, %c48] : memref<8x8x256xbf16, #tpu.memory_space<vmem>>, vector<8x8x4xbf16>
    tpu.vector_store %arg7[%c0_88, %c0_89, %c48], %67 {strides = array<i32>} : memref<8x8x256xbf16, #tpu.memory_space<vmem>>, vector<8x8x4xbf16>,
    %c0_i32_90 = arith.constant 0 : i32
    %69 = arith.addi %1, %c0_i32_90 : i32
    %c0_91 = arith.constant 0 : index
    %c2_92 = arith.constant 2 : index
    %70 = arith.index_cast %69 : i32 to index
    %c3_93 = arith.constant 3 : index
    %c0_94 = arith.constant 0 : index
    %71 = vector.load %arg2[%c0_91, %c2_92, %70, %c3_93, %c0_94] : memref<1x4x11x11x4xbf16, #tpu.memory_space<vmem>>, vector<1x1x8x8x4xbf16>
    %72 = vector.shape_cast %71 : vector<1x1x8x8x4xbf16> to vector<8x8x4xbf16>
    %c0_95 = arith.constant 0 : index
    %c0_96 = arith.constant 0 : index
    %c52 = arith.constant 52 : index
    %73 = vector.load %arg7[%c0_95, %c0_96, %c52] : memref<8x8x256xbf16, #tpu.memory_space<vmem>>, vector<8x8x4xbf16>
    tpu.vector_store %arg7[%c0_95, %c0_96, %c52], %72 {strides = array<i32>} : memref<8x8x256xbf16, #tpu.memory_space<vmem>>, vector<8x8x4xbf16>,
    %c1_i32 = arith.constant 1 : i32
    %74 = arith.addi %1, %c1_i32 : i32
    %c0_97 = arith.constant 0 : index
    %c0_98 = arith.constant 0 : index
    %75 = arith.index_cast %74 : i32 to index
    %c0_99 = arith.constant 0 : index
    %c0_100 = arith.constant 0 : index
    %76 = vector.load %arg2[%c0_97, %c0_98, %75, %c0_99, %c0_100] : memref<1x4x11x11x4xbf16, #tpu.memory_space<vmem>>, vector<1x1x8x8x4xbf16>
    %77 = vector.shape_cast %76 : vector<1x1x8x8x4xbf16> to vector<8x8x4xbf16>
    %c0_101 = arith.constant 0 : index
    %c0_102 = arith.constant 0 : index
    %c56 = arith.constant 56 : index
    %78 = vector.load %arg7[%c0_101, %c0_102, %c56] : memref<8x8x256xbf16, #tpu.memory_space<vmem>>, vector<8x8x4xbf16>
    tpu.vector_store %arg7[%c0_101, %c0_102, %c56], %77 {strides = array<i32>} : memref<8x8x256xbf16, #tpu.memory_space<vmem>>, vector<8x8x4xbf16>,
    %c1_i32_103 = arith.constant 1 : i32
    %79 = arith.addi %1, %c1_i32_103 : i32
    %c0_104 = arith.constant 0 : index
    %c1_105 = arith.constant 1 : index
    %80 = arith.index_cast %79 : i32 to index
    %c0_106 = arith.constant 0 : index
    %c0_107 = arith.constant 0 : index
    %81 = vector.load %arg2[%c0_104, %c1_105, %80, %c0_106, %c0_107] : memref<1x4x11x11x4xbf16, #tpu.memory_space<vmem>>, vector<1x1x8x8x4xbf16>
    %82 = vector.shape_cast %81 : vector<1x1x8x8x4xbf16> to vector<8x8x4xbf16>
    %c0_108 = arith.constant 0 : index
    %c0_109 = arith.constant 0 : index
    %c60 = arith.constant 60 : index
    %83 = vector.load %arg7[%c0_108, %c0_109, %c60] : memref<8x8x256xbf16, #tpu.memory_space<vmem>>, vector<8x8x4xbf16>
    tpu.vector_store %arg7[%c0_108, %c0_109, %c60], %82 {strides = array<i32>} : memref<8x8x256xbf16, #tpu.memory_space<vmem>>, vector<8x8x4xbf16>,
    %c1_i32_110 = arith.constant 1 : i32
    %84 = arith.addi %1, %c1_i32_110 : i32
    %c0_111 = arith.constant 0 : index
    %c0_112 = arith.constant 0 : index
    %85 = arith.index_cast %84 : i32 to index
    %c1_113 = arith.constant 1 : index
    %c0_114 = arith.constant 0 : index
    %86 = vector.load %arg2[%c0_111, %c0_112, %85, %c1_113, %c0_114] : memref<1x4x11x11x4xbf16, #tpu.memory_space<vmem>>, vector<1x1x8x8x4xbf16>
    %87 = vector.shape_cast %86 : vector<1x1x8x8x4xbf16> to vector<8x8x4xbf16>
    %c0_115 = arith.constant 0 : index
    %c0_116 = arith.constant 0 : index
    %c64 = arith.constant 64 : index
    %88 = vector.load %arg7[%c0_115, %c0_116, %c64] : memref<8x8x256xbf16, #tpu.memory_space<vmem>>, vector<8x8x4xbf16>
    tpu.vector_store %arg7[%c0_115, %c0_116, %c64], %87 {strides = array<i32>} : memref<8x8x256xbf16, #tpu.memory_space<vmem>>, vector<8x8x4xbf16>,
    %c1_i32_117 = arith.constant 1 : i32
    %89 = arith.addi %1, %c1_i32_117 : i32
    %c0_118 = arith.constant 0 : index
    %c1_119 = arith.constant 1 : index
    %90 = arith.index_cast %89 : i32 to index
    %c1_120 = arith.constant 1 : index
    %c0_121 = arith.constant 0 : index
    %91 = vector.load %arg2[%c0_118, %c1_119, %90, %c1_120, %c0_121] : memref<1x4x11x11x4xbf16, #tpu.memory_space<vmem>>, vector<1x1x8x8x4xbf16>
    %92 = vector.shape_cast %91 : vector<1x1x8x8x4xbf16> to vector<8x8x4xbf16>
    %c0_122 = arith.constant 0 : index
    %c0_123 = arith.constant 0 : index
    %c68 = arith.constant 68 : index
    %93 = vector.load %arg7[%c0_122, %c0_123, %c68] : memref<8x8x256xbf16, #tpu.memory_space<vmem>>, vector<8x8x4xbf16>
    tpu.vector_store %arg7[%c0_122, %c0_123, %c68], %92 {strides = array<i32>} : memref<8x8x256xbf16, #tpu.memory_space<vmem>>, vector<8x8x4xbf16>,
    %c1_i32_124 = arith.constant 1 : i32
    %94 = arith.addi %1, %c1_i32_124 : i32
    %c0_125 = arith.constant 0 : index
    %c0_126 = arith.constant 0 : index
    %95 = arith.index_cast %94 : i32 to index
    %c2_127 = arith.constant 2 : index
    %c0_128 = arith.constant 0 : index
    %96 = vector.load %arg2[%c0_125, %c0_126, %95, %c2_127, %c0_128] : memref<1x4x11x11x4xbf16, #tpu.memory_space<vmem>>, vector<1x1x8x8x4xbf16>
    %97 = vector.shape_cast %96 : vector<1x1x8x8x4xbf16> to vector<8x8x4xbf16>
    %c0_129 = arith.constant 0 : index
    %c0_130 = arith.constant 0 : index
    %c72 = arith.constant 72 : index
    %98 = vector.load %arg7[%c0_129, %c0_130, %c72] : memref<8x8x256xbf16, #tpu.memory_space<vmem>>, vector<8x8x4xbf16>
    tpu.vector_store %arg7[%c0_129, %c0_130, %c72], %97 {strides = array<i32>} : memref<8x8x256xbf16, #tpu.memory_space<vmem>>, vector<8x8x4xbf16>,
    %c1_i32_131 = arith.constant 1 : i32
    %99 = arith.addi %1, %c1_i32_131 : i32
    %c0_132 = arith.constant 0 : index
    %c1_133 = arith.constant 1 : index
    %100 = arith.index_cast %99 : i32 to index
    %c2_134 = arith.constant 2 : index
    %c0_135 = arith.constant 0 : index
    %101 = vector.load %arg2[%c0_132, %c1_133, %100, %c2_134, %c0_135] : memref<1x4x11x11x4xbf16, #tpu.memory_space<vmem>>, vector<1x1x8x8x4xbf16>
    %102 = vector.shape_cast %101 : vector<1x1x8x8x4xbf16> to vector<8x8x4xbf16>
    %c0_136 = arith.constant 0 : index
    %c0_137 = arith.constant 0 : index
    %c76 = arith.constant 76 : index
    %103 = vector.load %arg7[%c0_136, %c0_137, %c76] : memref<8x8x256xbf16, #tpu.memory_space<vmem>>, vector<8x8x4xbf16>
    tpu.vector_store %arg7[%c0_136, %c0_137, %c76], %102 {strides = array<i32>} : memref<8x8x256xbf16, #tpu.memory_space<vmem>>, vector<8x8x4xbf16>,
    %c1_i32_138 = arith.constant 1 : i32
    %104 = arith.addi %1, %c1_i32_138 : i32
    %c0_139 = arith.constant 0 : index
    %c0_140 = arith.constant 0 : index
    %105 = arith.index_cast %104 : i32 to index
    %c3_141 = arith.constant 3 : index
    %c0_142 = arith.constant 0 : index
    %106 = vector.load %arg2[%c0_139, %c0_140, %105, %c3_141, %c0_142] : memref<1x4x11x11x4xbf16, #tpu.memory_space<vmem>>, vector<1x1x8x8x4xbf16>
    %107 = vector.shape_cast %106 : vector<1x1x8x8x4xbf16> to vector<8x8x4xbf16>
    %c0_143 = arith.constant 0 : index
    %c0_144 = arith.constant 0 : index
    %c80 = arith.constant 80 : index
    %108 = vector.load %arg7[%c0_143, %c0_144, %c80] : memref<8x8x256xbf16, #tpu.memory_space<vmem>>, vector<8x8x4xbf16>
    tpu.vector_store %arg7[%c0_143, %c0_144, %c80], %107 {strides = array<i32>} : memref<8x8x256xbf16, #tpu.memory_space<vmem>>, vector<8x8x4xbf16>,
    %c1_i32_145 = arith.constant 1 : i32
    %109 = arith.addi %1, %c1_i32_145 : i32
    %c0_146 = arith.constant 0 : index
    %c2_147 = arith.constant 2 : index
    %110 = arith.index_cast %109 : i32 to index
    %c0_148 = arith.constant 0 : index
    %c0_149 = arith.constant 0 : index
    %111 = vector.load %arg2[%c0_146, %c2_147, %110, %c0_148, %c0_149] : memref<1x4x11x11x4xbf16, #tpu.memory_space<vmem>>, vector<1x1x8x8x4xbf16>
    %112 = vector.shape_cast %111 : vector<1x1x8x8x4xbf16> to vector<8x8x4xbf16>
    %c0_150 = arith.constant 0 : index
    %c0_151 = arith.constant 0 : index
    %c84 = arith.constant 84 : index
    %113 = vector.load %arg7[%c0_150, %c0_151, %c84] : memref<8x8x256xbf16, #tpu.memory_space<vmem>>, vector<8x8x4xbf16>
    tpu.vector_store %arg7[%c0_150, %c0_151, %c84], %112 {strides = array<i32>} : memref<8x8x256xbf16, #tpu.memory_space<vmem>>, vector<8x8x4xbf16>,
    %c1_i32_152 = arith.constant 1 : i32
    %114 = arith.addi %1, %c1_i32_152 : i32
    %c0_153 = arith.constant 0 : index
    %c3_154 = arith.constant 3 : index
    %115 = arith.index_cast %114 : i32 to index
    %c0_155 = arith.constant 0 : index
    %c0_156 = arith.constant 0 : index
    %116 = vector.load %arg2[%c0_153, %c3_154, %115, %c0_155, %c0_156] : memref<1x4x11x11x4xbf16, #tpu.memory_space<vmem>>, vector<1x1x8x8x4xbf16>
    %117 = vector.shape_cast %116 : vector<1x1x8x8x4xbf16> to vector<8x8x4xbf16>
    %c0_157 = arith.constant 0 : index
    %c0_158 = arith.constant 0 : index
    %c88 = arith.constant 88 : index
    %118 = vector.load %arg7[%c0_157, %c0_158, %c88] : memref<8x8x256xbf16, #tpu.memory_space<vmem>>, vector<8x8x4xbf16>
    tpu.vector_store %arg7[%c0_157, %c0_158, %c88], %117 {strides = array<i32>} : memref<8x8x256xbf16, #tpu.memory_space<vmem>>, vector<8x8x4xbf16>,
    %c1_i32_159 = arith.constant 1 : i32
    %119 = arith.addi %1, %c1_i32_159 : i32
    %c0_160 = arith.constant 0 : index
    %c2_161 = arith.constant 2 : index
    %120 = arith.index_cast %119 : i32 to index
    %c1_162 = arith.constant 1 : index
    %c0_163 = arith.constant 0 : index
    %121 = vector.load %arg2[%c0_160, %c2_161, %120, %c1_162, %c0_163] : memref<1x4x11x11x4xbf16, #tpu.memory_space<vmem>>, vector<1x1x8x8x4xbf16>
    %122 = vector.shape_cast %121 : vector<1x1x8x8x4xbf16> to vector<8x8x4xbf16>
    %c0_164 = arith.constant 0 : index
    %c0_165 = arith.constant 0 : index
    %c92 = arith.constant 92 : index
    %123 = vector.load %arg7[%c0_164, %c0_165, %c92] : memref<8x8x256xbf16, #tpu.memory_space<vmem>>, vector<8x8x4xbf16>
    tpu.vector_store %arg7[%c0_164, %c0_165, %c92], %122 {strides = array<i32>} : memref<8x8x256xbf16, #tpu.memory_space<vmem>>, vector<8x8x4xbf16>,
    %c1_i32_166 = arith.constant 1 : i32
    %124 = arith.addi %1, %c1_i32_166 : i32
    %c0_167 = arith.constant 0 : index
    %c3_168 = arith.constant 3 : index
    %125 = arith.index_cast %124 : i32 to index
    %c1_169 = arith.constant 1 : index
    %c0_170 = arith.constant 0 : index
    %126 = vector.load %arg2[%c0_167, %c3_168, %125, %c1_169, %c0_170] : memref<1x4x11x11x4xbf16, #tpu.memory_space<vmem>>, vector<1x1x8x8x4xbf16>
    %127 = vector.shape_cast %126 : vector<1x1x8x8x4xbf16> to vector<8x8x4xbf16>
    %c0_171 = arith.constant 0 : index
    %c0_172 = arith.constant 0 : index
    %c96 = arith.constant 96 : index
    %128 = vector.load %arg7[%c0_171, %c0_172, %c96] : memref<8x8x256xbf16, #tpu.memory_space<vmem>>, vector<8x8x4xbf16>
    tpu.vector_store %arg7[%c0_171, %c0_172, %c96], %127 {strides = array<i32>} : memref<8x8x256xbf16, #tpu.memory_space<vmem>>, vector<8x8x4xbf16>,
    %c1_i32_173 = arith.constant 1 : i32
    %129 = arith.addi %1, %c1_i32_173 : i32
    %c0_174 = arith.constant 0 : index
    %c2_175 = arith.constant 2 : index
    %130 = arith.index_cast %129 : i32 to index
    %c2_176 = arith.constant 2 : index
    %c0_177 = arith.constant 0 : index
    %131 = vector.load %arg2[%c0_174, %c2_175, %130, %c2_176, %c0_177] : memref<1x4x11x11x4xbf16, #tpu.memory_space<vmem>>, vector<1x1x8x8x4xbf16>
    %132 = vector.shape_cast %131 : vector<1x1x8x8x4xbf16> to vector<8x8x4xbf16>
    %c0_178 = arith.constant 0 : index
    %c0_179 = arith.constant 0 : index
    %c100 = arith.constant 100 : index
    %133 = vector.load %arg7[%c0_178, %c0_179, %c100] : memref<8x8x256xbf16, #tpu.memory_space<vmem>>, vector<8x8x4xbf16>
    tpu.vector_store %arg7[%c0_178, %c0_179, %c100], %132 {strides = array<i32>} : memref<8x8x256xbf16, #tpu.memory_space<vmem>>, vector<8x8x4xbf16>,
    %c1_i32_180 = arith.constant 1 : i32
    %134 = arith.addi %1, %c1_i32_180 : i32
    %c0_181 = arith.constant 0 : index
    %c3_182 = arith.constant 3 : index
    %135 = arith.index_cast %134 : i32 to index
    %c2_183 = arith.constant 2 : index
    %c0_184 = arith.constant 0 : index
    %136 = vector.load %arg2[%c0_181, %c3_182, %135, %c2_183, %c0_184] : memref<1x4x11x11x4xbf16, #tpu.memory_space<vmem>>, vector<1x1x8x8x4xbf16>
    %137 = vector.shape_cast %136 : vector<1x1x8x8x4xbf16> to vector<8x8x4xbf16>
    %c0_185 = arith.constant 0 : index
    %c0_186 = arith.constant 0 : index
    %c104 = arith.constant 104 : index
    %138 = vector.load %arg7[%c0_185, %c0_186, %c104] : memref<8x8x256xbf16, #tpu.memory_space<vmem>>, vector<8x8x4xbf16>
    tpu.vector_store %arg7[%c0_185, %c0_186, %c104], %137 {strides = array<i32>} : memref<8x8x256xbf16, #tpu.memory_space<vmem>>, vector<8x8x4xbf16>,
    %c1_i32_187 = arith.constant 1 : i32
    %139 = arith.addi %1, %c1_i32_187 : i32
    %c0_188 = arith.constant 0 : index
    %c2_189 = arith.constant 2 : index
    %140 = arith.index_cast %139 : i32 to index
    %c3_190 = arith.constant 3 : index
    %c0_191 = arith.constant 0 : index
    %141 = vector.load %arg2[%c0_188, %c2_189, %140, %c3_190, %c0_191] : memref<1x4x11x11x4xbf16, #tpu.memory_space<vmem>>, vector<1x1x8x8x4xbf16>
    %142 = vector.shape_cast %141 : vector<1x1x8x8x4xbf16> to vector<8x8x4xbf16>
    %c0_192 = arith.constant 0 : index
    %c0_193 = arith.constant 0 : index
    %c108 = arith.constant 108 : index
    %143 = vector.load %arg7[%c0_192, %c0_193, %c108] : memref<8x8x256xbf16, #tpu.memory_space<vmem>>, vector<8x8x4xbf16>
    tpu.vector_store %arg7[%c0_192, %c0_193, %c108], %142 {strides = array<i32>} : memref<8x8x256xbf16, #tpu.memory_space<vmem>>, vector<8x8x4xbf16>,
    %c2_i32 = arith.constant 2 : i32
    %144 = arith.addi %1, %c2_i32 : i32
    %c0_194 = arith.constant 0 : index
    %c0_195 = arith.constant 0 : index
    %145 = arith.index_cast %144 : i32 to index
    %c0_196 = arith.constant 0 : index
    %c0_197 = arith.constant 0 : index
    %146 = vector.load %arg2[%c0_194, %c0_195, %145, %c0_196, %c0_197] : memref<1x4x11x11x4xbf16, #tpu.memory_space<vmem>>, vector<1x1x8x8x4xbf16>
    %147 = vector.shape_cast %146 : vector<1x1x8x8x4xbf16> to vector<8x8x4xbf16>
    %c0_198 = arith.constant 0 : index
    %c0_199 = arith.constant 0 : index
    %c112 = arith.constant 112 : index
    %148 = vector.load %arg7[%c0_198, %c0_199, %c112] : memref<8x8x256xbf16, #tpu.memory_space<vmem>>, vector<8x8x4xbf16>
    tpu.vector_store %arg7[%c0_198, %c0_199, %c112], %147 {strides = array<i32>} : memref<8x8x256xbf16, #tpu.memory_space<vmem>>, vector<8x8x4xbf16>,
    %c2_i32_200 = arith.constant 2 : i32
    %149 = arith.addi %1, %c2_i32_200 : i32
    %c0_201 = arith.constant 0 : index
    %c1_202 = arith.constant 1 : index
    %150 = arith.index_cast %149 : i32 to index
    %c0_203 = arith.constant 0 : index
    %c0_204 = arith.constant 0 : index
    %151 = vector.load %arg2[%c0_201, %c1_202, %150, %c0_203, %c0_204] : memref<1x4x11x11x4xbf16, #tpu.memory_space<vmem>>, vector<1x1x8x8x4xbf16>
    %152 = vector.shape_cast %151 : vector<1x1x8x8x4xbf16> to vector<8x8x4xbf16>
    %c0_205 = arith.constant 0 : index
    %c0_206 = arith.constant 0 : index
    %c116 = arith.constant 116 : index
    %153 = vector.load %arg7[%c0_205, %c0_206, %c116] : memref<8x8x256xbf16, #tpu.memory_space<vmem>>, vector<8x8x4xbf16>
    tpu.vector_store %arg7[%c0_205, %c0_206, %c116], %152 {strides = array<i32>} : memref<8x8x256xbf16, #tpu.memory_space<vmem>>, vector<8x8x4xbf16>,
    %c2_i32_207 = arith.constant 2 : i32
    %154 = arith.addi %1, %c2_i32_207 : i32
    %c0_208 = arith.constant 0 : index
    %c0_209 = arith.constant 0 : index
    %155 = arith.index_cast %154 : i32 to index
    %c1_210 = arith.constant 1 : index
    %c0_211 = arith.constant 0 : index
    %156 = vector.load %arg2[%c0_208, %c0_209, %155, %c1_210, %c0_211] : memref<1x4x11x11x4xbf16, #tpu.memory_space<vmem>>, vector<1x1x8x8x4xbf16>
    %157 = vector.shape_cast %156 : vector<1x1x8x8x4xbf16> to vector<8x8x4xbf16>
    %c0_212 = arith.constant 0 : index
    %c0_213 = arith.constant 0 : index
    %c120 = arith.constant 120 : index
    %158 = vector.load %arg7[%c0_212, %c0_213, %c120] : memref<8x8x256xbf16, #tpu.memory_space<vmem>>, vector<8x8x4xbf16>
    tpu.vector_store %arg7[%c0_212, %c0_213, %c120], %157 {strides = array<i32>} : memref<8x8x256xbf16, #tpu.memory_space<vmem>>, vector<8x8x4xbf16>,
    %c2_i32_214 = arith.constant 2 : i32
    %159 = arith.addi %1, %c2_i32_214 : i32
    %c0_215 = arith.constant 0 : index
    %c1_216 = arith.constant 1 : index
    %160 = arith.index_cast %159 : i32 to index
    %c1_217 = arith.constant 1 : index
    %c0_218 = arith.constant 0 : index
    %161 = vector.load %arg2[%c0_215, %c1_216, %160, %c1_217, %c0_218] : memref<1x4x11x11x4xbf16, #tpu.memory_space<vmem>>, vector<1x1x8x8x4xbf16>
    %162 = vector.shape_cast %161 : vector<1x1x8x8x4xbf16> to vector<8x8x4xbf16>
    %c0_219 = arith.constant 0 : index
    %c0_220 = arith.constant 0 : index
    %c124 = arith.constant 124 : index
    %163 = vector.load %arg7[%c0_219, %c0_220, %c124] : memref<8x8x256xbf16, #tpu.memory_space<vmem>>, vector<8x8x4xbf16>
    tpu.vector_store %arg7[%c0_219, %c0_220, %c124], %162 {strides = array<i32>} : memref<8x8x256xbf16, #tpu.memory_space<vmem>>, vector<8x8x4xbf16>,
    %c2_i32_221 = arith.constant 2 : i32
    %164 = arith.addi %1, %c2_i32_221 : i32
    %c0_222 = arith.constant 0 : index
    %c0_223 = arith.constant 0 : index
    %165 = arith.index_cast %164 : i32 to index
    %c2_224 = arith.constant 2 : index
    %c0_225 = arith.constant 0 : index
    %166 = vector.load %arg2[%c0_222, %c0_223, %165, %c2_224, %c0_225] : memref<1x4x11x11x4xbf16, #tpu.memory_space<vmem>>, vector<1x1x8x8x4xbf16>
    %167 = vector.shape_cast %166 : vector<1x1x8x8x4xbf16> to vector<8x8x4xbf16>
    %c0_226 = arith.constant 0 : index
    %c0_227 = arith.constant 0 : index
    %c128 = arith.constant 128 : index
    %168 = vector.load %arg7[%c0_226, %c0_227, %c128] : memref<8x8x256xbf16, #tpu.memory_space<vmem>>, vector<8x8x4xbf16>
    tpu.vector_store %arg7[%c0_226, %c0_227, %c128], %167 {strides = array<i32>} : memref<8x8x256xbf16, #tpu.memory_space<vmem>>, vector<8x8x4xbf16>,
    %c2_i32_228 = arith.constant 2 : i32
    %169 = arith.addi %1, %c2_i32_228 : i32
    %c0_229 = arith.constant 0 : index
    %c1_230 = arith.constant 1 : index
    %170 = arith.index_cast %169 : i32 to index
    %c2_231 = arith.constant 2 : index
    %c0_232 = arith.constant 0 : index
    %171 = vector.load %arg2[%c0_229, %c1_230, %170, %c2_231, %c0_232] : memref<1x4x11x11x4xbf16, #tpu.memory_space<vmem>>, vector<1x1x8x8x4xbf16>
    %172 = vector.shape_cast %171 : vector<1x1x8x8x4xbf16> to vector<8x8x4xbf16>
    %c0_233 = arith.constant 0 : index
    %c0_234 = arith.constant 0 : index
    %c132 = arith.constant 132 : index
    %173 = vector.load %arg7[%c0_233, %c0_234, %c132] : memref<8x8x256xbf16, #tpu.memory_space<vmem>>, vector<8x8x4xbf16>
    tpu.vector_store %arg7[%c0_233, %c0_234, %c132], %172 {strides = array<i32>} : memref<8x8x256xbf16, #tpu.memory_space<vmem>>, vector<8x8x4xbf16>,
    %c2_i32_235 = arith.constant 2 : i32
    %174 = arith.addi %1, %c2_i32_235 : i32
    %c0_236 = arith.constant 0 : index
    %c0_237 = arith.constant 0 : index
    %175 = arith.index_cast %174 : i32 to index
    %c3_238 = arith.constant 3 : index
    %c0_239 = arith.constant 0 : index
    %176 = vector.load %arg2[%c0_236, %c0_237, %175, %c3_238, %c0_239] : memref<1x4x11x11x4xbf16, #tpu.memory_space<vmem>>, vector<1x1x8x8x4xbf16>
    %177 = vector.shape_cast %176 : vector<1x1x8x8x4xbf16> to vector<8x8x4xbf16>
    %c0_240 = arith.constant 0 : index
    %c0_241 = arith.constant 0 : index
    %c136 = arith.constant 136 : index
    %178 = vector.load %arg7[%c0_240, %c0_241, %c136] : memref<8x8x256xbf16, #tpu.memory_space<vmem>>, vector<8x8x4xbf16>
    tpu.vector_store %arg7[%c0_240, %c0_241, %c136], %177 {strides = array<i32>} : memref<8x8x256xbf16, #tpu.memory_space<vmem>>, vector<8x8x4xbf16>,
    %c2_i32_242 = arith.constant 2 : i32
    %179 = arith.addi %1, %c2_i32_242 : i32
    %c0_243 = arith.constant 0 : index
    %c2_244 = arith.constant 2 : index
    %180 = arith.index_cast %179 : i32 to index
    %c0_245 = arith.constant 0 : index
    %c0_246 = arith.constant 0 : index
    %181 = vector.load %arg2[%c0_243, %c2_244, %180, %c0_245, %c0_246] : memref<1x4x11x11x4xbf16, #tpu.memory_space<vmem>>, vector<1x1x8x8x4xbf16>
    %182 = vector.shape_cast %181 : vector<1x1x8x8x4xbf16> to vector<8x8x4xbf16>
    %c0_247 = arith.constant 0 : index
    %c0_248 = arith.constant 0 : index
    %c140 = arith.constant 140 : index
    %183 = vector.load %arg7[%c0_247, %c0_248, %c140] : memref<8x8x256xbf16, #tpu.memory_space<vmem>>, vector<8x8x4xbf16>
    tpu.vector_store %arg7[%c0_247, %c0_248, %c140], %182 {strides = array<i32>} : memref<8x8x256xbf16, #tpu.memory_space<vmem>>, vector<8x8x4xbf16>,
    %c2_i32_249 = arith.constant 2 : i32
    %184 = arith.addi %1, %c2_i32_249 : i32
    %c0_250 = arith.constant 0 : index
    %c3_251 = arith.constant 3 : index
    %185 = arith.index_cast %184 : i32 to index
    %c0_252 = arith.constant 0 : index
    %c0_253 = arith.constant 0 : index
    %186 = vector.load %arg2[%c0_250, %c3_251, %185, %c0_252, %c0_253] : memref<1x4x11x11x4xbf16, #tpu.memory_space<vmem>>, vector<1x1x8x8x4xbf16>
    %187 = vector.shape_cast %186 : vector<1x1x8x8x4xbf16> to vector<8x8x4xbf16>
    %c0_254 = arith.constant 0 : index
    %c0_255 = arith.constant 0 : index
    %c144 = arith.constant 144 : index
    %188 = vector.load %arg7[%c0_254, %c0_255, %c144] : memref<8x8x256xbf16, #tpu.memory_space<vmem>>, vector<8x8x4xbf16>
    tpu.vector_store %arg7[%c0_254, %c0_255, %c144], %187 {strides = array<i32>} : memref<8x8x256xbf16, #tpu.memory_space<vmem>>, vector<8x8x4xbf16>,
    %c2_i32_256 = arith.constant 2 : i32
    %189 = arith.addi %1, %c2_i32_256 : i32
    %c0_257 = arith.constant 0 : index
    %c2_258 = arith.constant 2 : index
    %190 = arith.index_cast %189 : i32 to index
    %c1_259 = arith.constant 1 : index
    %c0_260 = arith.constant 0 : index
    %191 = vector.load %arg2[%c0_257, %c2_258, %190, %c1_259, %c0_260] : memref<1x4x11x11x4xbf16, #tpu.memory_space<vmem>>, vector<1x1x8x8x4xbf16>
    %192 = vector.shape_cast %191 : vector<1x1x8x8x4xbf16> to vector<8x8x4xbf16>
    %c0_261 = arith.constant 0 : index
    %c0_262 = arith.constant 0 : index
    %c148 = arith.constant 148 : index
    %193 = vector.load %arg7[%c0_261, %c0_262, %c148] : memref<8x8x256xbf16, #tpu.memory_space<vmem>>, vector<8x8x4xbf16>
    tpu.vector_store %arg7[%c0_261, %c0_262, %c148], %192 {strides = array<i32>} : memref<8x8x256xbf16, #tpu.memory_space<vmem>>, vector<8x8x4xbf16>,
    %c2_i32_263 = arith.constant 2 : i32
    %194 = arith.addi %1, %c2_i32_263 : i32
    %c0_264 = arith.constant 0 : index
    %c3_265 = arith.constant 3 : index
    %195 = arith.index_cast %194 : i32 to index
    %c1_266 = arith.constant 1 : index
    %c0_267 = arith.constant 0 : index
    %196 = vector.load %arg2[%c0_264, %c3_265, %195, %c1_266, %c0_267] : memref<1x4x11x11x4xbf16, #tpu.memory_space<vmem>>, vector<1x1x8x8x4xbf16>
    %197 = vector.shape_cast %196 : vector<1x1x8x8x4xbf16> to vector<8x8x4xbf16>
    %c0_268 = arith.constant 0 : index
    %c0_269 = arith.constant 0 : index
    %c152 = arith.constant 152 : index
    %198 = vector.load %arg7[%c0_268, %c0_269, %c152] : memref<8x8x256xbf16, #tpu.memory_space<vmem>>, vector<8x8x4xbf16>
    tpu.vector_store %arg7[%c0_268, %c0_269, %c152], %197 {strides = array<i32>} : memref<8x8x256xbf16, #tpu.memory_space<vmem>>, vector<8x8x4xbf16>,
    %c2_i32_270 = arith.constant 2 : i32
    %199 = arith.addi %1, %c2_i32_270 : i32
    %c0_271 = arith.constant 0 : index
    %c2_272 = arith.constant 2 : index
    %200 = arith.index_cast %199 : i32 to index
    %c2_273 = arith.constant 2 : index
    %c0_274 = arith.constant 0 : index
    %201 = vector.load %arg2[%c0_271, %c2_272, %200, %c2_273, %c0_274] : memref<1x4x11x11x4xbf16, #tpu.memory_space<vmem>>, vector<1x1x8x8x4xbf16>
    %202 = vector.shape_cast %201 : vector<1x1x8x8x4xbf16> to vector<8x8x4xbf16>
    %c0_275 = arith.constant 0 : index
    %c0_276 = arith.constant 0 : index
    %c156 = arith.constant 156 : index
    %203 = vector.load %arg7[%c0_275, %c0_276, %c156] : memref<8x8x256xbf16, #tpu.memory_space<vmem>>, vector<8x8x4xbf16>
    tpu.vector_store %arg7[%c0_275, %c0_276, %c156], %202 {strides = array<i32>} : memref<8x8x256xbf16, #tpu.memory_space<vmem>>, vector<8x8x4xbf16>,
    %c2_i32_277 = arith.constant 2 : i32
    %204 = arith.addi %1, %c2_i32_277 : i32
    %c0_278 = arith.constant 0 : index
    %c3_279 = arith.constant 3 : index
    %205 = arith.index_cast %204 : i32 to index
    %c2_280 = arith.constant 2 : index
    %c0_281 = arith.constant 0 : index
    %206 = vector.load %arg2[%c0_278, %c3_279, %205, %c2_280, %c0_281] : memref<1x4x11x11x4xbf16, #tpu.memory_space<vmem>>, vector<1x1x8x8x4xbf16>
    %207 = vector.shape_cast %206 : vector<1x1x8x8x4xbf16> to vector<8x8x4xbf16>
    %c0_282 = arith.constant 0 : index
    %c0_283 = arith.constant 0 : index
    %c160 = arith.constant 160 : index
    %208 = vector.load %arg7[%c0_282, %c0_283, %c160] : memref<8x8x256xbf16, #tpu.memory_space<vmem>>, vector<8x8x4xbf16>
    tpu.vector_store %arg7[%c0_282, %c0_283, %c160], %207 {strides = array<i32>} : memref<8x8x256xbf16, #tpu.memory_space<vmem>>, vector<8x8x4xbf16>,
    %c2_i32_284 = arith.constant 2 : i32
    %209 = arith.addi %1, %c2_i32_284 : i32
    %c0_285 = arith.constant 0 : index
    %c2_286 = arith.constant 2 : index
    %210 = arith.index_cast %209 : i32 to index
    %c3_287 = arith.constant 3 : index
    %c0_288 = arith.constant 0 : index
    %211 = vector.load %arg2[%c0_285, %c2_286, %210, %c3_287, %c0_288] : memref<1x4x11x11x4xbf16, #tpu.memory_space<vmem>>, vector<1x1x8x8x4xbf16>
    %212 = vector.shape_cast %211 : vector<1x1x8x8x4xbf16> to vector<8x8x4xbf16>
    %c0_289 = arith.constant 0 : index
    %c0_290 = arith.constant 0 : index
    %c164 = arith.constant 164 : index
    %213 = vector.load %arg7[%c0_289, %c0_290, %c164] : memref<8x8x256xbf16, #tpu.memory_space<vmem>>, vector<8x8x4xbf16>
    tpu.vector_store %arg7[%c0_289, %c0_290, %c164], %212 {strides = array<i32>} : memref<8x8x256xbf16, #tpu.memory_space<vmem>>, vector<8x8x4xbf16>,
    %c3_i32 = arith.constant 3 : i32
    %214 = arith.addi %1, %c3_i32 : i32
    %c0_291 = arith.constant 0 : index
    %c0_292 = arith.constant 0 : index
    %215 = arith.index_cast %214 : i32 to index
    %c0_293 = arith.constant 0 : index
    %c0_294 = arith.constant 0 : index
    %216 = vector.load %arg2[%c0_291, %c0_292, %215, %c0_293, %c0_294] : memref<1x4x11x11x4xbf16, #tpu.memory_space<vmem>>, vector<1x1x8x8x4xbf16>
    %217 = vector.shape_cast %216 : vector<1x1x8x8x4xbf16> to vector<8x8x4xbf16>
    %c0_295 = arith.constant 0 : index
    %c0_296 = arith.constant 0 : index
    %c168 = arith.constant 168 : index
    %218 = vector.load %arg7[%c0_295, %c0_296, %c168] : memref<8x8x256xbf16, #tpu.memory_space<vmem>>, vector<8x8x4xbf16>
    tpu.vector_store %arg7[%c0_295, %c0_296, %c168], %217 {strides = array<i32>} : memref<8x8x256xbf16, #tpu.memory_space<vmem>>, vector<8x8x4xbf16>,
    %c3_i32_297 = arith.constant 3 : i32
    %219 = arith.addi %1, %c3_i32_297 : i32
    %c0_298 = arith.constant 0 : index
    %c1_299 = arith.constant 1 : index
    %220 = arith.index_cast %219 : i32 to index
    %c0_300 = arith.constant 0 : index
    %c0_301 = arith.constant 0 : index
    %221 = vector.load %arg2[%c0_298, %c1_299, %220, %c0_300, %c0_301] : memref<1x4x11x11x4xbf16, #tpu.memory_space<vmem>>, vector<1x1x8x8x4xbf16>
    %222 = vector.shape_cast %221 : vector<1x1x8x8x4xbf16> to vector<8x8x4xbf16>
    %c0_302 = arith.constant 0 : index
    %c0_303 = arith.constant 0 : index
    %c172 = arith.constant 172 : index
    %223 = vector.load %arg7[%c0_302, %c0_303, %c172] : memref<8x8x256xbf16, #tpu.memory_space<vmem>>, vector<8x8x4xbf16>
    tpu.vector_store %arg7[%c0_302, %c0_303, %c172], %222 {strides = array<i32>} : memref<8x8x256xbf16, #tpu.memory_space<vmem>>, vector<8x8x4xbf16>,
    %c3_i32_304 = arith.constant 3 : i32
    %224 = arith.addi %1, %c3_i32_304 : i32
    %c0_305 = arith.constant 0 : index
    %c0_306 = arith.constant 0 : index
    %225 = arith.index_cast %224 : i32 to index
    %c1_307 = arith.constant 1 : index
    %c0_308 = arith.constant 0 : index
    %226 = vector.load %arg2[%c0_305, %c0_306, %225, %c1_307, %c0_308] : memref<1x4x11x11x4xbf16, #tpu.memory_space<vmem>>, vector<1x1x8x8x4xbf16>
    %227 = vector.shape_cast %226 : vector<1x1x8x8x4xbf16> to vector<8x8x4xbf16>
    %c0_309 = arith.constant 0 : index
    %c0_310 = arith.constant 0 : index
    %c176 = arith.constant 176 : index
    %228 = vector.load %arg7[%c0_309, %c0_310, %c176] : memref<8x8x256xbf16, #tpu.memory_space<vmem>>, vector<8x8x4xbf16>
    tpu.vector_store %arg7[%c0_309, %c0_310, %c176], %227 {strides = array<i32>} : memref<8x8x256xbf16, #tpu.memory_space<vmem>>, vector<8x8x4xbf16>,
    %c3_i32_311 = arith.constant 3 : i32
    %229 = arith.addi %1, %c3_i32_311 : i32
    %c0_312 = arith.constant 0 : index
    %c1_313 = arith.constant 1 : index
    %230 = arith.index_cast %229 : i32 to index
    %c1_314 = arith.constant 1 : index
    %c0_315 = arith.constant 0 : index
    %231 = vector.load %arg2[%c0_312, %c1_313, %230, %c1_314, %c0_315] : memref<1x4x11x11x4xbf16, #tpu.memory_space<vmem>>, vector<1x1x8x8x4xbf16>
    %232 = vector.shape_cast %231 : vector<1x1x8x8x4xbf16> to vector<8x8x4xbf16>
    %c0_316 = arith.constant 0 : index
    %c0_317 = arith.constant 0 : index
    %c180 = arith.constant 180 : index
    %233 = vector.load %arg7[%c0_316, %c0_317, %c180] : memref<8x8x256xbf16, #tpu.memory_space<vmem>>, vector<8x8x4xbf16>
    tpu.vector_store %arg7[%c0_316, %c0_317, %c180], %232 {strides = array<i32>} : memref<8x8x256xbf16, #tpu.memory_space<vmem>>, vector<8x8x4xbf16>,
    %c3_i32_318 = arith.constant 3 : i32
    %234 = arith.addi %1, %c3_i32_318 : i32
    %c0_319 = arith.constant 0 : index
    %c0_320 = arith.constant 0 : index
    %235 = arith.index_cast %234 : i32 to index
    %c2_321 = arith.constant 2 : index
    %c0_322 = arith.constant 0 : index
    %236 = vector.load %arg2[%c0_319, %c0_320, %235, %c2_321, %c0_322] : memref<1x4x11x11x4xbf16, #tpu.memory_space<vmem>>, vector<1x1x8x8x4xbf16>
    %237 = vector.shape_cast %236 : vector<1x1x8x8x4xbf16> to vector<8x8x4xbf16>
    %c0_323 = arith.constant 0 : index
    %c0_324 = arith.constant 0 : index
    %c184 = arith.constant 184 : index
    %238 = vector.load %arg7[%c0_323, %c0_324, %c184] : memref<8x8x256xbf16, #tpu.memory_space<vmem>>, vector<8x8x4xbf16>
    tpu.vector_store %arg7[%c0_323, %c0_324, %c184], %237 {strides = array<i32>} : memref<8x8x256xbf16, #tpu.memory_space<vmem>>, vector<8x8x4xbf16>,
    %c3_i32_325 = arith.constant 3 : i32
    %239 = arith.addi %1, %c3_i32_325 : i32
    %c0_326 = arith.constant 0 : index
    %c1_327 = arith.constant 1 : index
    %240 = arith.index_cast %239 : i32 to index
    %c2_328 = arith.constant 2 : index
    %c0_329 = arith.constant 0 : index
    %241 = vector.load %arg2[%c0_326, %c1_327, %240, %c2_328, %c0_329] : memref<1x4x11x11x4xbf16, #tpu.memory_space<vmem>>, vector<1x1x8x8x4xbf16>
    %242 = vector.shape_cast %241 : vector<1x1x8x8x4xbf16> to vector<8x8x4xbf16>
    %c0_330 = arith.constant 0 : index
    %c0_331 = arith.constant 0 : index
    %c188 = arith.constant 188 : index
    %243 = vector.load %arg7[%c0_330, %c0_331, %c188] : memref<8x8x256xbf16, #tpu.memory_space<vmem>>, vector<8x8x4xbf16>
    tpu.vector_store %arg7[%c0_330, %c0_331, %c188], %242 {strides = array<i32>} : memref<8x8x256xbf16, #tpu.memory_space<vmem>>, vector<8x8x4xbf16>,
    %c3_i32_332 = arith.constant 3 : i32
    %244 = arith.addi %1, %c3_i32_332 : i32
    %c0_333 = arith.constant 0 : index
    %c0_334 = arith.constant 0 : index
    %245 = arith.index_cast %244 : i32 to index
    %c3_335 = arith.constant 3 : index
    %c0_336 = arith.constant 0 : index
    %246 = vector.load %arg2[%c0_333, %c0_334, %245, %c3_335, %c0_336] : memref<1x4x11x11x4xbf16, #tpu.memory_space<vmem>>, vector<1x1x8x8x4xbf16>
    %247 = vector.shape_cast %246 : vector<1x1x8x8x4xbf16> to vector<8x8x4xbf16>
    %c0_337 = arith.constant 0 : index
    %c0_338 = arith.constant 0 : index
    %c192 = arith.constant 192 : index
    %248 = vector.load %arg7[%c0_337, %c0_338, %c192] : memref<8x8x256xbf16, #tpu.memory_space<vmem>>, vector<8x8x4xbf16>
    tpu.vector_store %arg7[%c0_337, %c0_338, %c192], %247 {strides = array<i32>} : memref<8x8x256xbf16, #tpu.memory_space<vmem>>, vector<8x8x4xbf16>,
    %c0_339 = arith.constant 0 : index
    %c0_340 = arith.constant 0 : index
    %c0_341 = arith.constant 0 : index
    %249 = vector.load %arg7[%c0_339, %c0_340, %c0_341] : memref<8x8x256xbf16, #tpu.memory_space<vmem>>, vector<8x8x256xbf16>
    %250 = vector.shape_cast %249 : vector<8x8x256xbf16> to vector<64x256xbf16>
    %c0_342 = arith.constant 0 : index
    %c0_343 = arith.constant 0 : index
    %251 = vector.load %arg3[%c0_342, %c0_343] : memref<256x64xbf16, #tpu.memory_space<vmem>>, vector<256x64xbf16>
    %cst_344 = arith.constant dense<0.000000e+00> : vector<64x64xf32>
    %252 = tpu.matmul %250, %251, %cst_344 {dimension_numbers = #tpu.dot_dimension_numbers<[1], [0], [0], [1], [0, 0, 1, 1], [], []>} : vector<64x256xbf16>, vector<256x64xbf16>, vector<64x64xf32> -> vector<64x64xf32>
    %cst_345 = arith.constant 0.000000e+00 : f32
    %253 = vector.broadcast %cst_345 : f32 to vector<64x64xf32>
    %254 = arith.maximumf %252, %253 : vector<64x64xf32>
    %255 = arith.truncf %254 : vector<64x64xf32> to vector<64x64xbf16>
    %c0_346 = arith.constant 0 : index
    %c0_347 = arith.constant 0 : index
    %256 = vector.load %arg4[%c0_346, %c0_347] : memref<64x128xbf16, #tpu.memory_space<vmem>>, vector<64x128xbf16>
    %cst_348 = arith.constant dense<0.000000e+00> : vector<64x128xf32>
    %257 = tpu.matmul %255, %256, %cst_348 {dimension_numbers = #tpu.dot_dimension_numbers<[1], [0], [0], [1], [0, 0, 1, 1], [], []>} : vector<64x64xbf16>, vector<64x128xbf16>, vector<64x128xf32> -> vector<64x128xf32>
    %c0_349 = arith.constant 0 : index
    %c0_350 = arith.constant 0 : index
    %258 = vector.load %arg5[%c0_349, %c0_350] : memref<1x128xf32, #tpu.memory_space<vmem>>, vector<1x128xf32>
    %259 = vector.broadcast %258 : vector<1x128xf32> to vector<64x128xf32>
    %260 = arith.addf %257, %259 : vector<64x128xf32>
    %c0_351 = arith.constant 0 : index
    %c0_352 = arith.constant 0 : index
    %c0_353 = arith.constant 0 : index
    %261 = vector.load %arg6[%c0_351, %c0_352, %c0_353] : memref<1x64x128xf32, #tpu.memory_space<vmem>>, vector<1x64x128xf32>
    %262 = vector.shape_cast %261 : vector<1x64x128xf32> to vector<64x128xf32>
    %263 = vector.shape_cast %260 : vector<64x128xf32> to vector<1x64x128xf32>
    tpu.vector_store %arg6[%c0_351, %c0_352, %c0_353], %263 {strides = array<i32>} : memref<1x64x128xf32, #tpu.memory_space<vmem>>, vector<1x64x128xf32>,
    return
  }
  func.func @transform_0(%arg0: i32, %arg1: i32) -> (i32, i32, i32, i32, i32) {
    %c0_i32 = arith.constant 0 : i32
    %c0_i32_0 = arith.constant 0 : i32
    %c0_i32_1 = arith.constant 0 : i32
    %c0_i32_2 = arith.constant 0 : i32
    %c0_i32_3 = arith.constant 0 : i32
    return %arg0, %c0_i32, %c0_i32_0, %c0_i32_1, %c0_i32_2 : i32, i32, i32, i32, i32
  }
  func.func @transform_1(%arg0: i32, %arg1: i32) -> (i32, i32) {
    %c0_i32 = arith.constant 0 : i32
    %c0_i32_0 = arith.constant 0 : i32
    %c0_i32_1 = arith.constant 0 : i32
    return %c0_i32, %c0_i32_0 : i32, i32
  }
  func.func @transform_2(%arg0: i32, %arg1: i32) -> (i32, i32) {
    %c0_i32 = arith.constant 0 : i32
    %c0_i32_0 = arith.constant 0 : i32
    %c0_i32_1 = arith.constant 0 : i32
    return %c0_i32, %c0_i32_0 : i32, i32
  }
  func.func @transform_3(%arg0: i32, %arg1: i32) -> (i32, i32) {
    %c0_i32 = arith.constant 0 : i32
    %c0_i32_0 = arith.constant 0 : i32
    %c0_i32_1 = arith.constant 0 : i32
    return %c0_i32, %c0_i32_0 : i32, i32
  }
  func.func @transform_4(%arg0: i32, %arg1: i32) -> (i32, i32, i32) {
    %c0_i32 = arith.constant 0 : i32
    %c0_i32_0 = arith.constant 0 : i32
    return %arg0, %arg1, %c0_i32 : i32, i32, i32
  }
}

</mosaic_0001>

<llo_original>
// kernel: deeplab_wrapper_forward.4
$region0: #{deeplab_wrapper_forward.4}
  #allocation0 [shape = 'u32[]', space=smem, size = 0x4, offset = 0x4, fixed_abs, tag = 'smem constant byte address 0x4 - core index']
  #allocation1 [shape = 'u32[144,128]{1,0:T(1,128)}', space=vmem, size = 0x12000, scoped, tag = 'internal scratch']
  %s0 = inlined_call_operand.vmem [shape: f32[16,8], index: 0, kind: input, shape index: {}]
  %s1 = inlined_call_operand.vmem [shape: f32[16,8,128], index: 1, kind: input, shape index: {}]
  %s2 = inlined_call_operand.vmem [shape: f32[16,16,128], index: 2, kind: output, shape index: {}]
  %s3 = sld [smem:[#allocation0]]
  $region41: #{deeplab_wrapper_forward.4} parent=0
    _
  %s5 = ssub.s32 1, %s3
  %s6 = scalar_select 0, %s5, %s3
  loop: start=0, step=1, limit=18
  $region2: #{deeplab_wrapper_forward.4} parent=0 // loop_pre_header
    _
  $region3: #{deeplab_wrapper_forward.4} parent=0 // loop_header
    %s8 = sphi 0, %s12
    %p9 = scmp.ge.s32.totalorder %s8, 18
    %s15 = sphi 0, %s27
    %s16 = sphi 0, %s23
    %s17 = sphi 0, %s15
    %s18 = sphi 0, %s16
    %s19 = sphi 0, %s17
    %s20 = sphi 0, %s18
    %s28 = sphi 0, %s28
    %s30 = sphi 0, %s28
    %s31 = sphi 0, %s30
    %s45 = sphi 0, %s31
    %s53 = sphi 0, %s55
    %s56 = sphi 0, %s53
    %s57 = sphi 0, %s56
    %s73 = sphi 0, %s57
    %s81 = sphi 0, %s83
    %s84 = sphi 0, %s81
    %s85 = sphi 0, %s84
    %s101 = sphi 0, %s85
  $region4: #{deeplab_wrapper_forward.4} parent=0 // loop_header_branch
    %11 = sbr.rel (%p9) target = $region8
  $region5: #{deeplab_wrapper_forward.4} parent=0 // loop_body
    %s13 = ssub.s32 %s8, 1
    %s14 = ssub.s32 %s8, 2
    %s21 = sadd.s32 1, %s16
    %p22 = scmp.ge.s32.totalorder %s21, 1
    %s23 = scalar_select %p22, 0, %s21
    %s24 = sadd.s32 1, %s15
    %s25 = scalar_select %p22, %s24, %s15
    %p26 = scmp.ge.s32.totalorder %s25, 16
    %s27 = scalar_select %p26, 0, %s25
    %s29 = sadd.s32 %s28, 1
    %p32 = scmp.eq.s32.totalorder %s8, 15
    %p33 = scmp.ne.s32.totalorder %s28, %s30
    %p34 = scmp.eq.s32.totalorder %s8, 0
    %p35 = por %p33, %p34
    %p36 = scmp.ne.s32.totalorder %s28, %s30
    %p37 = scmp.eq.s32.totalorder %s13, 15
    %p38 = por %p36, %p37
    %p39 = scmp.ne.s32.totalorder %s30, %s31
    %p40 = scmp.eq.s32.totalorder %s13, 0
    %p41 = por %p39, %p40
    %p42 = scmp.ne.s32.totalorder %s30, %s31
    %p43 = scmp.eq.s32.totalorder %s14, 15
    %p44 = por %p42, %p43
    %p46 = scmp.ne.s32.totalorder %s31, %s45
    %p47 = scmp.eq.s32.totalorder %s14, 0
    %p48 = por %p46, %p47
    %s49 = ssub.s32 %s15, %s27
    %s50 = ssub.s32 %s16, %s23
    %s51 = sor.u32 %s49, %s50
    %p52 = scmp.eq.s32.totalorder %s51, 0
    %s54 = sadd.s32 %s53, 1
    %s55 = scalar_select %p52, %s53, %s54
    %p58 = pneg %p52
    %p59 = scmp.eq.s32.totalorder %s8, 15
    %p60 = por %p58, %p59
    %p61 = scmp.ne.s32.totalorder %s53, %s56
    %p62 = scmp.eq.s32.totalorder %s8, 0
    %p63 = por %p61, %p62
    %p64 = scmp.ne.s32.totalorder %s53, %s56
    %p65 = scmp.eq.s32.totalorder %s13, 15
    %p66 = por %p64, %p65
    %p67 = scmp.ne.s32.totalorder %s56, %s57
    %p68 = scmp.eq.s32.totalorder %s13, 0
    %p69 = por %p67, %p68
    %p70 = scmp.ne.s32.totalorder %s56, %s57
    %p71 = scmp.eq.s32.totalorder %s14, 15
    %p72 = por %p70, %p71
    %p74 = scmp.ne.s32.totalorder %s57, %s73
    %p75 = scmp.eq.s32.totalorder %s14, 0
    %p76 = por %p74, %p75
    %s77 = ssub.s32 %s15, %s27
    %s78 = ssub.s32 %s16, %s23
    %s79 = sor.u32 %s77, %s78
    %p80 = scmp.eq.s32.totalorder %s79, 0
    %s82 = sadd.s32 %s81, 1
    %s83 = scalar_select %p80, %s81, %s82
    %p86 = pneg %p80
    %p87 = scmp.eq.s32.totalorder %s8, 15
    %p88 = por %p86, %p87
    %p89 = scmp.ne.s32.totalorder %s81, %s84
    %p90 = scmp.eq.s32.totalorder %s8, 0
    %p91 = por %p89, %p90
    %p92 = scmp.ne.s32.totalorder %s81, %s84
    %p93 = scmp.eq.s32.totalorder %s13, 15
    %p94 = por %p92, %p93
    %p95 = scmp.ne.s32.totalorder %s84, %s85
    %p96 = scmp.eq.s32.totalorder %s13, 0
    %p97 = por %p95, %p96
    %p98 = scmp.ne.s32.totalorder %s84, %s85
    %p99 = scmp.eq.s32.totalorder %s14, 15
    %p100 = por %p98, %p99
    %p102 = scmp.ne.s32.totalorder %s85, %s101
    %p103 = scmp.eq.s32.totalorder %s14, 0
    %p104 = por %p102, %p103
    %p105 = scmp.le.s32.totalorder 1, %s8
    %p106 = scmp.lt.s32.totalorder %s8, 17
    %p107 = pnand %p105, %p106
    %p108 = pneg %p107
    // Predicated region
    $region9: #{deeplab_wrapper_forward.4} parent=5 // pred_check
      _
    $region10: #{deeplab_wrapper_forward.4} parent=5 // pred_check_branch
      %110 = sbr.rel (%p107) target = $region12
    $region11: #{deeplab_wrapper_forward.4} parent=5 // pred_region
      %s111 = ssub.s32 %s8, 1
      // Predicated region
      $region13: #{deeplab_wrapper_forward.4} parent=11 // pred_check
        %p112 = pneg %p41
      $region14: #{deeplab_wrapper_forward.4} parent=11 // pred_check_branch
        %114 = sbr.rel (%p112) target = $region16
      $region15: #{deeplab_wrapper_forward.4} parent=11 // pred_region
        _
      $region16: #{deeplab_wrapper_forward.4} parent=11 // pred_fallthru
        _
    $region12: #{deeplab_wrapper_forward.4} parent=5 // pred_fallthru
      _
    %p115 = scmp.lt.s32.totalorder %s8, 16
    // Predicated region
    $region17: #{deeplab_wrapper_forward.4} parent=5 // pred_check
      %p116 = pneg %p115
    $region18: #{deeplab_wrapper_forward.4} parent=5 // pred_check_branch
      %118 = sbr.rel (%p116) target = $region20
    $region19: #{deeplab_wrapper_forward.4} parent=5 // pred_region
      // Predicated region
      $region21: #{deeplab_wrapper_forward.4} parent=19 // pred_check
        %p119 = pneg %p63
      $region22: #{deeplab_wrapper_forward.4} parent=19 // pred_check_branch
        %121 = sbr.rel (%p119) target = $region24
      $region23: #{deeplab_wrapper_forward.4} parent=19 // pred_region
        %p122 = scmp.lt.s32.totalorder %s15, 15
        %s123 = scalar_select %p122, %s15, 15
        %p124 = scmp.lt.s32.totalorder %s16, 0
        %s125 = scalar_select %p124, %s16, 0
        %s126 = sadd.s32 %s125, %s123
        %s127 = smul.addr %s126, 8
        %s128 = scalar_lea.vmem %s1, %s127
      $region24: #{deeplab_wrapper_forward.4} parent=19 // pred_fallthru
        _
    $region20: #{deeplab_wrapper_forward.4} parent=5 // pred_fallthru
      _
    %p129 = scmp.le.s32.totalorder 1, %s8
    %p130 = scmp.lt.s32.totalorder %s8, 17
    %p131 = pnand %p129, %p130
    %p132 = pneg %p131
    // Predicated region
    $region25: #{deeplab_wrapper_forward.4} parent=5 // pred_check
      _
    $region26: #{deeplab_wrapper_forward.4} parent=5 // pred_check_branch
      %134 = sbr.rel (%p131) target = $region28
    $region27: #{deeplab_wrapper_forward.4} parent=5 // pred_region
      %s135 = ssub.s32 %s8, 1
      %p136 = pneg %p41
      %p137 = pneg %p38
      %p138 = scmp.lt.s32.totalorder %s17, 15
      %s139 = scalar_select %p138, %s17, 15
      %p140 = scmp.lt.s32.totalorder %s18, 0
      %s141 = scalar_select %p140, %s18, 0
      %s142 = sadd.s32 %s141, %s139
      %s143 = smul.addr %s142, 8
      %s144 = scalar_lea.vmem %s1, %s143
      %p145 = pneg %p69
      %p146 = pneg %p66
      %p147 = pneg %p97
      %p148 = pneg %p94
      %p149 = scmp.lt.s32.totalorder %s17, 15
      %s150 = scalar_select %p149, %s17, 15
      %p151 = scmp.lt.s32.totalorder %s18, 0
      %s152 = scalar_select %p151, %s18, 0
      %s153 = smul.addr %s150, 2
      %s154 = sadd.s32 %s152, %s153
      %s155 = smul.addr %s154, 8
      %s156 = scalar_lea.vmem %s2, %s155
      %p157 = scmp.lt.s32.totalorder %s17, 15
      %s158 = scalar_select %p157, %s17, 15
      %p159 = scmp.lt.s32.totalorder %s18, 0
      %s160 = scalar_select %p159, %s18, 0
      %s161 = sadd.s32 %s160, %s158
      %s162 = smul.addr %s161, 8
      %s163 = scalar_lea.vmem %s1, %s162
      %p164 = scmp.lt.s32.totalorder %s17, 15
      %s165 = scalar_select %p164, %s17, 15
      %p166 = scmp.lt.s32.totalorder %s18, 0
      %s167 = scalar_select %p166, %s18, 0
      %s168 = smul.addr %s165, 2
      %s169 = sadd.s32 %s167, %s168
      %s170 = smul.addr %s169, 8
      %s171 = scalar_lea.vmem %s2, %s170
      %v172 = vld [vmem:[%s0] sm:$0xff]
      %v173 = vld [vmem:[%s0 + $0x8] sm:$0xff]
      %v174 = vld [vmem:[%s163] sm:$0xff]
      %vm175 = vcmask 64512
      %v177 = vsel %vm175, %v172, 0
      %v180 = vsel %vm175, %v173, 0
      %182 = vmatprep.subr.mxu0 0.0
      %183 = vmatpush1.msra.mxu0 %v174
      %184 = vmatprep.subr.mxu0 0.0
      %185 = vmatpush1.msra.mxu0 0.0
      %186 = vmatprep.subr.mxu0 0.0
      %187 = vmatpush1.msra.mxu0 0.0
      %188 = vmatprep.subr.mxu0 0.0
      %189 = vmatpush1.msra.mxu0 0.0
      %190 = vmatprep.subr.mxu0 0.0
      %191 = vmatpush1.msra.mxu0 0.0
      %192 = vmatprep.subr.mxu0 0.0
      %193 = vmatpush1.msra.mxu0 0.0
      %194 = vmatprep.subr.mxu0 0.0
      %195 = vmatpush1.msra.mxu0 0.0
      %196 = vmatprep.subr.mxu0 0.0
      %197 = vmatpush1.msra.mxu0 0.0
      %198 = vmatprep.subr.mxu0 0.0
      %199 = vmatpush1.msra.mxu0 0.0
      %200 = vmatprep.subr.mxu0 0.0
      %201 = vmatpush1.msra.mxu0 0.0
      %202 = vmatprep.subr.mxu0 0.0
      %203 = vmatpush1.msra.mxu0 0.0
      %204 = vmatprep.subr.mxu0 0.0
      %205 = vmatpush1.msra.mxu0 0.0
      %206 = vmatprep.subr.mxu0 0.0
      %207 = vmatpush1.msra.mxu0 0.0
      %208 = vmatprep.subr.mxu0 0.0
      %209 = vmatpush1.msra.mxu0 0.0
      %210 = vmatprep.subr.mxu0 0.0
      %211 = vmatpush1.msra.mxu0 0.0
      %212 = vmatprep.subr.mxu0 0.0
      %213 = vmatpush1.msra.mxu0 0.0
      %214 = vmatprep.subr.mxu0 0.0
      %215 = vmatpush1.msra.mxu0 0.0
      %216 = vmatprep.subr.mxu0 0.0
      %217 = vmatpush1.msra.mxu0 0.0
      %218 = vmatprep.subr.mxu0 0.0
      %219 = vmatpush1.msra.mxu0 0.0
      %220 = vmatprep.subr.mxu0 0.0
      %221 = vmatpush1.msra.mxu0 0.0
      %222 = vmatprep.subr.mxu0 0.0
      %223 = vmatpush1.msra.mxu0 0.0
      %224 = vmatprep.subr.mxu0 0.0
      %225 = vmatpush1.msra.mxu0 0.0
      %226 = vmatprep.subr.mxu0 0.0
      %227 = vmatpush1.msra.mxu0 0.0
      %228 = vmatprep.subr.mxu0 0.0
      %229 = vmatpush1.msra.mxu0 0.0
      %230 = vmatprep.subr.mxu0 0.0
      %231 = vmatpush1.msra.mxu0 0.0
      %232 = vmatprep.subr.mxu0 0.0
      %233 = vmatpush1.msra.mxu0 0.0
      %234 = vmatprep.subr.mxu0 0.0
      %235 = vmatpush1.msra.mxu0 0.0
      %236 = vmatprep.subr.mxu0 0.0
      %237 = vmatpush1.msra.mxu0 0.0
      %238 = vmatprep.subr.mxu0 0.0
      %239 = vmatpush1.msra.mxu0 0.0
      %240 = vmatprep.subr.mxu0 0.0
      %241 = vmatpush1.msra.mxu0 0.0
      %242 = vmatprep.subr.mxu0 0.0
      %243 = vmatpush1.msra.mxu0 0.0
      %244 = vmatprep.subr.mxu0 0.0
      %245 = vmatpush1.msra.mxu0 0.0
      %246 = vmatprep.mubr.f32.mxu0 0.0
      %247 = vmatmul.mubr.f32.gmra.mrb[0].mxu0 %v177
      %v248 = vpop.f32.mrb[0].mxu0
      %v249 = vadd.f32 0.0, %v248
      %v250 = vpop.f32.mrb[0].mxu0
      %251 = vmatprep.mubr.f32.mxu0 0.0
      %252 = vmatmul.mubr.f32.gmra.mrb[0].mxu0 %v180
      %v253 = vpop.f32.mrb[0].mxu0
      %v254 = vadd.f32 0.0, %v253
      %v255 = vpop.f32.mrb[0].mxu0
      %256 = vdwg.mxu0
      %257 = vst [vmem:[%s171] sm:$0xff] %v249
      %258 = vst [vmem:[%s171 + $0x8] sm:$0xff] %v254
      %p259 = scmp.lt.s32.totalorder %s17, 15
      %s260 = scalar_select %p259, %s17, 15
      %p261 = scmp.lt.s32.totalorder %s18, 0
      %s262 = scalar_select %p261, %s18, 0
      %s263 = smul.addr %s260, 2
      %s264 = sadd.s32 %s262, %s263
      %s265 = smul.addr %s264, 8
      %s266 = scalar_lea.vmem %s2, %s265
      // Predicated region
      $region29: #{deeplab_wrapper_forward.4} parent=27 // pred_check
        %p267 = pneg %p94
      $region30: #{deeplab_wrapper_forward.4} parent=27 // pred_check_branch
        %269 = sbr.rel (%p267) target = $region32
      $region31: #{deeplab_wrapper_forward.4} parent=27 // pred_region
        _
      $region32: #{deeplab_wrapper_forward.4} parent=27 // pred_fallthru
        _
    $region28: #{deeplab_wrapper_forward.4} parent=5 // pred_fallthru
      _
    %p270 = scmp.le.s32.totalorder 2, %s8
    // Predicated region
    $region33: #{deeplab_wrapper_forward.4} parent=5 // pred_check
      %p271 = pneg %p270
    $region34: #{deeplab_wrapper_forward.4} parent=5 // pred_check_branch
      %273 = sbr.rel (%p271) target = $region36
    $region35: #{deeplab_wrapper_forward.4} parent=5 // pred_region
      %s274 = ssub.s32 %s8, 2
      // Predicated region
      $region37: #{deeplab_wrapper_forward.4} parent=35 // pred_check
        %p275 = pneg %p100
      $region38: #{deeplab_wrapper_forward.4} parent=35 // pred_check_branch
        %277 = sbr.rel (%p275) target = $region40
      $region39: #{deeplab_wrapper_forward.4} parent=35 // pred_region
        %p278 = scmp.lt.s32.totalorder %s19, 15
        %s279 = scalar_select %p278, %s19, 15
        %p280 = scmp.lt.s32.totalorder %s20, 0
        %s281 = scalar_select %p280, %s20, 0
        %s282 = smul.addr %s279, 2
        %s283 = sadd.s32 %s281, %s282
        %s284 = smul.addr %s283, 8
        %s285 = scalar_lea.vmem %s2, %s284
      $region40: #{deeplab_wrapper_forward.4} parent=35 // pred_fallthru
        _
    $region36: #{deeplab_wrapper_forward.4} parent=5 // pred_fallthru
      _
  $region6: #{deeplab_wrapper_forward.4} parent=0 // loop_footer
    %s12 = sadd.s32 1, %s8
  $region7: #{deeplab_wrapper_forward.4} parent=0 // loop_footer_branch
    %7 = sbr.rel target = $region3
  $region8: #{deeplab_wrapper_forward.4} parent=0 // loop_exit
    _

// kernel: deeplab_wrapper_forward.5
$region0: #{deeplab_wrapper_forward.5}
  #allocation0 [shape = 'u32[]', space=smem, size = 0x4, offset = 0x4, fixed_abs, tag = 'smem constant byte address 0x4 - core index']
  #allocation1 [shape = 'u32[144,128]{1,0:T(1,128)}', space=vmem, size = 0x12000, scoped, tag = 'internal scratch']
  %s0 = inlined_call_operand.vmem [shape: f32[16,8], index: 0, kind: input, shape index: {}]
  %s1 = inlined_call_operand.vmem [shape: f32[2,8,2048], index: 1, kind: input, shape index: {}]
  %s2 = inlined_call_operand.vmem [shape: f32[2,16,2048], index: 2, kind: output, shape index: {}]
  %s3 = sld [smem:[#allocation0]]
  $region41: #{deeplab_wrapper_forward.5} parent=0
    _
  %s5 = ssub.s32 1, %s3
  %s6 = scalar_select 0, %s5, %s3
  loop: start=0, step=1, limit=4
  $region2: #{deeplab_wrapper_forward.5} parent=0 // loop_pre_header
    _
  $region3: #{deeplab_wrapper_forward.5} parent=0 // loop_header
    %s8 = sphi 0, %s12
    %p9 = scmp.ge.s32.totalorder %s8, 4
    %s15 = sphi 0, %s27
    %s16 = sphi 0, %s23
    %s17 = sphi 0, %s15
    %s18 = sphi 0, %s16
    %s19 = sphi 0, %s17
    %s20 = sphi 0, %s18
    %s28 = sphi 0, %s28
    %s30 = sphi 0, %s28
    %s31 = sphi 0, %s30
    %s45 = sphi 0, %s31
    %s53 = sphi 0, %s55
    %s56 = sphi 0, %s53
    %s57 = sphi 0, %s56
    %s73 = sphi 0, %s57
    %s81 = sphi 0, %s83
    %s84 = sphi 0, %s81
    %s85 = sphi 0, %s84
    %s101 = sphi 0, %s85
  $region4: #{deeplab_wrapper_forward.5} parent=0 // loop_header_branch
    %11 = sbr.rel (%p9) target = $region8
  $region5: #{deeplab_wrapper_forward.5} parent=0 // loop_body
    %s13 = ssub.s32 %s8, 1
    %s14 = ssub.s32 %s8, 2
    %s21 = sadd.s32 1, %s16
    %p22 = scmp.ge.s32.totalorder %s21, 1
    %s23 = scalar_select %p22, 0, %s21
    %s24 = sadd.s32 1, %s15
    %s25 = scalar_select %p22, %s24, %s15
    %p26 = scmp.ge.s32.totalorder %s25, 2
    %s27 = scalar_select %p26, 0, %s25
    %s29 = sadd.s32 %s28, 1
    %p32 = scmp.eq.s32.totalorder %s8, 1
    %p33 = scmp.ne.s32.totalorder %s28, %s30
    %p34 = scmp.eq.s32.totalorder %s8, 0
    %p35 = por %p33, %p34
    %p36 = scmp.ne.s32.totalorder %s28, %s30
    %p37 = scmp.eq.s32.totalorder %s13, 1
    %p38 = por %p36, %p37
    %p39 = scmp.ne.s32.totalorder %s30, %s31
    %p40 = scmp.eq.s32.totalorder %s13, 0
    %p41 = por %p39, %p40
    %p42 = scmp.ne.s32.totalorder %s30, %s31
    %p43 = scmp.eq.s32.totalorder %s14, 1
    %p44 = por %p42, %p43
    %p46 = scmp.ne.s32.totalorder %s31, %s45
    %p47 = scmp.eq.s32.totalorder %s14, 0
    %p48 = por %p46, %p47
    %s49 = ssub.s32 %s15, %s27
    %s50 = ssub.s32 %s16, %s23
    %s51 = sor.u32 %s49, %s50
    %p52 = scmp.eq.s32.totalorder %s51, 0
    %s54 = sadd.s32 %s53, 1
    %s55 = scalar_select %p52, %s53, %s54
    %p58 = pneg %p52
    %p59 = scmp.eq.s32.totalorder %s8, 1
    %p60 = por %p58, %p59
    %p61 = scmp.ne.s32.totalorder %s53, %s56
    %p62 = scmp.eq.s32.totalorder %s8, 0
    %p63 = por %p61, %p62
    %p64 = scmp.ne.s32.totalorder %s53, %s56
    %p65 = scmp.eq.s32.totalorder %s13, 1
    %p66 = por %p64, %p65
    %p67 = scmp.ne.s32.totalorder %s56, %s57
    %p68 = scmp.eq.s32.totalorder %s13, 0
    %p69 = por %p67, %p68
    %p70 = scmp.ne.s32.totalorder %s56, %s57
    %p71 = scmp.eq.s32.totalorder %s14, 1
    %p72 = por %p70, %p71
    %p74 = scmp.ne.s32.totalorder %s57, %s73
    %p75 = scmp.eq.s32.totalorder %s14, 0
    %p76 = por %p74, %p75
    %s77 = ssub.s32 %s15, %s27
    %s78 = ssub.s32 %s16, %s23
    %s79 = sor.u32 %s77, %s78
    %p80 = scmp.eq.s32.totalorder %s79, 0
    %s82 = sadd.s32 %s81, 1
    %s83 = scalar_select %p80, %s81, %s82
    %p86 = pneg %p80
    %p87 = scmp.eq.s32.totalorder %s8, 1
    %p88 = por %p86, %p87
    %p89 = scmp.ne.s32.totalorder %s81, %s84
    %p90 = scmp.eq.s32.totalorder %s8, 0
    %p91 = por %p89, %p90
    %p92 = scmp.ne.s32.totalorder %s81, %s84
    %p93 = scmp.eq.s32.totalorder %s13, 1
    %p94 = por %p92, %p93
    %p95 = scmp.ne.s32.totalorder %s84, %s85
    %p96 = scmp.eq.s32.totalorder %s13, 0
    %p97 = por %p95, %p96
    %p98 = scmp.ne.s32.totalorder %s84, %s85
    %p99 = scmp.eq.s32.totalorder %s14, 1
    %p100 = por %p98, %p99
    %p102 = scmp.ne.s32.totalorder %s85, %s101
    %p103 = scmp.eq.s32.totalorder %s14, 0
    %p104 = por %p102, %p103
    %p105 = scmp.le.s32.totalorder 1, %s8
    %p106 = scmp.lt.s32.totalorder %s8, 3
    %p107 = pnand %p105, %p106
    %p108 = pneg %p107
    // Predicated region
    $region9: #{deeplab_wrapper_forward.5} parent=5 // pred_check
      _
    $region10: #{deeplab_wrapper_forward.5} parent=5 // pred_check_branch
      %110 = sbr.rel (%p107) target = $region12
    $region11: #{deeplab_wrapper_forward.5} parent=5 // pred_region
      %s111 = ssub.s32 %s8, 1
      // Predicated region
      $region13: #{deeplab_wrapper_forward.5} parent=11 // pred_check
        %p112 = pneg %p41
      $region14: #{deeplab_wrapper_forward.5} parent=11 // pred_check_branch
        %114 = sbr.rel (%p112) target = $region16
      $region15: #{deeplab_wrapper_forward.5} parent=11 // pred_region
        _
      $region16: #{deeplab_wrapper_forward.5} parent=11 // pred_fallthru
        _
    $region12: #{deeplab_wrapper_forward.5} parent=5 // pred_fallthru
      _
    %p115 = scmp.lt.s32.totalorder %s8, 2
    // Predicated region
    $region17: #{deeplab_wrapper_forward.5} parent=5 // pred_check
      %p116 = pneg %p115
    $region18: #{deeplab_wrapper_forward.5} parent=5 // pred_check_branch
      %118 = sbr.rel (%p116) target = $region20
    $region19: #{deeplab_wrapper_forward.5} parent=5 // pred_region
      // Predicated region
      $region21: #{deeplab_wrapper_forward.5} parent=19 // pred_check
        %p119 = pneg %p63
      $region22: #{deeplab_wrapper_forward.5} parent=19 // pred_check_branch
        %121 = sbr.rel (%p119) target = $region24
      $region23: #{deeplab_wrapper_forward.5} parent=19 // pred_region
        %s122 = smul.u32 16, %s16
        %p123 = scmp.lt.s32.totalorder %s15, 1
        %s124 = scalar_select %p123, %s15, 1
        %p125 = scmp.lt.s32.totalorder %s122, 15
        %s126 = scalar_select %p125, %s122, 15
        %s127 = smul.addr %s124, 16
        %s128 = sadd.s32 %s126, %s127
        %s129 = smul.addr %s128, 8
        %s130 = scalar_lea.vmem %s1, %s129
        %s131 = smul.u32 16, %s16
      $region24: #{deeplab_wrapper_forward.5} parent=19 // pred_fallthru
        _
    $region20: #{deeplab_wrapper_forward.5} parent=5 // pred_fallthru
      _
    %p132 = scmp.le.s32.totalorder 1, %s8
    %p133 = scmp.lt.s32.totalorder %s8, 3
    %p134 = pnand %p132, %p133
    %p135 = pneg %p134
    // Predicated region
    $region25: #{deeplab_wrapper_forward.5} parent=5 // pred_check
      _
    $region26: #{deeplab_wrapper_forward.5} parent=5 // pred_check_branch
      %137 = sbr.rel (%p134) target = $region28
    $region27: #{deeplab_wrapper_forward.5} parent=5 // pred_region
      %s138 = ssub.s32 %s8, 1
      %p139 = pneg %p41
      %p140 = pneg %p38
      %s141 = smul.u32 16, %s18
      %p142 = scmp.lt.s32.totalorder %s17, 1
      %s143 = scalar_select %p142, %s17, 1
      %p144 = scmp.lt.s32.totalorder %s141, 15
      %s145 = scalar_select %p144, %s141, 15
      %s146 = smul.addr %s143, 16
      %s147 = sadd.s32 %s145, %s146
      %s148 = smul.addr %s147, 8
      %s149 = scalar_lea.vmem %s1, %s148
      %p150 = pneg %p69
      %p151 = pneg %p66
      %p152 = pneg %p97
      %p153 = pneg %p94
      %s154 = smul.u32 16, %s18
      %p155 = scmp.lt.s32.totalorder %s17, 1
      %s156 = scalar_select %p155, %s17, 1
      %p157 = scmp.lt.s32.totalorder %s154, 15
      %s158 = scalar_select %p157, %s154, 15
      %s159 = smul.addr %s156, 32
      %s160 = sadd.s32 %s158, %s159
      %s161 = smul.addr %s160, 8
      %s162 = scalar_lea.vmem %s2, %s161
      %s163 = smul.u32 16, %s18
      %p164 = scmp.lt.s32.totalorder %s17, 1
      %s165 = scalar_select %p164, %s17, 1
      %p166 = scmp.lt.s32.totalorder %s163, 15
      %s167 = scalar_select %p166, %s163, 15
      %s168 = smul.addr %s165, 16
      %s169 = sadd.s32 %s167, %s168
      %s170 = smul.addr %s169, 8
      %s171 = scalar_lea.vmem %s1, %s170
      %s172 = smul.u32 16, %s18
      %s173 = smul.u32 16, %s18
      %p174 = scmp.lt.s32.totalorder %s17, 1
      %s175 = scalar_select %p174, %s17, 1
      %p176 = scmp.lt.s32.totalorder %s173, 15
      %s177 = scalar_select %p176, %s173, 15
      %s178 = smul.addr %s175, 32
      %s179 = sadd.s32 %s177, %s178
      %s180 = smul.addr %s179, 8
      %s181 = scalar_lea.vmem %s2, %s180
      %s182 = smul.u32 16, %s18
      %v183 = vld [vmem:[%s0] sm:$0xff]
      %v184 = vld [vmem:[%s0 + $0x8] sm:$0xff]
      %v185 = vld [vmem:[%s171] sm:$0xff]
      %v186 = vld [vmem:[%s171 + $0x8] sm:$0xff]
      %v187 = vld [vmem:[%s171 + $0x10] sm:$0xff]
      %v188 = vld [vmem:[%s171 + $0x18] sm:$0xff]
      %v189 = vld [vmem:[%s171 + $0x20] sm:$0xff]
      %v190 = vld [vmem:[%s171 + $0x28] sm:$0xff]
      %v191 = vld [vmem:[%s171 + $0x30] sm:$0xff]
      %v192 = vld [vmem:[%s171 + $0x38] sm:$0xff]
      %v193 = vld [vmem:[%s171 + $0x40] sm:$0xff]
      %v194 = vld [vmem:[%s171 + $0x48] sm:$0xff]
      %v195 = vld [vmem:[%s171 + $0x50] sm:$0xff]
      %v196 = vld [vmem:[%s171 + $0x58] sm:$0xff]
      %v197 = vld [vmem:[%s171 + $0x60] sm:$0xff]
      %v198 = vld [vmem:[%s171 + $0x68] sm:$0xff]
      %v199 = vld [vmem:[%s171 + $0x70] sm:$0xff]
      %v200 = vld [vmem:[%s171 + $0x78] sm:$0xff]
      %vm201 = vcmask 64512
      %v203 = vsel %vm201, %v183, 0
      %v206 = vsel %vm201, %v184, 0
      %208 = vmatprep.subr.mxu0 %v186
      %209 = vmatpush1.msra.mxu0 %v185
      %210 = vmatprep.subr.mxu0 0.0
      %211 = vmatpush1.msra.mxu0 0.0
      %212 = vmatprep.subr.mxu0 0.0
      %213 = vmatpush1.msra.mxu0 0.0
      %214 = vmatprep.subr.mxu0 0.0
      %215 = vmatpush1.msra.mxu0 0.0
      %216 = vmatprep.subr.mxu0 0.0
      %217 = vmatpush1.msra.mxu0 0.0
      %218 = vmatprep.subr.mxu0 0.0
      %219 = vmatpush1.msra.mxu0 0.0
      %220 = vmatprep.subr.mxu0 0.0
      %221 = vmatpush1.msra.mxu0 0.0
      %222 = vmatprep.subr.mxu0 0.0
      %223 = vmatpush1.msra.mxu0 0.0
      %224 = vmatprep.subr.mxu0 0.0
      %225 = vmatpush1.msra.mxu0 0.0
      %226 = vmatprep.subr.mxu0 0.0
      %227 = vmatpush1.msra.mxu0 0.0
      %228 = vmatprep.subr.mxu0 0.0
      %229 = vmatpush1.msra.mxu0 0.0
      %230 = vmatprep.subr.mxu0 0.0
      %231 = vmatpush1.msra.mxu0 0.0
      %232 = vmatprep.subr.mxu0 0.0
      %233 = vmatpush1.msra.mxu0 0.0
      %234 = vmatprep.subr.mxu0 0.0
      %235 = vmatpush1.msra.mxu0 0.0
      %236 = vmatprep.subr.mxu0 0.0
      %237 = vmatpush1.msra.mxu0 0.0
      %238 = vmatprep.subr.mxu0 0.0
      %239 = vmatpush1.msra.mxu0 0.0
      %240 = vmatprep.subr.mxu0 0.0
      %241 = vmatpush1.msra.mxu0 0.0
      %242 = vmatprep.subr.mxu0 0.0
      %243 = vmatpush1.msra.mxu0 0.0
      %244 = vmatprep.subr.mxu0 0.0
      %245 = vmatpush1.msra.mxu0 0.0
      %246 = vmatprep.subr.mxu0 0.0
      %247 = vmatpush1.msra.mxu0 0.0
      %248 = vmatprep.subr.mxu0 0.0
      %249 = vmatpush1.msra.mxu0 0.0
      %250 = vmatprep.subr.mxu0 0.0
      %251 = vmatpush1.msra.mxu0 0.0
      %252 = vmatprep.subr.mxu0 0.0
      %253 = vmatpush1.msra.mxu0 0.0
      %254 = vmatprep.subr.mxu0 0.0
      %255 = vmatpush1.msra.mxu0 0.0
      %256 = vmatprep.subr.mxu0 0.0
      %257 = vmatpush1.msra.mxu0 0.0
      %258 = vmatprep.subr.mxu0 0.0
      %259 = vmatpush1.msra.mxu0 0.0
      %260 = vmatprep.subr.mxu0 0.0
      %261 = vmatpush1.msra.mxu0 0.0
      %262 = vmatprep.subr.mxu0 0.0
      %263 = vmatpush1.msra.mxu0 0.0
      %264 = vmatprep.subr.mxu0 0.0
      %265 = vmatpush1.msra.mxu0 0.0
      %266 = vmatprep.subr.mxu0 0.0
      %267 = vmatpush1.msra.mxu0 0.0
      %268 = vmatprep.subr.mxu0 0.0
      %269 = vmatpush1.msra.mxu0 0.0
      %270 = vmatprep.subr.mxu0 0.0
      %271 = vmatpush1.msra.mxu0 0.0
      %272 = vmatprep.mubr.f32.mxu0 0.0
      %273 = vmatmul.mubr.f32.gmra.mrb[0].mxu0 %v203
      %v274 = vpop.f32.mrb[0].mxu0
      %v275 = vadd.f32 0.0, %v274
      %v276 = vpop.f32.mrb[0].mxu0
      %v277 = vadd.f32 0.0, %v276
      %278 = vmatprep.mubr.f32.mxu0 0.0
      %279 = vmatmul.mubr.f32.gmra.mrb[0].mxu0 %v206
      %v280 = vpop.f32.mrb[0].mxu0
      %v281 = vadd.f32 0.0, %v280
      %v282 = vpop.f32.mrb[0].mxu0
      %v283 = vadd.f32 0.0, %v282
      %284 = vdwg.mxu0
      %285 = vmatprep.subr.mxu0 %v188
      %286 = vmatpush1.msra.mxu0 %v187
      %287 = vmatprep.subr.mxu0 0.0
      %288 = vmatpush1.msra.mxu0 0.0
      %289 = vmatprep.subr.mxu0 0.0
      %290 = vmatpush1.msra.mxu0 0.0
      %291 = vmatprep.subr.mxu0 0.0
      %292 = vmatpush1.msra.mxu0 0.0
      %293 = vmatprep.subr.mxu0 0.0
      %294 = vmatpush1.msra.mxu0 0.0
      %295 = vmatprep.subr.mxu0 0.0
      %296 = vmatpush1.msra.mxu0 0.0
      %297 = vmatprep.subr.mxu0 0.0
      %298 = vmatpush1.msra.mxu0 0.0
      %299 = vmatprep.subr.mxu0 0.0
      %300 = vmatpush1.msra.mxu0 0.0
      %301 = vmatprep.subr.mxu0 0.0
      %302 = vmatpush1.msra.mxu0 0.0
      %303 = vmatprep.subr.mxu0 0.0
      %304 = vmatpush1.msra.mxu0 0.0
      %305 = vmatprep.subr.mxu0 0.0
      %306 = vmatpush1.msra.mxu0 0.0
      %307 = vmatprep.subr.mxu0 0.0
      %308 = vmatpush1.msra.mxu0 0.0
      %309 = vmatprep.subr.mxu0 0.0
      %310 = vmatpush1.msra.mxu0 0.0
      %311 = vmatprep.subr.mxu0 0.0
      %312 = vmatpush1.msra.mxu0 0.0
      %313 = vmatprep.subr.mxu0 0.0
      %314 = vmatpush1.msra.mxu0 0.0
      %315 = vmatprep.subr.mxu0 0.0
      %316 = vmatpush1.msra.mxu0 0.0
      %317 = vmatprep.subr.mxu0 0.0
      %318 = vmatpush1.msra.mxu0 0.0
      %319 = vmatprep.subr.mxu0 0.0
      %320 = vmatpush1.msra.mxu0 0.0
      %321 = vmatprep.subr.mxu0 0.0
      %322 = vmatpush1.msra.mxu0 0.0
      %323 = vmatprep.subr.mxu0 0.0
      %324 = vmatpush1.msra.mxu0 0.0
      %325 = vmatprep.subr.mxu0 0.0
      %326 = vmatpush1.msra.mxu0 0.0
      %327 = vmatprep.subr.mxu0 0.0
      %328 = vmatpush1.msra.mxu0 0.0
      %329 = vmatprep.subr.mxu0 0.0
      %330 = vmatpush1.msra.mxu0 0.0
      %331 = vmatprep.subr.mxu0 0.0
      %332 = vmatpush1.msra.mxu0 0.0
      %333 = vmatprep.subr.mxu0 0.0
      %334 = vmatpush1.msra.mxu0 0.0
      %335 = vmatprep.subr.mxu0 0.0
      %336 = vmatpush1.msra.mxu0 0.0
      %337 = vmatprep.subr.mxu0 0.0
      %338 = vmatpush1.msra.mxu0 0.0
      %339 = vmatprep.subr.mxu0 0.0
      %340 = vmatpush1.msra.mxu0 0.0
      %341 = vmatprep.subr.mxu0 0.0
      %342 = vmatpush1.msra.mxu0 0.0
      %343 = vmatprep.subr.mxu0 0.0
      %344 = vmatpush1.msra.mxu0 0.0
      %345 = vmatprep.subr.mxu0 0.0
      %346 = vmatpush1.msra.mxu0 0.0
      %347 = vmatprep.subr.mxu0 0.0
      %348 = vmatpush1.msra.mxu0 0.0
      %349 = vmatprep.mubr.f32.mxu0 0.0
      %350 = vmatmul.mubr.f32.gmra.mrb[0].mxu0 %v203
      %v351 = vpop.f32.mrb[0].mxu0
      %v352 = vadd.f32 0.0, %v351
      %v353 = vpop.f32.mrb[0].mxu0
      %v354 = vadd.f32 0.0, %v353
      %355 = vmatprep.mubr.f32.mxu0 0.0
      %356 = vmatmul.mubr.f32.gmra.mrb[0].mxu0 %v206
      %v357 = vpop.f32.mrb[0].mxu0
      %v358 = vadd.f32 0.0, %v357
      %v359 = vpop.f32.mrb[0].mxu0
      %v360 = vadd.f32 0.0, %v359
      %361 = vdwg.mxu0
      %362 = vmatprep.subr.mxu0 %v190
      %363 = vmatpush1.msra.mxu0 %v189
      %364 = vmatprep.subr.mxu0 0.0
      %365 = vmatpush1.msra.mxu0 0.0
      %366 = vmatprep.subr.mxu0 0.0
      %367 = vmatpush1.msra.mxu0 0.0
      %368 = vmatprep.subr.mxu0 0.0
      %369 = vmatpush1.msra.mxu0 0.0
      %370 = vmatprep.subr.mxu0 0.0
      %371 = vmatpush1.msra.mxu0 0.0
      %372 = vmatprep.subr.mxu0 0.0
      %373 = vmatpush1.msra.mxu0 0.0
      %374 = vmatprep.subr.mxu0 0.0
      %375 = vmatpush1.msra.mxu0 0.0
      %376 = vmatprep.subr.mxu0 0.0
      %377 = vmatpush1.msra.mxu0 0.0
      %378 = vmatprep.subr.mxu0 0.0
      %379 = vmatpush1.msra.mxu0 0.0
      %380 = vmatprep.subr.mxu0 0.0
      %381 = vmatpush1.msra.mxu0 0.0
      %382 = vmatprep.subr.mxu0 0.0
      %383 = vmatpush1.msra.mxu0 0.0
      %384 = vmatprep.subr.mxu0 0.0
      %385 = vmatpush1.msra.mxu0 0.0
      %386 = vmatprep.subr.mxu0 0.0
      %387 = vmatpush1.msra.mxu0 0.0
      %388 = vmatprep.subr.mxu0 0.0
      %389 = vmatpush1.msra.mxu0 0.0
      %390 = vmatprep.subr.mxu0 0.0
      %391 = vmatpush1.msra.mxu0 0.0
      %392 = vmatprep.subr.mxu0 0.0
      %393 = vmatpush1.msra.mxu0 0.0
      %394 = vmatprep.subr.mxu0 0.0
      %395 = vmatpush1.msra.mxu0 0.0
      %396 = vmatprep.subr.mxu0 0.0
      %397 = vmatpush1.msra.mxu0 0.0
      %398 = vmatprep.subr.mxu0 0.0
      %399 = vmatpush1.msra.mxu0 0.0
      %400 = vmatprep.subr.mxu0 0.0
      %401 = vmatpush1.msra.mxu0 0.0
      %402 = vmatprep.subr.mxu0 0.0
      %403 = vmatpush1.msra.mxu0 0.0
      %404 = vmatprep.subr.mxu0 0.0
      %405 = vmatpush1.msra.mxu0 0.0
      %406 = vmatprep.subr.mxu0 0.0
      %407 = vmatpush1.msra.mxu0 0.0
      %408 = vmatprep.subr.mxu0 0.0
      %409 = vmatpush1.msra.mxu0 0.0
      %410 = vmatprep.subr.mxu0 0.0
      %411 = vmatpush1.msra.mxu0 0.0
      %412 = vmatprep.subr.mxu0 0.0
      %413 = vmatpush1.msra.mxu0 0.0
      %414 = vmatprep.subr.mxu0 0.0
      %415 = vmatpush1.msra.mxu0 0.0
      %416 = vmatprep.subr.mxu0 0.0
      %417 = vmatpush1.msra.mxu0 0.0
      %418 = vmatprep.subr.mxu0 0.0
      %419 = vmatpush1.msra.mxu0 0.0
      %420 = vmatprep.subr.mxu0 0.0
      %421 = vmatpush1.msra.mxu0 0.0
      %422 = vmatprep.subr.mxu0 0.0
      %423 = vmatpush1.msra.mxu0 0.0
      %424 = vmatprep.subr.mxu0 0.0
      %425 = vmatpush1.msra.mxu0 0.0
      %426 = vmatprep.mubr.f32.mxu0 0.0
      %427 = vmatmul.mubr.f32.gmra.mrb[0].mxu0 %v203
      %v428 = vpop.f32.mrb[0].mxu0
      %v429 = vadd.f32 0.0, %v428
      %v430 = vpop.f32.mrb[0].mxu0
      %v431 = vadd.f32 0.0, %v430
      %432 = vmatprep.mubr.f32.mxu0 0.0
      %433 = vmatmul.mubr.f32.gmra.mrb[0].mxu0 %v206
      %v434 = vpop.f32.mrb[0].mxu0
      %v435 = vadd.f32 0.0, %v434
      %v436 = vpop.f32.mrb[0].mxu0
      %v437 = vadd.f32 0.0, %v436
      %438 = vdwg.mxu0
      %439 = vmatprep.subr.mxu0 %v192
      %440 = vmatpush1.msra.mxu0 %v191
      %441 = vmatprep.subr.mxu0 0.0
      %442 = vmatpush1.msra.mxu0 0.0
      %443 = vmatprep.subr.mxu0 0.0
      %444 = vmatpush1.msra.mxu0 0.0
      %445 = vmatprep.subr.mxu0 0.0
      %446 = vmatpush1.msra.mxu0 0.0
      %447 = vmatprep.subr.mxu0 0.0
      %448 = vmatpush1.msra.mxu0 0.0
      %449 = vmatprep.subr.mxu0 0.0
      %450 = vmatpush1.msra.mxu0 0.0
      %451 = vmatprep.subr.mxu0 0.0
      %452 = vmatpush1.msra.mxu0 0.0
      %453 = vmatprep.subr.mxu0 0.0
      %454 = vmatpush1.msra.mxu0 0.0
      %455 = vmatprep.subr.mxu0 0.0
      %456 = vmatpush1.msra.mxu0 0.0
      %457 = vmatprep.subr.mxu0 0.0
      %458 = vmatpush1.msra.mxu0 0.0
      %459 = vmatprep.subr.mxu0 0.0
      %460 = vmatpush1.msra.mxu0 0.0
      %461 = vmatprep.subr.mxu0 0.0
      %462 = vmatpush1.msra.mxu0 0.0
      %463 = vmatprep.subr.mxu0 0.0
      %464 = vmatpush1.msra.mxu0 0.0
      %465 = vmatprep.subr.mxu0 0.0
      %466 = vmatpush1.msra.mxu0 0.0
      %467 = vmatprep.subr.mxu0 0.0
      %468 = vmatpush1.msra.mxu0 0.0
      %469 = vmatprep.subr.mxu0 0.0
      %470 = vmatpush1.msra.mxu0 0.0
      %471 = vmatprep.subr.mxu0 0.0
      %472 = vmatpush1.msra.mxu0 0.0
      %473 = vmatprep.subr.mxu0 0.0
      %474 = vmatpush1.msra.mxu0 0.0
      %475 = vmatprep.subr.mxu0 0.0
      %476 = vmatpush1.msra.mxu0 0.0
      %477 = vmatprep.subr.mxu0 0.0
      %478 = vmatpush1.msra.mxu0 0.0
      %479 = vmatprep.subr.mxu0 0.0
      %480 = vmatpush1.msra.mxu0 0.0
      %481 = vmatprep.subr.mxu0 0.0
      %482 = vmatpush1.msra.mxu0 0.0
      %483 = vmatprep.subr.mxu0 0.0
      %484 = vmatpush1.msra.mxu0 0.0
      %485 = vmatprep.subr.mxu0 0.0
      %486 = vmatpush1.msra.mxu0 0.0
      %487 = vmatprep.subr.mxu0 0.0
      %488 = vmatpush1.msra.mxu0 0.0
      %489 = vmatprep.subr.mxu0 0.0
      %490 = vmatpush1.msra.mxu0 0.0
      %491 = vmatprep.subr.mxu0 0.0
      %492 = vmatpush1.msra.mxu0 0.0
      %493 = vmatprep.subr.mxu0 0.0
      %494 = vmatpush1.msra.mxu0 0.0
      %495 = vmatprep.subr.mxu0 0.0
      %496 = vmatpush1.msra.mxu0 0.0
      %497 = vmatprep.subr.mxu0 0.0
      %498 = vmatpush1.msra.mxu0 0.0
      %499 = vmatprep.subr.mxu0 0.0
      %500 = vmatpush1.msra.mxu0 0.0
      %501 = vmatprep.subr.mxu0 0.0
      %502 = vmatpush1.msra.mxu0 0.0
      %503 = vmatprep.mubr.f32.mxu0 0.0
      %504 = vmatmul.mubr.f32.gmra.mrb[0].mxu0 %v203
      %v505 = vpop.f32.mrb[0].mxu0
      %v506 = vadd.f32 0.0, %v505
      %v507 = vpop.f32.mrb[0].mxu0
      %v508 = vadd.f32 0.0, %v507
      %509 = vmatprep.mubr.f32.mxu0 0.0
      %510 = vmatmul.mubr.f32.gmra.mrb[0].mxu0 %v206
      %v511 = vpop.f32.mrb[0].mxu0
      %v512 = vadd.f32 0.0, %v511
      %v513 = vpop.f32.mrb[0].mxu0
      %v514 = vadd.f32 0.0, %v513
      %515 = vdwg.mxu0
      %516 = vmatprep.subr.mxu0 %v194
      %517 = vmatpush1.msra.mxu0 %v193
      %518 = vmatprep.subr.mxu0 0.0
      %519 = vmatpush1.msra.mxu0 0.0
      %520 = vmatprep.subr.mxu0 0.0
      %521 = vmatpush1.msra.mxu0 0.0
      %522 = vmatprep.subr.mxu0 0.0
      %523 = vmatpush1.msra.mxu0 0.0
      %524 = vmatprep.subr.mxu0 0.0
      %525 = vmatpush1.msra.mxu0 0.0
      %526 = vmatprep.subr.mxu0 0.0
      %527 = vmatpush1.msra.mxu0 0.0
      %528 = vmatprep.subr.mxu0 0.0
      %529 = vmatpush1.msra.mxu0 0.0
      %530 = vmatprep.subr.mxu0 0.0
      %531 = vmatpush1.msra.mxu0 0.0
      %532 = vmatprep.subr.mxu0 0.0
      %533 = vmatpush1.msra.mxu0 0.0
      %534 = vmatprep.subr.mxu0 0.0
      %535 = vmatpush1.msra.mxu0 0.0
      %536 = vmatprep.subr.mxu0 0.0
      %537 = vmatpush1.msra.mxu0 0.0
      %538 = vmatprep.subr.mxu0 0.0
      %539 = vmatpush1.msra.mxu0 0.0
      %540 = vmatprep.subr.mxu0 0.0
      %541 = vmatpush1.msra.mxu0 0.0
      %542 = vmatprep.subr.mxu0 0.0
      %543 = vmatpush1.msra.mxu0 0.0
      %544 = vmatprep.subr.mxu0 0.0
      %545 = vmatpush1.msra.mxu0 0.0
      %546 = vmatprep.subr.mxu0 0.0
      %547 = vmatpush1.msra.mxu0 0.0
      %548 = vmatprep.subr.mxu0 0.0
      %549 = vmatpush1.msra.mxu0 0.0
      %550 = vmatprep.subr.mxu0 0.0
      %551 = vmatpush1.msra.mxu0 0.0
      %552 = vmatprep.subr.mxu0 0.0
      %553 = vmatpush1.msra.mxu0 0.0
      %554 = vmatprep.subr.mxu0 0.0
      %555 = vmatpush1.msra.mxu0 0.0
      %556 = vmatprep.subr.mxu0 0.0
      %557 = vmatpush1.msra.mxu0 0.0
      %558 = vmatprep.subr.mxu0 0.0
      %559 = vmatpush1.msra.mxu0 0.0
      %560 = vmatprep.subr.mxu0 0.0
      %561 = vmatpush1.msra.mxu0 0.0
      %562 = vmatprep.subr.mxu0 0.0
      %563 = vmatpush1.msra.mxu0 0.0
      %564 = vmatprep.subr.mxu0 0.0
      %565 = vmatpush1.msra.mxu0 0.0
      %566 = vmatprep.subr.mxu0 0.0
      %567 = vmatpush1.msra.mxu0 0.0
      %568 = vmatprep.subr.mxu0 0.0
      %569 = vmatpush1.msra.mxu0 0.0
      %570 = vmatprep.subr.mxu0 0.0
      %571 = vmatpush1.msra.mxu0 0.0
      %572 = vmatprep.subr.mxu0 0.0
      %573 = vmatpush1.msra.mxu0 0.0
      %574 = vmatprep.subr.mxu0 0.0
      %575 = vmatpush1.msra.mxu0 0.0
      %576 = vmatprep.subr.mxu0 0.0
      %577 = vmatpush1.msra.mxu0 0.0
      %578 = vmatprep.subr.mxu0 0.0
      %579 = vmatpush1.msra.mxu0 0.0
      %580 = vmatprep.mubr.f32.mxu0 0.0
      %581 = vmatmul.mubr.f32.gmra.mrb[0].mxu0 %v203
      %v582 = vpop.f32.mrb[0].mxu0
      %v583 = vadd.f32 0.0, %v582
      %v584 = vpop.f32.mrb[0].mxu0
      %v585 = vadd.f32 0.0, %v584
      %586 = vmatprep.mubr.f32.mxu0 0.0
      %587 = vmatmul.mubr.f32.gmra.mrb[0].mxu0 %v206
      %v588 = vpop.f32.mrb[0].mxu0
      %v589 = vadd.f32 0.0, %v588
      %v590 = vpop.f32.mrb[0].mxu0
      %v591 = vadd.f32 0.0, %v590
      %592 = vdwg.mxu0
      %593 = vmatprep.subr.mxu0 %v196
      %594 = vmatpush1.msra.mxu0 %v195
      %595 = vmatprep.subr.mxu0 0.0
      %596 = vmatpush1.msra.mxu0 0.0
      %597 = vmatprep.subr.mxu0 0.0
      %598 = vmatpush1.msra.mxu0 0.0
      %599 = vmatprep.subr.mxu0 0.0
      %600 = vmatpush1.msra.mxu0 0.0
      %601 = vmatprep.subr.mxu0 0.0
      %602 = vmatpush1.msra.mxu0 0.0
      %603 = vmatprep.subr.mxu0 0.0
      %604 = vmatpush1.msra.mxu0 0.0
      %605 = vmatprep.subr.mxu0 0.0
      %606 = vmatpush1.msra.mxu0 0.0
      %607 = vmatprep.subr.mxu0 0.0
      %608 = vmatpush1.msra.mxu0 0.0
      %609 = vmatprep.subr.mxu0 0.0
      %610 = vmatpush1.msra.mxu0 0.0
      %611 = vmatprep.subr.mxu0 0.0
      %612 = vmatpush1.msra.mxu0 0.0
      %613 = vmatprep.subr.mxu0 0.0
      %614 = vmatpush1.msra.mxu0 0.0
      %615 = vmatprep.subr.mxu0 0.0
      %616 = vmatpush1.msra.mxu0 0.0
      %617 = vmatprep.subr.mxu0 0.0
      %618 = vmatpush1.msra.mxu0 0.0
      %619 = vmatprep.subr.mxu0 0.0
      %620 = vmatpush1.msra.mxu0 0.0
      %621 = vmatprep.subr.mxu0 0.0
      %622 = vmatpush1.msra.mxu0 0.0
      %623 = vmatprep.subr.mxu0 0.0
      %624 = vmatpush1.msra.mxu0 0.0
      %625 = vmatprep.subr.mxu0 0.0
      %626 = vmatpush1.msra.mxu0 0.0
      %627 = vmatprep.subr.mxu0 0.0
      %628 = vmatpush1.msra.mxu0 0.0
      %629 = vmatprep.subr.mxu0 0.0
      %630 = vmatpush1.msra.mxu0 0.0
      %631 = vmatprep.subr.mxu0 0.0
      %632 = vmatpush1.msra.mxu0 0.0
      %633 = vmatprep.subr.mxu0 0.0
      %634 = vmatpush1.msra.mxu0 0.0
      %635 = vmatprep.subr.mxu0 0.0
      %636 = vmatpush1.msra.mxu0 0.0
      %637 = vmatprep.subr.mxu0 0.0
      %638 = vmatpush1.msra.mxu0 0.0
      %639 = vmatprep.subr.mxu0 0.0
      %640 = vmatpush1.msra.mxu0 0.0
      %641 = vmatprep.subr.mxu0 0.0
      %642 = vmatpush1.msra.mxu0 0.0
      %643 = vmatprep.subr.mxu0 0.0
      %644 = vmatpush1.msra.mxu0 0.0
      %645 = vmatprep.subr.mxu0 0.0
      %646 = vmatpush1.msra.mxu0 0.0
      %647 = vmatprep.subr.mxu0 0.0
      %648 = vmatpush1.msra.mxu0 0.0
      %649 = vmatprep.subr.mxu0 0.0
      %650 = vmatpush1.msra.mxu0 0.0
      %651 = vmatprep.subr.mxu0 0.0
      %652 = vmatpush1.msra.mxu0 0.0
      %653 = vmatprep.subr.mxu0 0.0
      %654 = vmatpush1.msra.mxu0 0.0
      %655 = vmatprep.subr.mxu0 0.0
      %656 = vmatpush1.msra.mxu0 0.0
      %657 = vmatprep.mubr.f32.mxu0 0.0
      %658 = vmatmul.mubr.f32.gmra.mrb[0].mxu0 %v203
      %v659 = vpop.f32.mrb[0].mxu0
      %v660 = vadd.f32 0.0, %v659
      %v661 = vpop.f32.mrb[0].mxu0
      %v662 = vadd.f32 0.0, %v661
      %663 = vmatprep.mubr.f32.mxu0 0.0
      %664 = vmatmul.mubr.f32.gmra.mrb[0].mxu0 %v206
      %v665 = vpop.f32.mrb[0].mxu0
      %v666 = vadd.f32 0.0, %v665
      %v667 = vpop.f32.mrb[0].mxu0
      %v668 = vadd.f32 0.0, %v667
      %669 = vdwg.mxu0
      %670 = vmatprep.subr.mxu0 %v198
      %671 = vmatpush1.msra.mxu0 %v197
      %672 = vmatprep.subr.mxu0 0.0
      %673 = vmatpush1.msra.mxu0 0.0
      %674 = vmatprep.subr.mxu0 0.0
      %675 = vmatpush1.msra.mxu0 0.0
      %676 = vmatprep.subr.mxu0 0.0
      %677 = vmatpush1.msra.mxu0 0.0
      %678 = vmatprep.subr.mxu0 0.0
      %679 = vmatpush1.msra.mxu0 0.0
      %680 = vmatprep.subr.mxu0 0.0
      %681 = vmatpush1.msra.mxu0 0.0
      %682 = vmatprep.subr.mxu0 0.0
      %683 = vmatpush1.msra.mxu0 0.0
      %684 = vmatprep.subr.mxu0 0.0
      %685 = vmatpush1.msra.mxu0 0.0
      %686 = vmatprep.subr.mxu0 0.0
      %687 = vmatpush1.msra.mxu0 0.0
      %688 = vmatprep.subr.mxu0 0.0
      %689 = vmatpush1.msra.mxu0 0.0
      %690 = vmatprep.subr.mxu0 0.0
      %691 = vmatpush1.msra.mxu0 0.0
      %692 = vmatprep.subr.mxu0 0.0
      %693 = vmatpush1.msra.mxu0 0.0
      %694 = vmatprep.subr.mxu0 0.0
      %695 = vmatpush1.msra.mxu0 0.0
      %696 = vmatprep.subr.mxu0 0.0
      %697 = vmatpush1.msra.mxu0 0.0
      %698 = vmatprep.subr.mxu0 0.0
      %699 = vmatpush1.msra.mxu0 0.0
      %700 = vmatprep.subr.mxu0 0.0
      %701 = vmatpush1.msra.mxu0 0.0
      %702 = vmatprep.subr.mxu0 0.0
      %703 = vmatpush1.msra.mxu0 0.0
      %704 = vmatprep.subr.mxu0 0.0
      %705 = vmatpush1.msra.mxu0 0.0
      %706 = vmatprep.subr.mxu0 0.0
      %707 = vmatpush1.msra.mxu0 0.0
      %708 = vmatprep.subr.mxu0 0.0
      %709 = vmatpush1.msra.mxu0 0.0
      %710 = vmatprep.subr.mxu0 0.0
      %711 = vmatpush1.msra.mxu0 0.0
      %712 = vmatprep.subr.mxu0 0.0
      %713 = vmatpush1.msra.mxu0 0.0
      %714 = vmatprep.subr.mxu0 0.0
      %715 = vmatpush1.msra.mxu0 0.0
      %716 = vmatprep.subr.mxu0 0.0
      %717 = vmatpush1.msra.mxu0 0.0
      %718 = vmatprep.subr.mxu0 0.0
      %719 = vmatpush1.msra.mxu0 0.0
      %720 = vmatprep.subr.mxu0 0.0
      %721 = vmatpush1.msra.mxu0 0.0
      %722 = vmatprep.subr.mxu0 0.0
      %723 = vmatpush1.msra.mxu0 0.0
      %724 = vmatprep.subr.mxu0 0.0
      %725 = vmatpush1.msra.mxu0 0.0
      %726 = vmatprep.subr.mxu0 0.0
      %727 = vmatpush1.msra.mxu0 0.0
      %728 = vmatprep.subr.mxu0 0.0
      %729 = vmatpush1.msra.mxu0 0.0
      %730 = vmatprep.subr.mxu0 0.0
      %731 = vmatpush1.msra.mxu0 0.0
      %732 = vmatprep.subr.mxu0 0.0
      %733 = vmatpush1.msra.mxu0 0.0
      %734 = vmatprep.mubr.f32.mxu0 0.0
      %735 = vmatmul.mubr.f32.gmra.mrb[0].mxu0 %v203
      %v736 = vpop.f32.mrb[0].mxu0
      %v737 = vadd.f32 0.0, %v736
      %v738 = vpop.f32.mrb[0].mxu0
      %v739 = vadd.f32 0.0, %v738
      %740 = vmatprep.mubr.f32.mxu0 0.0
      %741 = vmatmul.mubr.f32.gmra.mrb[0].mxu0 %v206
      %v742 = vpop.f32.mrb[0].mxu0
      %v743 = vadd.f32 0.0, %v742
      %v744 = vpop.f32.mrb[0].mxu0
      %v745 = vadd.f32 0.0, %v744
      %746 = vdwg.mxu0
      %747 = vmatprep.subr.mxu0 %v200
      %748 = vmatpush1.msra.mxu0 %v199
      %749 = vmatprep.subr.mxu0 0.0
      %750 = vmatpush1.msra.mxu0 0.0
      %751 = vmatprep.subr.mxu0 0.0
      %752 = vmatpush1.msra.mxu0 0.0
      %753 = vmatprep.subr.mxu0 0.0
      %754 = vmatpush1.msra.mxu0 0.0
      %755 = vmatprep.subr.mxu0 0.0
      %756 = vmatpush1.msra.mxu0 0.0
      %757 = vmatprep.subr.mxu0 0.0
      %758 = vmatpush1.msra.mxu0 0.0
      %759 = vmatprep.subr.mxu0 0.0
      %760 = vmatpush1.msra.mxu0 0.0
      %761 = vmatprep.subr.mxu0 0.0
      %762 = vmatpush1.msra.mxu0 0.0
      %763 = vmatprep.subr.mxu0 0.0
      %764 = vmatpush1.msra.mxu0 0.0
      %765 = vmatprep.subr.mxu0 0.0
      %766 = vmatpush1.msra.mxu0 0.0
      %767 = vmatprep.subr.mxu0 0.0
      %768 = vmatpush1.msra.mxu0 0.0
      %769 = vmatprep.subr.mxu0 0.0
      %770 = vmatpush1.msra.mxu0 0.0
      %771 = vmatprep.subr.mxu0 0.0
      %772 = vmatpush1.msra.mxu0 0.0
      %773 = vmatprep.subr.mxu0 0.0
      %774 = vmatpush1.msra.mxu0 0.0
      %775 = vmatprep.subr.mxu0 0.0
      %776 = vmatpush1.msra.mxu0 0.0
      %777 = vmatprep.subr.mxu0 0.0
      %778 = vmatpush1.msra.mxu0 0.0
      %779 = vmatprep.subr.mxu0 0.0
      %780 = vmatpush1.msra.mxu0 0.0
      %781 = vmatprep.subr.mxu0 0.0
      %782 = vmatpush1.msra.mxu0 0.0
      %783 = vmatprep.subr.mxu0 0.0
      %784 = vmatpush1.msra.mxu0 0.0
      %785 = vmatprep.subr.mxu0 0.0
      %786 = vmatpush1.msra.mxu0 0.0
      %787 = vmatprep.subr.mxu0 0.0
      %788 = vmatpush1.msra.mxu0 0.0
      %789 = vmatprep.subr.mxu0 0.0
      %790 = vmatpush1.msra.mxu0 0.0
      %791 = vmatprep.subr.mxu0 0.0
      %792 = vmatpush1.msra.mxu0 0.0
      %793 = vmatprep.subr.mxu0 0.0
      %794 = vmatpush1.msra.mxu0 0.0
      %795 = vmatprep.subr.mxu0 0.0
      %796 = vmatpush1.msra.mxu0 0.0
      %797 = vmatprep.subr.mxu0 0.0
      %798 = vmatpush1.msra.mxu0 0.0
      %799 = vmatprep.subr.mxu0 0.0
      %800 = vmatpush1.msra.mxu0 0.0
      %801 = vmatprep.subr.mxu0 0.0
      %802 = vmatpush1.msra.mxu0 0.0
      %803 = vmatprep.subr.mxu0 0.0
      %804 = vmatpush1.msra.mxu0 0.0
      %805 = vmatprep.subr.mxu0 0.0
      %806 = vmatpush1.msra.mxu0 0.0
      %807 = vmatprep.subr.mxu0 0.0
      %808 = vmatpush1.msra.mxu0 0.0
      %809 = vmatprep.subr.mxu0 0.0
      %810 = vmatpush1.msra.mxu0 0.0
      %811 = vmatprep.mubr.f32.mxu0 0.0
      %812 = vmatmul.mubr.f32.gmra.mrb[0].mxu0 %v203
      %v813 = vpop.f32.mrb[0].mxu0
      %v814 = vadd.f32 0.0, %v813
      %v815 = vpop.f32.mrb[0].mxu0
      %v816 = vadd.f32 0.0, %v815
      %817 = vmatprep.mubr.f32.mxu0 0.0
      %818 = vmatmul.mubr.f32.gmra.mrb[0].mxu0 %v206
      %v819 = vpop.f32.mrb[0].mxu0
      %v820 = vadd.f32 0.0, %v819
      %v821 = vpop.f32.mrb[0].mxu0
      %v822 = vadd.f32 0.0, %v821
      %823 = vdwg.mxu0
      %824 = vst [vmem:[%s181] sm:$0xff] %v275
      %825 = vst [vmem:[%s181 + $0x8] sm:$0xff] %v277
      %826 = vst [vmem:[%s181 + $0x10] sm:$0xff] %v352
      %827 = vst [vmem:[%s181 + $0x18] sm:$0xff] %v354
      %828 = vst [vmem:[%s181 + $0x20] sm:$0xff] %v429
      %829 = vst [vmem:[%s181 + $0x28] sm:$0xff] %v431
      %830 = vst [vmem:[%s181 + $0x30] sm:$0xff] %v506
      %831 = vst [vmem:[%s181 + $0x38] sm:$0xff] %v508
      %832 = vst [vmem:[%s181 + $0x40] sm:$0xff] %v583
      %833 = vst [vmem:[%s181 + $0x48] sm:$0xff] %v585
      %834 = vst [vmem:[%s181 + $0x50] sm:$0xff] %v660
      %835 = vst [vmem:[%s181 + $0x58] sm:$0xff] %v662
      %836 = vst [vmem:[%s181 + $0x60] sm:$0xff] %v737
      %837 = vst [vmem:[%s181 + $0x68] sm:$0xff] %v739
      %838 = vst [vmem:[%s181 + $0x70] sm:$0xff] %v814
      %839 = vst [vmem:[%s181 + $0x78] sm:$0xff] %v816
      %840 = vst [vmem:[%s181 + $0x80] sm:$0xff] %v281
      %841 = vst [vmem:[%s181 + $0x88] sm:$0xff] %v283
      %842 = vst [vmem:[%s181 + $0x90] sm:$0xff] %v358
      %843 = vst [vmem:[%s181 + $0x98] sm:$0xff] %v360
      %844 = vst [vmem:[%s181 + $0xa0] sm:$0xff] %v435
      %845 = vst [vmem:[%s181 + $0xa8] sm:$0xff] %v437
      %846 = vst [vmem:[%s181 + $0xb0] sm:$0xff] %v512
      %847 = vst [vmem:[%s181 + $0xb8] sm:$0xff] %v514
      %848 = vst [vmem:[%s181 + $0xc0] sm:$0xff] %v589
      %849 = vst [vmem:[%s181 + $0xc8] sm:$0xff] %v591
      %850 = vst [vmem:[%s181 + $0xd0] sm:$0xff] %v666
      %851 = vst [vmem:[%s181 + $0xd8] sm:$0xff] %v668
      %852 = vst [vmem:[%s181 + $0xe0] sm:$0xff] %v743
      %853 = vst [vmem:[%s181 + $0xe8] sm:$0xff] %v745
      %854 = vst [vmem:[%s181 + $0xf0] sm:$0xff] %v820
      %855 = vst [vmem:[%s181 + $0xf8] sm:$0xff] %v822
      %s856 = smul.u32 16, %s18
      %p857 = scmp.lt.s32.totalorder %s17, 1
      %s858 = scalar_select %p857, %s17, 1
      %p859 = scmp.lt.s32.totalorder %s856, 15
      %s860 = scalar_select %p859, %s856, 15
      %s861 = smul.addr %s858, 32
      %s862 = sadd.s32 %s860, %s861
      %s863 = smul.addr %s862, 8
      %s864 = scalar_lea.vmem %s2, %s863
      // Predicated region
      $region29: #{deeplab_wrapper_forward.5} parent=27 // pred_check
        %p865 = pneg %p94
      $region30: #{deeplab_wrapper_forward.5} parent=27 // pred_check_branch
        %867 = sbr.rel (%p865) target = $region32
      $region31: #{deeplab_wrapper_forward.5} parent=27 // pred_region
        %s868 = smul.u32 16, %s18
      $region32: #{deeplab_wrapper_forward.5} parent=27 // pred_fallthru
        _
    $region28: #{deeplab_wrapper_forward.5} parent=5 // pred_fallthru
      _
    %p869 = scmp.le.s32.totalorder 2, %s8
    // Predicated region
    $region33: #{deeplab_wrapper_forward.5} parent=5 // pred_check
      %p870 = pneg %p869
    $region34: #{deeplab_wrapper_forward.5} parent=5 // pred_check_branch
      %872 = sbr.rel (%p870) target = $region36
    $region35: #{deeplab_wrapper_forward.5} parent=5 // pred_region
      %s873 = ssub.s32 %s8, 2
      // Predicated region
      $region37: #{deeplab_wrapper_forward.5} parent=35 // pred_check
        %p874 = pneg %p100
      $region38: #{deeplab_wrapper_forward.5} parent=35 // pred_check_branch
        %876 = sbr.rel (%p874) target = $region40
      $region39: #{deeplab_wrapper_forward.5} parent=35 // pred_region
        %s877 = smul.u32 16, %s20
        %p878 = scmp.lt.s32.totalorder %s19, 1
        %s879 = scalar_select %p878, %s19, 1
        %p880 = scmp.lt.s32.totalorder %s877, 15
        %s881 = scalar_select %p880, %s877, 15
        %s882 = smul.addr %s879, 32
        %s883 = sadd.s32 %s881, %s882
        %s884 = smul.addr %s883, 8
        %s885 = scalar_lea.vmem %s2, %s884
      $region40: #{deeplab_wrapper_forward.5} parent=35 // pred_fallthru
        _
    $region36: #{deeplab_wrapper_forward.5} parent=5 // pred_fallthru
      _
  $region6: #{deeplab_wrapper_forward.5} parent=0 // loop_footer
    %s12 = sadd.s32 1, %s8
  $region7: #{deeplab_wrapper_forward.5} parent=0 // loop_footer_branch
    %7 = sbr.rel target = $region3
  $region8: #{deeplab_wrapper_forward.5} parent=0 // loop_exit
    _

// kernel: deeplab_wrapper_forward.3
$region0: #{deeplab_wrapper_forward.3}
  #allocation0 [shape = 'u32[]', space=smem, size = 0x4, offset = 0x4, fixed_abs, tag = 'smem constant byte address 0x4 - core index']
  #allocation1 [shape = 'u32[144,128]{1,0:T(1,128)}', space=vmem, size = 0x12000, scoped, tag = 'internal scratch']
  #allocation2 [shape = 'bf16[8,8,256]{2,1,0:T(8,128)(2,1)}', space=vmem, size = 0x8000, scoped, tag = 'scratch operand']
  %s0 = inlined_call_operand.vmem [shape: bf16[2,4,11,11,4], index: 0, kind: input, shape index: {}]
  %s1 = inlined_call_operand.vmem [shape: bf16[256,64], index: 1, kind: input, shape index: {}]
  %s2 = inlined_call_operand.vmem [shape: bf16[64,128], index: 2, kind: input, shape index: {}]
  %s3 = inlined_call_operand.vmem [shape: f32[1,128], index: 3, kind: input, shape index: {}]
  %s4 = inlined_call_operand.vmem [shape: f32[2,64,128], index: 4, kind: output, shape index: {}]
  %s5 = sld [smem:[#allocation0]]
  $region49: #{deeplab_wrapper_forward.3} parent=0
    _
  %s7 = ssub.s32 1, %s5
  %s8 = scalar_select 0, %s7, %s5
  loop: start=0, step=1, limit=4
  $region2: #{deeplab_wrapper_forward.3} parent=0 // loop_pre_header
    _
  $region3: #{deeplab_wrapper_forward.3} parent=0 // loop_header
    %s10 = sphi 0, %s14
    %p11 = scmp.ge.s32.totalorder %s10, 4
    %s17 = sphi 0, %s29
    %s18 = sphi 0, %s25
    %s19 = sphi 0, %s17
    %s20 = sphi 0, %s18
    %s21 = sphi 0, %s19
    %s22 = sphi 0, %s20
    %s32 = sphi 0, %s34
    %s35 = sphi 0, %s32
    %s36 = sphi 0, %s35
    %s52 = sphi 0, %s36
    %s56 = sphi 0, %s56
    %s58 = sphi 0, %s56
    %s59 = sphi 0, %s58
    %s73 = sphi 0, %s59
    %s77 = sphi 0, %s77
    %s79 = sphi 0, %s77
    %s80 = sphi 0, %s79
    %s94 = sphi 0, %s80
    %s98 = sphi 0, %s98
    %s100 = sphi 0, %s98
    %s101 = sphi 0, %s100
    %s115 = sphi 0, %s101
    %s123 = sphi 0, %s125
    %s126 = sphi 0, %s123
    %s127 = sphi 0, %s126
    %s143 = sphi 0, %s127
  $region4: #{deeplab_wrapper_forward.3} parent=0 // loop_header_branch
    %13 = sbr.rel (%p11) target = $region8
  $region5: #{deeplab_wrapper_forward.3} parent=0 // loop_body
    %s15 = ssub.s32 %s10, 1
    %s16 = ssub.s32 %s10, 2
    %s23 = sadd.s32 1, %s18
    %p24 = scmp.ge.s32.totalorder %s23, 1
    %s25 = scalar_select %p24, 0, %s23
    %s26 = sadd.s32 1, %s17
    %s27 = scalar_select %p24, %s26, %s17
    %p28 = scmp.ge.s32.totalorder %s27, 2
    %s29 = scalar_select %p28, 0, %s27
    %s30 = ssub.s32 %s17, %s29
    %p31 = scmp.eq.s32.totalorder %s30, 0
    %s33 = sadd.s32 %s32, 1
    %s34 = scalar_select %p31, %s32, %s33
    %p37 = pneg %p31
    %p38 = scmp.eq.s32.totalorder %s10, 1
    %p39 = por %p37, %p38
    %p40 = scmp.ne.s32.totalorder %s32, %s35
    %p41 = scmp.eq.s32.totalorder %s10, 0
    %p42 = por %p40, %p41
    %p43 = scmp.ne.s32.totalorder %s32, %s35
    %p44 = scmp.eq.s32.totalorder %s15, 1
    %p45 = por %p43, %p44
    %p46 = scmp.ne.s32.totalorder %s35, %s36
    %p47 = scmp.eq.s32.totalorder %s15, 0
    %p48 = por %p46, %p47
    %p49 = scmp.ne.s32.totalorder %s35, %s36
    %p50 = scmp.eq.s32.totalorder %s16, 1
    %p51 = por %p49, %p50
    %p53 = scmp.ne.s32.totalorder %s36, %s52
    %p54 = scmp.eq.s32.totalorder %s16, 0
    %p55 = por %p53, %p54
    %s57 = sadd.s32 %s56, 1
    %p60 = scmp.eq.s32.totalorder %s10, 1
    %p61 = scmp.ne.s32.totalorder %s56, %s58
    %p62 = scmp.eq.s32.totalorder %s10, 0
    %p63 = por %p61, %p62
    %p64 = scmp.ne.s32.totalorder %s56, %s58
    %p65 = scmp.eq.s32.totalorder %s15, 1
    %p66 = por %p64, %p65
    %p67 = scmp.ne.s32.totalorder %s58, %s59
    %p68 = scmp.eq.s32.totalorder %s15, 0
    %p69 = por %p67, %p68
    %p70 = scmp.ne.s32.totalorder %s58, %s59
    %p71 = scmp.eq.s32.totalorder %s16, 1
    %p72 = por %p70, %p71
    %p74 = scmp.ne.s32.totalorder %s59, %s73
    %p75 = scmp.eq.s32.totalorder %s16, 0
    %p76 = por %p74, %p75
    %s78 = sadd.s32 %s77, 1
    %p81 = scmp.eq.s32.totalorder %s10, 1
    %p82 = scmp.ne.s32.totalorder %s77, %s79
    %p83 = scmp.eq.s32.totalorder %s10, 0
    %p84 = por %p82, %p83
    %p85 = scmp.ne.s32.totalorder %s77, %s79
    %p86 = scmp.eq.s32.totalorder %s15, 1
    %p87 = por %p85, %p86
    %p88 = scmp.ne.s32.totalorder %s79, %s80
    %p89 = scmp.eq.s32.totalorder %s15, 0
    %p90 = por %p88, %p89
    %p91 = scmp.ne.s32.totalorder %s79, %s80
    %p92 = scmp.eq.s32.totalorder %s16, 1
    %p93 = por %p91, %p92
    %p95 = scmp.ne.s32.totalorder %s80, %s94
    %p96 = scmp.eq.s32.totalorder %s16, 0
    %p97 = por %p95, %p96
    %s99 = sadd.s32 %s98, 1
    %p102 = scmp.eq.s32.totalorder %s10, 1
    %p103 = scmp.ne.s32.totalorder %s98, %s100
    %p104 = scmp.eq.s32.totalorder %s10, 0
    %p105 = por %p103, %p104
    %p106 = scmp.ne.s32.totalorder %s98, %s100
    %p107 = scmp.eq.s32.totalorder %s15, 1
    %p108 = por %p106, %p107
    %p109 = scmp.ne.s32.totalorder %s100, %s101
    %p110 = scmp.eq.s32.totalorder %s15, 0
    %p111 = por %p109, %p110
    %p112 = scmp.ne.s32.totalorder %s100, %s101
    %p113 = scmp.eq.s32.totalorder %s16, 1
    %p114 = por %p112, %p113
    %p116 = scmp.ne.s32.totalorder %s101, %s115
    %p117 = scmp.eq.s32.totalorder %s16, 0
    %p118 = por %p116, %p117
    %s119 = ssub.s32 %s17, %s29
    %s120 = ssub.s32 %s18, %s25
    %s121 = sor.u32 %s119, %s120
    %p122 = scmp.eq.s32.totalorder %s121, 0
    %s124 = sadd.s32 %s123, 1
    %s125 = scalar_select %p122, %s123, %s124
    %p128 = pneg %p122
    %p129 = scmp.eq.s32.totalorder %s10, 1
    %p130 = por %p128, %p129
    %p131 = scmp.ne.s32.totalorder %s123, %s126
    %p132 = scmp.eq.s32.totalorder %s10, 0
    %p133 = por %p131, %p132
    %p134 = scmp.ne.s32.totalorder %s123, %s126
    %p135 = scmp.eq.s32.totalorder %s15, 1
    %p136 = por %p134, %p135
    %p137 = scmp.ne.s32.totalorder %s126, %s127
    %p138 = scmp.eq.s32.totalorder %s15, 0
    %p139 = por %p137, %p138
    %p140 = scmp.ne.s32.totalorder %s126, %s127
    %p141 = scmp.eq.s32.totalorder %s16, 1
    %p142 = por %p140, %p141
    %p144 = scmp.ne.s32.totalorder %s127, %s143
    %p145 = scmp.eq.s32.totalorder %s16, 0
    %p146 = por %p144, %p145
    %p147 = scmp.le.s32.totalorder 1, %s10
    %p148 = scmp.lt.s32.totalorder %s10, 3
    %p149 = pnand %p147, %p148
    %p150 = pneg %p149
    // Predicated region
    $region9: #{deeplab_wrapper_forward.3} parent=5 // pred_check
      _
    $region10: #{deeplab_wrapper_forward.3} parent=5 // pred_check_branch
      %152 = sbr.rel (%p149) target = $region12
    $region11: #{deeplab_wrapper_forward.3} parent=5 // pred_region
      %s153 = ssub.s32 %s10, 1
      // Predicated region
      $region13: #{deeplab_wrapper_forward.3} parent=11 // pred_check
        %p154 = pneg %p69
      $region14: #{deeplab_wrapper_forward.3} parent=11 // pred_check_branch
        %156 = sbr.rel (%p154) target = $region16
      $region15: #{deeplab_wrapper_forward.3} parent=11 // pred_region
        _
      $region16: #{deeplab_wrapper_forward.3} parent=11 // pred_fallthru
        _
      // Predicated region
      $region17: #{deeplab_wrapper_forward.3} parent=11 // pred_check
        %p157 = pneg %p90
      $region18: #{deeplab_wrapper_forward.3} parent=11 // pred_check_branch
        %159 = sbr.rel (%p157) target = $region20
      $region19: #{deeplab_wrapper_forward.3} parent=11 // pred_region
        _
      $region20: #{deeplab_wrapper_forward.3} parent=11 // pred_fallthru
        _
      // Predicated region
      $region21: #{deeplab_wrapper_forward.3} parent=11 // pred_check
        %p160 = pneg %p111
      $region22: #{deeplab_wrapper_forward.3} parent=11 // pred_check_branch
        %162 = sbr.rel (%p160) target = $region24
      $region23: #{deeplab_wrapper_forward.3} parent=11 // pred_region
        _
      $region24: #{deeplab_wrapper_forward.3} parent=11 // pred_fallthru
        _
    $region12: #{deeplab_wrapper_forward.3} parent=5 // pred_fallthru
      _
    %p163 = scmp.lt.s32.totalorder %s10, 2
    // Predicated region
    $region25: #{deeplab_wrapper_forward.3} parent=5 // pred_check
      %p164 = pneg %p163
    $region26: #{deeplab_wrapper_forward.3} parent=5 // pred_check_branch
      %166 = sbr.rel (%p164) target = $region28
    $region27: #{deeplab_wrapper_forward.3} parent=5 // pred_region
      // Predicated region
      $region29: #{deeplab_wrapper_forward.3} parent=27 // pred_check
        %p167 = pneg %p42
      $region30: #{deeplab_wrapper_forward.3} parent=27 // pred_check_branch
        %169 = sbr.rel (%p167) target = $region32
      $region31: #{deeplab_wrapper_forward.3} parent=27 // pred_region
        %p170 = scmp.lt.s32.totalorder %s17, 1
        %s171 = scalar_select %p170, %s17, 1
        %s172 = smul.addr %s171, 88
        %s173 = smul.addr %s172, 4
        %s174 = scalar_lea.vmem %s0, %s173
      $region32: #{deeplab_wrapper_forward.3} parent=27 // pred_fallthru
        _
    $region28: #{deeplab_wrapper_forward.3} parent=5 // pred_fallthru
      _
    %p175 = scmp.le.s32.totalorder 1, %s10
    %p176 = scmp.lt.s32.totalorder %s10, 3
    %p177 = pnand %p175, %p176
    %p178 = pneg %p177
    // Predicated region
    $region33: #{deeplab_wrapper_forward.3} parent=5 // pred_check
      _
    $region34: #{deeplab_wrapper_forward.3} parent=5 // pred_check_branch
      %180 = sbr.rel (%p177) target = $region36
    $region35: #{deeplab_wrapper_forward.3} parent=5 // pred_region
      %s181 = ssub.s32 %s10, 1
      %p182 = scmp.lt.s32.totalorder %s19, 1
      %s183 = scalar_select %p182, %s19, 1
      %s184 = smul.addr %s183, 88
      %s185 = smul.addr %s184, 4
      %s186 = scalar_lea.vmem %s0, %s185
      %p187 = pneg %p48
      %p188 = pneg %p45
      %p189 = pneg %p69
      %p190 = pneg %p66
      %p191 = pneg %p90
      %p192 = pneg %p87
      %p193 = pneg %p111
      %p194 = pneg %p108
      %p195 = pneg %p139
      %p196 = pneg %p136
      %s197 = smul.u32 8, %s20
      %p198 = scmp.lt.s32.totalorder %s19, 1
      %s199 = scalar_select %p198, %s19, 1
      %p200 = scmp.lt.s32.totalorder %s197, 7
      %s201 = scalar_select %p200, %s197, 7
      %s202 = smul.addr %s199, 8
      %s203 = sadd.s32 %s201, %s202
      %s204 = smul.addr %s203, 8
      %s205 = scalar_lea.vmem %s4, %s204
      %p206 = scmp.lt.s32.totalorder %s19, 1
      %s207 = scalar_select %p206, %s19, 1
      %s208 = smul.addr %s207, 88
      %s209 = smul.addr %s208, 4
      %s210 = scalar_lea.vmem %s0, %s209
      %s211 = smul.u32 8, %s20
      %p212 = scmp.lt.s32.totalorder %s19, 1
      %s213 = scalar_select %p212, %s19, 1
      %p214 = scmp.lt.s32.totalorder %s211, 7
      %s215 = scalar_select %p214, %s211, 7
      %s216 = smul.addr %s213, 8
      %s217 = sadd.s32 %s215, %s216
      %s218 = smul.addr %s217, 8
      %s219 = scalar_lea.vmem %s4, %s218
      %s220 = smul.u32 8, %s20
      %s222 = smul.u32 %s20, 8
      %223 = vst [vmem:[#allocation2] sm:$0xff] 0
      %224 = vst [vmem:[#allocation2 + $0x8] sm:$0xff] 0
      %225 = vst [vmem:[#allocation2 + $0x10] sm:$0xff] 0
      %226 = vst [vmem:[#allocation2 + $0x18] sm:$0xff] 0
      %227 = vst [vmem:[#allocation2 + $0x20] sm:$0xff] 0
      %228 = vst [vmem:[#allocation2 + $0x28] sm:$0xff] 0
      %229 = vst [vmem:[#allocation2 + $0x30] sm:$0xff] 0
      %230 = vst [vmem:[#allocation2 + $0x38] sm:$0xff] 0
      %s231 = smul.u32 %s222, 2
      %s232 = smul.addr %s231, 4
      %s233 = scalar_lea.vmem %s210, %s232
      %v234 = vld [vmem:[%s233] sm:$0xf]
      %v235 = vld [vmem:[%s233 + $0x8] sm:$0xf]
      %v236 = vld [vmem:[%s233 + $0x10] sm:$0xf]
      %v237 = vld [vmem:[%s233 + $0x18] sm:$0xf]
      %v238 = vld [vmem:[%s233 + $0x20] sm:$0xf]
      %v239 = vld [vmem:[%s233 + $0x28] sm:$0xf]
      %v240 = vld [vmem:[%s233 + $0x30] sm:$0xf]
      %v241 = vld [vmem:[%s233 + $0x38] sm:$0xf]
      %vm242 = vcmask 27648
      %243 = vst.msk [vmem:[#allocation2] sm:$0xf] %vm242, %v234
      %244 = vst.msk [vmem:[#allocation2 + $0x8] sm:$0xf] %vm242, %v235
      %245 = vst.msk [vmem:[#allocation2 + $0x10] sm:$0xf] %vm242, %v236
      %246 = vst.msk [vmem:[#allocation2 + $0x18] sm:$0xf] %vm242, %v237
      %247 = vst.msk [vmem:[#allocation2 + $0x20] sm:$0xf] %vm242, %v238
      %248 = vst.msk [vmem:[#allocation2 + $0x28] sm:$0xf] %vm242, %v239
      %249 = vst.msk [vmem:[#allocation2 + $0x30] sm:$0xf] %vm242, %v240
      %250 = vst.msk [vmem:[#allocation2 + $0x38] sm:$0xf] %vm242, %v241
      %s251 = sadd.s32 %s231, 22
      %s252 = smul.addr %s251, 4
      %s253 = scalar_lea.vmem %s210, %s252
      %v254 = vld [vmem:[%s253] sm:$0xf]
      %v255 = vld [vmem:[%s253 + $0x8] sm:$0xf]
      %v256 = vld [vmem:[%s253 + $0x10] sm:$0xf]
      %v257 = vld [vmem:[%s253 + $0x18] sm:$0xf]
      %v258 = vld [vmem:[%s253 + $0x20] sm:$0xf]
      %v259 = vld [vmem:[%s253 + $0x28] sm:$0xf]
      %v260 = vld [vmem:[%s253 + $0x30] sm:$0xf]
      %v261 = vld [vmem:[%s253 + $0x38] sm:$0xf]
      %270 = vrot.lane.b32.xlu0 %v254, 4
      %v271 = vpop.permute.xlu0 %270
      %272 = vrot.lane.b32.xlu0 %v255, 4
      %v273 = vpop.permute.xlu0 %272
      %274 = vrot.lane.b32.xlu0 %v256, 4
      %v275 = vpop.permute.xlu0 %274
      %276 = vrot.lane.b32.xlu0 %v257, 4
      %v277 = vpop.permute.xlu0 %276
      %278 = vrot.lane.b32.xlu0 %v258, 4
      %v279 = vpop.permute.xlu0 %278
      %280 = vrot.lane.b32.xlu0 %v259, 4
      %v281 = vpop.permute.xlu0 %280
      %282 = vrot.lane.b32.xlu0 %v260, 4
      %v283 = vpop.permute.xlu0 %282
      %284 = vrot.lane.b32.xlu0 %v261, 4
      %v285 = vpop.permute.xlu0 %284
      %vm294 = vcmask 60448
      %295 = vst.msk [vmem:[#allocation2] sm:$0xf] %vm294, %v271
      %296 = vst.msk [vmem:[#allocation2 + $0x8] sm:$0xf] %vm294, %v273
      %297 = vst.msk [vmem:[#allocation2 + $0x10] sm:$0xf] %vm294, %v275
      %298 = vst.msk [vmem:[#allocation2 + $0x18] sm:$0xf] %vm294, %v277
      %299 = vst.msk [vmem:[#allocation2 + $0x20] sm:$0xf] %vm294, %v279
      %300 = vst.msk [vmem:[#allocation2 + $0x28] sm:$0xf] %vm294, %v281
      %301 = vst.msk [vmem:[#allocation2 + $0x30] sm:$0xf] %vm294, %v283
      %302 = vst.msk [vmem:[#allocation2 + $0x38] sm:$0xf] %vm294, %v285
      %v303 = vld [vmem:[%s233] sm:$0xf]
      %v304 = vld [vmem:[%s233 + $0x4] sm:$0x1]
      %v305 = vld [vmem:[%s233 + $0x8] sm:$0xf]
      %v306 = vld [vmem:[%s233 + $0xc] sm:$0x1]
      %v307 = vld [vmem:[%s233 + $0x10] sm:$0xf]
      %v308 = vld [vmem:[%s233 + $0x14] sm:$0x1]
      %v309 = vld [vmem:[%s233 + $0x18] sm:$0xf]
      %v310 = vld [vmem:[%s233 + $0x1c] sm:$0x1]
      %v311 = vld [vmem:[%s233 + $0x20] sm:$0xf]
      %v312 = vld [vmem:[%s233 + $0x24] sm:$0x1]
      %v313 = vld [vmem:[%s233 + $0x28] sm:$0xf]
      %v314 = vld [vmem:[%s233 + $0x2c] sm:$0x1]
      %v315 = vld [vmem:[%s233 + $0x30] sm:$0xf]
      %v316 = vld [vmem:[%s233 + $0x34] sm:$0x1]
      %v317 = vld [vmem:[%s233 + $0x38] sm:$0xf]
      %v318 = vld [vmem:[%s233 + $0x3c] sm:$0x1]
      %vm319 = vsmask.f32 3328
      %vm320 = vsmask.f32 7440
      %vm321 = vmor %vm319, %vm320
      %v323 = vshrl.u32 %v303, 16
      %v325 = vrot.slane %v323, 4
      %v326 = vshll.u32 %v303, 16
      %v328 = vrot.slane %v326, 5
      %v329 = vor.u32 %v325, %v328
      %v330 = vrot.slane %v329, 4
      %v332 = vshll.u32 %v304, 16
      %v334 = vrot.slane %v332, 5
      %v335 = vsel %vm321, %v330, %v334
      %v337 = vshrl.u32 %v305, 16
      %v339 = vrot.slane %v337, 4
      %v340 = vshll.u32 %v305, 16
      %v342 = vrot.slane %v340, 5
      %v343 = vor.u32 %v339, %v342
      %v344 = vrot.slane %v343, 4
      %v346 = vshll.u32 %v306, 16
      %v348 = vrot.slane %v346, 5
      %v349 = vsel %vm321, %v344, %v348
      %v351 = vshrl.u32 %v307, 16
      %v353 = vrot.slane %v351, 4
      %v354 = vshll.u32 %v307, 16
      %v356 = vrot.slane %v354, 5
      %v357 = vor.u32 %v353, %v356
      %v358 = vrot.slane %v357, 4
      %v360 = vshll.u32 %v308, 16
      %v362 = vrot.slane %v360, 5
      %v363 = vsel %vm321, %v358, %v362
      %v365 = vshrl.u32 %v309, 16
      %v367 = vrot.slane %v365, 4
      %v368 = vshll.u32 %v309, 16
      %v370 = vrot.slane %v368, 5
      %v371 = vor.u32 %v367, %v370
      %v372 = vrot.slane %v371, 4
      %v374 = vshll.u32 %v310, 16
      %v376 = vrot.slane %v374, 5
      %v377 = vsel %vm321, %v372, %v376
      %v379 = vshrl.u32 %v311, 16
      %v381 = vrot.slane %v379, 4
      %v382 = vshll.u32 %v311, 16
      %v384 = vrot.slane %v382, 5
      %v385 = vor.u32 %v381, %v384
      %v386 = vrot.slane %v385, 4
      %v388 = vshll.u32 %v312, 16
      %v390 = vrot.slane %v388, 5
      %v391 = vsel %vm321, %v386, %v390
      %v393 = vshrl.u32 %v313, 16
      %v395 = vrot.slane %v393, 4
      %v396 = vshll.u32 %v313, 16
      %v398 = vrot.slane %v396, 5
      %v399 = vor.u32 %v395, %v398
      %v400 = vrot.slane %v399, 4
      %v402 = vshll.u32 %v314, 16
      %v404 = vrot.slane %v402, 5
      %v405 = vsel %vm321, %v400, %v404
      %v407 = vshrl.u32 %v315, 16
      %v409 = vrot.slane %v407, 4
      %v410 = vshll.u32 %v315, 16
      %v412 = vrot.slane %v410, 5
      %v413 = vor.u32 %v409, %v412
      %v414 = vrot.slane %v413, 4
      %v416 = vshll.u32 %v316, 16
      %v418 = vrot.slane %v416, 5
      %v419 = vsel %vm321, %v414, %v418
      %v421 = vshrl.u32 %v317, 16
      %v423 = vrot.slane %v421, 4
      %v424 = vshll.u32 %v317, 16
      %v426 = vrot.slane %v424, 5
      %v427 = vor.u32 %v423, %v426
      %v428 = vrot.slane %v427, 4
      %v430 = vshll.u32 %v318, 16
      %v432 = vrot.slane %v430, 5
      %v433 = vsel %vm321, %v428, %v432
      %434 = vrot.lane.b32.xlu0 %v335, 8
      %v435 = vpop.permute.xlu0 %434
      %436 = vrot.lane.b32.xlu0 %v349, 8
      %v437 = vpop.permute.xlu0 %436
      %438 = vrot.lane.b32.xlu0 %v363, 8
      %v439 = vpop.permute.xlu0 %438
      %440 = vrot.lane.b32.xlu0 %v377, 8
      %v441 = vpop.permute.xlu0 %440
      %442 = vrot.lane.b32.xlu0 %v391, 8
      %v443 = vpop.permute.xlu0 %442
      %444 = vrot.lane.b32.xlu0 %v405, 8
      %v445 = vpop.permute.xlu0 %444
      %446 = vrot.lane.b32.xlu0 %v419, 8
      %v447 = vpop.permute.xlu0 %446
      %448 = vrot.lane.b32.xlu0 %v433, 8
      %v449 = vpop.permute.xlu0 %448
      %vm458 = vcmask 93248
      %459 = vst.msk [vmem:[#allocation2] sm:$0xf] %vm458, %v435
      %460 = vst.msk [vmem:[#allocation2 + $0x8] sm:$0xf] %vm458, %v437
      %461 = vst.msk [vmem:[#allocation2 + $0x10] sm:$0xf] %vm458, %v439
      %462 = vst.msk [vmem:[#allocation2 + $0x18] sm:$0xf] %vm458, %v441
      %463 = vst.msk [vmem:[#allocation2 + $0x20] sm:$0xf] %vm458, %v443
      %464 = vst.msk [vmem:[#allocation2 + $0x28] sm:$0xf] %vm458, %v445
      %465 = vst.msk [vmem:[#allocation2 + $0x30] sm:$0xf] %vm458, %v447
      %466 = vst.msk [vmem:[#allocation2 + $0x38] sm:$0xf] %vm458, %v449
      %v467 = vld [vmem:[%s253] sm:$0xf]
      %v468 = vld [vmem:[%s253 + $0x4] sm:$0x1]
      %v469 = vld [vmem:[%s253 + $0x8] sm:$0xf]
      %v470 = vld [vmem:[%s253 + $0xc] sm:$0x1]
      %v471 = vld [vmem:[%s253 + $0x10] sm:$0xf]
      %v472 = vld [vmem:[%s253 + $0x14] sm:$0x1]
      %v473 = vld [vmem:[%s253 + $0x18] sm:$0xf]
      %v474 = vld [vmem:[%s253 + $0x1c] sm:$0x1]
      %v475 = vld [vmem:[%s253 + $0x20] sm:$0xf]
      %v476 = vld [vmem:[%s253 + $0x24] sm:$0x1]
      %v477 = vld [vmem:[%s253 + $0x28] sm:$0xf]
      %v478 = vld [vmem:[%s253 + $0x2c] sm:$0x1]
      %v479 = vld [vmem:[%s253 + $0x30] sm:$0xf]
      %v480 = vld [vmem:[%s253 + $0x34] sm:$0x1]
      %v481 = vld [vmem:[%s253 + $0x38] sm:$0xf]
      %v482 = vld [vmem:[%s253 + $0x3c] sm:$0x1]
      %v484 = vshrl.u32 %v467, 16
      %v486 = vrot.slane %v484, 4
      %v487 = vshll.u32 %v467, 16
      %v489 = vrot.slane %v487, 5
      %v490 = vor.u32 %v486, %v489
      %v491 = vrot.slane %v490, 4
      %v493 = vshll.u32 %v468, 16
      %v495 = vrot.slane %v493, 5
      %v496 = vsel %vm321, %v491, %v495
      %v498 = vshrl.u32 %v469, 16
      %v500 = vrot.slane %v498, 4
      %v501 = vshll.u32 %v469, 16
      %v503 = vrot.slane %v501, 5
      %v504 = vor.u32 %v500, %v503
      %v505 = vrot.slane %v504, 4
      %v507 = vshll.u32 %v470, 16
      %v509 = vrot.slane %v507, 5
      %v510 = vsel %vm321, %v505, %v509
      %v512 = vshrl.u32 %v471, 16
      %v514 = vrot.slane %v512, 4
      %v515 = vshll.u32 %v471, 16
      %v517 = vrot.slane %v515, 5
      %v518 = vor.u32 %v514, %v517
      %v519 = vrot.slane %v518, 4
      %v521 = vshll.u32 %v472, 16
      %v523 = vrot.slane %v521, 5
      %v524 = vsel %vm321, %v519, %v523
      %v526 = vshrl.u32 %v473, 16
      %v528 = vrot.slane %v526, 4
      %v529 = vshll.u32 %v473, 16
      %v531 = vrot.slane %v529, 5
      %v532 = vor.u32 %v528, %v531
      %v533 = vrot.slane %v532, 4
      %v535 = vshll.u32 %v474, 16
      %v537 = vrot.slane %v535, 5
      %v538 = vsel %vm321, %v533, %v537
      %v540 = vshrl.u32 %v475, 16
      %v542 = vrot.slane %v540, 4
      %v543 = vshll.u32 %v475, 16
      %v545 = vrot.slane %v543, 5
      %v546 = vor.u32 %v542, %v545
      %v547 = vrot.slane %v546, 4
      %v549 = vshll.u32 %v476, 16
      %v551 = vrot.slane %v549, 5
      %v552 = vsel %vm321, %v547, %v551
      %v554 = vshrl.u32 %v477, 16
      %v556 = vrot.slane %v554, 4
      %v557 = vshll.u32 %v477, 16
      %v559 = vrot.slane %v557, 5
      %v560 = vor.u32 %v556, %v559
      %v561 = vrot.slane %v560, 4
      %v563 = vshll.u32 %v478, 16
      %v565 = vrot.slane %v563, 5
      %v566 = vsel %vm321, %v561, %v565
      %v568 = vshrl.u32 %v479, 16
      %v570 = vrot.slane %v568, 4
      %v571 = vshll.u32 %v479, 16
      %v573 = vrot.slane %v571, 5
      %v574 = vor.u32 %v570, %v573
      %v575 = vrot.slane %v574, 4
      %v577 = vshll.u32 %v480, 16
      %v579 = vrot.slane %v577, 5
      %v580 = vsel %vm321, %v575, %v579
      %v582 = vshrl.u32 %v481, 16
      %v584 = vrot.slane %v582, 4
      %v585 = vshll.u32 %v481, 16
      %v587 = vrot.slane %v585, 5
      %v588 = vor.u32 %v584, %v587
      %v589 = vrot.slane %v588, 4
      %v591 = vshll.u32 %v482, 16
      %v593 = vrot.slane %v591, 5
      %v594 = vsel %vm321, %v589, %v593
      %595 = vrot.lane.b32.xlu0 %v496, 12
      %v596 = vpop.permute.xlu0 %595
      %597 = vrot.lane.b32.xlu0 %v510, 12
      %v598 = vpop.permute.xlu0 %597
      %599 = vrot.lane.b32.xlu0 %v524, 12
      %v600 = vpop.permute.xlu0 %599
      %601 = vrot.lane.b32.xlu0 %v538, 12
      %v602 = vpop.permute.xlu0 %601
      %603 = vrot.lane.b32.xlu0 %v552, 12
      %v604 = vpop.permute.xlu0 %603
      %605 = vrot.lane.b32.xlu0 %v566, 12
      %v606 = vpop.permute.xlu0 %605
      %607 = vrot.lane.b32.xlu0 %v580, 12
      %v608 = vpop.permute.xlu0 %607
      %609 = vrot.lane.b32.xlu0 %v594, 12
      %v610 = vpop.permute.xlu0 %609
      %vm619 = vcmask 126048
      %620 = vst.msk [vmem:[#allocation2] sm:$0xf] %vm619, %v596
      %621 = vst.msk [vmem:[#allocation2 + $0x8] sm:$0xf] %vm619, %v598
      %622 = vst.msk [vmem:[#allocation2 + $0x10] sm:$0xf] %vm619, %v600
      %623 = vst.msk [vmem:[#allocation2 + $0x18] sm:$0xf] %vm619, %v602
      %624 = vst.msk [vmem:[#allocation2 + $0x20] sm:$0xf] %vm619, %v604
      %625 = vst.msk [vmem:[#allocation2 + $0x28] sm:$0xf] %vm619, %v606
      %626 = vst.msk [vmem:[#allocation2 + $0x30] sm:$0xf] %vm619, %v608
      %627 = vst.msk [vmem:[#allocation2 + $0x38] sm:$0xf] %vm619, %v610
      %v628 = vld [vmem:[%s233] sm:$0xe]
      %v629 = vld [vmem:[%s233 + $0x4] sm:$0x1]
      %v630 = vld [vmem:[%s233 + $0x8] sm:$0xe]
      %v631 = vld [vmem:[%s233 + $0xc] sm:$0x1]
      %v632 = vld [vmem:[%s233 + $0x10] sm:$0xe]
      %v633 = vld [vmem:[%s233 + $0x14] sm:$0x1]
      %v634 = vld [vmem:[%s233 + $0x18] sm:$0xe]
      %v635 = vld [vmem:[%s233 + $0x1c] sm:$0x1]
      %v636 = vld [vmem:[%s233 + $0x20] sm:$0xe]
      %v637 = vld [vmem:[%s233 + $0x24] sm:$0x1]
      %v638 = vld [vmem:[%s233 + $0x28] sm:$0xe]
      %v639 = vld [vmem:[%s233 + $0x2c] sm:$0x1]
      %v640 = vld [vmem:[%s233 + $0x30] sm:$0xe]
      %v641 = vld [vmem:[%s233 + $0x34] sm:$0x1]
      %v642 = vld [vmem:[%s233 + $0x38] sm:$0xe]
      %v643 = vld [vmem:[%s233 + $0x3c] sm:$0x1]
      %vm660 = vcmask 1042432
      %vm661 = vcmask 1046532
      %vm662 = vmor %vm660, %vm661
      %v663 = vrot.slane %v628, 5
      %v664 = vrot.slane %v663, 4
      %v665 = vrot.slane %v629, 5
      %v666 = vsel %vm662, %v664, %v665
      %v667 = vrot.slane %v630, 5
      %v668 = vrot.slane %v667, 4
      %v669 = vrot.slane %v631, 5
      %v670 = vsel %vm662, %v668, %v669
      %v671 = vrot.slane %v632, 5
      %v672 = vrot.slane %v671, 4
      %v673 = vrot.slane %v633, 5
      %v674 = vsel %vm662, %v672, %v673
      %v675 = vrot.slane %v634, 5
      %v676 = vrot.slane %v675, 4
      %v677 = vrot.slane %v635, 5
      %v678 = vsel %vm662, %v676, %v677
      %v679 = vrot.slane %v636, 5
      %v680 = vrot.slane %v679, 4
      %v681 = vrot.slane %v637, 5
      %v682 = vsel %vm662, %v680, %v681
      %v683 = vrot.slane %v638, 5
      %v684 = vrot.slane %v683, 4
      %v685 = vrot.slane %v639, 5
      %v686 = vsel %vm662, %v684, %v685
      %v687 = vrot.slane %v640, 5
      %v688 = vrot.slane %v687, 4
      %v689 = vrot.slane %v641, 5
      %v690 = vsel %vm662, %v688, %v689
      %v691 = vrot.slane %v642, 5
      %v692 = vrot.slane %v691, 4
      %v693 = vrot.slane %v643, 5
      %v694 = vsel %vm662, %v692, %v693
      %695 = vrot.lane.b32.xlu0 %v666, 16
      %v696 = vpop.permute.xlu0 %695
      %697 = vrot.lane.b32.xlu0 %v670, 16
      %v698 = vpop.permute.xlu0 %697
      %699 = vrot.lane.b32.xlu0 %v674, 16
      %v700 = vpop.permute.xlu0 %699
      %701 = vrot.lane.b32.xlu0 %v678, 16
      %v702 = vpop.permute.xlu0 %701
      %703 = vrot.lane.b32.xlu0 %v682, 16
      %v704 = vpop.permute.xlu0 %703
      %705 = vrot.lane.b32.xlu0 %v686, 16
      %v706 = vpop.permute.xlu0 %705
      %707 = vrot.lane.b32.xlu0 %v690, 16
      %v708 = vpop.permute.xlu0 %707
      %709 = vrot.lane.b32.xlu0 %v694, 16
      %v710 = vpop.permute.xlu0 %709
      %vm719 = vcmask 158848
      %720 = vst.msk [vmem:[#allocation2] sm:$0xf] %vm719, %v696
      %721 = vst.msk [vmem:[#allocation2 + $0x8] sm:$0xf] %vm719, %v698
      %722 = vst.msk [vmem:[#allocation2 + $0x10] sm:$0xf] %vm719, %v700
      %723 = vst.msk [vmem:[#allocation2 + $0x18] sm:$0xf] %vm719, %v702
      %724 = vst.msk [vmem:[#allocation2 + $0x20] sm:$0xf] %vm719, %v704
      %725 = vst.msk [vmem:[#allocation2 + $0x28] sm:$0xf] %vm719, %v706
      %726 = vst.msk [vmem:[#allocation2 + $0x30] sm:$0xf] %vm719, %v708
      %727 = vst.msk [vmem:[#allocation2 + $0x38] sm:$0xf] %vm719, %v710
      %v728 = vld [vmem:[%s253] sm:$0xe]
      %v729 = vld [vmem:[%s253 + $0x4] sm:$0x1]
      %v730 = vld [vmem:[%s253 + $0x8] sm:$0xe]
      %v731 = vld [vmem:[%s253 + $0xc] sm:$0x1]
      %v732 = vld [vmem:[%s253 + $0x10] sm:$0xe]
      %v733 = vld [vmem:[%s253 + $0x14] sm:$0x1]
      %v734 = vld [vmem:[%s253 + $0x18] sm:$0xe]
      %v735 = vld [vmem:[%s253 + $0x1c] sm:$0x1]
      %v736 = vld [vmem:[%s253 + $0x20] sm:$0xe]
      %v737 = vld [vmem:[%s253 + $0x24] sm:$0x1]
      %v738 = vld [vmem:[%s253 + $0x28] sm:$0xe]
      %v739 = vld [vmem:[%s253 + $0x2c] sm:$0x1]
      %v740 = vld [vmem:[%s253 + $0x30] sm:$0xe]
      %v741 = vld [vmem:[%s253 + $0x34] sm:$0x1]
      %v742 = vld [vmem:[%s253 + $0x38] sm:$0xe]
      %v743 = vld [vmem:[%s253 + $0x3c] sm:$0x1]
      %v760 = vrot.slane %v728, 5
      %v761 = vrot.slane %v760, 4
      %v762 = vrot.slane %v729, 5
      %v763 = vsel %vm662, %v761, %v762
      %v764 = vrot.slane %v730, 5
      %v765 = vrot.slane %v764, 4
      %v766 = vrot.slane %v731, 5
      %v767 = vsel %vm662, %v765, %v766
      %v768 = vrot.slane %v732, 5
      %v769 = vrot.slane %v768, 4
      %v770 = vrot.slane %v733, 5
      %v771 = vsel %vm662, %v769, %v770
      %v772 = vrot.slane %v734, 5
      %v773 = vrot.slane %v772, 4
      %v774 = vrot.slane %v735, 5
      %v775 = vsel %vm662, %v773, %v774
      %v776 = vrot.slane %v736, 5
      %v777 = vrot.slane %v776, 4
      %v778 = vrot.slane %v737, 5
      %v779 = vsel %vm662, %v777, %v778
      %v780 = vrot.slane %v738, 5
      %v781 = vrot.slane %v780, 4
      %v782 = vrot.slane %v739, 5
      %v783 = vsel %vm662, %v781, %v782
      %v784 = vrot.slane %v740, 5
      %v785 = vrot.slane %v784, 4
      %v786 = vrot.slane %v741, 5
      %v787 = vsel %vm662, %v785, %v786
      %v788 = vrot.slane %v742, 5
      %v789 = vrot.slane %v788, 4
      %v790 = vrot.slane %v743, 5
      %v791 = vsel %vm662, %v789, %v790
      %792 = vrot.lane.b32.xlu0 %v763, 20
      %v793 = vpop.permute.xlu0 %792
      %794 = vrot.lane.b32.xlu0 %v767, 20
      %v795 = vpop.permute.xlu0 %794
      %796 = vrot.lane.b32.xlu0 %v771, 20
      %v797 = vpop.permute.xlu0 %796
      %798 = vrot.lane.b32.xlu0 %v775, 20
      %v799 = vpop.permute.xlu0 %798
      %800 = vrot.lane.b32.xlu0 %v779, 20
      %v801 = vpop.permute.xlu0 %800
      %802 = vrot.lane.b32.xlu0 %v783, 20
      %v803 = vpop.permute.xlu0 %802
      %804 = vrot.lane.b32.xlu0 %v787, 20
      %v805 = vpop.permute.xlu0 %804
      %806 = vrot.lane.b32.xlu0 %v791, 20
      %v807 = vpop.permute.xlu0 %806
      %vm816 = vcmask 191648
      %817 = vst.msk [vmem:[#allocation2] sm:$0xf] %vm816, %v793
      %818 = vst.msk [vmem:[#allocation2 + $0x8] sm:$0xf] %vm816, %v795
      %819 = vst.msk [vmem:[#allocation2 + $0x10] sm:$0xf] %vm816, %v797
      %820 = vst.msk [vmem:[#allocation2 + $0x18] sm:$0xf] %vm816, %v799
      %821 = vst.msk [vmem:[#allocation2 + $0x20] sm:$0xf] %vm816, %v801
      %822 = vst.msk [vmem:[#allocation2 + $0x28] sm:$0xf] %vm816, %v803
      %823 = vst.msk [vmem:[#allocation2 + $0x30] sm:$0xf] %vm816, %v805
      %824 = vst.msk [vmem:[#allocation2 + $0x38] sm:$0xf] %vm816, %v807
      %v825 = vld [vmem:[%s233] sm:$0xe]
      %v826 = vld [vmem:[%s233 + $0x4] sm:$0x3]
      %v827 = vld [vmem:[%s233 + $0x8] sm:$0xe]
      %v828 = vld [vmem:[%s233 + $0xc] sm:$0x3]
      %v829 = vld [vmem:[%s233 + $0x10] sm:$0xe]
      %v830 = vld [vmem:[%s233 + $0x14] sm:$0x3]
      %v831 = vld [vmem:[%s233 + $0x18] sm:$0xe]
      %v832 = vld [vmem:[%s233 + $0x1c] sm:$0x3]
      %v833 = vld [vmem:[%s233 + $0x20] sm:$0xe]
      %v834 = vld [vmem:[%s233 + $0x24] sm:$0x3]
      %v835 = vld [vmem:[%s233 + $0x28] sm:$0xe]
      %v836 = vld [vmem:[%s233 + $0x2c] sm:$0x3]
      %v837 = vld [vmem:[%s233 + $0x30] sm:$0xe]
      %v838 = vld [vmem:[%s233 + $0x34] sm:$0x3]
      %v839 = vld [vmem:[%s233 + $0x38] sm:$0xe]
      %v840 = vld [vmem:[%s233 + $0x3c] sm:$0x3]
      %vm841 = vsmask.f32 2304
      %vm842 = vsmask.f32 6416
      %vm843 = vmor %vm841, %vm842
      %v845 = vshrl.u32 %v825, 16
      %v847 = vrot.slane %v845, 5
      %v848 = vshll.u32 %v825, 16
      %v850 = vrot.slane %v848, 6
      %v851 = vor.u32 %v847, %v850
      %v852 = vrot.slane %v851, 4
      %v854 = vshrl.u32 %v826, 16
      %v856 = vrot.slane %v854, 5
      %v857 = vshll.u32 %v826, 16
      %v859 = vrot.slane %v857, 6
      %v860 = vor.u32 %v856, %v859
      %v861 = vsel %vm843, %v852, %v860
      %v863 = vshrl.u32 %v827, 16
      %v865 = vrot.slane %v863, 5
      %v866 = vshll.u32 %v827, 16
      %v868 = vrot.slane %v866, 6
      %v869 = vor.u32 %v865, %v868
      %v870 = vrot.slane %v869, 4
      %v872 = vshrl.u32 %v828, 16
      %v874 = vrot.slane %v872, 5
      %v875 = vshll.u32 %v828, 16
      %v877 = vrot.slane %v875, 6
      %v878 = vor.u32 %v874, %v877
      %v879 = vsel %vm843, %v870, %v878
      %v881 = vshrl.u32 %v829, 16
      %v883 = vrot.slane %v881, 5
      %v884 = vshll.u32 %v829, 16
      %v886 = vrot.slane %v884, 6
      %v887 = vor.u32 %v883, %v886
      %v888 = vrot.slane %v887, 4
      %v890 = vshrl.u32 %v830, 16
      %v892 = vrot.slane %v890, 5
      %v893 = vshll.u32 %v830, 16
      %v895 = vrot.slane %v893, 6
      %v896 = vor.u32 %v892, %v895
      %v897 = vsel %vm843, %v888, %v896
      %v899 = vshrl.u32 %v831, 16
      %v901 = vrot.slane %v899, 5
      %v902 = vshll.u32 %v831, 16
      %v904 = vrot.slane %v902, 6
      %v905 = vor.u32 %v901, %v904
      %v906 = vrot.slane %v905, 4
      %v908 = vshrl.u32 %v832, 16
      %v910 = vrot.slane %v908, 5
      %v911 = vshll.u32 %v832, 16
      %v913 = vrot.slane %v911, 6
      %v914 = vor.u32 %v910, %v913
      %v915 = vsel %vm843, %v906, %v914
      %v917 = vshrl.u32 %v833, 16
      %v919 = vrot.slane %v917, 5
      %v920 = vshll.u32 %v833, 16
      %v922 = vrot.slane %v920, 6
      %v923 = vor.u32 %v919, %v922
      %v924 = vrot.slane %v923, 4
      %v926 = vshrl.u32 %v834, 16
      %v928 = vrot.slane %v926, 5
      %v929 = vshll.u32 %v834, 16
      %v931 = vrot.slane %v929, 6
      %v932 = vor.u32 %v928, %v931
      %v933 = vsel %vm843, %v924, %v932
      %v935 = vshrl.u32 %v835, 16
      %v937 = vrot.slane %v935, 5
      %v938 = vshll.u32 %v835, 16
      %v940 = vrot.slane %v938, 6
      %v941 = vor.u32 %v937, %v940
      %v942 = vrot.slane %v941, 4
      %v944 = vshrl.u32 %v836, 16
      %v946 = vrot.slane %v944, 5
      %v947 = vshll.u32 %v836, 16
      %v949 = vrot.slane %v947, 6
      %v950 = vor.u32 %v946, %v949
      %v951 = vsel %vm843, %v942, %v950
      %v953 = vshrl.u32 %v837, 16
      %v955 = vrot.slane %v953, 5
      %v956 = vshll.u32 %v837, 16
      %v958 = vrot.slane %v956, 6
      %v959 = vor.u32 %v955, %v958
      %v960 = vrot.slane %v959, 4
      %v962 = vshrl.u32 %v838, 16
      %v964 = vrot.slane %v962, 5
      %v965 = vshll.u32 %v838, 16
      %v967 = vrot.slane %v965, 6
      %v968 = vor.u32 %v964, %v967
      %v969 = vsel %vm843, %v960, %v968
      %v971 = vshrl.u32 %v839, 16
      %v973 = vrot.slane %v971, 5
      %v974 = vshll.u32 %v839, 16
      %v976 = vrot.slane %v974, 6
      %v977 = vor.u32 %v973, %v976
      %v978 = vrot.slane %v977, 4
      %v980 = vshrl.u32 %v840, 16
      %v982 = vrot.slane %v980, 5
      %v983 = vshll.u32 %v840, 16
      %v985 = vrot.slane %v983, 6
      %v986 = vor.u32 %v982, %v985
      %v987 = vsel %vm843, %v978, %v986
      %988 = vrot.lane.b32.xlu0 %v861, 24
      %v989 = vpop.permute.xlu0 %988
      %990 = vrot.lane.b32.xlu0 %v879, 24
      %v991 = vpop.permute.xlu0 %990
      %992 = vrot.lane.b32.xlu0 %v897, 24
      %v993 = vpop.permute.xlu0 %992
      %994 = vrot.lane.b32.xlu0 %v915, 24
      %v995 = vpop.permute.xlu0 %994
      %996 = vrot.lane.b32.xlu0 %v933, 24
      %v997 = vpop.permute.xlu0 %996
      %998 = vrot.lane.b32.xlu0 %v951, 24
      %v999 = vpop.permute.xlu0 %998
      %1000 = vrot.lane.b32.xlu0 %v969, 24
      %v1001 = vpop.permute.xlu0 %1000
      %1002 = vrot.lane.b32.xlu0 %v987, 24
      %v1003 = vpop.permute.xlu0 %1002
      %vm1012 = vcmask 224448
      %1013 = vst.msk [vmem:[#allocation2] sm:$0xf] %vm1012, %v989
      %1014 = vst.msk [vmem:[#allocation2 + $0x8] sm:$0xf] %vm1012, %v991
      %1015 = vst.msk [vmem:[#allocation2 + $0x10] sm:$0xf] %vm1012, %v993
      %1016 = vst.msk [vmem:[#allocation2 + $0x18] sm:$0xf] %vm1012, %v995
      %1017 = vst.msk [vmem:[#allocation2 + $0x20] sm:$0xf] %vm1012, %v997
      %1018 = vst.msk [vmem:[#allocation2 + $0x28] sm:$0xf] %vm1012, %v999
      %1019 = vst.msk [vmem:[#allocation2 + $0x30] sm:$0xf] %vm1012, %v1001
      %1020 = vst.msk [vmem:[#allocation2 + $0x38] sm:$0xf] %vm1012, %v1003
      %s1021 = sadd.s32 %s231, 44
      %s1022 = smul.addr %s1021, 4
      %s1023 = scalar_lea.vmem %s210, %s1022
      %v1024 = vld [vmem:[%s1023] sm:$0xf]
      %v1025 = vld [vmem:[%s1023 + $0x8] sm:$0xf]
      %v1026 = vld [vmem:[%s1023 + $0x10] sm:$0xf]
      %v1027 = vld [vmem:[%s1023 + $0x18] sm:$0xf]
      %v1028 = vld [vmem:[%s1023 + $0x20] sm:$0xf]
      %v1029 = vld [vmem:[%s1023 + $0x28] sm:$0xf]
      %v1030 = vld [vmem:[%s1023 + $0x30] sm:$0xf]
      %v1031 = vld [vmem:[%s1023 + $0x38] sm:$0xf]
      %1040 = vrot.lane.b32.xlu0 %v1024, 28
      %v1041 = vpop.permute.xlu0 %1040
      %1042 = vrot.lane.b32.xlu0 %v1025, 28
      %v1043 = vpop.permute.xlu0 %1042
      %1044 = vrot.lane.b32.xlu0 %v1026, 28
      %v1045 = vpop.permute.xlu0 %1044
      %1046 = vrot.lane.b32.xlu0 %v1027, 28
      %v1047 = vpop.permute.xlu0 %1046
      %1048 = vrot.lane.b32.xlu0 %v1028, 28
      %v1049 = vpop.permute.xlu0 %1048
      %1050 = vrot.lane.b32.xlu0 %v1029, 28
      %v1051 = vpop.permute.xlu0 %1050
      %1052 = vrot.lane.b32.xlu0 %v1030, 28
      %v1053 = vpop.permute.xlu0 %1052
      %1054 = vrot.lane.b32.xlu0 %v1031, 28
      %v1055 = vpop.permute.xlu0 %1054
      %vm1064 = vcmask 257248
      %1065 = vst.msk [vmem:[#allocation2] sm:$0xf] %vm1064, %v1041
      %1066 = vst.msk [vmem:[#allocation2 + $0x8] sm:$0xf] %vm1064, %v1043
      %1067 = vst.msk [vmem:[#allocation2 + $0x10] sm:$0xf] %vm1064, %v1045
      %1068 = vst.msk [vmem:[#allocation2 + $0x18] sm:$0xf] %vm1064, %v1047
      %1069 = vst.msk [vmem:[#allocation2 + $0x20] sm:$0xf] %vm1064, %v1049
      %1070 = vst.msk [vmem:[#allocation2 + $0x28] sm:$0xf] %vm1064, %v1051
      %1071 = vst.msk [vmem:[#allocation2 + $0x30] sm:$0xf] %vm1064, %v1053
      %1072 = vst.msk [vmem:[#allocation2 + $0x38] sm:$0xf] %vm1064, %v1055
      %s1073 = sadd.s32 %s231, 66
      %s1074 = smul.addr %s1073, 4
      %s1075 = scalar_lea.vmem %s210, %s1074
      %v1076 = vld [vmem:[%s1075] sm:$0xf]
      %v1077 = vld [vmem:[%s1075 + $0x8] sm:$0xf]
      %v1078 = vld [vmem:[%s1075 + $0x10] sm:$0xf]
      %v1079 = vld [vmem:[%s1075 + $0x18] sm:$0xf]
      %v1080 = vld [vmem:[%s1075 + $0x20] sm:$0xf]
      %v1081 = vld [vmem:[%s1075 + $0x28] sm:$0xf]
      %v1082 = vld [vmem:[%s1075 + $0x30] sm:$0xf]
      %v1083 = vld [vmem:[%s1075 + $0x38] sm:$0xf]
      %1092 = vrot.lane.b32.xlu0 %v1076, 32
      %v1093 = vpop.permute.xlu0 %1092
      %1094 = vrot.lane.b32.xlu0 %v1077, 32
      %v1095 = vpop.permute.xlu0 %1094
      %1096 = vrot.lane.b32.xlu0 %v1078, 32
      %v1097 = vpop.permute.xlu0 %1096
      %1098 = vrot.lane.b32.xlu0 %v1079, 32
      %v1099 = vpop.permute.xlu0 %1098
      %1100 = vrot.lane.b32.xlu0 %v1080, 32
      %v1101 = vpop.permute.xlu0 %1100
      %1102 = vrot.lane.b32.xlu0 %v1081, 32
      %v1103 = vpop.permute.xlu0 %1102
      %1104 = vrot.lane.b32.xlu0 %v1082, 32
      %v1105 = vpop.permute.xlu0 %1104
      %1106 = vrot.lane.b32.xlu0 %v1083, 32
      %v1107 = vpop.permute.xlu0 %1106
      %vm1116 = vcmask 290048
      %1117 = vst.msk [vmem:[#allocation2] sm:$0xf] %vm1116, %v1093
      %1118 = vst.msk [vmem:[#allocation2 + $0x8] sm:$0xf] %vm1116, %v1095
      %1119 = vst.msk [vmem:[#allocation2 + $0x10] sm:$0xf] %vm1116, %v1097
      %1120 = vst.msk [vmem:[#allocation2 + $0x18] sm:$0xf] %vm1116, %v1099
      %1121 = vst.msk [vmem:[#allocation2 + $0x20] sm:$0xf] %vm1116, %v1101
      %1122 = vst.msk [vmem:[#allocation2 + $0x28] sm:$0xf] %vm1116, %v1103
      %1123 = vst.msk [vmem:[#allocation2 + $0x30] sm:$0xf] %vm1116, %v1105
      %1124 = vst.msk [vmem:[#allocation2 + $0x38] sm:$0xf] %vm1116, %v1107
      %v1125 = vld [vmem:[%s1023] sm:$0xf]
      %v1126 = vld [vmem:[%s1023 + $0x4] sm:$0x1]
      %v1127 = vld [vmem:[%s1023 + $0x8] sm:$0xf]
      %v1128 = vld [vmem:[%s1023 + $0xc] sm:$0x1]
      %v1129 = vld [vmem:[%s1023 + $0x10] sm:$0xf]
      %v1130 = vld [vmem:[%s1023 + $0x14] sm:$0x1]
      %v1131 = vld [vmem:[%s1023 + $0x18] sm:$0xf]
      %v1132 = vld [vmem:[%s1023 + $0x1c] sm:$0x1]
      %v1133 = vld [vmem:[%s1023 + $0x20] sm:$0xf]
      %v1134 = vld [vmem:[%s1023 + $0x24] sm:$0x1]
      %v1135 = vld [vmem:[%s1023 + $0x28] sm:$0xf]
      %v1136 = vld [vmem:[%s1023 + $0x2c] sm:$0x1]
      %v1137 = vld [vmem:[%s1023 + $0x30] sm:$0xf]
      %v1138 = vld [vmem:[%s1023 + $0x34] sm:$0x1]
      %v1139 = vld [vmem:[%s1023 + $0x38] sm:$0xf]
      %v1140 = vld [vmem:[%s1023 + $0x3c] sm:$0x1]
      %v1142 = vshrl.u32 %v1125, 16
      %v1144 = vrot.slane %v1142, 4
      %v1145 = vshll.u32 %v1125, 16
      %v1147 = vrot.slane %v1145, 5
      %v1148 = vor.u32 %v1144, %v1147
      %v1149 = vrot.slane %v1148, 4
      %v1151 = vshll.u32 %v1126, 16
      %v1153 = vrot.slane %v1151, 5
      %v1154 = vsel %vm321, %v1149, %v1153
      %v1156 = vshrl.u32 %v1127, 16
      %v1158 = vrot.slane %v1156, 4
      %v1159 = vshll.u32 %v1127, 16
      %v1161 = vrot.slane %v1159, 5
      %v1162 = vor.u32 %v1158, %v1161
      %v1163 = vrot.slane %v1162, 4
      %v1165 = vshll.u32 %v1128, 16
      %v1167 = vrot.slane %v1165, 5
      %v1168 = vsel %vm321, %v1163, %v1167
      %v1170 = vshrl.u32 %v1129, 16
      %v1172 = vrot.slane %v1170, 4
      %v1173 = vshll.u32 %v1129, 16
      %v1175 = vrot.slane %v1173, 5
      %v1176 = vor.u32 %v1172, %v1175
      %v1177 = vrot.slane %v1176, 4
      %v1179 = vshll.u32 %v1130, 16
      %v1181 = vrot.slane %v1179, 5
      %v1182 = vsel %vm321, %v1177, %v1181
      %v1184 = vshrl.u32 %v1131, 16
      %v1186 = vrot.slane %v1184, 4
      %v1187 = vshll.u32 %v1131, 16
      %v1189 = vrot.slane %v1187, 5
      %v1190 = vor.u32 %v1186, %v1189
      %v1191 = vrot.slane %v1190, 4
      %v1193 = vshll.u32 %v1132, 16
      %v1195 = vrot.slane %v1193, 5
      %v1196 = vsel %vm321, %v1191, %v1195
      %v1198 = vshrl.u32 %v1133, 16
      %v1200 = vrot.slane %v1198, 4
      %v1201 = vshll.u32 %v1133, 16
      %v1203 = vrot.slane %v1201, 5
      %v1204 = vor.u32 %v1200, %v1203
      %v1205 = vrot.slane %v1204, 4
      %v1207 = vshll.u32 %v1134, 16
      %v1209 = vrot.slane %v1207, 5
      %v1210 = vsel %vm321, %v1205, %v1209
      %v1212 = vshrl.u32 %v1135, 16
      %v1214 = vrot.slane %v1212, 4
      %v1215 = vshll.u32 %v1135, 16
      %v1217 = vrot.slane %v1215, 5
      %v1218 = vor.u32 %v1214, %v1217
      %v1219 = vrot.slane %v1218, 4
      %v1221 = vshll.u32 %v1136, 16
      %v1223 = vrot.slane %v1221, 5
      %v1224 = vsel %vm321, %v1219, %v1223
      %v1226 = vshrl.u32 %v1137, 16
      %v1228 = vrot.slane %v1226, 4
      %v1229 = vshll.u32 %v1137, 16
      %v1231 = vrot.slane %v1229, 5
      %v1232 = vor.u32 %v1228, %v1231
      %v1233 = vrot.slane %v1232, 4
      %v1235 = vshll.u32 %v1138, 16
      %v1237 = vrot.slane %v1235, 5
      %v1238 = vsel %vm321, %v1233, %v1237
      %v1240 = vshrl.u32 %v1139, 16
      %v1242 = vrot.slane %v1240, 4
      %v1243 = vshll.u32 %v1139, 16
      %v1245 = vrot.slane %v1243, 5
      %v1246 = vor.u32 %v1242, %v1245
      %v1247 = vrot.slane %v1246, 4
      %v1249 = vshll.u32 %v1140, 16
      %v1251 = vrot.slane %v1249, 5
      %v1252 = vsel %vm321, %v1247, %v1251
      %1253 = vrot.lane.b32.xlu0 %v1154, 36
      %v1254 = vpop.permute.xlu0 %1253
      %1255 = vrot.lane.b32.xlu0 %v1168, 36
      %v1256 = vpop.permute.xlu0 %1255
      %1257 = vrot.lane.b32.xlu0 %v1182, 36
      %v1258 = vpop.permute.xlu0 %1257
      %1259 = vrot.lane.b32.xlu0 %v1196, 36
      %v1260 = vpop.permute.xlu0 %1259
      %1261 = vrot.lane.b32.xlu0 %v1210, 36
      %v1262 = vpop.permute.xlu0 %1261
      %1263 = vrot.lane.b32.xlu0 %v1224, 36
      %v1264 = vpop.permute.xlu0 %1263
      %1265 = vrot.lane.b32.xlu0 %v1238, 36
      %v1266 = vpop.permute.xlu0 %1265
      %1267 = vrot.lane.b32.xlu0 %v1252, 36
      %v1268 = vpop.permute.xlu0 %1267
      %vm1277 = vcmask 322848
      %1278 = vst.msk [vmem:[#allocation2] sm:$0xf] %vm1277, %v1254
      %1279 = vst.msk [vmem:[#allocation2 + $0x8] sm:$0xf] %vm1277, %v1256
      %1280 = vst.msk [vmem:[#allocation2 + $0x10] sm:$0xf] %vm1277, %v1258
      %1281 = vst.msk [vmem:[#allocation2 + $0x18] sm:$0xf] %vm1277, %v1260
      %1282 = vst.msk [vmem:[#allocation2 + $0x20] sm:$0xf] %vm1277, %v1262
      %1283 = vst.msk [vmem:[#allocation2 + $0x28] sm:$0xf] %vm1277, %v1264
      %1284 = vst.msk [vmem:[#allocation2 + $0x30] sm:$0xf] %vm1277, %v1266
      %1285 = vst.msk [vmem:[#allocation2 + $0x38] sm:$0xf] %vm1277, %v1268
      %v1286 = vld [vmem:[%s1075] sm:$0xf]
      %v1287 = vld [vmem:[%s1075 + $0x4] sm:$0x1]
      %v1288 = vld [vmem:[%s1075 + $0x8] sm:$0xf]
      %v1289 = vld [vmem:[%s1075 + $0xc] sm:$0x1]
      %v1290 = vld [vmem:[%s1075 + $0x10] sm:$0xf]
      %v1291 = vld [vmem:[%s1075 + $0x14] sm:$0x1]
      %v1292 = vld [vmem:[%s1075 + $0x18] sm:$0xf]
      %v1293 = vld [vmem:[%s1075 + $0x1c] sm:$0x1]
      %v1294 = vld [vmem:[%s1075 + $0x20] sm:$0xf]
      %v1295 = vld [vmem:[%s1075 + $0x24] sm:$0x1]
      %v1296 = vld [vmem:[%s1075 + $0x28] sm:$0xf]
      %v1297 = vld [vmem:[%s1075 + $0x2c] sm:$0x1]
      %v1298 = vld [vmem:[%s1075 + $0x30] sm:$0xf]
      %v1299 = vld [vmem:[%s1075 + $0x34] sm:$0x1]
      %v1300 = vld [vmem:[%s1075 + $0x38] sm:$0xf]
      %v1301 = vld [vmem:[%s1075 + $0x3c] sm:$0x1]
      %v1303 = vshrl.u32 %v1286, 16
      %v1305 = vrot.slane %v1303, 4
      %v1306 = vshll.u32 %v1286, 16
      %v1308 = vrot.slane %v1306, 5
      %v1309 = vor.u32 %v1305, %v1308
      %v1310 = vrot.slane %v1309, 4
      %v1312 = vshll.u32 %v1287, 16
      %v1314 = vrot.slane %v1312, 5
      %v1315 = vsel %vm321, %v1310, %v1314
      %v1317 = vshrl.u32 %v1288, 16
      %v1319 = vrot.slane %v1317, 4
      %v1320 = vshll.u32 %v1288, 16
      %v1322 = vrot.slane %v1320, 5
      %v1323 = vor.u32 %v1319, %v1322
      %v1324 = vrot.slane %v1323, 4
      %v1326 = vshll.u32 %v1289, 16
      %v1328 = vrot.slane %v1326, 5
      %v1329 = vsel %vm321, %v1324, %v1328
      %v1331 = vshrl.u32 %v1290, 16
      %v1333 = vrot.slane %v1331, 4
      %v1334 = vshll.u32 %v1290, 16
      %v1336 = vrot.slane %v1334, 5
      %v1337 = vor.u32 %v1333, %v1336
      %v1338 = vrot.slane %v1337, 4
      %v1340 = vshll.u32 %v1291, 16
      %v1342 = vrot.slane %v1340, 5
      %v1343 = vsel %vm321, %v1338, %v1342
      %v1345 = vshrl.u32 %v1292, 16
      %v1347 = vrot.slane %v1345, 4
      %v1348 = vshll.u32 %v1292, 16
      %v1350 = vrot.slane %v1348, 5
      %v1351 = vor.u32 %v1347, %v1350
      %v1352 = vrot.slane %v1351, 4
      %v1354 = vshll.u32 %v1293, 16
      %v1356 = vrot.slane %v1354, 5
      %v1357 = vsel %vm321, %v1352, %v1356
      %v1359 = vshrl.u32 %v1294, 16
      %v1361 = vrot.slane %v1359, 4
      %v1362 = vshll.u32 %v1294, 16
      %v1364 = vrot.slane %v1362, 5
      %v1365 = vor.u32 %v1361, %v1364
      %v1366 = vrot.slane %v1365, 4
      %v1368 = vshll.u32 %v1295, 16
      %v1370 = vrot.slane %v1368, 5
      %v1371 = vsel %vm321, %v1366, %v1370
      %v1373 = vshrl.u32 %v1296, 16
      %v1375 = vrot.slane %v1373, 4
      %v1376 = vshll.u32 %v1296, 16
      %v1378 = vrot.slane %v1376, 5
      %v1379 = vor.u32 %v1375, %v1378
      %v1380 = vrot.slane %v1379, 4
      %v1382 = vshll.u32 %v1297, 16
      %v1384 = vrot.slane %v1382, 5
      %v1385 = vsel %vm321, %v1380, %v1384
      %v1387 = vshrl.u32 %v1298, 16
      %v1389 = vrot.slane %v1387, 4
      %v1390 = vshll.u32 %v1298, 16
      %v1392 = vrot.slane %v1390, 5
      %v1393 = vor.u32 %v1389, %v1392
      %v1394 = vrot.slane %v1393, 4
      %v1396 = vshll.u32 %v1299, 16
      %v1398 = vrot.slane %v1396, 5
      %v1399 = vsel %vm321, %v1394, %v1398
      %v1401 = vshrl.u32 %v1300, 16
      %v1403 = vrot.slane %v1401, 4
      %v1404 = vshll.u32 %v1300, 16
      %v1406 = vrot.slane %v1404, 5
      %v1407 = vor.u32 %v1403, %v1406
      %v1408 = vrot.slane %v1407, 4
      %v1410 = vshll.u32 %v1301, 16
      %v1412 = vrot.slane %v1410, 5
      %v1413 = vsel %vm321, %v1408, %v1412
      %1414 = vrot.lane.b32.xlu0 %v1315, 40
      %v1415 = vpop.permute.xlu0 %1414
      %1416 = vrot.lane.b32.xlu0 %v1329, 40
      %v1417 = vpop.permute.xlu0 %1416
      %1418 = vrot.lane.b32.xlu0 %v1343, 40
      %v1419 = vpop.permute.xlu0 %1418
      %1420 = vrot.lane.b32.xlu0 %v1357, 40
      %v1421 = vpop.permute.xlu0 %1420
      %1422 = vrot.lane.b32.xlu0 %v1371, 40
      %v1423 = vpop.permute.xlu0 %1422
      %1424 = vrot.lane.b32.xlu0 %v1385, 40
      %v1425 = vpop.permute.xlu0 %1424
      %1426 = vrot.lane.b32.xlu0 %v1399, 40
      %v1427 = vpop.permute.xlu0 %1426
      %1428 = vrot.lane.b32.xlu0 %v1413, 40
      %v1429 = vpop.permute.xlu0 %1428
      %vm1438 = vcmask 355648
      %1439 = vst.msk [vmem:[#allocation2] sm:$0xf] %vm1438, %v1415
      %1440 = vst.msk [vmem:[#allocation2 + $0x8] sm:$0xf] %vm1438, %v1417
      %1441 = vst.msk [vmem:[#allocation2 + $0x10] sm:$0xf] %vm1438, %v1419
      %1442 = vst.msk [vmem:[#allocation2 + $0x18] sm:$0xf] %vm1438, %v1421
      %1443 = vst.msk [vmem:[#allocation2 + $0x20] sm:$0xf] %vm1438, %v1423
      %1444 = vst.msk [vmem:[#allocation2 + $0x28] sm:$0xf] %vm1438, %v1425
      %1445 = vst.msk [vmem:[#allocation2 + $0x30] sm:$0xf] %vm1438, %v1427
      %1446 = vst.msk [vmem:[#allocation2 + $0x38] sm:$0xf] %vm1438, %v1429
      %v1447 = vld [vmem:[%s1023] sm:$0xe]
      %v1448 = vld [vmem:[%s1023 + $0x4] sm:$0x1]
      %v1449 = vld [vmem:[%s1023 + $0x8] sm:$0xe]
      %v1450 = vld [vmem:[%s1023 + $0xc] sm:$0x1]
      %v1451 = vld [vmem:[%s1023 + $0x10] sm:$0xe]
      %v1452 = vld [vmem:[%s1023 + $0x14] sm:$0x1]
      %v1453 = vld [vmem:[%s1023 + $0x18] sm:$0xe]
      %v1454 = vld [vmem:[%s1023 + $0x1c] sm:$0x1]
      %v1455 = vld [vmem:[%s1023 + $0x20] sm:$0xe]
      %v1456 = vld [vmem:[%s1023 + $0x24] sm:$0x1]
      %v1457 = vld [vmem:[%s1023 + $0x28] sm:$0xe]
      %v1458 = vld [vmem:[%s1023 + $0x2c] sm:$0x1]
      %v1459 = vld [vmem:[%s1023 + $0x30] sm:$0xe]
      %v1460 = vld [vmem:[%s1023 + $0x34] sm:$0x1]
      %v1461 = vld [vmem:[%s1023 + $0x38] sm:$0xe]
      %v1462 = vld [vmem:[%s1023 + $0x3c] sm:$0x1]
      %v1479 = vrot.slane %v1447, 5
      %v1480 = vrot.slane %v1479, 4
      %v1481 = vrot.slane %v1448, 5
      %v1482 = vsel %vm662, %v1480, %v1481
      %v1483 = vrot.slane %v1449, 5
      %v1484 = vrot.slane %v1483, 4
      %v1485 = vrot.slane %v1450, 5
      %v1486 = vsel %vm662, %v1484, %v1485
      %v1487 = vrot.slane %v1451, 5
      %v1488 = vrot.slane %v1487, 4
      %v1489 = vrot.slane %v1452, 5
      %v1490 = vsel %vm662, %v1488, %v1489
      %v1491 = vrot.slane %v1453, 5
      %v1492 = vrot.slane %v1491, 4
      %v1493 = vrot.slane %v1454, 5
      %v1494 = vsel %vm662, %v1492, %v1493
      %v1495 = vrot.slane %v1455, 5
      %v1496 = vrot.slane %v1495, 4
      %v1497 = vrot.slane %v1456, 5
      %v1498 = vsel %vm662, %v1496, %v1497
      %v1499 = vrot.slane %v1457, 5
      %v1500 = vrot.slane %v1499, 4
      %v1501 = vrot.slane %v1458, 5
      %v1502 = vsel %vm662, %v1500, %v1501
      %v1503 = vrot.slane %v1459, 5
      %v1504 = vrot.slane %v1503, 4
      %v1505 = vrot.slane %v1460, 5
      %v1506 = vsel %vm662, %v1504, %v1505
      %v1507 = vrot.slane %v1461, 5
      %v1508 = vrot.slane %v1507, 4
      %v1509 = vrot.slane %v1462, 5
      %v1510 = vsel %vm662, %v1508, %v1509
      %1511 = vrot.lane.b32.xlu0 %v1482, 44
      %v1512 = vpop.permute.xlu0 %1511
      %1513 = vrot.lane.b32.xlu0 %v1486, 44
      %v1514 = vpop.permute.xlu0 %1513
      %1515 = vrot.lane.b32.xlu0 %v1490, 44
      %v1516 = vpop.permute.xlu0 %1515
      %1517 = vrot.lane.b32.xlu0 %v1494, 44
      %v1518 = vpop.permute.xlu0 %1517
      %1519 = vrot.lane.b32.xlu0 %v1498, 44
      %v1520 = vpop.permute.xlu0 %1519
      %1521 = vrot.lane.b32.xlu0 %v1502, 44
      %v1522 = vpop.permute.xlu0 %1521
      %1523 = vrot.lane.b32.xlu0 %v1506, 44
      %v1524 = vpop.permute.xlu0 %1523
      %1525 = vrot.lane.b32.xlu0 %v1510, 44
      %v1526 = vpop.permute.xlu0 %1525
      %vm1535 = vcmask 388448
      %1536 = vst.msk [vmem:[#allocation2] sm:$0xf] %vm1535, %v1512
      %1537 = vst.msk [vmem:[#allocation2 + $0x8] sm:$0xf] %vm1535, %v1514
      %1538 = vst.msk [vmem:[#allocation2 + $0x10] sm:$0xf] %vm1535, %v1516
      %1539 = vst.msk [vmem:[#allocation2 + $0x18] sm:$0xf] %vm1535, %v1518
      %1540 = vst.msk [vmem:[#allocation2 + $0x20] sm:$0xf] %vm1535, %v1520
      %1541 = vst.msk [vmem:[#allocation2 + $0x28] sm:$0xf] %vm1535, %v1522
      %1542 = vst.msk [vmem:[#allocation2 + $0x30] sm:$0xf] %vm1535, %v1524
      %1543 = vst.msk [vmem:[#allocation2 + $0x38] sm:$0xf] %vm1535, %v1526
      %v1544 = vld [vmem:[%s1075] sm:$0xe]
      %v1545 = vld [vmem:[%s1075 + $0x4] sm:$0x1]
      %v1546 = vld [vmem:[%s1075 + $0x8] sm:$0xe]
      %v1547 = vld [vmem:[%s1075 + $0xc] sm:$0x1]
      %v1548 = vld [vmem:[%s1075 + $0x10] sm:$0xe]
      %v1549 = vld [vmem:[%s1075 + $0x14] sm:$0x1]
      %v1550 = vld [vmem:[%s1075 + $0x18] sm:$0xe]
      %v1551 = vld [vmem:[%s1075 + $0x1c] sm:$0x1]
      %v1552 = vld [vmem:[%s1075 + $0x20] sm:$0xe]
      %v1553 = vld [vmem:[%s1075 + $0x24] sm:$0x1]
      %v1554 = vld [vmem:[%s1075 + $0x28] sm:$0xe]
      %v1555 = vld [vmem:[%s1075 + $0x2c] sm:$0x1]
      %v1556 = vld [vmem:[%s1075 + $0x30] sm:$0xe]
      %v1557 = vld [vmem:[%s1075 + $0x34] sm:$0x1]
      %v1558 = vld [vmem:[%s1075 + $0x38] sm:$0xe]
      %v1559 = vld [vmem:[%s1075 + $0x3c] sm:$0x1]
      %v1576 = vrot.slane %v1544, 5
      %v1577 = vrot.slane %v1576, 4
      %v1578 = vrot.slane %v1545, 5
      %v1579 = vsel %vm662, %v1577, %v1578
      %v1580 = vrot.slane %v1546, 5
      %v1581 = vrot.slane %v1580, 4
      %v1582 = vrot.slane %v1547, 5
      %v1583 = vsel %vm662, %v1581, %v1582
      %v1584 = vrot.slane %v1548, 5
      %v1585 = vrot.slane %v1584, 4
      %v1586 = vrot.slane %v1549, 5
      %v1587 = vsel %vm662, %v1585, %v1586
      %v1588 = vrot.slane %v1550, 5
      %v1589 = vrot.slane %v1588, 4
      %v1590 = vrot.slane %v1551, 5
      %v1591 = vsel %vm662, %v1589, %v1590
      %v1592 = vrot.slane %v1552, 5
      %v1593 = vrot.slane %v1592, 4
      %v1594 = vrot.slane %v1553, 5
      %v1595 = vsel %vm662, %v1593, %v1594
      %v1596 = vrot.slane %v1554, 5
      %v1597 = vrot.slane %v1596, 4
      %v1598 = vrot.slane %v1555, 5
      %v1599 = vsel %vm662, %v1597, %v1598
      %v1600 = vrot.slane %v1556, 5
      %v1601 = vrot.slane %v1600, 4
      %v1602 = vrot.slane %v1557, 5
      %v1603 = vsel %vm662, %v1601, %v1602
      %v1604 = vrot.slane %v1558, 5
      %v1605 = vrot.slane %v1604, 4
      %v1606 = vrot.slane %v1559, 5
      %v1607 = vsel %vm662, %v1605, %v1606
      %1608 = vrot.lane.b32.xlu0 %v1579, 48
      %v1609 = vpop.permute.xlu0 %1608
      %1610 = vrot.lane.b32.xlu0 %v1583, 48
      %v1611 = vpop.permute.xlu0 %1610
      %1612 = vrot.lane.b32.xlu0 %v1587, 48
      %v1613 = vpop.permute.xlu0 %1612
      %1614 = vrot.lane.b32.xlu0 %v1591, 48
      %v1615 = vpop.permute.xlu0 %1614
      %1616 = vrot.lane.b32.xlu0 %v1595, 48
      %v1617 = vpop.permute.xlu0 %1616
      %1618 = vrot.lane.b32.xlu0 %v1599, 48
      %v1619 = vpop.permute.xlu0 %1618
      %1620 = vrot.lane.b32.xlu0 %v1603, 48
      %v1621 = vpop.permute.xlu0 %1620
      %1622 = vrot.lane.b32.xlu0 %v1607, 48
      %v1623 = vpop.permute.xlu0 %1622
      %vm1632 = vcmask 421248
      %1633 = vst.msk [vmem:[#allocation2] sm:$0xf] %vm1632, %v1609
      %1634 = vst.msk [vmem:[#allocation2 + $0x8] sm:$0xf] %vm1632, %v1611
      %1635 = vst.msk [vmem:[#allocation2 + $0x10] sm:$0xf] %vm1632, %v1613
      %1636 = vst.msk [vmem:[#allocation2 + $0x18] sm:$0xf] %vm1632, %v1615
      %1637 = vst.msk [vmem:[#allocation2 + $0x20] sm:$0xf] %vm1632, %v1617
      %1638 = vst.msk [vmem:[#allocation2 + $0x28] sm:$0xf] %vm1632, %v1619
      %1639 = vst.msk [vmem:[#allocation2 + $0x30] sm:$0xf] %vm1632, %v1621
      %1640 = vst.msk [vmem:[#allocation2 + $0x38] sm:$0xf] %vm1632, %v1623
      %v1641 = vld [vmem:[%s1023] sm:$0xe]
      %v1642 = vld [vmem:[%s1023 + $0x4] sm:$0x3]
      %v1643 = vld [vmem:[%s1023 + $0x8] sm:$0xe]
      %v1644 = vld [vmem:[%s1023 + $0xc] sm:$0x3]
      %v1645 = vld [vmem:[%s1023 + $0x10] sm:$0xe]
      %v1646 = vld [vmem:[%s1023 + $0x14] sm:$0x3]
      %v1647 = vld [vmem:[%s1023 + $0x18] sm:$0xe]
      %v1648 = vld [vmem:[%s1023 + $0x1c] sm:$0x3]
      %v1649 = vld [vmem:[%s1023 + $0x20] sm:$0xe]
      %v1650 = vld [vmem:[%s1023 + $0x24] sm:$0x3]
      %v1651 = vld [vmem:[%s1023 + $0x28] sm:$0xe]
      %v1652 = vld [vmem:[%s1023 + $0x2c] sm:$0x3]
      %v1653 = vld [vmem:[%s1023 + $0x30] sm:$0xe]
      %v1654 = vld [vmem:[%s1023 + $0x34] sm:$0x3]
      %v1655 = vld [vmem:[%s1023 + $0x38] sm:$0xe]
      %v1656 = vld [vmem:[%s1023 + $0x3c] sm:$0x3]
      %v1658 = vshrl.u32 %v1641, 16
      %v1660 = vrot.slane %v1658, 5
      %v1661 = vshll.u32 %v1641, 16
      %v1663 = vrot.slane %v1661, 6
      %v1664 = vor.u32 %v1660, %v1663
      %v1665 = vrot.slane %v1664, 4
      %v1667 = vshrl.u32 %v1642, 16
      %v1669 = vrot.slane %v1667, 5
      %v1670 = vshll.u32 %v1642, 16
      %v1672 = vrot.slane %v1670, 6
      %v1673 = vor.u32 %v1669, %v1672
      %v1674 = vsel %vm843, %v1665, %v1673
      %v1676 = vshrl.u32 %v1643, 16
      %v1678 = vrot.slane %v1676, 5
      %v1679 = vshll.u32 %v1643, 16
      %v1681 = vrot.slane %v1679, 6
      %v1682 = vor.u32 %v1678, %v1681
      %v1683 = vrot.slane %v1682, 4
      %v1685 = vshrl.u32 %v1644, 16
      %v1687 = vrot.slane %v1685, 5
      %v1688 = vshll.u32 %v1644, 16
      %v1690 = vrot.slane %v1688, 6
      %v1691 = vor.u32 %v1687, %v1690
      %v1692 = vsel %vm843, %v1683, %v1691
      %v1694 = vshrl.u32 %v1645, 16
      %v1696 = vrot.slane %v1694, 5
      %v1697 = vshll.u32 %v1645, 16
      %v1699 = vrot.slane %v1697, 6
      %v1700 = vor.u32 %v1696, %v1699
      %v1701 = vrot.slane %v1700, 4
      %v1703 = vshrl.u32 %v1646, 16
      %v1705 = vrot.slane %v1703, 5
      %v1706 = vshll.u32 %v1646, 16
      %v1708 = vrot.slane %v1706, 6
      %v1709 = vor.u32 %v1705, %v1708
      %v1710 = vsel %vm843, %v1701, %v1709
      %v1712 = vshrl.u32 %v1647, 16
      %v1714 = vrot.slane %v1712, 5
      %v1715 = vshll.u32 %v1647, 16
      %v1717 = vrot.slane %v1715, 6
      %v1718 = vor.u32 %v1714, %v1717
      %v1719 = vrot.slane %v1718, 4
      %v1721 = vshrl.u32 %v1648, 16
      %v1723 = vrot.slane %v1721, 5
      %v1724 = vshll.u32 %v1648, 16
      %v1726 = vrot.slane %v1724, 6
      %v1727 = vor.u32 %v1723, %v1726
      %v1728 = vsel %vm843, %v1719, %v1727
      %v1730 = vshrl.u32 %v1649, 16
      %v1732 = vrot.slane %v1730, 5
      %v1733 = vshll.u32 %v1649, 16
      %v1735 = vrot.slane %v1733, 6
      %v1736 = vor.u32 %v1732, %v1735
      %v1737 = vrot.slane %v1736, 4
      %v1739 = vshrl.u32 %v1650, 16
      %v1741 = vrot.slane %v1739, 5
      %v1742 = vshll.u32 %v1650, 16
      %v1744 = vrot.slane %v1742, 6
      %v1745 = vor.u32 %v1741, %v1744
      %v1746 = vsel %vm843, %v1737, %v1745
      %v1748 = vshrl.u32 %v1651, 16
      %v1750 = vrot.slane %v1748, 5
      %v1751 = vshll.u32 %v1651, 16
      %v1753 = vrot.slane %v1751, 6
      %v1754 = vor.u32 %v1750, %v1753
      %v1755 = vrot.slane %v1754, 4
      %v1757 = vshrl.u32 %v1652, 16
      %v1759 = vrot.slane %v1757, 5
      %v1760 = vshll.u32 %v1652, 16
      %v1762 = vrot.slane %v1760, 6
      %v1763 = vor.u32 %v1759, %v1762
      %v1764 = vsel %vm843, %v1755, %v1763
      %v1766 = vshrl.u32 %v1653, 16
      %v1768 = vrot.slane %v1766, 5
      %v1769 = vshll.u32 %v1653, 16
      %v1771 = vrot.slane %v1769, 6
      %v1772 = vor.u32 %v1768, %v1771
      %v1773 = vrot.slane %v1772, 4
      %v1775 = vshrl.u32 %v1654, 16
      %v1777 = vrot.slane %v1775, 5
      %v1778 = vshll.u32 %v1654, 16
      %v1780 = vrot.slane %v1778, 6
      %v1781 = vor.u32 %v1777, %v1780
      %v1782 = vsel %vm843, %v1773, %v1781
      %v1784 = vshrl.u32 %v1655, 16
      %v1786 = vrot.slane %v1784, 5
      %v1787 = vshll.u32 %v1655, 16
      %v1789 = vrot.slane %v1787, 6
      %v1790 = vor.u32 %v1786, %v1789
      %v1791 = vrot.slane %v1790, 4
      %v1793 = vshrl.u32 %v1656, 16
      %v1795 = vrot.slane %v1793, 5
      %v1796 = vshll.u32 %v1656, 16
      %v1798 = vrot.slane %v1796, 6
      %v1799 = vor.u32 %v1795, %v1798
      %v1800 = vsel %vm843, %v1791, %v1799
      %1801 = vrot.lane.b32.xlu0 %v1674, 52
      %v1802 = vpop.permute.xlu0 %1801
      %1803 = vrot.lane.b32.xlu0 %v1692, 52
      %v1804 = vpop.permute.xlu0 %1803
      %1805 = vrot.lane.b32.xlu0 %v1710, 52
      %v1806 = vpop.permute.xlu0 %1805
      %1807 = vrot.lane.b32.xlu0 %v1728, 52
      %v1808 = vpop.permute.xlu0 %1807
      %1809 = vrot.lane.b32.xlu0 %v1746, 52
      %v1810 = vpop.permute.xlu0 %1809
      %1811 = vrot.lane.b32.xlu0 %v1764, 52
      %v1812 = vpop.permute.xlu0 %1811
      %1813 = vrot.lane.b32.xlu0 %v1782, 52
      %v1814 = vpop.permute.xlu0 %1813
      %1815 = vrot.lane.b32.xlu0 %v1800, 52
      %v1816 = vpop.permute.xlu0 %1815
      %vm1825 = vcmask 454048
      %1826 = vst.msk [vmem:[#allocation2] sm:$0xf] %vm1825, %v1802
      %1827 = vst.msk [vmem:[#allocation2 + $0x8] sm:$0xf] %vm1825, %v1804
      %1828 = vst.msk [vmem:[#allocation2 + $0x10] sm:$0xf] %vm1825, %v1806
      %1829 = vst.msk [vmem:[#allocation2 + $0x18] sm:$0xf] %vm1825, %v1808
      %1830 = vst.msk [vmem:[#allocation2 + $0x20] sm:$0xf] %vm1825, %v1810
      %1831 = vst.msk [vmem:[#allocation2 + $0x28] sm:$0xf] %vm1825, %v1812
      %1832 = vst.msk [vmem:[#allocation2 + $0x30] sm:$0xf] %vm1825, %v1814
      %1833 = vst.msk [vmem:[#allocation2 + $0x38] sm:$0xf] %vm1825, %v1816
      %s1834 = sadd.s32 %s222, 1
      %s1835 = smul.u32 %s1834, 2
      %s1836 = smul.addr %s1835, 4
      %s1837 = scalar_lea.vmem %s210, %s1836
      %v1838 = vld [vmem:[%s1837] sm:$0xf]
      %v1839 = vld [vmem:[%s1837 + $0x8] sm:$0xf]
      %v1840 = vld [vmem:[%s1837 + $0x10] sm:$0xf]
      %v1841 = vld [vmem:[%s1837 + $0x18] sm:$0xf]
      %v1842 = vld [vmem:[%s1837 + $0x20] sm:$0xf]
      %v1843 = vld [vmem:[%s1837 + $0x28] sm:$0xf]
      %v1844 = vld [vmem:[%s1837 + $0x30] sm:$0xf]
      %v1845 = vld [vmem:[%s1837 + $0x38] sm:$0xf]
      %1854 = vrot.lane.b32.xlu0 %v1838, 56
      %v1855 = vpop.permute.xlu0 %1854
      %1856 = vrot.lane.b32.xlu0 %v1839, 56
      %v1857 = vpop.permute.xlu0 %1856
      %1858 = vrot.lane.b32.xlu0 %v1840, 56
      %v1859 = vpop.permute.xlu0 %1858
      %1860 = vrot.lane.b32.xlu0 %v1841, 56
      %v1861 = vpop.permute.xlu0 %1860
      %1862 = vrot.lane.b32.xlu0 %v1842, 56
      %v1863 = vpop.permute.xlu0 %1862
      %1864 = vrot.lane.b32.xlu0 %v1843, 56
      %v1865 = vpop.permute.xlu0 %1864
      %1866 = vrot.lane.b32.xlu0 %v1844, 56
      %v1867 = vpop.permute.xlu0 %1866
      %1868 = vrot.lane.b32.xlu0 %v1845, 56
      %v1869 = vpop.permute.xlu0 %1868
      %vm1878 = vcmask 486848
      %1879 = vst.msk [vmem:[#allocation2] sm:$0xf] %vm1878, %v1855
      %1880 = vst.msk [vmem:[#allocation2 + $0x8] sm:$0xf] %vm1878, %v1857
      %1881 = vst.msk [vmem:[#allocation2 + $0x10] sm:$0xf] %vm1878, %v1859
      %1882 = vst.msk [vmem:[#allocation2 + $0x18] sm:$0xf] %vm1878, %v1861
      %1883 = vst.msk [vmem:[#allocation2 + $0x20] sm:$0xf] %vm1878, %v1863
      %1884 = vst.msk [vmem:[#allocation2 + $0x28] sm:$0xf] %vm1878, %v1865
      %1885 = vst.msk [vmem:[#allocation2 + $0x30] sm:$0xf] %vm1878, %v1867
      %1886 = vst.msk [vmem:[#allocation2 + $0x38] sm:$0xf] %vm1878, %v1869
      %s1887 = sadd.s32 %s1835, 22
      %s1888 = smul.addr %s1887, 4
      %s1889 = scalar_lea.vmem %s210, %s1888
      %v1890 = vld [vmem:[%s1889] sm:$0xf]
      %v1891 = vld [vmem:[%s1889 + $0x8] sm:$0xf]
      %v1892 = vld [vmem:[%s1889 + $0x10] sm:$0xf]
      %v1893 = vld [vmem:[%s1889 + $0x18] sm:$0xf]
      %v1894 = vld [vmem:[%s1889 + $0x20] sm:$0xf]
      %v1895 = vld [vmem:[%s1889 + $0x28] sm:$0xf]
      %v1896 = vld [vmem:[%s1889 + $0x30] sm:$0xf]
      %v1897 = vld [vmem:[%s1889 + $0x38] sm:$0xf]
      %1906 = vrot.lane.b32.xlu0 %v1890, 60
      %v1907 = vpop.permute.xlu0 %1906
      %1908 = vrot.lane.b32.xlu0 %v1891, 60
      %v1909 = vpop.permute.xlu0 %1908
      %1910 = vrot.lane.b32.xlu0 %v1892, 60
      %v1911 = vpop.permute.xlu0 %1910
      %1912 = vrot.lane.b32.xlu0 %v1893, 60
      %v1913 = vpop.permute.xlu0 %1912
      %1914 = vrot.lane.b32.xlu0 %v1894, 60
      %v1915 = vpop.permute.xlu0 %1914
      %1916 = vrot.lane.b32.xlu0 %v1895, 60
      %v1917 = vpop.permute.xlu0 %1916
      %1918 = vrot.lane.b32.xlu0 %v1896, 60
      %v1919 = vpop.permute.xlu0 %1918
      %1920 = vrot.lane.b32.xlu0 %v1897, 60
      %v1921 = vpop.permute.xlu0 %1920
      %vm1930 = vcmask 519648
      %1931 = vst.msk [vmem:[#allocation2] sm:$0xf] %vm1930, %v1907
      %1932 = vst.msk [vmem:[#allocation2 + $0x8] sm:$0xf] %vm1930, %v1909
      %1933 = vst.msk [vmem:[#allocation2 + $0x10] sm:$0xf] %vm1930, %v1911
      %1934 = vst.msk [vmem:[#allocation2 + $0x18] sm:$0xf] %vm1930, %v1913
      %1935 = vst.msk [vmem:[#allocation2 + $0x20] sm:$0xf] %vm1930, %v1915
      %1936 = vst.msk [vmem:[#allocation2 + $0x28] sm:$0xf] %vm1930, %v1917
      %1937 = vst.msk [vmem:[#allocation2 + $0x30] sm:$0xf] %vm1930, %v1919
      %1938 = vst.msk [vmem:[#allocation2 + $0x38] sm:$0xf] %vm1930, %v1921
      %v1939 = vld [vmem:[%s1837] sm:$0xf]
      %v1940 = vld [vmem:[%s1837 + $0x4] sm:$0x1]
      %v1941 = vld [vmem:[%s1837 + $0x8] sm:$0xf]
      %v1942 = vld [vmem:[%s1837 + $0xc] sm:$0x1]
      %v1943 = vld [vmem:[%s1837 + $0x10] sm:$0xf]
      %v1944 = vld [vmem:[%s1837 + $0x14] sm:$0x1]
      %v1945 = vld [vmem:[%s1837 + $0x18] sm:$0xf]
      %v1946 = vld [vmem:[%s1837 + $0x1c] sm:$0x1]
      %v1947 = vld [vmem:[%s1837 + $0x20] sm:$0xf]
      %v1948 = vld [vmem:[%s1837 + $0x24] sm:$0x1]
      %v1949 = vld [vmem:[%s1837 + $0x28] sm:$0xf]
      %v1950 = vld [vmem:[%s1837 + $0x2c] sm:$0x1]
      %v1951 = vld [vmem:[%s1837 + $0x30] sm:$0xf]
      %v1952 = vld [vmem:[%s1837 + $0x34] sm:$0x1]
      %v1953 = vld [vmem:[%s1837 + $0x38] sm:$0xf]
      %v1954 = vld [vmem:[%s1837 + $0x3c] sm:$0x1]
      %v1956 = vshrl.u32 %v1939, 16
      %v1958 = vrot.slane %v1956, 4
      %v1959 = vshll.u32 %v1939, 16
      %v1961 = vrot.slane %v1959, 5
      %v1962 = vor.u32 %v1958, %v1961
      %v1963 = vrot.slane %v1962, 4
      %v1965 = vshll.u32 %v1940, 16
      %v1967 = vrot.slane %v1965, 5
      %v1968 = vsel %vm321, %v1963, %v1967
      %v1970 = vshrl.u32 %v1941, 16
      %v1972 = vrot.slane %v1970, 4
      %v1973 = vshll.u32 %v1941, 16
      %v1975 = vrot.slane %v1973, 5
      %v1976 = vor.u32 %v1972, %v1975
      %v1977 = vrot.slane %v1976, 4
      %v1979 = vshll.u32 %v1942, 16
      %v1981 = vrot.slane %v1979, 5
      %v1982 = vsel %vm321, %v1977, %v1981
      %v1984 = vshrl.u32 %v1943, 16
      %v1986 = vrot.slane %v1984, 4
      %v1987 = vshll.u32 %v1943, 16
      %v1989 = vrot.slane %v1987, 5
      %v1990 = vor.u32 %v1986, %v1989
      %v1991 = vrot.slane %v1990, 4
      %v1993 = vshll.u32 %v1944, 16
      %v1995 = vrot.slane %v1993, 5
      %v1996 = vsel %vm321, %v1991, %v1995
      %v1998 = vshrl.u32 %v1945, 16
      %v2000 = vrot.slane %v1998, 4
      %v2001 = vshll.u32 %v1945, 16
      %v2003 = vrot.slane %v2001, 5
      %v2004 = vor.u32 %v2000, %v2003
      %v2005 = vrot.slane %v2004, 4
      %v2007 = vshll.u32 %v1946, 16
      %v2009 = vrot.slane %v2007, 5
      %v2010 = vsel %vm321, %v2005, %v2009
      %v2012 = vshrl.u32 %v1947, 16
      %v2014 = vrot.slane %v2012, 4
      %v2015 = vshll.u32 %v1947, 16
      %v2017 = vrot.slane %v2015, 5
      %v2018 = vor.u32 %v2014, %v2017
      %v2019 = vrot.slane %v2018, 4
      %v2021 = vshll.u32 %v1948, 16
      %v2023 = vrot.slane %v2021, 5
      %v2024 = vsel %vm321, %v2019, %v2023
      %v2026 = vshrl.u32 %v1949, 16
      %v2028 = vrot.slane %v2026, 4
      %v2029 = vshll.u32 %v1949, 16
      %v2031 = vrot.slane %v2029, 5
      %v2032 = vor.u32 %v2028, %v2031
      %v2033 = vrot.slane %v2032, 4
      %v2035 = vshll.u32 %v1950, 16
      %v2037 = vrot.slane %v2035, 5
      %v2038 = vsel %vm321, %v2033, %v2037
      %v2040 = vshrl.u32 %v1951, 16
      %v2042 = vrot.slane %v2040, 4
      %v2043 = vshll.u32 %v1951, 16
      %v2045 = vrot.slane %v2043, 5
      %v2046 = vor.u32 %v2042, %v2045
      %v2047 = vrot.slane %v2046, 4
      %v2049 = vshll.u32 %v1952, 16
      %v2051 = vrot.slane %v2049, 5
      %v2052 = vsel %vm321, %v2047, %v2051
      %v2054 = vshrl.u32 %v1953, 16
      %v2056 = vrot.slane %v2054, 4
      %v2057 = vshll.u32 %v1953, 16
      %v2059 = vrot.slane %v2057, 5
      %v2060 = vor.u32 %v2056, %v2059
      %v2061 = vrot.slane %v2060, 4
      %v2063 = vshll.u32 %v1954, 16
      %v2065 = vrot.slane %v2063, 5
      %v2066 = vsel %vm321, %v2061, %v2065
      %2067 = vrot.lane.b32.xlu0 %v1968, 64
      %v2068 = vpop.permute.xlu0 %2067
      %2069 = vrot.lane.b32.xlu0 %v1982, 64
      %v2070 = vpop.permute.xlu0 %2069
      %2071 = vrot.lane.b32.xlu0 %v1996, 64
      %v2072 = vpop.permute.xlu0 %2071
      %2073 = vrot.lane.b32.xlu0 %v2010, 64
      %v2074 = vpop.permute.xlu0 %2073
      %2075 = vrot.lane.b32.xlu0 %v2024, 64
      %v2076 = vpop.permute.xlu0 %2075
      %2077 = vrot.lane.b32.xlu0 %v2038, 64
      %v2078 = vpop.permute.xlu0 %2077
      %2079 = vrot.lane.b32.xlu0 %v2052, 64
      %v2080 = vpop.permute.xlu0 %2079
      %2081 = vrot.lane.b32.xlu0 %v2066, 64
      %v2082 = vpop.permute.xlu0 %2081
      %vm2091 = vcmask 552448
      %2092 = vst.msk [vmem:[#allocation2] sm:$0xf] %vm2091, %v2068
      %2093 = vst.msk [vmem:[#allocation2 + $0x8] sm:$0xf] %vm2091, %v2070
      %2094 = vst.msk [vmem:[#allocation2 + $0x10] sm:$0xf] %vm2091, %v2072
      %2095 = vst.msk [vmem:[#allocation2 + $0x18] sm:$0xf] %vm2091, %v2074
      %2096 = vst.msk [vmem:[#allocation2 + $0x20] sm:$0xf] %vm2091, %v2076
      %2097 = vst.msk [vmem:[#allocation2 + $0x28] sm:$0xf] %vm2091, %v2078
      %2098 = vst.msk [vmem:[#allocation2 + $0x30] sm:$0xf] %vm2091, %v2080
      %2099 = vst.msk [vmem:[#allocation2 + $0x38] sm:$0xf] %vm2091, %v2082
      %v2100 = vld [vmem:[%s1889] sm:$0xf]
      %v2101 = vld [vmem:[%s1889 + $0x4] sm:$0x1]
      %v2102 = vld [vmem:[%s1889 + $0x8] sm:$0xf]
      %v2103 = vld [vmem:[%s1889 + $0xc] sm:$0x1]
      %v2104 = vld [vmem:[%s1889 + $0x10] sm:$0xf]
      %v2105 = vld [vmem:[%s1889 + $0x14] sm:$0x1]
      %v2106 = vld [vmem:[%s1889 + $0x18] sm:$0xf]
      %v2107 = vld [vmem:[%s1889 + $0x1c] sm:$0x1]
      %v2108 = vld [vmem:[%s1889 + $0x20] sm:$0xf]
      %v2109 = vld [vmem:[%s1889 + $0x24] sm:$0x1]
      %v2110 = vld [vmem:[%s1889 + $0x28] sm:$0xf]
      %v2111 = vld [vmem:[%s1889 + $0x2c] sm:$0x1]
      %v2112 = vld [vmem:[%s1889 + $0x30] sm:$0xf]
      %v2113 = vld [vmem:[%s1889 + $0x34] sm:$0x1]
      %v2114 = vld [vmem:[%s1889 + $0x38] sm:$0xf]
      %v2115 = vld [vmem:[%s1889 + $0x3c] sm:$0x1]
      %v2117 = vshrl.u32 %v2100, 16
      %v2119 = vrot.slane %v2117, 4
      %v2120 = vshll.u32 %v2100, 16
      %v2122 = vrot.slane %v2120, 5
      %v2123 = vor.u32 %v2119, %v2122
      %v2124 = vrot.slane %v2123, 4
      %v2126 = vshll.u32 %v2101, 16
      %v2128 = vrot.slane %v2126, 5
      %v2129 = vsel %vm321, %v2124, %v2128
      %v2131 = vshrl.u32 %v2102, 16
      %v2133 = vrot.slane %v2131, 4
      %v2134 = vshll.u32 %v2102, 16
      %v2136 = vrot.slane %v2134, 5
      %v2137 = vor.u32 %v2133, %v2136
      %v2138 = vrot.slane %v2137, 4
      %v2140 = vshll.u32 %v2103, 16
      %v2142 = vrot.slane %v2140, 5
      %v2143 = vsel %vm321, %v2138, %v2142
      %v2145 = vshrl.u32 %v2104, 16
      %v2147 = vrot.slane %v2145, 4
      %v2148 = vshll.u32 %v2104, 16
      %v2150 = vrot.slane %v2148, 5
      %v2151 = vor.u32 %v2147, %v2150
      %v2152 = vrot.slane %v2151, 4
      %v2154 = vshll.u32 %v2105, 16
      %v2156 = vrot.slane %v2154, 5
      %v2157 = vsel %vm321, %v2152, %v2156
      %v2159 = vshrl.u32 %v2106, 16
      %v2161 = vrot.slane %v2159, 4
      %v2162 = vshll.u32 %v2106, 16
      %v2164 = vrot.slane %v2162, 5
      %v2165 = vor.u32 %v2161, %v2164
      %v2166 = vrot.slane %v2165, 4
      %v2168 = vshll.u32 %v2107, 16
      %v2170 = vrot.slane %v2168, 5
      %v2171 = vsel %vm321, %v2166, %v2170
      %v2173 = vshrl.u32 %v2108, 16
      %v2175 = vrot.slane %v2173, 4
      %v2176 = vshll.u32 %v2108, 16
      %v2178 = vrot.slane %v2176, 5
      %v2179 = vor.u32 %v2175, %v2178
      %v2180 = vrot.slane %v2179, 4
      %v2182 = vshll.u32 %v2109, 16
      %v2184 = vrot.slane %v2182, 5
      %v2185 = vsel %vm321, %v2180, %v2184
      %v2187 = vshrl.u32 %v2110, 16
      %v2189 = vrot.slane %v2187, 4
      %v2190 = vshll.u32 %v2110, 16
      %v2192 = vrot.slane %v2190, 5
      %v2193 = vor.u32 %v2189, %v2192
      %v2194 = vrot.slane %v2193, 4
      %v2196 = vshll.u32 %v2111, 16
      %v2198 = vrot.slane %v2196, 5
      %v2199 = vsel %vm321, %v2194, %v2198
      %v2201 = vshrl.u32 %v2112, 16
      %v2203 = vrot.slane %v2201, 4
      %v2204 = vshll.u32 %v2112, 16
      %v2206 = vrot.slane %v2204, 5
      %v2207 = vor.u32 %v2203, %v2206
      %v2208 = vrot.slane %v2207, 4
      %v2210 = vshll.u32 %v2113, 16
      %v2212 = vrot.slane %v2210, 5
      %v2213 = vsel %vm321, %v2208, %v2212
      %v2215 = vshrl.u32 %v2114, 16
      %v2217 = vrot.slane %v2215, 4
      %v2218 = vshll.u32 %v2114, 16
      %v2220 = vrot.slane %v2218, 5
      %v2221 = vor.u32 %v2217, %v2220
      %v2222 = vrot.slane %v2221, 4
      %v2224 = vshll.u32 %v2115, 16
      %v2226 = vrot.slane %v2224, 5
      %v2227 = vsel %vm321, %v2222, %v2226
      %2228 = vrot.lane.b32.xlu0 %v2129, 68
      %v2229 = vpop.permute.xlu0 %2228
      %2230 = vrot.lane.b32.xlu0 %v2143, 68
      %v2231 = vpop.permute.xlu0 %2230
      %2232 = vrot.lane.b32.xlu0 %v2157, 68
      %v2233 = vpop.permute.xlu0 %2232
      %2234 = vrot.lane.b32.xlu0 %v2171, 68
      %v2235 = vpop.permute.xlu0 %2234
      %2236 = vrot.lane.b32.xlu0 %v2185, 68
      %v2237 = vpop.permute.xlu0 %2236
      %2238 = vrot.lane.b32.xlu0 %v2199, 68
      %v2239 = vpop.permute.xlu0 %2238
      %2240 = vrot.lane.b32.xlu0 %v2213, 68
      %v2241 = vpop.permute.xlu0 %2240
      %2242 = vrot.lane.b32.xlu0 %v2227, 68
      %v2243 = vpop.permute.xlu0 %2242
      %vm2252 = vcmask 585248
      %2253 = vst.msk [vmem:[#allocation2] sm:$0xf] %vm2252, %v2229
      %2254 = vst.msk [vmem:[#allocation2 + $0x8] sm:$0xf] %vm2252, %v2231
      %2255 = vst.msk [vmem:[#allocation2 + $0x10] sm:$0xf] %vm2252, %v2233
      %2256 = vst.msk [vmem:[#allocation2 + $0x18] sm:$0xf] %vm2252, %v2235
      %2257 = vst.msk [vmem:[#allocation2 + $0x20] sm:$0xf] %vm2252, %v2237
      %2258 = vst.msk [vmem:[#allocation2 + $0x28] sm:$0xf] %vm2252, %v2239
      %2259 = vst.msk [vmem:[#allocation2 + $0x30] sm:$0xf] %vm2252, %v2241
      %2260 = vst.msk [vmem:[#allocation2 + $0x38] sm:$0xf] %vm2252, %v2243
      %v2261 = vld [vmem:[%s1837] sm:$0xe]
      %v2262 = vld [vmem:[%s1837 + $0x4] sm:$0x1]
      %v2263 = vld [vmem:[%s1837 + $0x8] sm:$0xe]
      %v2264 = vld [vmem:[%s1837 + $0xc] sm:$0x1]
      %v2265 = vld [vmem:[%s1837 + $0x10] sm:$0xe]
      %v2266 = vld [vmem:[%s1837 + $0x14] sm:$0x1]
      %v2267 = vld [vmem:[%s1837 + $0x18] sm:$0xe]
      %v2268 = vld [vmem:[%s1837 + $0x1c] sm:$0x1]
      %v2269 = vld [vmem:[%s1837 + $0x20] sm:$0xe]
      %v2270 = vld [vmem:[%s1837 + $0x24] sm:$0x1]
      %v2271 = vld [vmem:[%s1837 + $0x28] sm:$0xe]
      %v2272 = vld [vmem:[%s1837 + $0x2c] sm:$0x1]
      %v2273 = vld [vmem:[%s1837 + $0x30] sm:$0xe]
      %v2274 = vld [vmem:[%s1837 + $0x34] sm:$0x1]
      %v2275 = vld [vmem:[%s1837 + $0x38] sm:$0xe]
      %v2276 = vld [vmem:[%s1837 + $0x3c] sm:$0x1]
      %v2293 = vrot.slane %v2261, 5
      %v2294 = vrot.slane %v2293, 4
      %v2295 = vrot.slane %v2262, 5
      %v2296 = vsel %vm662, %v2294, %v2295
      %v2297 = vrot.slane %v2263, 5
      %v2298 = vrot.slane %v2297, 4
      %v2299 = vrot.slane %v2264, 5
      %v2300 = vsel %vm662, %v2298, %v2299
      %v2301 = vrot.slane %v2265, 5
      %v2302 = vrot.slane %v2301, 4
      %v2303 = vrot.slane %v2266, 5
      %v2304 = vsel %vm662, %v2302, %v2303
      %v2305 = vrot.slane %v2267, 5
      %v2306 = vrot.slane %v2305, 4
      %v2307 = vrot.slane %v2268, 5
      %v2308 = vsel %vm662, %v2306, %v2307
      %v2309 = vrot.slane %v2269, 5
      %v2310 = vrot.slane %v2309, 4
      %v2311 = vrot.slane %v2270, 5
      %v2312 = vsel %vm662, %v2310, %v2311
      %v2313 = vrot.slane %v2271, 5
      %v2314 = vrot.slane %v2313, 4
      %v2315 = vrot.slane %v2272, 5
      %v2316 = vsel %vm662, %v2314, %v2315
      %v2317 = vrot.slane %v2273, 5
      %v2318 = vrot.slane %v2317, 4
      %v2319 = vrot.slane %v2274, 5
      %v2320 = vsel %vm662, %v2318, %v2319
      %v2321 = vrot.slane %v2275, 5
      %v2322 = vrot.slane %v2321, 4
      %v2323 = vrot.slane %v2276, 5
      %v2324 = vsel %vm662, %v2322, %v2323
      %2325 = vrot.lane.b32.xlu0 %v2296, 72
      %v2326 = vpop.permute.xlu0 %2325
      %2327 = vrot.lane.b32.xlu0 %v2300, 72
      %v2328 = vpop.permute.xlu0 %2327
      %2329 = vrot.lane.b32.xlu0 %v2304, 72
      %v2330 = vpop.permute.xlu0 %2329
      %2331 = vrot.lane.b32.xlu0 %v2308, 72
      %v2332 = vpop.permute.xlu0 %2331
      %2333 = vrot.lane.b32.xlu0 %v2312, 72
      %v2334 = vpop.permute.xlu0 %2333
      %2335 = vrot.lane.b32.xlu0 %v2316, 72
      %v2336 = vpop.permute.xlu0 %2335
      %2337 = vrot.lane.b32.xlu0 %v2320, 72
      %v2338 = vpop.permute.xlu0 %2337
      %2339 = vrot.lane.b32.xlu0 %v2324, 72
      %v2340 = vpop.permute.xlu0 %2339
      %vm2349 = vcmask 618048
      %2350 = vst.msk [vmem:[#allocation2] sm:$0xf] %vm2349, %v2326
      %2351 = vst.msk [vmem:[#allocation2 + $0x8] sm:$0xf] %vm2349, %v2328
      %2352 = vst.msk [vmem:[#allocation2 + $0x10] sm:$0xf] %vm2349, %v2330
      %2353 = vst.msk [vmem:[#allocation2 + $0x18] sm:$0xf] %vm2349, %v2332
      %2354 = vst.msk [vmem:[#allocation2 + $0x20] sm:$0xf] %vm2349, %v2334
      %2355 = vst.msk [vmem:[#allocation2 + $0x28] sm:$0xf] %vm2349, %v2336
      %2356 = vst.msk [vmem:[#allocation2 + $0x30] sm:$0xf] %vm2349, %v2338
      %2357 = vst.msk [vmem:[#allocation2 + $0x38] sm:$0xf] %vm2349, %v2340
      %v2358 = vld [vmem:[%s1889] sm:$0xe]
      %v2359 = vld [vmem:[%s1889 + $0x4] sm:$0x1]
      %v2360 = vld [vmem:[%s1889 + $0x8] sm:$0xe]
      %v2361 = vld [vmem:[%s1889 + $0xc] sm:$0x1]
      %v2362 = vld [vmem:[%s1889 + $0x10] sm:$0xe]
      %v2363 = vld [vmem:[%s1889 + $0x14] sm:$0x1]
      %v2364 = vld [vmem:[%s1889 + $0x18] sm:$0xe]
      %v2365 = vld [vmem:[%s1889 + $0x1c] sm:$0x1]
      %v2366 = vld [vmem:[%s1889 + $0x20] sm:$0xe]
      %v2367 = vld [vmem:[%s1889 + $0x24] sm:$0x1]
      %v2368 = vld [vmem:[%s1889 + $0x28] sm:$0xe]
      %v2369 = vld [vmem:[%s1889 + $0x2c] sm:$0x1]
      %v2370 = vld [vmem:[%s1889 + $0x30] sm:$0xe]
      %v2371 = vld [vmem:[%s1889 + $0x34] sm:$0x1]
      %v2372 = vld [vmem:[%s1889 + $0x38] sm:$0xe]
      %v2373 = vld [vmem:[%s1889 + $0x3c] sm:$0x1]
      %v2390 = vrot.slane %v2358, 5
      %v2391 = vrot.slane %v2390, 4
      %v2392 = vrot.slane %v2359, 5
      %v2393 = vsel %vm662, %v2391, %v2392
      %v2394 = vrot.slane %v2360, 5
      %v2395 = vrot.slane %v2394, 4
      %v2396 = vrot.slane %v2361, 5
      %v2397 = vsel %vm662, %v2395, %v2396
      %v2398 = vrot.slane %v2362, 5
      %v2399 = vrot.slane %v2398, 4
      %v2400 = vrot.slane %v2363, 5
      %v2401 = vsel %vm662, %v2399, %v2400
      %v2402 = vrot.slane %v2364, 5
      %v2403 = vrot.slane %v2402, 4
      %v2404 = vrot.slane %v2365, 5
      %v2405 = vsel %vm662, %v2403, %v2404
      %v2406 = vrot.slane %v2366, 5
      %v2407 = vrot.slane %v2406, 4
      %v2408 = vrot.slane %v2367, 5
      %v2409 = vsel %vm662, %v2407, %v2408
      %v2410 = vrot.slane %v2368, 5
      %v2411 = vrot.slane %v2410, 4
      %v2412 = vrot.slane %v2369, 5
      %v2413 = vsel %vm662, %v2411, %v2412
      %v2414 = vrot.slane %v2370, 5
      %v2415 = vrot.slane %v2414, 4
      %v2416 = vrot.slane %v2371, 5
      %v2417 = vsel %vm662, %v2415, %v2416
      %v2418 = vrot.slane %v2372, 5
      %v2419 = vrot.slane %v2418, 4
      %v2420 = vrot.slane %v2373, 5
      %v2421 = vsel %vm662, %v2419, %v2420
      %2422 = vrot.lane.b32.xlu0 %v2393, 76
      %v2423 = vpop.permute.xlu0 %2422
      %2424 = vrot.lane.b32.xlu0 %v2397, 76
      %v2425 = vpop.permute.xlu0 %2424
      %2426 = vrot.lane.b32.xlu0 %v2401, 76
      %v2427 = vpop.permute.xlu0 %2426
      %2428 = vrot.lane.b32.xlu0 %v2405, 76
      %v2429 = vpop.permute.xlu0 %2428
      %2430 = vrot.lane.b32.xlu0 %v2409, 76
      %v2431 = vpop.permute.xlu0 %2430
      %2432 = vrot.lane.b32.xlu0 %v2413, 76
      %v2433 = vpop.permute.xlu0 %2432
      %2434 = vrot.lane.b32.xlu0 %v2417, 76
      %v2435 = vpop.permute.xlu0 %2434
      %2436 = vrot.lane.b32.xlu0 %v2421, 76
      %v2437 = vpop.permute.xlu0 %2436
      %vm2446 = vcmask 650848
      %2447 = vst.msk [vmem:[#allocation2] sm:$0xf] %vm2446, %v2423
      %2448 = vst.msk [vmem:[#allocation2 + $0x8] sm:$0xf] %vm2446, %v2425
      %2449 = vst.msk [vmem:[#allocation2 + $0x10] sm:$0xf] %vm2446, %v2427
      %2450 = vst.msk [vmem:[#allocation2 + $0x18] sm:$0xf] %vm2446, %v2429
      %2451 = vst.msk [vmem:[#allocation2 + $0x20] sm:$0xf] %vm2446, %v2431
      %2452 = vst.msk [vmem:[#allocation2 + $0x28] sm:$0xf] %vm2446, %v2433
      %2453 = vst.msk [vmem:[#allocation2 + $0x30] sm:$0xf] %vm2446, %v2435
      %2454 = vst.msk [vmem:[#allocation2 + $0x38] sm:$0xf] %vm2446, %v2437
      %v2455 = vld [vmem:[%s1837] sm:$0xe]
      %v2456 = vld [vmem:[%s1837 + $0x4] sm:$0x3]
      %v2457 = vld [vmem:[%s1837 + $0x8] sm:$0xe]
      %v2458 = vld [vmem:[%s1837 + $0xc] sm:$0x3]
      %v2459 = vld [vmem:[%s1837 + $0x10] sm:$0xe]
      %v2460 = vld [vmem:[%s1837 + $0x14] sm:$0x3]
      %v2461 = vld [vmem:[%s1837 + $0x18] sm:$0xe]
      %v2462 = vld [vmem:[%s1837 + $0x1c] sm:$0x3]
      %v2463 = vld [vmem:[%s1837 + $0x20] sm:$0xe]
      %v2464 = vld [vmem:[%s1837 + $0x24] sm:$0x3]
      %v2465 = vld [vmem:[%s1837 + $0x28] sm:$0xe]
      %v2466 = vld [vmem:[%s1837 + $0x2c] sm:$0x3]
      %v2467 = vld [vmem:[%s1837 + $0x30] sm:$0xe]
      %v2468 = vld [vmem:[%s1837 + $0x34] sm:$0x3]
      %v2469 = vld [vmem:[%s1837 + $0x38] sm:$0xe]
      %v2470 = vld [vmem:[%s1837 + $0x3c] sm:$0x3]
      %v2472 = vshrl.u32 %v2455, 16
      %v2474 = vrot.slane %v2472, 5
      %v2475 = vshll.u32 %v2455, 16
      %v2477 = vrot.slane %v2475, 6
      %v2478 = vor.u32 %v2474, %v2477
      %v2479 = vrot.slane %v2478, 4
      %v2481 = vshrl.u32 %v2456, 16
      %v2483 = vrot.slane %v2481, 5
      %v2484 = vshll.u32 %v2456, 16
      %v2486 = vrot.slane %v2484, 6
      %v2487 = vor.u32 %v2483, %v2486
      %v2488 = vsel %vm843, %v2479, %v2487
      %v2490 = vshrl.u32 %v2457, 16
      %v2492 = vrot.slane %v2490, 5
      %v2493 = vshll.u32 %v2457, 16
      %v2495 = vrot.slane %v2493, 6
      %v2496 = vor.u32 %v2492, %v2495
      %v2497 = vrot.slane %v2496, 4
      %v2499 = vshrl.u32 %v2458, 16
      %v2501 = vrot.slane %v2499, 5
      %v2502 = vshll.u32 %v2458, 16
      %v2504 = vrot.slane %v2502, 6
      %v2505 = vor.u32 %v2501, %v2504
      %v2506 = vsel %vm843, %v2497, %v2505
      %v2508 = vshrl.u32 %v2459, 16
      %v2510 = vrot.slane %v2508, 5
      %v2511 = vshll.u32 %v2459, 16
      %v2513 = vrot.slane %v2511, 6
      %v2514 = vor.u32 %v2510, %v2513
      %v2515 = vrot.slane %v2514, 4
      %v2517 = vshrl.u32 %v2460, 16
      %v2519 = vrot.slane %v2517, 5
      %v2520 = vshll.u32 %v2460, 16
      %v2522 = vrot.slane %v2520, 6
      %v2523 = vor.u32 %v2519, %v2522
      %v2524 = vsel %vm843, %v2515, %v2523
      %v2526 = vshrl.u32 %v2461, 16
      %v2528 = vrot.slane %v2526, 5
      %v2529 = vshll.u32 %v2461, 16
      %v2531 = vrot.slane %v2529, 6
      %v2532 = vor.u32 %v2528, %v2531
      %v2533 = vrot.slane %v2532, 4
      %v2535 = vshrl.u32 %v2462, 16
      %v2537 = vrot.slane %v2535, 5
      %v2538 = vshll.u32 %v2462, 16
      %v2540 = vrot.slane %v2538, 6
      %v2541 = vor.u32 %v2537, %v2540
      %v2542 = vsel %vm843, %v2533, %v2541
      %v2544 = vshrl.u32 %v2463, 16
      %v2546 = vrot.slane %v2544, 5
      %v2547 = vshll.u32 %v2463, 16
      %v2549 = vrot.slane %v2547, 6
      %v2550 = vor.u32 %v2546, %v2549
      %v2551 = vrot.slane %v2550, 4
      %v2553 = vshrl.u32 %v2464, 16
      %v2555 = vrot.slane %v2553, 5
      %v2556 = vshll.u32 %v2464, 16
      %v2558 = vrot.slane %v2556, 6
      %v2559 = vor.u32 %v2555, %v2558
      %v2560 = vsel %vm843, %v2551, %v2559
      %v2562 = vshrl.u32 %v2465, 16
      %v2564 = vrot.slane %v2562, 5
      %v2565 = vshll.u32 %v2465, 16
      %v2567 = vrot.slane %v2565, 6
      %v2568 = vor.u32 %v2564, %v2567
      %v2569 = vrot.slane %v2568, 4
      %v2571 = vshrl.u32 %v2466, 16
      %v2573 = vrot.slane %v2571, 5
      %v2574 = vshll.u32 %v2466, 16
      %v2576 = vrot.slane %v2574, 6
      %v2577 = vor.u32 %v2573, %v2576
      %v2578 = vsel %vm843, %v2569, %v2577
      %v2580 = vshrl.u32 %v2467, 16
      %v2582 = vrot.slane %v2580, 5
      %v2583 = vshll.u32 %v2467, 16
      %v2585 = vrot.slane %v2583, 6
      %v2586 = vor.u32 %v2582, %v2585
      %v2587 = vrot.slane %v2586, 4
      %v2589 = vshrl.u32 %v2468, 16
      %v2591 = vrot.slane %v2589, 5
      %v2592 = vshll.u32 %v2468, 16
      %v2594 = vrot.slane %v2592, 6
      %v2595 = vor.u32 %v2591, %v2594
      %v2596 = vsel %vm843, %v2587, %v2595
      %v2598 = vshrl.u32 %v2469, 16
      %v2600 = vrot.slane %v2598, 5
      %v2601 = vshll.u32 %v2469, 16
      %v2603 = vrot.slane %v2601, 6
      %v2604 = vor.u32 %v2600, %v2603
      %v2605 = vrot.slane %v2604, 4
      %v2607 = vshrl.u32 %v2470, 16
      %v2609 = vrot.slane %v2607, 5
      %v2610 = vshll.u32 %v2470, 16
      %v2612 = vrot.slane %v2610, 6
      %v2613 = vor.u32 %v2609, %v2612
      %v2614 = vsel %vm843, %v2605, %v2613
      %2615 = vrot.lane.b32.xlu0 %v2488, 80
      %v2616 = vpop.permute.xlu0 %2615
      %2617 = vrot.lane.b32.xlu0 %v2506, 80
      %v2618 = vpop.permute.xlu0 %2617
      %2619 = vrot.lane.b32.xlu0 %v2524, 80
      %v2620 = vpop.permute.xlu0 %2619
      %2621 = vrot.lane.b32.xlu0 %v2542, 80
      %v2622 = vpop.permute.xlu0 %2621
      %2623 = vrot.lane.b32.xlu0 %v2560, 80
      %v2624 = vpop.permute.xlu0 %2623
      %2625 = vrot.lane.b32.xlu0 %v2578, 80
      %v2626 = vpop.permute.xlu0 %2625
      %2627 = vrot.lane.b32.xlu0 %v2596, 80
      %v2628 = vpop.permute.xlu0 %2627
      %2629 = vrot.lane.b32.xlu0 %v2614, 80
      %v2630 = vpop.permute.xlu0 %2629
      %vm2639 = vcmask 683648
      %2640 = vst.msk [vmem:[#allocation2] sm:$0xf] %vm2639, %v2616
      %2641 = vst.msk [vmem:[#allocation2 + $0x8] sm:$0xf] %vm2639, %v2618
      %2642 = vst.msk [vmem:[#allocation2 + $0x10] sm:$0xf] %vm2639, %v2620
      %2643 = vst.msk [vmem:[#allocation2 + $0x18] sm:$0xf] %vm2639, %v2622
      %2644 = vst.msk [vmem:[#allocation2 + $0x20] sm:$0xf] %vm2639, %v2624
      %2645 = vst.msk [vmem:[#allocation2 + $0x28] sm:$0xf] %vm2639, %v2626
      %2646 = vst.msk [vmem:[#allocation2 + $0x30] sm:$0xf] %vm2639, %v2628
      %2647 = vst.msk [vmem:[#allocation2 + $0x38] sm:$0xf] %vm2639, %v2630
      %s2648 = sadd.s32 %s1835, 44
      %s2649 = smul.addr %s2648, 4
      %s2650 = scalar_lea.vmem %s210, %s2649
      %v2651 = vld [vmem:[%s2650] sm:$0xf]
      %v2652 = vld [vmem:[%s2650 + $0x8] sm:$0xf]
      %v2653 = vld [vmem:[%s2650 + $0x10] sm:$0xf]
      %v2654 = vld [vmem:[%s2650 + $0x18] sm:$0xf]
      %v2655 = vld [vmem:[%s2650 + $0x20] sm:$0xf]
      %v2656 = vld [vmem:[%s2650 + $0x28] sm:$0xf]
      %v2657 = vld [vmem:[%s2650 + $0x30] sm:$0xf]
      %v2658 = vld [vmem:[%s2650 + $0x38] sm:$0xf]
      %2667 = vrot.lane.b32.xlu0 %v2651, 84
      %v2668 = vpop.permute.xlu0 %2667
      %2669 = vrot.lane.b32.xlu0 %v2652, 84
      %v2670 = vpop.permute.xlu0 %2669
      %2671 = vrot.lane.b32.xlu0 %v2653, 84
      %v2672 = vpop.permute.xlu0 %2671
      %2673 = vrot.lane.b32.xlu0 %v2654, 84
      %v2674 = vpop.permute.xlu0 %2673
      %2675 = vrot.lane.b32.xlu0 %v2655, 84
      %v2676 = vpop.permute.xlu0 %2675
      %2677 = vrot.lane.b32.xlu0 %v2656, 84
      %v2678 = vpop.permute.xlu0 %2677
      %2679 = vrot.lane.b32.xlu0 %v2657, 84
      %v2680 = vpop.permute.xlu0 %2679
      %2681 = vrot.lane.b32.xlu0 %v2658, 84
      %v2682 = vpop.permute.xlu0 %2681
      %vm2691 = vcmask 716448
      %2692 = vst.msk [vmem:[#allocation2] sm:$0xf] %vm2691, %v2668
      %2693 = vst.msk [vmem:[#allocation2 + $0x8] sm:$0xf] %vm2691, %v2670
      %2694 = vst.msk [vmem:[#allocation2 + $0x10] sm:$0xf] %vm2691, %v2672
      %2695 = vst.msk [vmem:[#allocation2 + $0x18] sm:$0xf] %vm2691, %v2674
      %2696 = vst.msk [vmem:[#allocation2 + $0x20] sm:$0xf] %vm2691, %v2676
      %2697 = vst.msk [vmem:[#allocation2 + $0x28] sm:$0xf] %vm2691, %v2678
      %2698 = vst.msk [vmem:[#allocation2 + $0x30] sm:$0xf] %vm2691, %v2680
      %2699 = vst.msk [vmem:[#allocation2 + $0x38] sm:$0xf] %vm2691, %v2682
      %s2700 = sadd.s32 %s1835, 66
      %s2701 = smul.addr %s2700, 4
      %s2702 = scalar_lea.vmem %s210, %s2701
      %v2703 = vld [vmem:[%s2702] sm:$0xf]
      %v2704 = vld [vmem:[%s2702 + $0x8] sm:$0xf]
      %v2705 = vld [vmem:[%s2702 + $0x10] sm:$0xf]
      %v2706 = vld [vmem:[%s2702 + $0x18] sm:$0xf]
      %v2707 = vld [vmem:[%s2702 + $0x20] sm:$0xf]
      %v2708 = vld [vmem:[%s2702 + $0x28] sm:$0xf]
      %v2709 = vld [vmem:[%s2702 + $0x30] sm:$0xf]
      %v2710 = vld [vmem:[%s2702 + $0x38] sm:$0xf]
      %2719 = vrot.lane.b32.xlu0 %v2703, 88
      %v2720 = vpop.permute.xlu0 %2719
      %2721 = vrot.lane.b32.xlu0 %v2704, 88
      %v2722 = vpop.permute.xlu0 %2721
      %2723 = vrot.lane.b32.xlu0 %v2705, 88
      %v2724 = vpop.permute.xlu0 %2723
      %2725 = vrot.lane.b32.xlu0 %v2706, 88
      %v2726 = vpop.permute.xlu0 %2725
      %2727 = vrot.lane.b32.xlu0 %v2707, 88
      %v2728 = vpop.permute.xlu0 %2727
      %2729 = vrot.lane.b32.xlu0 %v2708, 88
      %v2730 = vpop.permute.xlu0 %2729
      %2731 = vrot.lane.b32.xlu0 %v2709, 88
      %v2732 = vpop.permute.xlu0 %2731
      %2733 = vrot.lane.b32.xlu0 %v2710, 88
      %v2734 = vpop.permute.xlu0 %2733
      %vm2743 = vcmask 749248
      %2744 = vst.msk [vmem:[#allocation2] sm:$0xf] %vm2743, %v2720
      %2745 = vst.msk [vmem:[#allocation2 + $0x8] sm:$0xf] %vm2743, %v2722
      %2746 = vst.msk [vmem:[#allocation2 + $0x10] sm:$0xf] %vm2743, %v2724
      %2747 = vst.msk [vmem:[#allocation2 + $0x18] sm:$0xf] %vm2743, %v2726
      %2748 = vst.msk [vmem:[#allocation2 + $0x20] sm:$0xf] %vm2743, %v2728
      %2749 = vst.msk [vmem:[#allocation2 + $0x28] sm:$0xf] %vm2743, %v2730
      %2750 = vst.msk [vmem:[#allocation2 + $0x30] sm:$0xf] %vm2743, %v2732
      %2751 = vst.msk [vmem:[#allocation2 + $0x38] sm:$0xf] %vm2743, %v2734
      %v2752 = vld [vmem:[%s2650] sm:$0xf]
      %v2753 = vld [vmem:[%s2650 + $0x4] sm:$0x1]
      %v2754 = vld [vmem:[%s2650 + $0x8] sm:$0xf]
      %v2755 = vld [vmem:[%s2650 + $0xc] sm:$0x1]
      %v2756 = vld [vmem:[%s2650 + $0x10] sm:$0xf]
      %v2757 = vld [vmem:[%s2650 + $0x14] sm:$0x1]
      %v2758 = vld [vmem:[%s2650 + $0x18] sm:$0xf]
      %v2759 = vld [vmem:[%s2650 + $0x1c] sm:$0x1]
      %v2760 = vld [vmem:[%s2650 + $0x20] sm:$0xf]
      %v2761 = vld [vmem:[%s2650 + $0x24] sm:$0x1]
      %v2762 = vld [vmem:[%s2650 + $0x28] sm:$0xf]
      %v2763 = vld [vmem:[%s2650 + $0x2c] sm:$0x1]
      %v2764 = vld [vmem:[%s2650 + $0x30] sm:$0xf]
      %v2765 = vld [vmem:[%s2650 + $0x34] sm:$0x1]
      %v2766 = vld [vmem:[%s2650 + $0x38] sm:$0xf]
      %v2767 = vld [vmem:[%s2650 + $0x3c] sm:$0x1]
      %v2769 = vshrl.u32 %v2752, 16
      %v2771 = vrot.slane %v2769, 4
      %v2772 = vshll.u32 %v2752, 16
      %v2774 = vrot.slane %v2772, 5
      %v2775 = vor.u32 %v2771, %v2774
      %v2776 = vrot.slane %v2775, 4
      %v2778 = vshll.u32 %v2753, 16
      %v2780 = vrot.slane %v2778, 5
      %v2781 = vsel %vm321, %v2776, %v2780
      %v2783 = vshrl.u32 %v2754, 16
      %v2785 = vrot.slane %v2783, 4
      %v2786 = vshll.u32 %v2754, 16
      %v2788 = vrot.slane %v2786, 5
      %v2789 = vor.u32 %v2785, %v2788
      %v2790 = vrot.slane %v2789, 4
      %v2792 = vshll.u32 %v2755, 16
      %v2794 = vrot.slane %v2792, 5
      %v2795 = vsel %vm321, %v2790, %v2794
      %v2797 = vshrl.u32 %v2756, 16
      %v2799 = vrot.slane %v2797, 4
      %v2800 = vshll.u32 %v2756, 16
      %v2802 = vrot.slane %v2800, 5
      %v2803 = vor.u32 %v2799, %v2802
      %v2804 = vrot.slane %v2803, 4
      %v2806 = vshll.u32 %v2757, 16
      %v2808 = vrot.slane %v2806, 5
      %v2809 = vsel %vm321, %v2804, %v2808
      %v2811 = vshrl.u32 %v2758, 16
      %v2813 = vrot.slane %v2811, 4
      %v2814 = vshll.u32 %v2758, 16
      %v2816 = vrot.slane %v2814, 5
      %v2817 = vor.u32 %v2813, %v2816
      %v2818 = vrot.slane %v2817, 4
      %v2820 = vshll.u32 %v2759, 16
      %v2822 = vrot.slane %v2820, 5
      %v2823 = vsel %vm321, %v2818, %v2822
      %v2825 = vshrl.u32 %v2760, 16
      %v2827 = vrot.slane %v2825, 4
      %v2828 = vshll.u32 %v2760, 16
      %v2830 = vrot.slane %v2828, 5
      %v2831 = vor.u32 %v2827, %v2830
      %v2832 = vrot.slane %v2831, 4
      %v2834 = vshll.u32 %v2761, 16
      %v2836 = vrot.slane %v2834, 5
      %v2837 = vsel %vm321, %v2832, %v2836
      %v2839 = vshrl.u32 %v2762, 16
      %v2841 = vrot.slane %v2839, 4
      %v2842 = vshll.u32 %v2762, 16
      %v2844 = vrot.slane %v2842, 5
      %v2845 = vor.u32 %v2841, %v2844
      %v2846 = vrot.slane %v2845, 4
      %v2848 = vshll.u32 %v2763, 16
      %v2850 = vrot.slane %v2848, 5
      %v2851 = vsel %vm321, %v2846, %v2850
      %v2853 = vshrl.u32 %v2764, 16
      %v2855 = vrot.slane %v2853, 4
      %v2856 = vshll.u32 %v2764, 16
      %v2858 = vrot.slane %v2856, 5
      %v2859 = vor.u32 %v2855, %v2858
      %v2860 = vrot.slane %v2859, 4
      %v2862 = vshll.u32 %v2765, 16
      %v2864 = vrot.slane %v2862, 5
      %v2865 = vsel %vm321, %v2860, %v2864
      %v2867 = vshrl.u32 %v2766, 16
      %v2869 = vrot.slane %v2867, 4
      %v2870 = vshll.u32 %v2766, 16
      %v2872 = vrot.slane %v2870, 5
      %v2873 = vor.u32 %v2869, %v2872
      %v2874 = vrot.slane %v2873, 4
      %v2876 = vshll.u32 %v2767, 16
      %v2878 = vrot.slane %v2876, 5
      %v2879 = vsel %vm321, %v2874, %v2878
      %2880 = vrot.lane.b32.xlu0 %v2781, 92
      %v2881 = vpop.permute.xlu0 %2880
      %2882 = vrot.lane.b32.xlu0 %v2795, 92
      %v2883 = vpop.permute.xlu0 %2882
      %2884 = vrot.lane.b32.xlu0 %v2809, 92
      %v2885 = vpop.permute.xlu0 %2884
      %2886 = vrot.lane.b32.xlu0 %v2823, 92
      %v2887 = vpop.permute.xlu0 %2886
      %2888 = vrot.lane.b32.xlu0 %v2837, 92
      %v2889 = vpop.permute.xlu0 %2888
      %2890 = vrot.lane.b32.xlu0 %v2851, 92
      %v2891 = vpop.permute.xlu0 %2890
      %2892 = vrot.lane.b32.xlu0 %v2865, 92
      %v2893 = vpop.permute.xlu0 %2892
      %2894 = vrot.lane.b32.xlu0 %v2879, 92
      %v2895 = vpop.permute.xlu0 %2894
      %vm2904 = vcmask 782048
      %2905 = vst.msk [vmem:[#allocation2] sm:$0xf] %vm2904, %v2881
      %2906 = vst.msk [vmem:[#allocation2 + $0x8] sm:$0xf] %vm2904, %v2883
      %2907 = vst.msk [vmem:[#allocation2 + $0x10] sm:$0xf] %vm2904, %v2885
      %2908 = vst.msk [vmem:[#allocation2 + $0x18] sm:$0xf] %vm2904, %v2887
      %2909 = vst.msk [vmem:[#allocation2 + $0x20] sm:$0xf] %vm2904, %v2889
      %2910 = vst.msk [vmem:[#allocation2 + $0x28] sm:$0xf] %vm2904, %v2891
      %2911 = vst.msk [vmem:[#allocation2 + $0x30] sm:$0xf] %vm2904, %v2893
      %2912 = vst.msk [vmem:[#allocation2 + $0x38] sm:$0xf] %vm2904, %v2895
      %v2913 = vld [vmem:[%s2702] sm:$0xf]
      %v2914 = vld [vmem:[%s2702 + $0x4] sm:$0x1]
      %v2915 = vld [vmem:[%s2702 + $0x8] sm:$0xf]
      %v2916 = vld [vmem:[%s2702 + $0xc] sm:$0x1]
      %v2917 = vld [vmem:[%s2702 + $0x10] sm:$0xf]
      %v2918 = vld [vmem:[%s2702 + $0x14] sm:$0x1]
      %v2919 = vld [vmem:[%s2702 + $0x18] sm:$0xf]
      %v2920 = vld [vmem:[%s2702 + $0x1c] sm:$0x1]
      %v2921 = vld [vmem:[%s2702 + $0x20] sm:$0xf]
      %v2922 = vld [vmem:[%s2702 + $0x24] sm:$0x1]
      %v2923 = vld [vmem:[%s2702 + $0x28] sm:$0xf]
      %v2924 = vld [vmem:[%s2702 + $0x2c] sm:$0x1]
      %v2925 = vld [vmem:[%s2702 + $0x30] sm:$0xf]
      %v2926 = vld [vmem:[%s2702 + $0x34] sm:$0x1]
      %v2927 = vld [vmem:[%s2702 + $0x38] sm:$0xf]
      %v2928 = vld [vmem:[%s2702 + $0x3c] sm:$0x1]
      %v2930 = vshrl.u32 %v2913, 16
      %v2932 = vrot.slane %v2930, 4
      %v2933 = vshll.u32 %v2913, 16
      %v2935 = vrot.slane %v2933, 5
      %v2936 = vor.u32 %v2932, %v2935
      %v2937 = vrot.slane %v2936, 4
      %v2939 = vshll.u32 %v2914, 16
      %v2941 = vrot.slane %v2939, 5
      %v2942 = vsel %vm321, %v2937, %v2941
      %v2944 = vshrl.u32 %v2915, 16
      %v2946 = vrot.slane %v2944, 4
      %v2947 = vshll.u32 %v2915, 16
      %v2949 = vrot.slane %v2947, 5
      %v2950 = vor.u32 %v2946, %v2949
      %v2951 = vrot.slane %v2950, 4
      %v2953 = vshll.u32 %v2916, 16
      %v2955 = vrot.slane %v2953, 5
      %v2956 = vsel %vm321, %v2951, %v2955
      %v2958 = vshrl.u32 %v2917, 16
      %v2960 = vrot.slane %v2958, 4
      %v2961 = vshll.u32 %v2917, 16
      %v2963 = vrot.slane %v2961, 5
      %v2964 = vor.u32 %v2960, %v2963
      %v2965 = vrot.slane %v2964, 4
      %v2967 = vshll.u32 %v2918, 16
      %v2969 = vrot.slane %v2967, 5
      %v2970 = vsel %vm321, %v2965, %v2969
      %v2972 = vshrl.u32 %v2919, 16
      %v2974 = vrot.slane %v2972, 4
      %v2975 = vshll.u32 %v2919, 16
      %v2977 = vrot.slane %v2975, 5
      %v2978 = vor.u32 %v2974, %v2977
      %v2979 = vrot.slane %v2978, 4
      %v2981 = vshll.u32 %v2920, 16
      %v2983 = vrot.slane %v2981, 5
      %v2984 = vsel %vm321, %v2979, %v2983
      %v2986 = vshrl.u32 %v2921, 16
      %v2988 = vrot.slane %v2986, 4
      %v2989 = vshll.u32 %v2921, 16
      %v2991 = vrot.slane %v2989, 5
      %v2992 = vor.u32 %v2988, %v2991
      %v2993 = vrot.slane %v2992, 4
      %v2995 = vshll.u32 %v2922, 16
      %v2997 = vrot.slane %v2995, 5
      %v2998 = vsel %vm321, %v2993, %v2997
      %v3000 = vshrl.u32 %v2923, 16
      %v3002 = vrot.slane %v3000, 4
      %v3003 = vshll.u32 %v2923, 16
      %v3005 = vrot.slane %v3003, 5
      %v3006 = vor.u32 %v3002, %v3005
      %v3007 = vrot.slane %v3006, 4
      %v3009 = vshll.u32 %v2924, 16
      %v3011 = vrot.slane %v3009, 5
      %v3012 = vsel %vm321, %v3007, %v3011
      %v3014 = vshrl.u32 %v2925, 16
      %v3016 = vrot.slane %v3014, 4
      %v3017 = vshll.u32 %v2925, 16
      %v3019 = vrot.slane %v3017, 5
      %v3020 = vor.u32 %v3016, %v3019
      %v3021 = vrot.slane %v3020, 4
      %v3023 = vshll.u32 %v2926, 16
      %v3025 = vrot.slane %v3023, 5
      %v3026 = vsel %vm321, %v3021, %v3025
      %v3028 = vshrl.u32 %v2927, 16
      %v3030 = vrot.slane %v3028, 4
      %v3031 = vshll.u32 %v2927, 16
      %v3033 = vrot.slane %v3031, 5
      %v3034 = vor.u32 %v3030, %v3033
      %v3035 = vrot.slane %v3034, 4
      %v3037 = vshll.u32 %v2928, 16
      %v3039 = vrot.slane %v3037, 5
      %v3040 = vsel %vm321, %v3035, %v3039
      %3041 = vrot.lane.b32.xlu0 %v2942, 96
      %v3042 = vpop.permute.xlu0 %3041
      %3043 = vrot.lane.b32.xlu0 %v2956, 96
      %v3044 = vpop.permute.xlu0 %3043
      %3045 = vrot.lane.b32.xlu0 %v2970, 96
      %v3046 = vpop.permute.xlu0 %3045
      %3047 = vrot.lane.b32.xlu0 %v2984, 96
      %v3048 = vpop.permute.xlu0 %3047
      %3049 = vrot.lane.b32.xlu0 %v2998, 96
      %v3050 = vpop.permute.xlu0 %3049
      %3051 = vrot.lane.b32.xlu0 %v3012, 96
      %v3052 = vpop.permute.xlu0 %3051
      %3053 = vrot.lane.b32.xlu0 %v3026, 96
      %v3054 = vpop.permute.xlu0 %3053
      %3055 = vrot.lane.b32.xlu0 %v3040, 96
      %v3056 = vpop.permute.xlu0 %3055
      %vm3065 = vcmask 814848
      %3066 = vst.msk [vmem:[#allocation2] sm:$0xf] %vm3065, %v3042
      %3067 = vst.msk [vmem:[#allocation2 + $0x8] sm:$0xf] %vm3065, %v3044
      %3068 = vst.msk [vmem:[#allocation2 + $0x10] sm:$0xf] %vm3065, %v3046
      %3069 = vst.msk [vmem:[#allocation2 + $0x18] sm:$0xf] %vm3065, %v3048
      %3070 = vst.msk [vmem:[#allocation2 + $0x20] sm:$0xf] %vm3065, %v3050
      %3071 = vst.msk [vmem:[#allocation2 + $0x28] sm:$0xf] %vm3065, %v3052
      %3072 = vst.msk [vmem:[#allocation2 + $0x30] sm:$0xf] %vm3065, %v3054
      %3073 = vst.msk [vmem:[#allocation2 + $0x38] sm:$0xf] %vm3065, %v3056
      %v3074 = vld [vmem:[%s2650] sm:$0xe]
      %v3075 = vld [vmem:[%s2650 + $0x4] sm:$0x1]
      %v3076 = vld [vmem:[%s2650 + $0x8] sm:$0xe]
      %v3077 = vld [vmem:[%s2650 + $0xc] sm:$0x1]
      %v3078 = vld [vmem:[%s2650 + $0x10] sm:$0xe]
      %v3079 = vld [vmem:[%s2650 + $0x14] sm:$0x1]
      %v3080 = vld [vmem:[%s2650 + $0x18] sm:$0xe]
      %v3081 = vld [vmem:[%s2650 + $0x1c] sm:$0x1]
      %v3082 = vld [vmem:[%s2650 + $0x20] sm:$0xe]
      %v3083 = vld [vmem:[%s2650 + $0x24] sm:$0x1]
      %v3084 = vld [vmem:[%s2650 + $0x28] sm:$0xe]
      %v3085 = vld [vmem:[%s2650 + $0x2c] sm:$0x1]
      %v3086 = vld [vmem:[%s2650 + $0x30] sm:$0xe]
      %v3087 = vld [vmem:[%s2650 + $0x34] sm:$0x1]
      %v3088 = vld [vmem:[%s2650 + $0x38] sm:$0xe]
      %v3089 = vld [vmem:[%s2650 + $0x3c] sm:$0x1]
      %v3106 = vrot.slane %v3074, 5
      %v3107 = vrot.slane %v3106, 4
      %v3108 = vrot.slane %v3075, 5
      %v3109 = vsel %vm662, %v3107, %v3108
      %v3110 = vrot.slane %v3076, 5
      %v3111 = vrot.slane %v3110, 4
      %v3112 = vrot.slane %v3077, 5
      %v3113 = vsel %vm662, %v3111, %v3112
      %v3114 = vrot.slane %v3078, 5
      %v3115 = vrot.slane %v3114, 4
      %v3116 = vrot.slane %v3079, 5
      %v3117 = vsel %vm662, %v3115, %v3116
      %v3118 = vrot.slane %v3080, 5
      %v3119 = vrot.slane %v3118, 4
      %v3120 = vrot.slane %v3081, 5
      %v3121 = vsel %vm662, %v3119, %v3120
      %v3122 = vrot.slane %v3082, 5
      %v3123 = vrot.slane %v3122, 4
      %v3124 = vrot.slane %v3083, 5
      %v3125 = vsel %vm662, %v3123, %v3124
      %v3126 = vrot.slane %v3084, 5
      %v3127 = vrot.slane %v3126, 4
      %v3128 = vrot.slane %v3085, 5
      %v3129 = vsel %vm662, %v3127, %v3128
      %v3130 = vrot.slane %v3086, 5
      %v3131 = vrot.slane %v3130, 4
      %v3132 = vrot.slane %v3087, 5
      %v3133 = vsel %vm662, %v3131, %v3132
      %v3134 = vrot.slane %v3088, 5
      %v3135 = vrot.slane %v3134, 4
      %v3136 = vrot.slane %v3089, 5
      %v3137 = vsel %vm662, %v3135, %v3136
      %3138 = vrot.lane.b32.xlu0 %v3109, 100
      %v3139 = vpop.permute.xlu0 %3138
      %3140 = vrot.lane.b32.xlu0 %v3113, 100
      %v3141 = vpop.permute.xlu0 %3140
      %3142 = vrot.lane.b32.xlu0 %v3117, 100
      %v3143 = vpop.permute.xlu0 %3142
      %3144 = vrot.lane.b32.xlu0 %v3121, 100
      %v3145 = vpop.permute.xlu0 %3144
      %3146 = vrot.lane.b32.xlu0 %v3125, 100
      %v3147 = vpop.permute.xlu0 %3146
      %3148 = vrot.lane.b32.xlu0 %v3129, 100
      %v3149 = vpop.permute.xlu0 %3148
      %3150 = vrot.lane.b32.xlu0 %v3133, 100
      %v3151 = vpop.permute.xlu0 %3150
      %3152 = vrot.lane.b32.xlu0 %v3137, 100
      %v3153 = vpop.permute.xlu0 %3152
      %vm3162 = vcmask 847648
      %3163 = vst.msk [vmem:[#allocation2] sm:$0xf] %vm3162, %v3139
      %3164 = vst.msk [vmem:[#allocation2 + $0x8] sm:$0xf] %vm3162, %v3141
      %3165 = vst.msk [vmem:[#allocation2 + $0x10] sm:$0xf] %vm3162, %v3143
      %3166 = vst.msk [vmem:[#allocation2 + $0x18] sm:$0xf] %vm3162, %v3145
      %3167 = vst.msk [vmem:[#allocation2 + $0x20] sm:$0xf] %vm3162, %v3147
      %3168 = vst.msk [vmem:[#allocation2 + $0x28] sm:$0xf] %vm3162, %v3149
      %3169 = vst.msk [vmem:[#allocation2 + $0x30] sm:$0xf] %vm3162, %v3151
      %3170 = vst.msk [vmem:[#allocation2 + $0x38] sm:$0xf] %vm3162, %v3153
      %v3171 = vld [vmem:[%s2702] sm:$0xe]
      %v3172 = vld [vmem:[%s2702 + $0x4] sm:$0x1]
      %v3173 = vld [vmem:[%s2702 + $0x8] sm:$0xe]
      %v3174 = vld [vmem:[%s2702 + $0xc] sm:$0x1]
      %v3175 = vld [vmem:[%s2702 + $0x10] sm:$0xe]
      %v3176 = vld [vmem:[%s2702 + $0x14] sm:$0x1]
      %v3177 = vld [vmem:[%s2702 + $0x18] sm:$0xe]
      %v3178 = vld [vmem:[%s2702 + $0x1c] sm:$0x1]
      %v3179 = vld [vmem:[%s2702 + $0x20] sm:$0xe]
      %v3180 = vld [vmem:[%s2702 + $0x24] sm:$0x1]
      %v3181 = vld [vmem:[%s2702 + $0x28] sm:$0xe]
      %v3182 = vld [vmem:[%s2702 + $0x2c] sm:$0x1]
      %v3183 = vld [vmem:[%s2702 + $0x30] sm:$0xe]
      %v3184 = vld [vmem:[%s2702 + $0x34] sm:$0x1]
      %v3185 = vld [vmem:[%s2702 + $0x38] sm:$0xe]
      %v3186 = vld [vmem:[%s2702 + $0x3c] sm:$0x1]
      %v3203 = vrot.slane %v3171, 5
      %v3204 = vrot.slane %v3203, 4
      %v3205 = vrot.slane %v3172, 5
      %v3206 = vsel %vm662, %v3204, %v3205
      %v3207 = vrot.slane %v3173, 5
      %v3208 = vrot.slane %v3207, 4
      %v3209 = vrot.slane %v3174, 5
      %v3210 = vsel %vm662, %v3208, %v3209
      %v3211 = vrot.slane %v3175, 5
      %v3212 = vrot.slane %v3211, 4
      %v3213 = vrot.slane %v3176, 5
      %v3214 = vsel %vm662, %v3212, %v3213
      %v3215 = vrot.slane %v3177, 5
      %v3216 = vrot.slane %v3215, 4
      %v3217 = vrot.slane %v3178, 5
      %v3218 = vsel %vm662, %v3216, %v3217
      %v3219 = vrot.slane %v3179, 5
      %v3220 = vrot.slane %v3219, 4
      %v3221 = vrot.slane %v3180, 5
      %v3222 = vsel %vm662, %v3220, %v3221
      %v3223 = vrot.slane %v3181, 5
      %v3224 = vrot.slane %v3223, 4
      %v3225 = vrot.slane %v3182, 5
      %v3226 = vsel %vm662, %v3224, %v3225
      %v3227 = vrot.slane %v3183, 5
      %v3228 = vrot.slane %v3227, 4
      %v3229 = vrot.slane %v3184, 5
      %v3230 = vsel %vm662, %v3228, %v3229
      %v3231 = vrot.slane %v3185, 5
      %v3232 = vrot.slane %v3231, 4
      %v3233 = vrot.slane %v3186, 5
      %v3234 = vsel %vm662, %v3232, %v3233
      %3235 = vrot.lane.b32.xlu0 %v3206, 104
      %v3236 = vpop.permute.xlu0 %3235
      %3237 = vrot.lane.b32.xlu0 %v3210, 104
      %v3238 = vpop.permute.xlu0 %3237
      %3239 = vrot.lane.b32.xlu0 %v3214, 104
      %v3240 = vpop.permute.xlu0 %3239
      %3241 = vrot.lane.b32.xlu0 %v3218, 104
      %v3242 = vpop.permute.xlu0 %3241
      %3243 = vrot.lane.b32.xlu0 %v3222, 104
      %v3244 = vpop.permute.xlu0 %3243
      %3245 = vrot.lane.b32.xlu0 %v3226, 104
      %v3246 = vpop.permute.xlu0 %3245
      %3247 = vrot.lane.b32.xlu0 %v3230, 104
      %v3248 = vpop.permute.xlu0 %3247
      %3249 = vrot.lane.b32.xlu0 %v3234, 104
      %v3250 = vpop.permute.xlu0 %3249
      %vm3259 = vcmask 880448
      %3260 = vst.msk [vmem:[#allocation2] sm:$0xf] %vm3259, %v3236
      %3261 = vst.msk [vmem:[#allocation2 + $0x8] sm:$0xf] %vm3259, %v3238
      %3262 = vst.msk [vmem:[#allocation2 + $0x10] sm:$0xf] %vm3259, %v3240
      %3263 = vst.msk [vmem:[#allocation2 + $0x18] sm:$0xf] %vm3259, %v3242
      %3264 = vst.msk [vmem:[#allocation2 + $0x20] sm:$0xf] %vm3259, %v3244
      %3265 = vst.msk [vmem:[#allocation2 + $0x28] sm:$0xf] %vm3259, %v3246
      %3266 = vst.msk [vmem:[#allocation2 + $0x30] sm:$0xf] %vm3259, %v3248
      %3267 = vst.msk [vmem:[#allocation2 + $0x38] sm:$0xf] %vm3259, %v3250
      %v3268 = vld [vmem:[%s2650] sm:$0xe]
      %v3269 = vld [vmem:[%s2650 + $0x4] sm:$0x3]
      %v3270 = vld [vmem:[%s2650 + $0x8] sm:$0xe]
      %v3271 = vld [vmem:[%s2650 + $0xc] sm:$0x3]
      %v3272 = vld [vmem:[%s2650 + $0x10] sm:$0xe]
      %v3273 = vld [vmem:[%s2650 + $0x14] sm:$0x3]
      %v3274 = vld [vmem:[%s2650 + $0x18] sm:$0xe]
      %v3275 = vld [vmem:[%s2650 + $0x1c] sm:$0x3]
      %v3276 = vld [vmem:[%s2650 + $0x20] sm:$0xe]
      %v3277 = vld [vmem:[%s2650 + $0x24] sm:$0x3]
      %v3278 = vld [vmem:[%s2650 + $0x28] sm:$0xe]
      %v3279 = vld [vmem:[%s2650 + $0x2c] sm:$0x3]
      %v3280 = vld [vmem:[%s2650 + $0x30] sm:$0xe]
      %v3281 = vld [vmem:[%s2650 + $0x34] sm:$0x3]
      %v3282 = vld [vmem:[%s2650 + $0x38] sm:$0xe]
      %v3283 = vld [vmem:[%s2650 + $0x3c] sm:$0x3]
      %v3285 = vshrl.u32 %v3268, 16
      %v3287 = vrot.slane %v3285, 5
      %v3288 = vshll.u32 %v3268, 16
      %v3290 = vrot.slane %v3288, 6
      %v3291 = vor.u32 %v3287, %v3290
      %v3292 = vrot.slane %v3291, 4
      %v3294 = vshrl.u32 %v3269, 16
      %v3296 = vrot.slane %v3294, 5
      %v3297 = vshll.u32 %v3269, 16
      %v3299 = vrot.slane %v3297, 6
      %v3300 = vor.u32 %v3296, %v3299
      %v3301 = vsel %vm843, %v3292, %v3300
      %v3303 = vshrl.u32 %v3270, 16
      %v3305 = vrot.slane %v3303, 5
      %v3306 = vshll.u32 %v3270, 16
      %v3308 = vrot.slane %v3306, 6
      %v3309 = vor.u32 %v3305, %v3308
      %v3310 = vrot.slane %v3309, 4
      %v3312 = vshrl.u32 %v3271, 16
      %v3314 = vrot.slane %v3312, 5
      %v3315 = vshll.u32 %v3271, 16
      %v3317 = vrot.slane %v3315, 6
      %v3318 = vor.u32 %v3314, %v3317
      %v3319 = vsel %vm843, %v3310, %v3318
      %v3321 = vshrl.u32 %v3272, 16
      %v3323 = vrot.slane %v3321, 5
      %v3324 = vshll.u32 %v3272, 16
      %v3326 = vrot.slane %v3324, 6
      %v3327 = vor.u32 %v3323, %v3326
      %v3328 = vrot.slane %v3327, 4
      %v3330 = vshrl.u32 %v3273, 16
      %v3332 = vrot.slane %v3330, 5
      %v3333 = vshll.u32 %v3273, 16
      %v3335 = vrot.slane %v3333, 6
      %v3336 = vor.u32 %v3332, %v3335
      %v3337 = vsel %vm843, %v3328, %v3336
      %v3339 = vshrl.u32 %v3274, 16
      %v3341 = vrot.slane %v3339, 5
      %v3342 = vshll.u32 %v3274, 16
      %v3344 = vrot.slane %v3342, 6
      %v3345 = vor.u32 %v3341, %v3344
      %v3346 = vrot.slane %v3345, 4
      %v3348 = vshrl.u32 %v3275, 16
      %v3350 = vrot.slane %v3348, 5
      %v3351 = vshll.u32 %v3275, 16
      %v3353 = vrot.slane %v3351, 6
      %v3354 = vor.u32 %v3350, %v3353
      %v3355 = vsel %vm843, %v3346, %v3354
      %v3357 = vshrl.u32 %v3276, 16
      %v3359 = vrot.slane %v3357, 5
      %v3360 = vshll.u32 %v3276, 16
      %v3362 = vrot.slane %v3360, 6
      %v3363 = vor.u32 %v3359, %v3362
      %v3364 = vrot.slane %v3363, 4
      %v3366 = vshrl.u32 %v3277, 16
      %v3368 = vrot.slane %v3366, 5
      %v3369 = vshll.u32 %v3277, 16
      %v3371 = vrot.slane %v3369, 6
      %v3372 = vor.u32 %v3368, %v3371
      %v3373 = vsel %vm843, %v3364, %v3372
      %v3375 = vshrl.u32 %v3278, 16
      %v3377 = vrot.slane %v3375, 5
      %v3378 = vshll.u32 %v3278, 16
      %v3380 = vrot.slane %v3378, 6
      %v3381 = vor.u32 %v3377, %v3380
      %v3382 = vrot.slane %v3381, 4
      %v3384 = vshrl.u32 %v3279, 16
      %v3386 = vrot.slane %v3384, 5
      %v3387 = vshll.u32 %v3279, 16
      %v3389 = vrot.slane %v3387, 6
      %v3390 = vor.u32 %v3386, %v3389
      %v3391 = vsel %vm843, %v3382, %v3390
      %v3393 = vshrl.u32 %v3280, 16
      %v3395 = vrot.slane %v3393, 5
      %v3396 = vshll.u32 %v3280, 16
      %v3398 = vrot.slane %v3396, 6
      %v3399 = vor.u32 %v3395, %v3398
      %v3400 = vrot.slane %v3399, 4
      %v3402 = vshrl.u32 %v3281, 16
      %v3404 = vrot.slane %v3402, 5
      %v3405 = vshll.u32 %v3281, 16
      %v3407 = vrot.slane %v3405, 6
      %v3408 = vor.u32 %v3404, %v3407
      %v3409 = vsel %vm843, %v3400, %v3408
      %v3411 = vshrl.u32 %v3282, 16
      %v3413 = vrot.slane %v3411, 5
      %v3414 = vshll.u32 %v3282, 16
      %v3416 = vrot.slane %v3414, 6
      %v3417 = vor.u32 %v3413, %v3416
      %v3418 = vrot.slane %v3417, 4
      %v3420 = vshrl.u32 %v3283, 16
      %v3422 = vrot.slane %v3420, 5
      %v3423 = vshll.u32 %v3283, 16
      %v3425 = vrot.slane %v3423, 6
      %v3426 = vor.u32 %v3422, %v3425
      %v3427 = vsel %vm843, %v3418, %v3426
      %3428 = vrot.lane.b32.xlu0 %v3301, 108
      %v3429 = vpop.permute.xlu0 %3428
      %3430 = vrot.lane.b32.xlu0 %v3319, 108
      %v3431 = vpop.permute.xlu0 %3430
      %3432 = vrot.lane.b32.xlu0 %v3337, 108
      %v3433 = vpop.permute.xlu0 %3432
      %3434 = vrot.lane.b32.xlu0 %v3355, 108
      %v3435 = vpop.permute.xlu0 %3434
      %3436 = vrot.lane.b32.xlu0 %v3373, 108
      %v3437 = vpop.permute.xlu0 %3436
      %3438 = vrot.lane.b32.xlu0 %v3391, 108
      %v3439 = vpop.permute.xlu0 %3438
      %3440 = vrot.lane.b32.xlu0 %v3409, 108
      %v3441 = vpop.permute.xlu0 %3440
      %3442 = vrot.lane.b32.xlu0 %v3427, 108
      %v3443 = vpop.permute.xlu0 %3442
      %vm3452 = vcmask 913248
      %3453 = vst.msk [vmem:[#allocation2] sm:$0xf] %vm3452, %v3429
      %3454 = vst.msk [vmem:[#allocation2 + $0x8] sm:$0xf] %vm3452, %v3431
      %3455 = vst.msk [vmem:[#allocation2 + $0x10] sm:$0xf] %vm3452, %v3433
      %3456 = vst.msk [vmem:[#allocation2 + $0x18] sm:$0xf] %vm3452, %v3435
      %3457 = vst.msk [vmem:[#allocation2 + $0x20] sm:$0xf] %vm3452, %v3437
      %3458 = vst.msk [vmem:[#allocation2 + $0x28] sm:$0xf] %vm3452, %v3439
      %3459 = vst.msk [vmem:[#allocation2 + $0x30] sm:$0xf] %vm3452, %v3441
      %3460 = vst.msk [vmem:[#allocation2 + $0x38] sm:$0xf] %vm3452, %v3443
      %s3461 = sadd.s32 %s222, 2
      %s3462 = smul.u32 %s3461, 2
      %s3463 = smul.addr %s3462, 4
      %s3464 = scalar_lea.vmem %s210, %s3463
      %v3465 = vld [vmem:[%s3464] sm:$0xf]
      %v3466 = vld [vmem:[%s3464 + $0x8] sm:$0xf]
      %v3467 = vld [vmem:[%s3464 + $0x10] sm:$0xf]
      %v3468 = vld [vmem:[%s3464 + $0x18] sm:$0xf]
      %v3469 = vld [vmem:[%s3464 + $0x20] sm:$0xf]
      %v3470 = vld [vmem:[%s3464 + $0x28] sm:$0xf]
      %v3471 = vld [vmem:[%s3464 + $0x30] sm:$0xf]
      %v3472 = vld [vmem:[%s3464 + $0x38] sm:$0xf]
      %3481 = vrot.lane.b32.xlu0 %v3465, 112
      %v3482 = vpop.permute.xlu0 %3481
      %3483 = vrot.lane.b32.xlu0 %v3466, 112
      %v3484 = vpop.permute.xlu0 %3483
      %3485 = vrot.lane.b32.xlu0 %v3467, 112
      %v3486 = vpop.permute.xlu0 %3485
      %3487 = vrot.lane.b32.xlu0 %v3468, 112
      %v3488 = vpop.permute.xlu0 %3487
      %3489 = vrot.lane.b32.xlu0 %v3469, 112
      %v3490 = vpop.permute.xlu0 %3489
      %3491 = vrot.lane.b32.xlu0 %v3470, 112
      %v3492 = vpop.permute.xlu0 %3491
      %3493 = vrot.lane.b32.xlu0 %v3471, 112
      %v3494 = vpop.permute.xlu0 %3493
      %3495 = vrot.lane.b32.xlu0 %v3472, 112
      %v3496 = vpop.permute.xlu0 %3495
      %vm3505 = vcmask 946048
      %3506 = vst.msk [vmem:[#allocation2] sm:$0xf] %vm3505, %v3482
      %3507 = vst.msk [vmem:[#allocation2 + $0x8] sm:$0xf] %vm3505, %v3484
      %3508 = vst.msk [vmem:[#allocation2 + $0x10] sm:$0xf] %vm3505, %v3486
      %3509 = vst.msk [vmem:[#allocation2 + $0x18] sm:$0xf] %vm3505, %v3488
      %3510 = vst.msk [vmem:[#allocation2 + $0x20] sm:$0xf] %vm3505, %v3490
      %3511 = vst.msk [vmem:[#allocation2 + $0x28] sm:$0xf] %vm3505, %v3492
      %3512 = vst.msk [vmem:[#allocation2 + $0x30] sm:$0xf] %vm3505, %v3494
      %3513 = vst.msk [vmem:[#allocation2 + $0x38] sm:$0xf] %vm3505, %v3496
      %s3514 = sadd.s32 %s3462, 22
      %s3515 = smul.addr %s3514, 4
      %s3516 = scalar_lea.vmem %s210, %s3515
      %v3517 = vld [vmem:[%s3516] sm:$0xf]
      %v3518 = vld [vmem:[%s3516 + $0x8] sm:$0xf]
      %v3519 = vld [vmem:[%s3516 + $0x10] sm:$0xf]
      %v3520 = vld [vmem:[%s3516 + $0x18] sm:$0xf]
      %v3521 = vld [vmem:[%s3516 + $0x20] sm:$0xf]
      %v3522 = vld [vmem:[%s3516 + $0x28] sm:$0xf]
      %v3523 = vld [vmem:[%s3516 + $0x30] sm:$0xf]
      %v3524 = vld [vmem:[%s3516 + $0x38] sm:$0xf]
      %3533 = vrot.lane.b32.xlu0 %v3517, 116
      %v3534 = vpop.permute.xlu0 %3533
      %3535 = vrot.lane.b32.xlu0 %v3518, 116
      %v3536 = vpop.permute.xlu0 %3535
      %3537 = vrot.lane.b32.xlu0 %v3519, 116
      %v3538 = vpop.permute.xlu0 %3537
      %3539 = vrot.lane.b32.xlu0 %v3520, 116
      %v3540 = vpop.permute.xlu0 %3539
      %3541 = vrot.lane.b32.xlu0 %v3521, 116
      %v3542 = vpop.permute.xlu0 %3541
      %3543 = vrot.lane.b32.xlu0 %v3522, 116
      %v3544 = vpop.permute.xlu0 %3543
      %3545 = vrot.lane.b32.xlu0 %v3523, 116
      %v3546 = vpop.permute.xlu0 %3545
      %3547 = vrot.lane.b32.xlu0 %v3524, 116
      %v3548 = vpop.permute.xlu0 %3547
      %vm3557 = vcmask 978848
      %3558 = vst.msk [vmem:[#allocation2] sm:$0xf] %vm3557, %v3534
      %3559 = vst.msk [vmem:[#allocation2 + $0x8] sm:$0xf] %vm3557, %v3536
      %3560 = vst.msk [vmem:[#allocation2 + $0x10] sm:$0xf] %vm3557, %v3538
      %3561 = vst.msk [vmem:[#allocation2 + $0x18] sm:$0xf] %vm3557, %v3540
      %3562 = vst.msk [vmem:[#allocation2 + $0x20] sm:$0xf] %vm3557, %v3542
      %3563 = vst.msk [vmem:[#allocation2 + $0x28] sm:$0xf] %vm3557, %v3544
      %3564 = vst.msk [vmem:[#allocation2 + $0x30] sm:$0xf] %vm3557, %v3546
      %3565 = vst.msk [vmem:[#allocation2 + $0x38] sm:$0xf] %vm3557, %v3548
      %v3566 = vld [vmem:[%s3464] sm:$0xf]
      %v3567 = vld [vmem:[%s3464 + $0x4] sm:$0x1]
      %v3568 = vld [vmem:[%s3464 + $0x8] sm:$0xf]
      %v3569 = vld [vmem:[%s3464 + $0xc] sm:$0x1]
      %v3570 = vld [vmem:[%s3464 + $0x10] sm:$0xf]
      %v3571 = vld [vmem:[%s3464 + $0x14] sm:$0x1]
      %v3572 = vld [vmem:[%s3464 + $0x18] sm:$0xf]
      %v3573 = vld [vmem:[%s3464 + $0x1c] sm:$0x1]
      %v3574 = vld [vmem:[%s3464 + $0x20] sm:$0xf]
      %v3575 = vld [vmem:[%s3464 + $0x24] sm:$0x1]
      %v3576 = vld [vmem:[%s3464 + $0x28] sm:$0xf]
      %v3577 = vld [vmem:[%s3464 + $0x2c] sm:$0x1]
      %v3578 = vld [vmem:[%s3464 + $0x30] sm:$0xf]
      %v3579 = vld [vmem:[%s3464 + $0x34] sm:$0x1]
      %v3580 = vld [vmem:[%s3464 + $0x38] sm:$0xf]
      %v3581 = vld [vmem:[%s3464 + $0x3c] sm:$0x1]
      %v3583 = vshrl.u32 %v3566, 16
      %v3585 = vrot.slane %v3583, 4
      %v3586 = vshll.u32 %v3566, 16
      %v3588 = vrot.slane %v3586, 5
      %v3589 = vor.u32 %v3585, %v3588
      %v3590 = vrot.slane %v3589, 4
      %v3592 = vshll.u32 %v3567, 16
      %v3594 = vrot.slane %v3592, 5
      %v3595 = vsel %vm321, %v3590, %v3594
      %v3597 = vshrl.u32 %v3568, 16
      %v3599 = vrot.slane %v3597, 4
      %v3600 = vshll.u32 %v3568, 16
      %v3602 = vrot.slane %v3600, 5
      %v3603 = vor.u32 %v3599, %v3602
      %v3604 = vrot.slane %v3603, 4
      %v3606 = vshll.u32 %v3569, 16
      %v3608 = vrot.slane %v3606, 5
      %v3609 = vsel %vm321, %v3604, %v3608
      %v3611 = vshrl.u32 %v3570, 16
      %v3613 = vrot.slane %v3611, 4
      %v3614 = vshll.u32 %v3570, 16
      %v3616 = vrot.slane %v3614, 5
      %v3617 = vor.u32 %v3613, %v3616
      %v3618 = vrot.slane %v3617, 4
      %v3620 = vshll.u32 %v3571, 16
      %v3622 = vrot.slane %v3620, 5
      %v3623 = vsel %vm321, %v3618, %v3622
      %v3625 = vshrl.u32 %v3572, 16
      %v3627 = vrot.slane %v3625, 4
      %v3628 = vshll.u32 %v3572, 16
      %v3630 = vrot.slane %v3628, 5
      %v3631 = vor.u32 %v3627, %v3630
      %v3632 = vrot.slane %v3631, 4
      %v3634 = vshll.u32 %v3573, 16
      %v3636 = vrot.slane %v3634, 5
      %v3637 = vsel %vm321, %v3632, %v3636
      %v3639 = vshrl.u32 %v3574, 16
      %v3641 = vrot.slane %v3639, 4
      %v3642 = vshll.u32 %v3574, 16
      %v3644 = vrot.slane %v3642, 5
      %v3645 = vor.u32 %v3641, %v3644
      %v3646 = vrot.slane %v3645, 4
      %v3648 = vshll.u32 %v3575, 16
      %v3650 = vrot.slane %v3648, 5
      %v3651 = vsel %vm321, %v3646, %v3650
      %v3653 = vshrl.u32 %v3576, 16
      %v3655 = vrot.slane %v3653, 4
      %v3656 = vshll.u32 %v3576, 16
      %v3658 = vrot.slane %v3656, 5
      %v3659 = vor.u32 %v3655, %v3658
      %v3660 = vrot.slane %v3659, 4
      %v3662 = vshll.u32 %v3577, 16
      %v3664 = vrot.slane %v3662, 5
      %v3665 = vsel %vm321, %v3660, %v3664
      %v3667 = vshrl.u32 %v3578, 16
      %v3669 = vrot.slane %v3667, 4
      %v3670 = vshll.u32 %v3578, 16
      %v3672 = vrot.slane %v3670, 5
      %v3673 = vor.u32 %v3669, %v3672
      %v3674 = vrot.slane %v3673, 4
      %v3676 = vshll.u32 %v3579, 16
      %v3678 = vrot.slane %v3676, 5
      %v3679 = vsel %vm321, %v3674, %v3678
      %v3681 = vshrl.u32 %v3580, 16
      %v3683 = vrot.slane %v3681, 4
      %v3684 = vshll.u32 %v3580, 16
      %v3686 = vrot.slane %v3684, 5
      %v3687 = vor.u32 %v3683, %v3686
      %v3688 = vrot.slane %v3687, 4
      %v3690 = vshll.u32 %v3581, 16
      %v3692 = vrot.slane %v3690, 5
      %v3693 = vsel %vm321, %v3688, %v3692
      %3694 = vrot.lane.b32.xlu0 %v3595, 120
      %v3695 = vpop.permute.xlu0 %3694
      %3696 = vrot.lane.b32.xlu0 %v3609, 120
      %v3697 = vpop.permute.xlu0 %3696
      %3698 = vrot.lane.b32.xlu0 %v3623, 120
      %v3699 = vpop.permute.xlu0 %3698
      %3700 = vrot.lane.b32.xlu0 %v3637, 120
      %v3701 = vpop.permute.xlu0 %3700
      %3702 = vrot.lane.b32.xlu0 %v3651, 120
      %v3703 = vpop.permute.xlu0 %3702
      %3704 = vrot.lane.b32.xlu0 %v3665, 120
      %v3705 = vpop.permute.xlu0 %3704
      %3706 = vrot.lane.b32.xlu0 %v3679, 120
      %v3707 = vpop.permute.xlu0 %3706
      %3708 = vrot.lane.b32.xlu0 %v3693, 120
      %v3709 = vpop.permute.xlu0 %3708
      %vm3718 = vcmask 1011648
      %3719 = vst.msk [vmem:[#allocation2] sm:$0xf] %vm3718, %v3695
      %3720 = vst.msk [vmem:[#allocation2 + $0x8] sm:$0xf] %vm3718, %v3697
      %3721 = vst.msk [vmem:[#allocation2 + $0x10] sm:$0xf] %vm3718, %v3699
      %3722 = vst.msk [vmem:[#allocation2 + $0x18] sm:$0xf] %vm3718, %v3701
      %3723 = vst.msk [vmem:[#allocation2 + $0x20] sm:$0xf] %vm3718, %v3703
      %3724 = vst.msk [vmem:[#allocation2 + $0x28] sm:$0xf] %vm3718, %v3705
      %3725 = vst.msk [vmem:[#allocation2 + $0x30] sm:$0xf] %vm3718, %v3707
      %3726 = vst.msk [vmem:[#allocation2 + $0x38] sm:$0xf] %vm3718, %v3709
      %v3727 = vld [vmem:[%s3516] sm:$0xf]
      %v3728 = vld [vmem:[%s3516 + $0x4] sm:$0x1]
      %v3729 = vld [vmem:[%s3516 + $0x8] sm:$0xf]
      %v3730 = vld [vmem:[%s3516 + $0xc] sm:$0x1]
      %v3731 = vld [vmem:[%s3516 + $0x10] sm:$0xf]
      %v3732 = vld [vmem:[%s3516 + $0x14] sm:$0x1]
      %v3733 = vld [vmem:[%s3516 + $0x18] sm:$0xf]
      %v3734 = vld [vmem:[%s3516 + $0x1c] sm:$0x1]
      %v3735 = vld [vmem:[%s3516 + $0x20] sm:$0xf]
      %v3736 = vld [vmem:[%s3516 + $0x24] sm:$0x1]
      %v3737 = vld [vmem:[%s3516 + $0x28] sm:$0xf]
      %v3738 = vld [vmem:[%s3516 + $0x2c] sm:$0x1]
      %v3739 = vld [vmem:[%s3516 + $0x30] sm:$0xf]
      %v3740 = vld [vmem:[%s3516 + $0x34] sm:$0x1]
      %v3741 = vld [vmem:[%s3516 + $0x38] sm:$0xf]
      %v3742 = vld [vmem:[%s3516 + $0x3c] sm:$0x1]
      %v3744 = vshrl.u32 %v3727, 16
      %v3746 = vrot.slane %v3744, 4
      %v3747 = vshll.u32 %v3727, 16
      %v3749 = vrot.slane %v3747, 5
      %v3750 = vor.u32 %v3746, %v3749
      %v3751 = vrot.slane %v3750, 4
      %v3753 = vshll.u32 %v3728, 16
      %v3755 = vrot.slane %v3753, 5
      %v3756 = vsel %vm321, %v3751, %v3755
      %v3758 = vshrl.u32 %v3729, 16
      %v3760 = vrot.slane %v3758, 4
      %v3761 = vshll.u32 %v3729, 16
      %v3763 = vrot.slane %v3761, 5
      %v3764 = vor.u32 %v3760, %v3763
      %v3765 = vrot.slane %v3764, 4
      %v3767 = vshll.u32 %v3730, 16
      %v3769 = vrot.slane %v3767, 5
      %v3770 = vsel %vm321, %v3765, %v3769
      %v3772 = vshrl.u32 %v3731, 16
      %v3774 = vrot.slane %v3772, 4
      %v3775 = vshll.u32 %v3731, 16
      %v3777 = vrot.slane %v3775, 5
      %v3778 = vor.u32 %v3774, %v3777
      %v3779 = vrot.slane %v3778, 4
      %v3781 = vshll.u32 %v3732, 16
      %v3783 = vrot.slane %v3781, 5
      %v3784 = vsel %vm321, %v3779, %v3783
      %v3786 = vshrl.u32 %v3733, 16
      %v3788 = vrot.slane %v3786, 4
      %v3789 = vshll.u32 %v3733, 16
      %v3791 = vrot.slane %v3789, 5
      %v3792 = vor.u32 %v3788, %v3791
      %v3793 = vrot.slane %v3792, 4
      %v3795 = vshll.u32 %v3734, 16
      %v3797 = vrot.slane %v3795, 5
      %v3798 = vsel %vm321, %v3793, %v3797
      %v3800 = vshrl.u32 %v3735, 16
      %v3802 = vrot.slane %v3800, 4
      %v3803 = vshll.u32 %v3735, 16
      %v3805 = vrot.slane %v3803, 5
      %v3806 = vor.u32 %v3802, %v3805
      %v3807 = vrot.slane %v3806, 4
      %v3809 = vshll.u32 %v3736, 16
      %v3811 = vrot.slane %v3809, 5
      %v3812 = vsel %vm321, %v3807, %v3811
      %v3814 = vshrl.u32 %v3737, 16
      %v3816 = vrot.slane %v3814, 4
      %v3817 = vshll.u32 %v3737, 16
      %v3819 = vrot.slane %v3817, 5
      %v3820 = vor.u32 %v3816, %v3819
      %v3821 = vrot.slane %v3820, 4
      %v3823 = vshll.u32 %v3738, 16
      %v3825 = vrot.slane %v3823, 5
      %v3826 = vsel %vm321, %v3821, %v3825
      %v3828 = vshrl.u32 %v3739, 16
      %v3830 = vrot.slane %v3828, 4
      %v3831 = vshll.u32 %v3739, 16
      %v3833 = vrot.slane %v3831, 5
      %v3834 = vor.u32 %v3830, %v3833
      %v3835 = vrot.slane %v3834, 4
      %v3837 = vshll.u32 %v3740, 16
      %v3839 = vrot.slane %v3837, 5
      %v3840 = vsel %vm321, %v3835, %v3839
      %v3842 = vshrl.u32 %v3741, 16
      %v3844 = vrot.slane %v3842, 4
      %v3845 = vshll.u32 %v3741, 16
      %v3847 = vrot.slane %v3845, 5
      %v3848 = vor.u32 %v3844, %v3847
      %v3849 = vrot.slane %v3848, 4
      %v3851 = vshll.u32 %v3742, 16
      %v3853 = vrot.slane %v3851, 5
      %v3854 = vsel %vm321, %v3849, %v3853
      %3855 = vrot.lane.b32.xlu0 %v3756, 124
      %v3856 = vpop.permute.xlu0 %3855
      %3857 = vrot.lane.b32.xlu0 %v3770, 124
      %v3858 = vpop.permute.xlu0 %3857
      %3859 = vrot.lane.b32.xlu0 %v3784, 124
      %v3860 = vpop.permute.xlu0 %3859
      %3861 = vrot.lane.b32.xlu0 %v3798, 124
      %v3862 = vpop.permute.xlu0 %3861
      %3863 = vrot.lane.b32.xlu0 %v3812, 124
      %v3864 = vpop.permute.xlu0 %3863
      %3865 = vrot.lane.b32.xlu0 %v3826, 124
      %v3866 = vpop.permute.xlu0 %3865
      %3867 = vrot.lane.b32.xlu0 %v3840, 124
      %v3868 = vpop.permute.xlu0 %3867
      %3869 = vrot.lane.b32.xlu0 %v3854, 124
      %v3870 = vpop.permute.xlu0 %3869
      %vm3879 = vcmask 1044448
      %3880 = vst.msk [vmem:[#allocation2] sm:$0xf] %vm3879, %v3856
      %3881 = vst.msk [vmem:[#allocation2 + $0x8] sm:$0xf] %vm3879, %v3858
      %3882 = vst.msk [vmem:[#allocation2 + $0x10] sm:$0xf] %vm3879, %v3860
      %3883 = vst.msk [vmem:[#allocation2 + $0x18] sm:$0xf] %vm3879, %v3862
      %3884 = vst.msk [vmem:[#allocation2 + $0x20] sm:$0xf] %vm3879, %v3864
      %3885 = vst.msk [vmem:[#allocation2 + $0x28] sm:$0xf] %vm3879, %v3866
      %3886 = vst.msk [vmem:[#allocation2 + $0x30] sm:$0xf] %vm3879, %v3868
      %3887 = vst.msk [vmem:[#allocation2 + $0x38] sm:$0xf] %vm3879, %v3870
      %v3888 = vld [vmem:[%s3464] sm:$0xe]
      %v3889 = vld [vmem:[%s3464 + $0x4] sm:$0x1]
      %v3890 = vld [vmem:[%s3464 + $0x8] sm:$0xe]
      %v3891 = vld [vmem:[%s3464 + $0xc] sm:$0x1]
      %v3892 = vld [vmem:[%s3464 + $0x10] sm:$0xe]
      %v3893 = vld [vmem:[%s3464 + $0x14] sm:$0x1]
      %v3894 = vld [vmem:[%s3464 + $0x18] sm:$0xe]
      %v3895 = vld [vmem:[%s3464 + $0x1c] sm:$0x1]
      %v3896 = vld [vmem:[%s3464 + $0x20] sm:$0xe]
      %v3897 = vld [vmem:[%s3464 + $0x24] sm:$0x1]
      %v3898 = vld [vmem:[%s3464 + $0x28] sm:$0xe]
      %v3899 = vld [vmem:[%s3464 + $0x2c] sm:$0x1]
      %v3900 = vld [vmem:[%s3464 + $0x30] sm:$0xe]
      %v3901 = vld [vmem:[%s3464 + $0x34] sm:$0x1]
      %v3902 = vld [vmem:[%s3464 + $0x38] sm:$0xe]
      %v3903 = vld [vmem:[%s3464 + $0x3c] sm:$0x1]
      %v3920 = vrot.slane %v3888, 5
      %v3921 = vrot.slane %v3920, 4
      %v3922 = vrot.slane %v3889, 5
      %v3923 = vsel %vm662, %v3921, %v3922
      %v3924 = vrot.slane %v3890, 5
      %v3925 = vrot.slane %v3924, 4
      %v3926 = vrot.slane %v3891, 5
      %v3927 = vsel %vm662, %v3925, %v3926
      %v3928 = vrot.slane %v3892, 5
      %v3929 = vrot.slane %v3928, 4
      %v3930 = vrot.slane %v3893, 5
      %v3931 = vsel %vm662, %v3929, %v3930
      %v3932 = vrot.slane %v3894, 5
      %v3933 = vrot.slane %v3932, 4
      %v3934 = vrot.slane %v3895, 5
      %v3935 = vsel %vm662, %v3933, %v3934
      %v3936 = vrot.slane %v3896, 5
      %v3937 = vrot.slane %v3936, 4
      %v3938 = vrot.slane %v3897, 5
      %v3939 = vsel %vm662, %v3937, %v3938
      %v3940 = vrot.slane %v3898, 5
      %v3941 = vrot.slane %v3940, 4
      %v3942 = vrot.slane %v3899, 5
      %v3943 = vsel %vm662, %v3941, %v3942
      %v3944 = vrot.slane %v3900, 5
      %v3945 = vrot.slane %v3944, 4
      %v3946 = vrot.slane %v3901, 5
      %v3947 = vsel %vm662, %v3945, %v3946
      %v3948 = vrot.slane %v3902, 5
      %v3949 = vrot.slane %v3948, 4
      %v3950 = vrot.slane %v3903, 5
      %v3951 = vsel %vm662, %v3949, %v3950
      %3960 = vst.msk [vmem:[#allocation2 + $0x4] sm:$0xf] %vm242, %v3923
      %3961 = vst.msk [vmem:[#allocation2 + $0xc] sm:$0xf] %vm242, %v3927
      %3962 = vst.msk [vmem:[#allocation2 + $0x14] sm:$0xf] %vm242, %v3931
      %3963 = vst.msk [vmem:[#allocation2 + $0x1c] sm:$0xf] %vm242, %v3935
      %3964 = vst.msk [vmem:[#allocation2 + $0x24] sm:$0xf] %vm242, %v3939
      %3965 = vst.msk [vmem:[#allocation2 + $0x2c] sm:$0xf] %vm242, %v3943
      %3966 = vst.msk [vmem:[#allocation2 + $0x34] sm:$0xf] %vm242, %v3947
      %3967 = vst.msk [vmem:[#allocation2 + $0x3c] sm:$0xf] %vm242, %v3951
      %v3968 = vld [vmem:[%s3516] sm:$0xe]
      %v3969 = vld [vmem:[%s3516 + $0x4] sm:$0x1]
      %v3970 = vld [vmem:[%s3516 + $0x8] sm:$0xe]
      %v3971 = vld [vmem:[%s3516 + $0xc] sm:$0x1]
      %v3972 = vld [vmem:[%s3516 + $0x10] sm:$0xe]
      %v3973 = vld [vmem:[%s3516 + $0x14] sm:$0x1]
      %v3974 = vld [vmem:[%s3516 + $0x18] sm:$0xe]
      %v3975 = vld [vmem:[%s3516 + $0x1c] sm:$0x1]
      %v3976 = vld [vmem:[%s3516 + $0x20] sm:$0xe]
      %v3977 = vld [vmem:[%s3516 + $0x24] sm:$0x1]
      %v3978 = vld [vmem:[%s3516 + $0x28] sm:$0xe]
      %v3979 = vld [vmem:[%s3516 + $0x2c] sm:$0x1]
      %v3980 = vld [vmem:[%s3516 + $0x30] sm:$0xe]
      %v3981 = vld [vmem:[%s3516 + $0x34] sm:$0x1]
      %v3982 = vld [vmem:[%s3516 + $0x38] sm:$0xe]
      %v3983 = vld [vmem:[%s3516 + $0x3c] sm:$0x1]
      %v4000 = vrot.slane %v3968, 5
      %v4001 = vrot.slane %v4000, 4
      %v4002 = vrot.slane %v3969, 5
      %v4003 = vsel %vm662, %v4001, %v4002
      %v4004 = vrot.slane %v3970, 5
      %v4005 = vrot.slane %v4004, 4
      %v4006 = vrot.slane %v3971, 5
      %v4007 = vsel %vm662, %v4005, %v4006
      %v4008 = vrot.slane %v3972, 5
      %v4009 = vrot.slane %v4008, 4
      %v4010 = vrot.slane %v3973, 5
      %v4011 = vsel %vm662, %v4009, %v4010
      %v4012 = vrot.slane %v3974, 5
      %v4013 = vrot.slane %v4012, 4
      %v4014 = vrot.slane %v3975, 5
      %v4015 = vsel %vm662, %v4013, %v4014
      %v4016 = vrot.slane %v3976, 5
      %v4017 = vrot.slane %v4016, 4
      %v4018 = vrot.slane %v3977, 5
      %v4019 = vsel %vm662, %v4017, %v4018
      %v4020 = vrot.slane %v3978, 5
      %v4021 = vrot.slane %v4020, 4
      %v4022 = vrot.slane %v3979, 5
      %v4023 = vsel %vm662, %v4021, %v4022
      %v4024 = vrot.slane %v3980, 5
      %v4025 = vrot.slane %v4024, 4
      %v4026 = vrot.slane %v3981, 5
      %v4027 = vsel %vm662, %v4025, %v4026
      %v4028 = vrot.slane %v3982, 5
      %v4029 = vrot.slane %v4028, 4
      %v4030 = vrot.slane %v3983, 5
      %v4031 = vsel %vm662, %v4029, %v4030
      %4032 = vrot.lane.b32.xlu0 %v4003, 4
      %v4033 = vpop.permute.xlu0 %4032
      %4034 = vrot.lane.b32.xlu0 %v4007, 4
      %v4035 = vpop.permute.xlu0 %4034
      %4036 = vrot.lane.b32.xlu0 %v4011, 4
      %v4037 = vpop.permute.xlu0 %4036
      %4038 = vrot.lane.b32.xlu0 %v4015, 4
      %v4039 = vpop.permute.xlu0 %4038
      %4040 = vrot.lane.b32.xlu0 %v4019, 4
      %v4041 = vpop.permute.xlu0 %4040
      %4042 = vrot.lane.b32.xlu0 %v4023, 4
      %v4043 = vpop.permute.xlu0 %4042
      %4044 = vrot.lane.b32.xlu0 %v4027, 4
      %v4045 = vpop.permute.xlu0 %4044
      %4046 = vrot.lane.b32.xlu0 %v4031, 4
      %v4047 = vpop.permute.xlu0 %4046
      %4056 = vst.msk [vmem:[#allocation2 + $0x4] sm:$0xf] %vm294, %v4033
      %4057 = vst.msk [vmem:[#allocation2 + $0xc] sm:$0xf] %vm294, %v4035
      %4058 = vst.msk [vmem:[#allocation2 + $0x14] sm:$0xf] %vm294, %v4037
      %4059 = vst.msk [vmem:[#allocation2 + $0x1c] sm:$0xf] %vm294, %v4039
      %4060 = vst.msk [vmem:[#allocation2 + $0x24] sm:$0xf] %vm294, %v4041
      %4061 = vst.msk [vmem:[#allocation2 + $0x2c] sm:$0xf] %vm294, %v4043
      %4062 = vst.msk [vmem:[#allocation2 + $0x34] sm:$0xf] %vm294, %v4045
      %4063 = vst.msk [vmem:[#allocation2 + $0x3c] sm:$0xf] %vm294, %v4047
      %v4064 = vld [vmem:[%s3464] sm:$0xe]
      %v4065 = vld [vmem:[%s3464 + $0x4] sm:$0x3]
      %v4066 = vld [vmem:[%s3464 + $0x8] sm:$0xe]
      %v4067 = vld [vmem:[%s3464 + $0xc] sm:$0x3]
      %v4068 = vld [vmem:[%s3464 + $0x10] sm:$0xe]
      %v4069 = vld [vmem:[%s3464 + $0x14] sm:$0x3]
      %v4070 = vld [vmem:[%s3464 + $0x18] sm:$0xe]
      %v4071 = vld [vmem:[%s3464 + $0x1c] sm:$0x3]
      %v4072 = vld [vmem:[%s3464 + $0x20] sm:$0xe]
      %v4073 = vld [vmem:[%s3464 + $0x24] sm:$0x3]
      %v4074 = vld [vmem:[%s3464 + $0x28] sm:$0xe]
      %v4075 = vld [vmem:[%s3464 + $0x2c] sm:$0x3]
      %v4076 = vld [vmem:[%s3464 + $0x30] sm:$0xe]
      %v4077 = vld [vmem:[%s3464 + $0x34] sm:$0x3]
      %v4078 = vld [vmem:[%s3464 + $0x38] sm:$0xe]
      %v4079 = vld [vmem:[%s3464 + $0x3c] sm:$0x3]
      %v4081 = vshrl.u32 %v4064, 16
      %v4083 = vrot.slane %v4081, 5
      %v4084 = vshll.u32 %v4064, 16
      %v4086 = vrot.slane %v4084, 6
      %v4087 = vor.u32 %v4083, %v4086
      %v4088 = vrot.slane %v4087, 4
      %v4090 = vshrl.u32 %v4065, 16
      %v4092 = vrot.slane %v4090, 5
      %v4093 = vshll.u32 %v4065, 16
      %v4095 = vrot.slane %v4093, 6
      %v4096 = vor.u32 %v4092, %v4095
      %v4097 = vsel %vm843, %v4088, %v4096
      %v4099 = vshrl.u32 %v4066, 16
      %v4101 = vrot.slane %v4099, 5
      %v4102 = vshll.u32 %v4066, 16
      %v4104 = vrot.slane %v4102, 6
      %v4105 = vor.u32 %v4101, %v4104
      %v4106 = vrot.slane %v4105, 4
      %v4108 = vshrl.u32 %v4067, 16
      %v4110 = vrot.slane %v4108, 5
      %v4111 = vshll.u32 %v4067, 16
      %v4113 = vrot.slane %v4111, 6
      %v4114 = vor.u32 %v4110, %v4113
      %v4115 = vsel %vm843, %v4106, %v4114
      %v4117 = vshrl.u32 %v4068, 16
      %v4119 = vrot.slane %v4117, 5
      %v4120 = vshll.u32 %v4068, 16
      %v4122 = vrot.slane %v4120, 6
      %v4123 = vor.u32 %v4119, %v4122
      %v4124 = vrot.slane %v4123, 4
      %v4126 = vshrl.u32 %v4069, 16
      %v4128 = vrot.slane %v4126, 5
      %v4129 = vshll.u32 %v4069, 16
      %v4131 = vrot.slane %v4129, 6
      %v4132 = vor.u32 %v4128, %v4131
      %v4133 = vsel %vm843, %v4124, %v4132
      %v4135 = vshrl.u32 %v4070, 16
      %v4137 = vrot.slane %v4135, 5
      %v4138 = vshll.u32 %v4070, 16
      %v4140 = vrot.slane %v4138, 6
      %v4141 = vor.u32 %v4137, %v4140
      %v4142 = vrot.slane %v4141, 4
      %v4144 = vshrl.u32 %v4071, 16
      %v4146 = vrot.slane %v4144, 5
      %v4147 = vshll.u32 %v4071, 16
      %v4149 = vrot.slane %v4147, 6
      %v4150 = vor.u32 %v4146, %v4149
      %v4151 = vsel %vm843, %v4142, %v4150
      %v4153 = vshrl.u32 %v4072, 16
      %v4155 = vrot.slane %v4153, 5
      %v4156 = vshll.u32 %v4072, 16
      %v4158 = vrot.slane %v4156, 6
      %v4159 = vor.u32 %v4155, %v4158
      %v4160 = vrot.slane %v4159, 4
      %v4162 = vshrl.u32 %v4073, 16
      %v4164 = vrot.slane %v4162, 5
      %v4165 = vshll.u32 %v4073, 16
      %v4167 = vrot.slane %v4165, 6
      %v4168 = vor.u32 %v4164, %v4167
      %v4169 = vsel %vm843, %v4160, %v4168
      %v4171 = vshrl.u32 %v4074, 16
      %v4173 = vrot.slane %v4171, 5
      %v4174 = vshll.u32 %v4074, 16
      %v4176 = vrot.slane %v4174, 6
      %v4177 = vor.u32 %v4173, %v4176
      %v4178 = vrot.slane %v4177, 4
      %v4180 = vshrl.u32 %v4075, 16
      %v4182 = vrot.slane %v4180, 5
      %v4183 = vshll.u32 %v4075, 16
      %v4185 = vrot.slane %v4183, 6
      %v4186 = vor.u32 %v4182, %v4185
      %v4187 = vsel %vm843, %v4178, %v4186
      %v4189 = vshrl.u32 %v4076, 16
      %v4191 = vrot.slane %v4189, 5
      %v4192 = vshll.u32 %v4076, 16
      %v4194 = vrot.slane %v4192, 6
      %v4195 = vor.u32 %v4191, %v4194
      %v4196 = vrot.slane %v4195, 4
      %v4198 = vshrl.u32 %v4077, 16
      %v4200 = vrot.slane %v4198, 5
      %v4201 = vshll.u32 %v4077, 16
      %v4203 = vrot.slane %v4201, 6
      %v4204 = vor.u32 %v4200, %v4203
      %v4205 = vsel %vm843, %v4196, %v4204
      %v4207 = vshrl.u32 %v4078, 16
      %v4209 = vrot.slane %v4207, 5
      %v4210 = vshll.u32 %v4078, 16
      %v4212 = vrot.slane %v4210, 6
      %v4213 = vor.u32 %v4209, %v4212
      %v4214 = vrot.slane %v4213, 4
      %v4216 = vshrl.u32 %v4079, 16
      %v4218 = vrot.slane %v4216, 5
      %v4219 = vshll.u32 %v4079, 16
      %v4221 = vrot.slane %v4219, 6
      %v4222 = vor.u32 %v4218, %v4221
      %v4223 = vsel %vm843, %v4214, %v4222
      %4224 = vrot.lane.b32.xlu0 %v4097, 8
      %v4225 = vpop.permute.xlu0 %4224
      %4226 = vrot.lane.b32.xlu0 %v4115, 8
      %v4227 = vpop.permute.xlu0 %4226
      %4228 = vrot.lane.b32.xlu0 %v4133, 8
      %v4229 = vpop.permute.xlu0 %4228
      %4230 = vrot.lane.b32.xlu0 %v4151, 8
      %v4231 = vpop.permute.xlu0 %4230
      %4232 = vrot.lane.b32.xlu0 %v4169, 8
      %v4233 = vpop.permute.xlu0 %4232
      %4234 = vrot.lane.b32.xlu0 %v4187, 8
      %v4235 = vpop.permute.xlu0 %4234
      %4236 = vrot.lane.b32.xlu0 %v4205, 8
      %v4237 = vpop.permute.xlu0 %4236
      %4238 = vrot.lane.b32.xlu0 %v4223, 8
      %v4239 = vpop.permute.xlu0 %4238
      %4248 = vst.msk [vmem:[#allocation2 + $0x4] sm:$0xf] %vm458, %v4225
      %4249 = vst.msk [vmem:[#allocation2 + $0xc] sm:$0xf] %vm458, %v4227
      %4250 = vst.msk [vmem:[#allocation2 + $0x14] sm:$0xf] %vm458, %v4229
      %4251 = vst.msk [vmem:[#allocation2 + $0x1c] sm:$0xf] %vm458, %v4231
      %4252 = vst.msk [vmem:[#allocation2 + $0x24] sm:$0xf] %vm458, %v4233
      %4253 = vst.msk [vmem:[#allocation2 + $0x2c] sm:$0xf] %vm458, %v4235
      %4254 = vst.msk [vmem:[#allocation2 + $0x34] sm:$0xf] %vm458, %v4237
      %4255 = vst.msk [vmem:[#allocation2 + $0x3c] sm:$0xf] %vm458, %v4239
      %s4256 = sadd.s32 %s3462, 44
      %s4257 = smul.addr %s4256, 4
      %s4258 = scalar_lea.vmem %s210, %s4257
      %v4259 = vld [vmem:[%s4258] sm:$0xf]
      %v4260 = vld [vmem:[%s4258 + $0x8] sm:$0xf]
      %v4261 = vld [vmem:[%s4258 + $0x10] sm:$0xf]
      %v4262 = vld [vmem:[%s4258 + $0x18] sm:$0xf]
      %v4263 = vld [vmem:[%s4258 + $0x20] sm:$0xf]
      %v4264 = vld [vmem:[%s4258 + $0x28] sm:$0xf]
      %v4265 = vld [vmem:[%s4258 + $0x30] sm:$0xf]
      %v4266 = vld [vmem:[%s4258 + $0x38] sm:$0xf]
      %4275 = vrot.lane.b32.xlu0 %v4259, 12
      %v4276 = vpop.permute.xlu0 %4275
      %4277 = vrot.lane.b32.xlu0 %v4260, 12
      %v4278 = vpop.permute.xlu0 %4277
      %4279 = vrot.lane.b32.xlu0 %v4261, 12
      %v4280 = vpop.permute.xlu0 %4279
      %4281 = vrot.lane.b32.xlu0 %v4262, 12
      %v4282 = vpop.permute.xlu0 %4281
      %4283 = vrot.lane.b32.xlu0 %v4263, 12
      %v4284 = vpop.permute.xlu0 %4283
      %4285 = vrot.lane.b32.xlu0 %v4264, 12
      %v4286 = vpop.permute.xlu0 %4285
      %4287 = vrot.lane.b32.xlu0 %v4265, 12
      %v4288 = vpop.permute.xlu0 %4287
      %4289 = vrot.lane.b32.xlu0 %v4266, 12
      %v4290 = vpop.permute.xlu0 %4289
      %4299 = vst.msk [vmem:[#allocation2 + $0x4] sm:$0xf] %vm619, %v4276
      %4300 = vst.msk [vmem:[#allocation2 + $0xc] sm:$0xf] %vm619, %v4278
      %4301 = vst.msk [vmem:[#allocation2 + $0x14] sm:$0xf] %vm619, %v4280
      %4302 = vst.msk [vmem:[#allocation2 + $0x1c] sm:$0xf] %vm619, %v4282
      %4303 = vst.msk [vmem:[#allocation2 + $0x24] sm:$0xf] %vm619, %v4284
      %4304 = vst.msk [vmem:[#allocation2 + $0x2c] sm:$0xf] %vm619, %v4286
      %4305 = vst.msk [vmem:[#allocation2 + $0x34] sm:$0xf] %vm619, %v4288
      %4306 = vst.msk [vmem:[#allocation2 + $0x3c] sm:$0xf] %vm619, %v4290
      %s4307 = sadd.s32 %s3462, 66
      %s4308 = smul.addr %s4307, 4
      %s4309 = scalar_lea.vmem %s210, %s4308
      %v4310 = vld [vmem:[%s4309] sm:$0xf]
      %v4311 = vld [vmem:[%s4309 + $0x8] sm:$0xf]
      %v4312 = vld [vmem:[%s4309 + $0x10] sm:$0xf]
      %v4313 = vld [vmem:[%s4309 + $0x18] sm:$0xf]
      %v4314 = vld [vmem:[%s4309 + $0x20] sm:$0xf]
      %v4315 = vld [vmem:[%s4309 + $0x28] sm:$0xf]
      %v4316 = vld [vmem:[%s4309 + $0x30] sm:$0xf]
      %v4317 = vld [vmem:[%s4309 + $0x38] sm:$0xf]
      %4326 = vrot.lane.b32.xlu0 %v4310, 16
      %v4327 = vpop.permute.xlu0 %4326
      %4328 = vrot.lane.b32.xlu0 %v4311, 16
      %v4329 = vpop.permute.xlu0 %4328
      %4330 = vrot.lane.b32.xlu0 %v4312, 16
      %v4331 = vpop.permute.xlu0 %4330
      %4332 = vrot.lane.b32.xlu0 %v4313, 16
      %v4333 = vpop.permute.xlu0 %4332
      %4334 = vrot.lane.b32.xlu0 %v4314, 16
      %v4335 = vpop.permute.xlu0 %4334
      %4336 = vrot.lane.b32.xlu0 %v4315, 16
      %v4337 = vpop.permute.xlu0 %4336
      %4338 = vrot.lane.b32.xlu0 %v4316, 16
      %v4339 = vpop.permute.xlu0 %4338
      %4340 = vrot.lane.b32.xlu0 %v4317, 16
      %v4341 = vpop.permute.xlu0 %4340
      %4350 = vst.msk [vmem:[#allocation2 + $0x4] sm:$0xf] %vm719, %v4327
      %4351 = vst.msk [vmem:[#allocation2 + $0xc] sm:$0xf] %vm719, %v4329
      %4352 = vst.msk [vmem:[#allocation2 + $0x14] sm:$0xf] %vm719, %v4331
      %4353 = vst.msk [vmem:[#allocation2 + $0x1c] sm:$0xf] %vm719, %v4333
      %4354 = vst.msk [vmem:[#allocation2 + $0x24] sm:$0xf] %vm719, %v4335
      %4355 = vst.msk [vmem:[#allocation2 + $0x2c] sm:$0xf] %vm719, %v4337
      %4356 = vst.msk [vmem:[#allocation2 + $0x34] sm:$0xf] %vm719, %v4339
      %4357 = vst.msk [vmem:[#allocation2 + $0x3c] sm:$0xf] %vm719, %v4341
      %v4358 = vld [vmem:[%s4258] sm:$0xf]
      %v4359 = vld [vmem:[%s4258 + $0x4] sm:$0x1]
      %v4360 = vld [vmem:[%s4258 + $0x8] sm:$0xf]
      %v4361 = vld [vmem:[%s4258 + $0xc] sm:$0x1]
      %v4362 = vld [vmem:[%s4258 + $0x10] sm:$0xf]
      %v4363 = vld [vmem:[%s4258 + $0x14] sm:$0x1]
      %v4364 = vld [vmem:[%s4258 + $0x18] sm:$0xf]
      %v4365 = vld [vmem:[%s4258 + $0x1c] sm:$0x1]
      %v4366 = vld [vmem:[%s4258 + $0x20] sm:$0xf]
      %v4367 = vld [vmem:[%s4258 + $0x24] sm:$0x1]
      %v4368 = vld [vmem:[%s4258 + $0x28] sm:$0xf]
      %v4369 = vld [vmem:[%s4258 + $0x2c] sm:$0x1]
      %v4370 = vld [vmem:[%s4258 + $0x30] sm:$0xf]
      %v4371 = vld [vmem:[%s4258 + $0x34] sm:$0x1]
      %v4372 = vld [vmem:[%s4258 + $0x38] sm:$0xf]
      %v4373 = vld [vmem:[%s4258 + $0x3c] sm:$0x1]
      %v4375 = vshrl.u32 %v4358, 16
      %v4377 = vrot.slane %v4375, 4
      %v4378 = vshll.u32 %v4358, 16
      %v4380 = vrot.slane %v4378, 5
      %v4381 = vor.u32 %v4377, %v4380
      %v4382 = vrot.slane %v4381, 4
      %v4384 = vshll.u32 %v4359, 16
      %v4386 = vrot.slane %v4384, 5
      %v4387 = vsel %vm321, %v4382, %v4386
      %v4389 = vshrl.u32 %v4360, 16
      %v4391 = vrot.slane %v4389, 4
      %v4392 = vshll.u32 %v4360, 16
      %v4394 = vrot.slane %v4392, 5
      %v4395 = vor.u32 %v4391, %v4394
      %v4396 = vrot.slane %v4395, 4
      %v4398 = vshll.u32 %v4361, 16
      %v4400 = vrot.slane %v4398, 5
      %v4401 = vsel %vm321, %v4396, %v4400
      %v4403 = vshrl.u32 %v4362, 16
      %v4405 = vrot.slane %v4403, 4
      %v4406 = vshll.u32 %v4362, 16
      %v4408 = vrot.slane %v4406, 5
      %v4409 = vor.u32 %v4405, %v4408
      %v4410 = vrot.slane %v4409, 4
      %v4412 = vshll.u32 %v4363, 16
      %v4414 = vrot.slane %v4412, 5
      %v4415 = vsel %vm321, %v4410, %v4414
      %v4417 = vshrl.u32 %v4364, 16
      %v4419 = vrot.slane %v4417, 4
      %v4420 = vshll.u32 %v4364, 16
      %v4422 = vrot.slane %v4420, 5
      %v4423 = vor.u32 %v4419, %v4422
      %v4424 = vrot.slane %v4423, 4
      %v4426 = vshll.u32 %v4365, 16
      %v4428 = vrot.slane %v4426, 5
      %v4429 = vsel %vm321, %v4424, %v4428
      %v4431 = vshrl.u32 %v4366, 16
      %v4433 = vrot.slane %v4431, 4
      %v4434 = vshll.u32 %v4366, 16
      %v4436 = vrot.slane %v4434, 5
      %v4437 = vor.u32 %v4433, %v4436
      %v4438 = vrot.slane %v4437, 4
      %v4440 = vshll.u32 %v4367, 16
      %v4442 = vrot.slane %v4440, 5
      %v4443 = vsel %vm321, %v4438, %v4442
      %v4445 = vshrl.u32 %v4368, 16
      %v4447 = vrot.slane %v4445, 4
      %v4448 = vshll.u32 %v4368, 16
      %v4450 = vrot.slane %v4448, 5
      %v4451 = vor.u32 %v4447, %v4450
      %v4452 = vrot.slane %v4451, 4
      %v4454 = vshll.u32 %v4369, 16
      %v4456 = vrot.slane %v4454, 5
      %v4457 = vsel %vm321, %v4452, %v4456
      %v4459 = vshrl.u32 %v4370, 16
      %v4461 = vrot.slane %v4459, 4
      %v4462 = vshll.u32 %v4370, 16
      %v4464 = vrot.slane %v4462, 5
      %v4465 = vor.u32 %v4461, %v4464
      %v4466 = vrot.slane %v4465, 4
      %v4468 = vshll.u32 %v4371, 16
      %v4470 = vrot.slane %v4468, 5
      %v4471 = vsel %vm321, %v4466, %v4470
      %v4473 = vshrl.u32 %v4372, 16
      %v4475 = vrot.slane %v4473, 4
      %v4476 = vshll.u32 %v4372, 16
      %v4478 = vrot.slane %v4476, 5
      %v4479 = vor.u32 %v4475, %v4478
      %v4480 = vrot.slane %v4479, 4
      %v4482 = vshll.u32 %v4373, 16
      %v4484 = vrot.slane %v4482, 5
      %v4485 = vsel %vm321, %v4480, %v4484
      %4486 = vrot.lane.b32.xlu0 %v4387, 20
      %v4487 = vpop.permute.xlu0 %4486
      %4488 = vrot.lane.b32.xlu0 %v4401, 20
      %v4489 = vpop.permute.xlu0 %4488
      %4490 = vrot.lane.b32.xlu0 %v4415, 20
      %v4491 = vpop.permute.xlu0 %4490
      %4492 = vrot.lane.b32.xlu0 %v4429, 20
      %v4493 = vpop.permute.xlu0 %4492
      %4494 = vrot.lane.b32.xlu0 %v4443, 20
      %v4495 = vpop.permute.xlu0 %4494
      %4496 = vrot.lane.b32.xlu0 %v4457, 20
      %v4497 = vpop.permute.xlu0 %4496
      %4498 = vrot.lane.b32.xlu0 %v4471, 20
      %v4499 = vpop.permute.xlu0 %4498
      %4500 = vrot.lane.b32.xlu0 %v4485, 20
      %v4501 = vpop.permute.xlu0 %4500
      %4510 = vst.msk [vmem:[#allocation2 + $0x4] sm:$0xf] %vm816, %v4487
      %4511 = vst.msk [vmem:[#allocation2 + $0xc] sm:$0xf] %vm816, %v4489
      %4512 = vst.msk [vmem:[#allocation2 + $0x14] sm:$0xf] %vm816, %v4491
      %4513 = vst.msk [vmem:[#allocation2 + $0x1c] sm:$0xf] %vm816, %v4493
      %4514 = vst.msk [vmem:[#allocation2 + $0x24] sm:$0xf] %vm816, %v4495
      %4515 = vst.msk [vmem:[#allocation2 + $0x2c] sm:$0xf] %vm816, %v4497
      %4516 = vst.msk [vmem:[#allocation2 + $0x34] sm:$0xf] %vm816, %v4499
      %4517 = vst.msk [vmem:[#allocation2 + $0x3c] sm:$0xf] %vm816, %v4501
      %v4518 = vld [vmem:[%s4309] sm:$0xf]
      %v4519 = vld [vmem:[%s4309 + $0x4] sm:$0x1]
      %v4520 = vld [vmem:[%s4309 + $0x8] sm:$0xf]
      %v4521 = vld [vmem:[%s4309 + $0xc] sm:$0x1]
      %v4522 = vld [vmem:[%s4309 + $0x10] sm:$0xf]
      %v4523 = vld [vmem:[%s4309 + $0x14] sm:$0x1]
      %v4524 = vld [vmem:[%s4309 + $0x18] sm:$0xf]
      %v4525 = vld [vmem:[%s4309 + $0x1c] sm:$0x1]
      %v4526 = vld [vmem:[%s4309 + $0x20] sm:$0xf]
      %v4527 = vld [vmem:[%s4309 + $0x24] sm:$0x1]
      %v4528 = vld [vmem:[%s4309 + $0x28] sm:$0xf]
      %v4529 = vld [vmem:[%s4309 + $0x2c] sm:$0x1]
      %v4530 = vld [vmem:[%s4309 + $0x30] sm:$0xf]
      %v4531 = vld [vmem:[%s4309 + $0x34] sm:$0x1]
      %v4532 = vld [vmem:[%s4309 + $0x38] sm:$0xf]
      %v4533 = vld [vmem:[%s4309 + $0x3c] sm:$0x1]
      %v4535 = vshrl.u32 %v4518, 16
      %v4537 = vrot.slane %v4535, 4
      %v4538 = vshll.u32 %v4518, 16
      %v4540 = vrot.slane %v4538, 5
      %v4541 = vor.u32 %v4537, %v4540
      %v4542 = vrot.slane %v4541, 4
      %v4544 = vshll.u32 %v4519, 16
      %v4546 = vrot.slane %v4544, 5
      %v4547 = vsel %vm321, %v4542, %v4546
      %v4549 = vshrl.u32 %v4520, 16
      %v4551 = vrot.slane %v4549, 4
      %v4552 = vshll.u32 %v4520, 16
      %v4554 = vrot.slane %v4552, 5
      %v4555 = vor.u32 %v4551, %v4554
      %v4556 = vrot.slane %v4555, 4
      %v4558 = vshll.u32 %v4521, 16
      %v4560 = vrot.slane %v4558, 5
      %v4561 = vsel %vm321, %v4556, %v4560
      %v4563 = vshrl.u32 %v4522, 16
      %v4565 = vrot.slane %v4563, 4
      %v4566 = vshll.u32 %v4522, 16
      %v4568 = vrot.slane %v4566, 5
      %v4569 = vor.u32 %v4565, %v4568
      %v4570 = vrot.slane %v4569, 4
      %v4572 = vshll.u32 %v4523, 16
      %v4574 = vrot.slane %v4572, 5
      %v4575 = vsel %vm321, %v4570, %v4574
      %v4577 = vshrl.u32 %v4524, 16
      %v4579 = vrot.slane %v4577, 4
      %v4580 = vshll.u32 %v4524, 16
      %v4582 = vrot.slane %v4580, 5
      %v4583 = vor.u32 %v4579, %v4582
      %v4584 = vrot.slane %v4583, 4
      %v4586 = vshll.u32 %v4525, 16
      %v4588 = vrot.slane %v4586, 5
      %v4589 = vsel %vm321, %v4584, %v4588
      %v4591 = vshrl.u32 %v4526, 16
      %v4593 = vrot.slane %v4591, 4
      %v4594 = vshll.u32 %v4526, 16
      %v4596 = vrot.slane %v4594, 5
      %v4597 = vor.u32 %v4593, %v4596
      %v4598 = vrot.slane %v4597, 4
      %v4600 = vshll.u32 %v4527, 16
      %v4602 = vrot.slane %v4600, 5
      %v4603 = vsel %vm321, %v4598, %v4602
      %v4605 = vshrl.u32 %v4528, 16
      %v4607 = vrot.slane %v4605, 4
      %v4608 = vshll.u32 %v4528, 16
      %v4610 = vrot.slane %v4608, 5
      %v4611 = vor.u32 %v4607, %v4610
      %v4612 = vrot.slane %v4611, 4
      %v4614 = vshll.u32 %v4529, 16
      %v4616 = vrot.slane %v4614, 5
      %v4617 = vsel %vm321, %v4612, %v4616
      %v4619 = vshrl.u32 %v4530, 16
      %v4621 = vrot.slane %v4619, 4
      %v4622 = vshll.u32 %v4530, 16
      %v4624 = vrot.slane %v4622, 5
      %v4625 = vor.u32 %v4621, %v4624
      %v4626 = vrot.slane %v4625, 4
      %v4628 = vshll.u32 %v4531, 16
      %v4630 = vrot.slane %v4628, 5
      %v4631 = vsel %vm321, %v4626, %v4630
      %v4633 = vshrl.u32 %v4532, 16
      %v4635 = vrot.slane %v4633, 4
      %v4636 = vshll.u32 %v4532, 16
      %v4638 = vrot.slane %v4636, 5
      %v4639 = vor.u32 %v4635, %v4638
      %v4640 = vrot.slane %v4639, 4
      %v4642 = vshll.u32 %v4533, 16
      %v4644 = vrot.slane %v4642, 5
      %v4645 = vsel %vm321, %v4640, %v4644
      %4646 = vrot.lane.b32.xlu0 %v4547, 24
      %v4647 = vpop.permute.xlu0 %4646
      %4648 = vrot.lane.b32.xlu0 %v4561, 24
      %v4649 = vpop.permute.xlu0 %4648
      %4650 = vrot.lane.b32.xlu0 %v4575, 24
      %v4651 = vpop.permute.xlu0 %4650
      %4652 = vrot.lane.b32.xlu0 %v4589, 24
      %v4653 = vpop.permute.xlu0 %4652
      %4654 = vrot.lane.b32.xlu0 %v4603, 24
      %v4655 = vpop.permute.xlu0 %4654
      %4656 = vrot.lane.b32.xlu0 %v4617, 24
      %v4657 = vpop.permute.xlu0 %4656
      %4658 = vrot.lane.b32.xlu0 %v4631, 24
      %v4659 = vpop.permute.xlu0 %4658
      %4660 = vrot.lane.b32.xlu0 %v4645, 24
      %v4661 = vpop.permute.xlu0 %4660
      %4670 = vst.msk [vmem:[#allocation2 + $0x4] sm:$0xf] %vm1012, %v4647
      %4671 = vst.msk [vmem:[#allocation2 + $0xc] sm:$0xf] %vm1012, %v4649
      %4672 = vst.msk [vmem:[#allocation2 + $0x14] sm:$0xf] %vm1012, %v4651
      %4673 = vst.msk [vmem:[#allocation2 + $0x1c] sm:$0xf] %vm1012, %v4653
      %4674 = vst.msk [vmem:[#allocation2 + $0x24] sm:$0xf] %vm1012, %v4655
      %4675 = vst.msk [vmem:[#allocation2 + $0x2c] sm:$0xf] %vm1012, %v4657
      %4676 = vst.msk [vmem:[#allocation2 + $0x34] sm:$0xf] %vm1012, %v4659
      %4677 = vst.msk [vmem:[#allocation2 + $0x3c] sm:$0xf] %vm1012, %v4661
      %v4678 = vld [vmem:[%s4258] sm:$0xe]
      %v4679 = vld [vmem:[%s4258 + $0x4] sm:$0x1]
      %v4680 = vld [vmem:[%s4258 + $0x8] sm:$0xe]
      %v4681 = vld [vmem:[%s4258 + $0xc] sm:$0x1]
      %v4682 = vld [vmem:[%s4258 + $0x10] sm:$0xe]
      %v4683 = vld [vmem:[%s4258 + $0x14] sm:$0x1]
      %v4684 = vld [vmem:[%s4258 + $0x18] sm:$0xe]
      %v4685 = vld [vmem:[%s4258 + $0x1c] sm:$0x1]
      %v4686 = vld [vmem:[%s4258 + $0x20] sm:$0xe]
      %v4687 = vld [vmem:[%s4258 + $0x24] sm:$0x1]
      %v4688 = vld [vmem:[%s4258 + $0x28] sm:$0xe]
      %v4689 = vld [vmem:[%s4258 + $0x2c] sm:$0x1]
      %v4690 = vld [vmem:[%s4258 + $0x30] sm:$0xe]
      %v4691 = vld [vmem:[%s4258 + $0x34] sm:$0x1]
      %v4692 = vld [vmem:[%s4258 + $0x38] sm:$0xe]
      %v4693 = vld [vmem:[%s4258 + $0x3c] sm:$0x1]
      %v4710 = vrot.slane %v4678, 5
      %v4711 = vrot.slane %v4710, 4
      %v4712 = vrot.slane %v4679, 5
      %v4713 = vsel %vm662, %v4711, %v4712
      %v4714 = vrot.slane %v4680, 5
      %v4715 = vrot.slane %v4714, 4
      %v4716 = vrot.slane %v4681, 5
      %v4717 = vsel %vm662, %v4715, %v4716
      %v4718 = vrot.slane %v4682, 5
      %v4719 = vrot.slane %v4718, 4
      %v4720 = vrot.slane %v4683, 5
      %v4721 = vsel %vm662, %v4719, %v4720
      %v4722 = vrot.slane %v4684, 5
      %v4723 = vrot.slane %v4722, 4
      %v4724 = vrot.slane %v4685, 5
      %v4725 = vsel %vm662, %v4723, %v4724
      %v4726 = vrot.slane %v4686, 5
      %v4727 = vrot.slane %v4726, 4
      %v4728 = vrot.slane %v4687, 5
      %v4729 = vsel %vm662, %v4727, %v4728
      %v4730 = vrot.slane %v4688, 5
      %v4731 = vrot.slane %v4730, 4
      %v4732 = vrot.slane %v4689, 5
      %v4733 = vsel %vm662, %v4731, %v4732
      %v4734 = vrot.slane %v4690, 5
      %v4735 = vrot.slane %v4734, 4
      %v4736 = vrot.slane %v4691, 5
      %v4737 = vsel %vm662, %v4735, %v4736
      %v4738 = vrot.slane %v4692, 5
      %v4739 = vrot.slane %v4738, 4
      %v4740 = vrot.slane %v4693, 5
      %v4741 = vsel %vm662, %v4739, %v4740
      %4742 = vrot.lane.b32.xlu0 %v4713, 28
      %v4743 = vpop.permute.xlu0 %4742
      %4744 = vrot.lane.b32.xlu0 %v4717, 28
      %v4745 = vpop.permute.xlu0 %4744
      %4746 = vrot.lane.b32.xlu0 %v4721, 28
      %v4747 = vpop.permute.xlu0 %4746
      %4748 = vrot.lane.b32.xlu0 %v4725, 28
      %v4749 = vpop.permute.xlu0 %4748
      %4750 = vrot.lane.b32.xlu0 %v4729, 28
      %v4751 = vpop.permute.xlu0 %4750
      %4752 = vrot.lane.b32.xlu0 %v4733, 28
      %v4753 = vpop.permute.xlu0 %4752
      %4754 = vrot.lane.b32.xlu0 %v4737, 28
      %v4755 = vpop.permute.xlu0 %4754
      %4756 = vrot.lane.b32.xlu0 %v4741, 28
      %v4757 = vpop.permute.xlu0 %4756
      %4766 = vst.msk [vmem:[#allocation2 + $0x4] sm:$0xf] %vm1064, %v4743
      %4767 = vst.msk [vmem:[#allocation2 + $0xc] sm:$0xf] %vm1064, %v4745
      %4768 = vst.msk [vmem:[#allocation2 + $0x14] sm:$0xf] %vm1064, %v4747
      %4769 = vst.msk [vmem:[#allocation2 + $0x1c] sm:$0xf] %vm1064, %v4749
      %4770 = vst.msk [vmem:[#allocation2 + $0x24] sm:$0xf] %vm1064, %v4751
      %4771 = vst.msk [vmem:[#allocation2 + $0x2c] sm:$0xf] %vm1064, %v4753
      %4772 = vst.msk [vmem:[#allocation2 + $0x34] sm:$0xf] %vm1064, %v4755
      %4773 = vst.msk [vmem:[#allocation2 + $0x3c] sm:$0xf] %vm1064, %v4757
      %v4774 = vld [vmem:[%s4309] sm:$0xe]
      %v4775 = vld [vmem:[%s4309 + $0x4] sm:$0x1]
      %v4776 = vld [vmem:[%s4309 + $0x8] sm:$0xe]
      %v4777 = vld [vmem:[%s4309 + $0xc] sm:$0x1]
      %v4778 = vld [vmem:[%s4309 + $0x10] sm:$0xe]
      %v4779 = vld [vmem:[%s4309 + $0x14] sm:$0x1]
      %v4780 = vld [vmem:[%s4309 + $0x18] sm:$0xe]
      %v4781 = vld [vmem:[%s4309 + $0x1c] sm:$0x1]
      %v4782 = vld [vmem:[%s4309 + $0x20] sm:$0xe]
      %v4783 = vld [vmem:[%s4309 + $0x24] sm:$0x1]
      %v4784 = vld [vmem:[%s4309 + $0x28] sm:$0xe]
      %v4785 = vld [vmem:[%s4309 + $0x2c] sm:$0x1]
      %v4786 = vld [vmem:[%s4309 + $0x30] sm:$0xe]
      %v4787 = vld [vmem:[%s4309 + $0x34] sm:$0x1]
      %v4788 = vld [vmem:[%s4309 + $0x38] sm:$0xe]
      %v4789 = vld [vmem:[%s4309 + $0x3c] sm:$0x1]
      %v4806 = vrot.slane %v4774, 5
      %v4807 = vrot.slane %v4806, 4
      %v4808 = vrot.slane %v4775, 5
      %v4809 = vsel %vm662, %v4807, %v4808
      %v4810 = vrot.slane %v4776, 5
      %v4811 = vrot.slane %v4810, 4
      %v4812 = vrot.slane %v4777, 5
      %v4813 = vsel %vm662, %v4811, %v4812
      %v4814 = vrot.slane %v4778, 5
      %v4815 = vrot.slane %v4814, 4
      %v4816 = vrot.slane %v4779, 5
      %v4817 = vsel %vm662, %v4815, %v4816
      %v4818 = vrot.slane %v4780, 5
      %v4819 = vrot.slane %v4818, 4
      %v4820 = vrot.slane %v4781, 5
      %v4821 = vsel %vm662, %v4819, %v4820
      %v4822 = vrot.slane %v4782, 5
      %v4823 = vrot.slane %v4822, 4
      %v4824 = vrot.slane %v4783, 5
      %v4825 = vsel %vm662, %v4823, %v4824
      %v4826 = vrot.slane %v4784, 5
      %v4827 = vrot.slane %v4826, 4
      %v4828 = vrot.slane %v4785, 5
      %v4829 = vsel %vm662, %v4827, %v4828
      %v4830 = vrot.slane %v4786, 5
      %v4831 = vrot.slane %v4830, 4
      %v4832 = vrot.slane %v4787, 5
      %v4833 = vsel %vm662, %v4831, %v4832
      %v4834 = vrot.slane %v4788, 5
      %v4835 = vrot.slane %v4834, 4
      %v4836 = vrot.slane %v4789, 5
      %v4837 = vsel %vm662, %v4835, %v4836
      %4838 = vrot.lane.b32.xlu0 %v4809, 32
      %v4839 = vpop.permute.xlu0 %4838
      %4840 = vrot.lane.b32.xlu0 %v4813, 32
      %v4841 = vpop.permute.xlu0 %4840
      %4842 = vrot.lane.b32.xlu0 %v4817, 32
      %v4843 = vpop.permute.xlu0 %4842
      %4844 = vrot.lane.b32.xlu0 %v4821, 32
      %v4845 = vpop.permute.xlu0 %4844
      %4846 = vrot.lane.b32.xlu0 %v4825, 32
      %v4847 = vpop.permute.xlu0 %4846
      %4848 = vrot.lane.b32.xlu0 %v4829, 32
      %v4849 = vpop.permute.xlu0 %4848
      %4850 = vrot.lane.b32.xlu0 %v4833, 32
      %v4851 = vpop.permute.xlu0 %4850
      %4852 = vrot.lane.b32.xlu0 %v4837, 32
      %v4853 = vpop.permute.xlu0 %4852
      %4862 = vst.msk [vmem:[#allocation2 + $0x4] sm:$0xf] %vm1116, %v4839
      %4863 = vst.msk [vmem:[#allocation2 + $0xc] sm:$0xf] %vm1116, %v4841
      %4864 = vst.msk [vmem:[#allocation2 + $0x14] sm:$0xf] %vm1116, %v4843
      %4865 = vst.msk [vmem:[#allocation2 + $0x1c] sm:$0xf] %vm1116, %v4845
      %4866 = vst.msk [vmem:[#allocation2 + $0x24] sm:$0xf] %vm1116, %v4847
      %4867 = vst.msk [vmem:[#allocation2 + $0x2c] sm:$0xf] %vm1116, %v4849
      %4868 = vst.msk [vmem:[#allocation2 + $0x34] sm:$0xf] %vm1116, %v4851
      %4869 = vst.msk [vmem:[#allocation2 + $0x3c] sm:$0xf] %vm1116, %v4853
      %v4870 = vld [vmem:[%s4258] sm:$0xe]
      %v4871 = vld [vmem:[%s4258 + $0x4] sm:$0x3]
      %v4872 = vld [vmem:[%s4258 + $0x8] sm:$0xe]
      %v4873 = vld [vmem:[%s4258 + $0xc] sm:$0x3]
      %v4874 = vld [vmem:[%s4258 + $0x10] sm:$0xe]
      %v4875 = vld [vmem:[%s4258 + $0x14] sm:$0x3]
      %v4876 = vld [vmem:[%s4258 + $0x18] sm:$0xe]
      %v4877 = vld [vmem:[%s4258 + $0x1c] sm:$0x3]
      %v4878 = vld [vmem:[%s4258 + $0x20] sm:$0xe]
      %v4879 = vld [vmem:[%s4258 + $0x24] sm:$0x3]
      %v4880 = vld [vmem:[%s4258 + $0x28] sm:$0xe]
      %v4881 = vld [vmem:[%s4258 + $0x2c] sm:$0x3]
      %v4882 = vld [vmem:[%s4258 + $0x30] sm:$0xe]
      %v4883 = vld [vmem:[%s4258 + $0x34] sm:$0x3]
      %v4884 = vld [vmem:[%s4258 + $0x38] sm:$0xe]
      %v4885 = vld [vmem:[%s4258 + $0x3c] sm:$0x3]
      %v4887 = vshrl.u32 %v4870, 16
      %v4889 = vrot.slane %v4887, 5
      %v4890 = vshll.u32 %v4870, 16
      %v4892 = vrot.slane %v4890, 6
      %v4893 = vor.u32 %v4889, %v4892
      %v4894 = vrot.slane %v4893, 4
      %v4896 = vshrl.u32 %v4871, 16
      %v4898 = vrot.slane %v4896, 5
      %v4899 = vshll.u32 %v4871, 16
      %v4901 = vrot.slane %v4899, 6
      %v4902 = vor.u32 %v4898, %v4901
      %v4903 = vsel %vm843, %v4894, %v4902
      %v4905 = vshrl.u32 %v4872, 16
      %v4907 = vrot.slane %v4905, 5
      %v4908 = vshll.u32 %v4872, 16
      %v4910 = vrot.slane %v4908, 6
      %v4911 = vor.u32 %v4907, %v4910
      %v4912 = vrot.slane %v4911, 4
      %v4914 = vshrl.u32 %v4873, 16
      %v4916 = vrot.slane %v4914, 5
      %v4917 = vshll.u32 %v4873, 16
      %v4919 = vrot.slane %v4917, 6
      %v4920 = vor.u32 %v4916, %v4919
      %v4921 = vsel %vm843, %v4912, %v4920
      %v4923 = vshrl.u32 %v4874, 16
      %v4925 = vrot.slane %v4923, 5
      %v4926 = vshll.u32 %v4874, 16
      %v4928 = vrot.slane %v4926, 6
      %v4929 = vor.u32 %v4925, %v4928
      %v4930 = vrot.slane %v4929, 4
      %v4932 = vshrl.u32 %v4875, 16
      %v4934 = vrot.slane %v4932, 5
      %v4935 = vshll.u32 %v4875, 16
      %v4937 = vrot.slane %v4935, 6
      %v4938 = vor.u32 %v4934, %v4937
      %v4939 = vsel %vm843, %v4930, %v4938
      %v4941 = vshrl.u32 %v4876, 16
      %v4943 = vrot.slane %v4941, 5
      %v4944 = vshll.u32 %v4876, 16
      %v4946 = vrot.slane %v4944, 6
      %v4947 = vor.u32 %v4943, %v4946
      %v4948 = vrot.slane %v4947, 4
      %v4950 = vshrl.u32 %v4877, 16
      %v4952 = vrot.slane %v4950, 5
      %v4953 = vshll.u32 %v4877, 16
      %v4955 = vrot.slane %v4953, 6
      %v4956 = vor.u32 %v4952, %v4955
      %v4957 = vsel %vm843, %v4948, %v4956
      %v4959 = vshrl.u32 %v4878, 16
      %v4961 = vrot.slane %v4959, 5
      %v4962 = vshll.u32 %v4878, 16
      %v4964 = vrot.slane %v4962, 6
      %v4965 = vor.u32 %v4961, %v4964
      %v4966 = vrot.slane %v4965, 4
      %v4968 = vshrl.u32 %v4879, 16
      %v4970 = vrot.slane %v4968, 5
      %v4971 = vshll.u32 %v4879, 16
      %v4973 = vrot.slane %v4971, 6
      %v4974 = vor.u32 %v4970, %v4973
      %v4975 = vsel %vm843, %v4966, %v4974
      %v4977 = vshrl.u32 %v4880, 16
      %v4979 = vrot.slane %v4977, 5
      %v4980 = vshll.u32 %v4880, 16
      %v4982 = vrot.slane %v4980, 6
      %v4983 = vor.u32 %v4979, %v4982
      %v4984 = vrot.slane %v4983, 4
      %v4986 = vshrl.u32 %v4881, 16
      %v4988 = vrot.slane %v4986, 5
      %v4989 = vshll.u32 %v4881, 16
      %v4991 = vrot.slane %v4989, 6
      %v4992 = vor.u32 %v4988, %v4991
      %v4993 = vsel %vm843, %v4984, %v4992
      %v4995 = vshrl.u32 %v4882, 16
      %v4997 = vrot.slane %v4995, 5
      %v4998 = vshll.u32 %v4882, 16
      %v5000 = vrot.slane %v4998, 6
      %v5001 = vor.u32 %v4997, %v5000
      %v5002 = vrot.slane %v5001, 4
      %v5004 = vshrl.u32 %v4883, 16
      %v5006 = vrot.slane %v5004, 5
      %v5007 = vshll.u32 %v4883, 16
      %v5009 = vrot.slane %v5007, 6
      %v5010 = vor.u32 %v5006, %v5009
      %v5011 = vsel %vm843, %v5002, %v5010
      %v5013 = vshrl.u32 %v4884, 16
      %v5015 = vrot.slane %v5013, 5
      %v5016 = vshll.u32 %v4884, 16
      %v5018 = vrot.slane %v5016, 6
      %v5019 = vor.u32 %v5015, %v5018
      %v5020 = vrot.slane %v5019, 4
      %v5022 = vshrl.u32 %v4885, 16
      %v5024 = vrot.slane %v5022, 5
      %v5025 = vshll.u32 %v4885, 16
      %v5027 = vrot.slane %v5025, 6
      %v5028 = vor.u32 %v5024, %v5027
      %v5029 = vsel %vm843, %v5020, %v5028
      %5030 = vrot.lane.b32.xlu0 %v4903, 36
      %v5031 = vpop.permute.xlu0 %5030
      %5032 = vrot.lane.b32.xlu0 %v4921, 36
      %v5033 = vpop.permute.xlu0 %5032
      %5034 = vrot.lane.b32.xlu0 %v4939, 36
      %v5035 = vpop.permute.xlu0 %5034
      %5036 = vrot.lane.b32.xlu0 %v4957, 36
      %v5037 = vpop.permute.xlu0 %5036
      %5038 = vrot.lane.b32.xlu0 %v4975, 36
      %v5039 = vpop.permute.xlu0 %5038
      %5040 = vrot.lane.b32.xlu0 %v4993, 36
      %v5041 = vpop.permute.xlu0 %5040
      %5042 = vrot.lane.b32.xlu0 %v5011, 36
      %v5043 = vpop.permute.xlu0 %5042
      %5044 = vrot.lane.b32.xlu0 %v5029, 36
      %v5045 = vpop.permute.xlu0 %5044
      %5054 = vst.msk [vmem:[#allocation2 + $0x4] sm:$0xf] %vm1277, %v5031
      %5055 = vst.msk [vmem:[#allocation2 + $0xc] sm:$0xf] %vm1277, %v5033
      %5056 = vst.msk [vmem:[#allocation2 + $0x14] sm:$0xf] %vm1277, %v5035
      %5057 = vst.msk [vmem:[#allocation2 + $0x1c] sm:$0xf] %vm1277, %v5037
      %5058 = vst.msk [vmem:[#allocation2 + $0x24] sm:$0xf] %vm1277, %v5039
      %5059 = vst.msk [vmem:[#allocation2 + $0x2c] sm:$0xf] %vm1277, %v5041
      %5060 = vst.msk [vmem:[#allocation2 + $0x34] sm:$0xf] %vm1277, %v5043
      %5061 = vst.msk [vmem:[#allocation2 + $0x3c] sm:$0xf] %vm1277, %v5045
      %s5062 = sadd.s32 %s222, 3
      %s5063 = smul.u32 %s5062, 2
      %s5064 = smul.addr %s5063, 4
      %s5065 = scalar_lea.vmem %s210, %s5064
      %v5066 = vld [vmem:[%s5065] sm:$0xf]
      %v5067 = vld [vmem:[%s5065 + $0x8] sm:$0xf]
      %v5068 = vld [vmem:[%s5065 + $0x10] sm:$0xf]
      %v5069 = vld [vmem:[%s5065 + $0x18] sm:$0xf]
      %v5070 = vld [vmem:[%s5065 + $0x20] sm:$0xf]
      %v5071 = vld [vmem:[%s5065 + $0x28] sm:$0xf]
      %v5072 = vld [vmem:[%s5065 + $0x30] sm:$0xf]
      %v5073 = vld [vmem:[%s5065 + $0x38] sm:$0xf]
      %5082 = vrot.lane.b32.xlu0 %v5066, 40
      %v5083 = vpop.permute.xlu0 %5082
      %5084 = vrot.lane.b32.xlu0 %v5067, 40
      %v5085 = vpop.permute.xlu0 %5084
      %5086 = vrot.lane.b32.xlu0 %v5068, 40
      %v5087 = vpop.permute.xlu0 %5086
      %5088 = vrot.lane.b32.xlu0 %v5069, 40
      %v5089 = vpop.permute.xlu0 %5088
      %5090 = vrot.lane.b32.xlu0 %v5070, 40
      %v5091 = vpop.permute.xlu0 %5090
      %5092 = vrot.lane.b32.xlu0 %v5071, 40
      %v5093 = vpop.permute.xlu0 %5092
      %5094 = vrot.lane.b32.xlu0 %v5072, 40
      %v5095 = vpop.permute.xlu0 %5094
      %5096 = vrot.lane.b32.xlu0 %v5073, 40
      %v5097 = vpop.permute.xlu0 %5096
      %5106 = vst.msk [vmem:[#allocation2 + $0x4] sm:$0xf] %vm1438, %v5083
      %5107 = vst.msk [vmem:[#allocation2 + $0xc] sm:$0xf] %vm1438, %v5085
      %5108 = vst.msk [vmem:[#allocation2 + $0x14] sm:$0xf] %vm1438, %v5087
      %5109 = vst.msk [vmem:[#allocation2 + $0x1c] sm:$0xf] %vm1438, %v5089
      %5110 = vst.msk [vmem:[#allocation2 + $0x24] sm:$0xf] %vm1438, %v5091
      %5111 = vst.msk [vmem:[#allocation2 + $0x2c] sm:$0xf] %vm1438, %v5093
      %5112 = vst.msk [vmem:[#allocation2 + $0x34] sm:$0xf] %vm1438, %v5095
      %5113 = vst.msk [vmem:[#allocation2 + $0x3c] sm:$0xf] %vm1438, %v5097
      %s5114 = sadd.s32 %s5063, 22
      %s5115 = smul.addr %s5114, 4
      %s5116 = scalar_lea.vmem %s210, %s5115
      %v5117 = vld [vmem:[%s5116] sm:$0xf]
      %v5118 = vld [vmem:[%s5116 + $0x8] sm:$0xf]
      %v5119 = vld [vmem:[%s5116 + $0x10] sm:$0xf]
      %v5120 = vld [vmem:[%s5116 + $0x18] sm:$0xf]
      %v5121 = vld [vmem:[%s5116 + $0x20] sm:$0xf]
      %v5122 = vld [vmem:[%s5116 + $0x28] sm:$0xf]
      %v5123 = vld [vmem:[%s5116 + $0x30] sm:$0xf]
      %v5124 = vld [vmem:[%s5116 + $0x38] sm:$0xf]
      %5133 = vrot.lane.b32.xlu0 %v5117, 44
      %v5134 = vpop.permute.xlu0 %5133
      %5135 = vrot.lane.b32.xlu0 %v5118, 44
      %v5136 = vpop.permute.xlu0 %5135
      %5137 = vrot.lane.b32.xlu0 %v5119, 44
      %v5138 = vpop.permute.xlu0 %5137
      %5139 = vrot.lane.b32.xlu0 %v5120, 44
      %v5140 = vpop.permute.xlu0 %5139
      %5141 = vrot.lane.b32.xlu0 %v5121, 44
      %v5142 = vpop.permute.xlu0 %5141
      %5143 = vrot.lane.b32.xlu0 %v5122, 44
      %v5144 = vpop.permute.xlu0 %5143
      %5145 = vrot.lane.b32.xlu0 %v5123, 44
      %v5146 = vpop.permute.xlu0 %5145
      %5147 = vrot.lane.b32.xlu0 %v5124, 44
      %v5148 = vpop.permute.xlu0 %5147
      %5157 = vst.msk [vmem:[#allocation2 + $0x4] sm:$0xf] %vm1535, %v5134
      %5158 = vst.msk [vmem:[#allocation2 + $0xc] sm:$0xf] %vm1535, %v5136
      %5159 = vst.msk [vmem:[#allocation2 + $0x14] sm:$0xf] %vm1535, %v5138
      %5160 = vst.msk [vmem:[#allocation2 + $0x1c] sm:$0xf] %vm1535, %v5140
      %5161 = vst.msk [vmem:[#allocation2 + $0x24] sm:$0xf] %vm1535, %v5142
      %5162 = vst.msk [vmem:[#allocation2 + $0x2c] sm:$0xf] %vm1535, %v5144
      %5163 = vst.msk [vmem:[#allocation2 + $0x34] sm:$0xf] %vm1535, %v5146
      %5164 = vst.msk [vmem:[#allocation2 + $0x3c] sm:$0xf] %vm1535, %v5148
      %v5165 = vld [vmem:[%s5065] sm:$0xf]
      %v5166 = vld [vmem:[%s5065 + $0x4] sm:$0x1]
      %v5167 = vld [vmem:[%s5065 + $0x8] sm:$0xf]
      %v5168 = vld [vmem:[%s5065 + $0xc] sm:$0x1]
      %v5169 = vld [vmem:[%s5065 + $0x10] sm:$0xf]
      %v5170 = vld [vmem:[%s5065 + $0x14] sm:$0x1]
      %v5171 = vld [vmem:[%s5065 + $0x18] sm:$0xf]
      %v5172 = vld [vmem:[%s5065 + $0x1c] sm:$0x1]
      %v5173 = vld [vmem:[%s5065 + $0x20] sm:$0xf]
      %v5174 = vld [vmem:[%s5065 + $0x24] sm:$0x1]
      %v5175 = vld [vmem:[%s5065 + $0x28] sm:$0xf]
      %v5176 = vld [vmem:[%s5065 + $0x2c] sm:$0x1]
      %v5177 = vld [vmem:[%s5065 + $0x30] sm:$0xf]
      %v5178 = vld [vmem:[%s5065 + $0x34] sm:$0x1]
      %v5179 = vld [vmem:[%s5065 + $0x38] sm:$0xf]
      %v5180 = vld [vmem:[%s5065 + $0x3c] sm:$0x1]
      %v5182 = vshrl.u32 %v5165, 16
      %v5184 = vrot.slane %v5182, 4
      %v5185 = vshll.u32 %v5165, 16
      %v5187 = vrot.slane %v5185, 5
      %v5188 = vor.u32 %v5184, %v5187
      %v5189 = vrot.slane %v5188, 4
      %v5191 = vshll.u32 %v5166, 16
      %v5193 = vrot.slane %v5191, 5
      %v5194 = vsel %vm321, %v5189, %v5193
      %v5196 = vshrl.u32 %v5167, 16
      %v5198 = vrot.slane %v5196, 4
      %v5199 = vshll.u32 %v5167, 16
      %v5201 = vrot.slane %v5199, 5
      %v5202 = vor.u32 %v5198, %v5201
      %v5203 = vrot.slane %v5202, 4
      %v5205 = vshll.u32 %v5168, 16
      %v5207 = vrot.slane %v5205, 5
      %v5208 = vsel %vm321, %v5203, %v5207
      %v5210 = vshrl.u32 %v5169, 16
      %v5212 = vrot.slane %v5210, 4
      %v5213 = vshll.u32 %v5169, 16
      %v5215 = vrot.slane %v5213, 5
      %v5216 = vor.u32 %v5212, %v5215
      %v5217 = vrot.slane %v5216, 4
      %v5219 = vshll.u32 %v5170, 16
      %v5221 = vrot.slane %v5219, 5
      %v5222 = vsel %vm321, %v5217, %v5221
      %v5224 = vshrl.u32 %v5171, 16
      %v5226 = vrot.slane %v5224, 4
      %v5227 = vshll.u32 %v5171, 16
      %v5229 = vrot.slane %v5227, 5
      %v5230 = vor.u32 %v5226, %v5229
      %v5231 = vrot.slane %v5230, 4
      %v5233 = vshll.u32 %v5172, 16
      %v5235 = vrot.slane %v5233, 5
      %v5236 = vsel %vm321, %v5231, %v5235
      %v5238 = vshrl.u32 %v5173, 16
      %v5240 = vrot.slane %v5238, 4
      %v5241 = vshll.u32 %v5173, 16
      %v5243 = vrot.slane %v5241, 5
      %v5244 = vor.u32 %v5240, %v5243
      %v5245 = vrot.slane %v5244, 4
      %v5247 = vshll.u32 %v5174, 16
      %v5249 = vrot.slane %v5247, 5
      %v5250 = vsel %vm321, %v5245, %v5249
      %v5252 = vshrl.u32 %v5175, 16
      %v5254 = vrot.slane %v5252, 4
      %v5255 = vshll.u32 %v5175, 16
      %v5257 = vrot.slane %v5255, 5
      %v5258 = vor.u32 %v5254, %v5257
      %v5259 = vrot.slane %v5258, 4
      %v5261 = vshll.u32 %v5176, 16
      %v5263 = vrot.slane %v5261, 5
      %v5264 = vsel %vm321, %v5259, %v5263
      %v5266 = vshrl.u32 %v5177, 16
      %v5268 = vrot.slane %v5266, 4
      %v5269 = vshll.u32 %v5177, 16
      %v5271 = vrot.slane %v5269, 5
      %v5272 = vor.u32 %v5268, %v5271
      %v5273 = vrot.slane %v5272, 4
      %v5275 = vshll.u32 %v5178, 16
      %v5277 = vrot.slane %v5275, 5
      %v5278 = vsel %vm321, %v5273, %v5277
      %v5280 = vshrl.u32 %v5179, 16
      %v5282 = vrot.slane %v5280, 4
      %v5283 = vshll.u32 %v5179, 16
      %v5285 = vrot.slane %v5283, 5
      %v5286 = vor.u32 %v5282, %v5285
      %v5287 = vrot.slane %v5286, 4
      %v5289 = vshll.u32 %v5180, 16
      %v5291 = vrot.slane %v5289, 5
      %v5292 = vsel %vm321, %v5287, %v5291
      %5293 = vrot.lane.b32.xlu0 %v5194, 48
      %v5294 = vpop.permute.xlu0 %5293
      %5295 = vrot.lane.b32.xlu0 %v5208, 48
      %v5296 = vpop.permute.xlu0 %5295
      %5297 = vrot.lane.b32.xlu0 %v5222, 48
      %v5298 = vpop.permute.xlu0 %5297
      %5299 = vrot.lane.b32.xlu0 %v5236, 48
      %v5300 = vpop.permute.xlu0 %5299
      %5301 = vrot.lane.b32.xlu0 %v5250, 48
      %v5302 = vpop.permute.xlu0 %5301
      %5303 = vrot.lane.b32.xlu0 %v5264, 48
      %v5304 = vpop.permute.xlu0 %5303
      %5305 = vrot.lane.b32.xlu0 %v5278, 48
      %v5306 = vpop.permute.xlu0 %5305
      %5307 = vrot.lane.b32.xlu0 %v5292, 48
      %v5308 = vpop.permute.xlu0 %5307
      %5317 = vst.msk [vmem:[#allocation2 + $0x4] sm:$0xf] %vm1632, %v5294
      %5318 = vst.msk [vmem:[#allocation2 + $0xc] sm:$0xf] %vm1632, %v5296
      %5319 = vst.msk [vmem:[#allocation2 + $0x14] sm:$0xf] %vm1632, %v5298
      %5320 = vst.msk [vmem:[#allocation2 + $0x1c] sm:$0xf] %vm1632, %v5300
      %5321 = vst.msk [vmem:[#allocation2 + $0x24] sm:$0xf] %vm1632, %v5302
      %5322 = vst.msk [vmem:[#allocation2 + $0x2c] sm:$0xf] %vm1632, %v5304
      %5323 = vst.msk [vmem:[#allocation2 + $0x34] sm:$0xf] %vm1632, %v5306
      %5324 = vst.msk [vmem:[#allocation2 + $0x3c] sm:$0xf] %vm1632, %v5308
      %v5325 = vld [vmem:[%s5116] sm:$0xf]
      %v5326 = vld [vmem:[%s5116 + $0x4] sm:$0x1]
      %v5327 = vld [vmem:[%s5116 + $0x8] sm:$0xf]
      %v5328 = vld [vmem:[%s5116 + $0xc] sm:$0x1]
      %v5329 = vld [vmem:[%s5116 + $0x10] sm:$0xf]
      %v5330 = vld [vmem:[%s5116 + $0x14] sm:$0x1]
      %v5331 = vld [vmem:[%s5116 + $0x18] sm:$0xf]
      %v5332 = vld [vmem:[%s5116 + $0x1c] sm:$0x1]
      %v5333 = vld [vmem:[%s5116 + $0x20] sm:$0xf]
      %v5334 = vld [vmem:[%s5116 + $0x24] sm:$0x1]
      %v5335 = vld [vmem:[%s5116 + $0x28] sm:$0xf]
      %v5336 = vld [vmem:[%s5116 + $0x2c] sm:$0x1]
      %v5337 = vld [vmem:[%s5116 + $0x30] sm:$0xf]
      %v5338 = vld [vmem:[%s5116 + $0x34] sm:$0x1]
      %v5339 = vld [vmem:[%s5116 + $0x38] sm:$0xf]
      %v5340 = vld [vmem:[%s5116 + $0x3c] sm:$0x1]
      %v5342 = vshrl.u32 %v5325, 16
      %v5344 = vrot.slane %v5342, 4
      %v5345 = vshll.u32 %v5325, 16
      %v5347 = vrot.slane %v5345, 5
      %v5348 = vor.u32 %v5344, %v5347
      %v5349 = vrot.slane %v5348, 4
      %v5351 = vshll.u32 %v5326, 16
      %v5353 = vrot.slane %v5351, 5
      %v5354 = vsel %vm321, %v5349, %v5353
      %v5356 = vshrl.u32 %v5327, 16
      %v5358 = vrot.slane %v5356, 4
      %v5359 = vshll.u32 %v5327, 16
      %v5361 = vrot.slane %v5359, 5
      %v5362 = vor.u32 %v5358, %v5361
      %v5363 = vrot.slane %v5362, 4
      %v5365 = vshll.u32 %v5328, 16
      %v5367 = vrot.slane %v5365, 5
      %v5368 = vsel %vm321, %v5363, %v5367
      %v5370 = vshrl.u32 %v5329, 16
      %v5372 = vrot.slane %v5370, 4
      %v5373 = vshll.u32 %v5329, 16
      %v5375 = vrot.slane %v5373, 5
      %v5376 = vor.u32 %v5372, %v5375
      %v5377 = vrot.slane %v5376, 4
      %v5379 = vshll.u32 %v5330, 16
      %v5381 = vrot.slane %v5379, 5
      %v5382 = vsel %vm321, %v5377, %v5381
      %v5384 = vshrl.u32 %v5331, 16
      %v5386 = vrot.slane %v5384, 4
      %v5387 = vshll.u32 %v5331, 16
      %v5389 = vrot.slane %v5387, 5
      %v5390 = vor.u32 %v5386, %v5389
      %v5391 = vrot.slane %v5390, 4
      %v5393 = vshll.u32 %v5332, 16
      %v5395 = vrot.slane %v5393, 5
      %v5396 = vsel %vm321, %v5391, %v5395
      %v5398 = vshrl.u32 %v5333, 16
      %v5400 = vrot.slane %v5398, 4
      %v5401 = vshll.u32 %v5333, 16
      %v5403 = vrot.slane %v5401, 5
      %v5404 = vor.u32 %v5400, %v5403
      %v5405 = vrot.slane %v5404, 4
      %v5407 = vshll.u32 %v5334, 16
      %v5409 = vrot.slane %v5407, 5
      %v5410 = vsel %vm321, %v5405, %v5409
      %v5412 = vshrl.u32 %v5335, 16
      %v5414 = vrot.slane %v5412, 4
      %v5415 = vshll.u32 %v5335, 16
      %v5417 = vrot.slane %v5415, 5
      %v5418 = vor.u32 %v5414, %v5417
      %v5419 = vrot.slane %v5418, 4
      %v5421 = vshll.u32 %v5336, 16
      %v5423 = vrot.slane %v5421, 5
      %v5424 = vsel %vm321, %v5419, %v5423
      %v5426 = vshrl.u32 %v5337, 16
      %v5428 = vrot.slane %v5426, 4
      %v5429 = vshll.u32 %v5337, 16
      %v5431 = vrot.slane %v5429, 5
      %v5432 = vor.u32 %v5428, %v5431
      %v5433 = vrot.slane %v5432, 4
      %v5435 = vshll.u32 %v5338, 16
      %v5437 = vrot.slane %v5435, 5
      %v5438 = vsel %vm321, %v5433, %v5437
      %v5440 = vshrl.u32 %v5339, 16
      %v5442 = vrot.slane %v5440, 4
      %v5443 = vshll.u32 %v5339, 16
      %v5445 = vrot.slane %v5443, 5
      %v5446 = vor.u32 %v5442, %v5445
      %v5447 = vrot.slane %v5446, 4
      %v5449 = vshll.u32 %v5340, 16
      %v5451 = vrot.slane %v5449, 5
      %v5452 = vsel %vm321, %v5447, %v5451
      %5453 = vrot.lane.b32.xlu0 %v5354, 52
      %v5454 = vpop.permute.xlu0 %5453
      %5455 = vrot.lane.b32.xlu0 %v5368, 52
      %v5456 = vpop.permute.xlu0 %5455
      %5457 = vrot.lane.b32.xlu0 %v5382, 52
      %v5458 = vpop.permute.xlu0 %5457
      %5459 = vrot.lane.b32.xlu0 %v5396, 52
      %v5460 = vpop.permute.xlu0 %5459
      %5461 = vrot.lane.b32.xlu0 %v5410, 52
      %v5462 = vpop.permute.xlu0 %5461
      %5463 = vrot.lane.b32.xlu0 %v5424, 52
      %v5464 = vpop.permute.xlu0 %5463
      %5465 = vrot.lane.b32.xlu0 %v5438, 52
      %v5466 = vpop.permute.xlu0 %5465
      %5467 = vrot.lane.b32.xlu0 %v5452, 52
      %v5468 = vpop.permute.xlu0 %5467
      %5477 = vst.msk [vmem:[#allocation2 + $0x4] sm:$0xf] %vm1825, %v5454
      %5478 = vst.msk [vmem:[#allocation2 + $0xc] sm:$0xf] %vm1825, %v5456
      %5479 = vst.msk [vmem:[#allocation2 + $0x14] sm:$0xf] %vm1825, %v5458
      %5480 = vst.msk [vmem:[#allocation2 + $0x1c] sm:$0xf] %vm1825, %v5460
      %5481 = vst.msk [vmem:[#allocation2 + $0x24] sm:$0xf] %vm1825, %v5462
      %5482 = vst.msk [vmem:[#allocation2 + $0x2c] sm:$0xf] %vm1825, %v5464
      %5483 = vst.msk [vmem:[#allocation2 + $0x34] sm:$0xf] %vm1825, %v5466
      %5484 = vst.msk [vmem:[#allocation2 + $0x3c] sm:$0xf] %vm1825, %v5468
      %v5485 = vld [vmem:[%s5065] sm:$0xe]
      %v5486 = vld [vmem:[%s5065 + $0x4] sm:$0x1]
      %v5487 = vld [vmem:[%s5065 + $0x8] sm:$0xe]
      %v5488 = vld [vmem:[%s5065 + $0xc] sm:$0x1]
      %v5489 = vld [vmem:[%s5065 + $0x10] sm:$0xe]
      %v5490 = vld [vmem:[%s5065 + $0x14] sm:$0x1]
      %v5491 = vld [vmem:[%s5065 + $0x18] sm:$0xe]
      %v5492 = vld [vmem:[%s5065 + $0x1c] sm:$0x1]
      %v5493 = vld [vmem:[%s5065 + $0x20] sm:$0xe]
      %v5494 = vld [vmem:[%s5065 + $0x24] sm:$0x1]
      %v5495 = vld [vmem:[%s5065 + $0x28] sm:$0xe]
      %v5496 = vld [vmem:[%s5065 + $0x2c] sm:$0x1]
      %v5497 = vld [vmem:[%s5065 + $0x30] sm:$0xe]
      %v5498 = vld [vmem:[%s5065 + $0x34] sm:$0x1]
      %v5499 = vld [vmem:[%s5065 + $0x38] sm:$0xe]
      %v5500 = vld [vmem:[%s5065 + $0x3c] sm:$0x1]
      %v5517 = vrot.slane %v5485, 5
      %v5518 = vrot.slane %v5517, 4
      %v5519 = vrot.slane %v5486, 5
      %v5520 = vsel %vm662, %v5518, %v5519
      %v5521 = vrot.slane %v5487, 5
      %v5522 = vrot.slane %v5521, 4
      %v5523 = vrot.slane %v5488, 5
      %v5524 = vsel %vm662, %v5522, %v5523
      %v5525 = vrot.slane %v5489, 5
      %v5526 = vrot.slane %v5525, 4
      %v5527 = vrot.slane %v5490, 5
      %v5528 = vsel %vm662, %v5526, %v5527
      %v5529 = vrot.slane %v5491, 5
      %v5530 = vrot.slane %v5529, 4
      %v5531 = vrot.slane %v5492, 5
      %v5532 = vsel %vm662, %v5530, %v5531
      %v5533 = vrot.slane %v5493, 5
      %v5534 = vrot.slane %v5533, 4
      %v5535 = vrot.slane %v5494, 5
      %v5536 = vsel %vm662, %v5534, %v5535
      %v5537 = vrot.slane %v5495, 5
      %v5538 = vrot.slane %v5537, 4
      %v5539 = vrot.slane %v5496, 5
      %v5540 = vsel %vm662, %v5538, %v5539
      %v5541 = vrot.slane %v5497, 5
      %v5542 = vrot.slane %v5541, 4
      %v5543 = vrot.slane %v5498, 5
      %v5544 = vsel %vm662, %v5542, %v5543
      %v5545 = vrot.slane %v5499, 5
      %v5546 = vrot.slane %v5545, 4
      %v5547 = vrot.slane %v5500, 5
      %v5548 = vsel %vm662, %v5546, %v5547
      %5549 = vrot.lane.b32.xlu0 %v5520, 56
      %v5550 = vpop.permute.xlu0 %5549
      %5551 = vrot.lane.b32.xlu0 %v5524, 56
      %v5552 = vpop.permute.xlu0 %5551
      %5553 = vrot.lane.b32.xlu0 %v5528, 56
      %v5554 = vpop.permute.xlu0 %5553
      %5555 = vrot.lane.b32.xlu0 %v5532, 56
      %v5556 = vpop.permute.xlu0 %5555
      %5557 = vrot.lane.b32.xlu0 %v5536, 56
      %v5558 = vpop.permute.xlu0 %5557
      %5559 = vrot.lane.b32.xlu0 %v5540, 56
      %v5560 = vpop.permute.xlu0 %5559
      %5561 = vrot.lane.b32.xlu0 %v5544, 56
      %v5562 = vpop.permute.xlu0 %5561
      %5563 = vrot.lane.b32.xlu0 %v5548, 56
      %v5564 = vpop.permute.xlu0 %5563
      %5573 = vst.msk [vmem:[#allocation2 + $0x4] sm:$0xf] %vm1878, %v5550
      %5574 = vst.msk [vmem:[#allocation2 + $0xc] sm:$0xf] %vm1878, %v5552
      %5575 = vst.msk [vmem:[#allocation2 + $0x14] sm:$0xf] %vm1878, %v5554
      %5576 = vst.msk [vmem:[#allocation2 + $0x1c] sm:$0xf] %vm1878, %v5556
      %5577 = vst.msk [vmem:[#allocation2 + $0x24] sm:$0xf] %vm1878, %v5558
      %5578 = vst.msk [vmem:[#allocation2 + $0x2c] sm:$0xf] %vm1878, %v5560
      %5579 = vst.msk [vmem:[#allocation2 + $0x34] sm:$0xf] %vm1878, %v5562
      %5580 = vst.msk [vmem:[#allocation2 + $0x3c] sm:$0xf] %vm1878, %v5564
      %v5581 = vld [vmem:[%s5116] sm:$0xe]
      %v5582 = vld [vmem:[%s5116 + $0x4] sm:$0x1]
      %v5583 = vld [vmem:[%s5116 + $0x8] sm:$0xe]
      %v5584 = vld [vmem:[%s5116 + $0xc] sm:$0x1]
      %v5585 = vld [vmem:[%s5116 + $0x10] sm:$0xe]
      %v5586 = vld [vmem:[%s5116 + $0x14] sm:$0x1]
      %v5587 = vld [vmem:[%s5116 + $0x18] sm:$0xe]
      %v5588 = vld [vmem:[%s5116 + $0x1c] sm:$0x1]
      %v5589 = vld [vmem:[%s5116 + $0x20] sm:$0xe]
      %v5590 = vld [vmem:[%s5116 + $0x24] sm:$0x1]
      %v5591 = vld [vmem:[%s5116 + $0x28] sm:$0xe]
      %v5592 = vld [vmem:[%s5116 + $0x2c] sm:$0x1]
      %v5593 = vld [vmem:[%s5116 + $0x30] sm:$0xe]
      %v5594 = vld [vmem:[%s5116 + $0x34] sm:$0x1]
      %v5595 = vld [vmem:[%s5116 + $0x38] sm:$0xe]
      %v5596 = vld [vmem:[%s5116 + $0x3c] sm:$0x1]
      %v5613 = vrot.slane %v5581, 5
      %v5614 = vrot.slane %v5613, 4
      %v5615 = vrot.slane %v5582, 5
      %v5616 = vsel %vm662, %v5614, %v5615
      %v5617 = vrot.slane %v5583, 5
      %v5618 = vrot.slane %v5617, 4
      %v5619 = vrot.slane %v5584, 5
      %v5620 = vsel %vm662, %v5618, %v5619
      %v5621 = vrot.slane %v5585, 5
      %v5622 = vrot.slane %v5621, 4
      %v5623 = vrot.slane %v5586, 5
      %v5624 = vsel %vm662, %v5622, %v5623
      %v5625 = vrot.slane %v5587, 5
      %v5626 = vrot.slane %v5625, 4
      %v5627 = vrot.slane %v5588, 5
      %v5628 = vsel %vm662, %v5626, %v5627
      %v5629 = vrot.slane %v5589, 5
      %v5630 = vrot.slane %v5629, 4
      %v5631 = vrot.slane %v5590, 5
      %v5632 = vsel %vm662, %v5630, %v5631
      %v5633 = vrot.slane %v5591, 5
      %v5634 = vrot.slane %v5633, 4
      %v5635 = vrot.slane %v5592, 5
      %v5636 = vsel %vm662, %v5634, %v5635
      %v5637 = vrot.slane %v5593, 5
      %v5638 = vrot.slane %v5637, 4
      %v5639 = vrot.slane %v5594, 5
      %v5640 = vsel %vm662, %v5638, %v5639
      %v5641 = vrot.slane %v5595, 5
      %v5642 = vrot.slane %v5641, 4
      %v5643 = vrot.slane %v5596, 5
      %v5644 = vsel %vm662, %v5642, %v5643
      %5645 = vrot.lane.b32.xlu0 %v5616, 60
      %v5646 = vpop.permute.xlu0 %5645
      %5647 = vrot.lane.b32.xlu0 %v5620, 60
      %v5648 = vpop.permute.xlu0 %5647
      %5649 = vrot.lane.b32.xlu0 %v5624, 60
      %v5650 = vpop.permute.xlu0 %5649
      %5651 = vrot.lane.b32.xlu0 %v5628, 60
      %v5652 = vpop.permute.xlu0 %5651
      %5653 = vrot.lane.b32.xlu0 %v5632, 60
      %v5654 = vpop.permute.xlu0 %5653
      %5655 = vrot.lane.b32.xlu0 %v5636, 60
      %v5656 = vpop.permute.xlu0 %5655
      %5657 = vrot.lane.b32.xlu0 %v5640, 60
      %v5658 = vpop.permute.xlu0 %5657
      %5659 = vrot.lane.b32.xlu0 %v5644, 60
      %v5660 = vpop.permute.xlu0 %5659
      %5669 = vst.msk [vmem:[#allocation2 + $0x4] sm:$0xf] %vm1930, %v5646
      %5670 = vst.msk [vmem:[#allocation2 + $0xc] sm:$0xf] %vm1930, %v5648
      %5671 = vst.msk [vmem:[#allocation2 + $0x14] sm:$0xf] %vm1930, %v5650
      %5672 = vst.msk [vmem:[#allocation2 + $0x1c] sm:$0xf] %vm1930, %v5652
      %5673 = vst.msk [vmem:[#allocation2 + $0x24] sm:$0xf] %vm1930, %v5654
      %5674 = vst.msk [vmem:[#allocation2 + $0x2c] sm:$0xf] %vm1930, %v5656
      %5675 = vst.msk [vmem:[#allocation2 + $0x34] sm:$0xf] %vm1930, %v5658
      %5676 = vst.msk [vmem:[#allocation2 + $0x3c] sm:$0xf] %vm1930, %v5660
      %v5677 = vld [vmem:[%s5065] sm:$0xe]
      %v5678 = vld [vmem:[%s5065 + $0x4] sm:$0x3]
      %v5679 = vld [vmem:[%s5065 + $0x8] sm:$0xe]
      %v5680 = vld [vmem:[%s5065 + $0xc] sm:$0x3]
      %v5681 = vld [vmem:[%s5065 + $0x10] sm:$0xe]
      %v5682 = vld [vmem:[%s5065 + $0x14] sm:$0x3]
      %v5683 = vld [vmem:[%s5065 + $0x18] sm:$0xe]
      %v5684 = vld [vmem:[%s5065 + $0x1c] sm:$0x3]
      %v5685 = vld [vmem:[%s5065 + $0x20] sm:$0xe]
      %v5686 = vld [vmem:[%s5065 + $0x24] sm:$0x3]
      %v5687 = vld [vmem:[%s5065 + $0x28] sm:$0xe]
      %v5688 = vld [vmem:[%s5065 + $0x2c] sm:$0x3]
      %v5689 = vld [vmem:[%s5065 + $0x30] sm:$0xe]
      %v5690 = vld [vmem:[%s5065 + $0x34] sm:$0x3]
      %v5691 = vld [vmem:[%s5065 + $0x38] sm:$0xe]
      %v5692 = vld [vmem:[%s5065 + $0x3c] sm:$0x3]
      %v5694 = vshrl.u32 %v5677, 16
      %v5696 = vrot.slane %v5694, 5
      %v5697 = vshll.u32 %v5677, 16
      %v5699 = vrot.slane %v5697, 6
      %v5700 = vor.u32 %v5696, %v5699
      %v5701 = vrot.slane %v5700, 4
      %v5703 = vshrl.u32 %v5678, 16
      %v5705 = vrot.slane %v5703, 5
      %v5706 = vshll.u32 %v5678, 16
      %v5708 = vrot.slane %v5706, 6
      %v5709 = vor.u32 %v5705, %v5708
      %v5710 = vsel %vm843, %v5701, %v5709
      %v5712 = vshrl.u32 %v5679, 16
      %v5714 = vrot.slane %v5712, 5
      %v5715 = vshll.u32 %v5679, 16
      %v5717 = vrot.slane %v5715, 6
      %v5718 = vor.u32 %v5714, %v5717
      %v5719 = vrot.slane %v5718, 4
      %v5721 = vshrl.u32 %v5680, 16
      %v5723 = vrot.slane %v5721, 5
      %v5724 = vshll.u32 %v5680, 16
      %v5726 = vrot.slane %v5724, 6
      %v5727 = vor.u32 %v5723, %v5726
      %v5728 = vsel %vm843, %v5719, %v5727
      %v5730 = vshrl.u32 %v5681, 16
      %v5732 = vrot.slane %v5730, 5
      %v5733 = vshll.u32 %v5681, 16
      %v5735 = vrot.slane %v5733, 6
      %v5736 = vor.u32 %v5732, %v5735
      %v5737 = vrot.slane %v5736, 4
      %v5739 = vshrl.u32 %v5682, 16
      %v5741 = vrot.slane %v5739, 5
      %v5742 = vshll.u32 %v5682, 16
      %v5744 = vrot.slane %v5742, 6
      %v5745 = vor.u32 %v5741, %v5744
      %v5746 = vsel %vm843, %v5737, %v5745
      %v5748 = vshrl.u32 %v5683, 16
      %v5750 = vrot.slane %v5748, 5
      %v5751 = vshll.u32 %v5683, 16
      %v5753 = vrot.slane %v5751, 6
      %v5754 = vor.u32 %v5750, %v5753
      %v5755 = vrot.slane %v5754, 4
      %v5757 = vshrl.u32 %v5684, 16
      %v5759 = vrot.slane %v5757, 5
      %v5760 = vshll.u32 %v5684, 16
      %v5762 = vrot.slane %v5760, 6
      %v5763 = vor.u32 %v5759, %v5762
      %v5764 = vsel %vm843, %v5755, %v5763
      %v5766 = vshrl.u32 %v5685, 16
      %v5768 = vrot.slane %v5766, 5
      %v5769 = vshll.u32 %v5685, 16
      %v5771 = vrot.slane %v5769, 6
      %v5772 = vor.u32 %v5768, %v5771
      %v5773 = vrot.slane %v5772, 4
      %v5775 = vshrl.u32 %v5686, 16
      %v5777 = vrot.slane %v5775, 5
      %v5778 = vshll.u32 %v5686, 16
      %v5780 = vrot.slane %v5778, 6
      %v5781 = vor.u32 %v5777, %v5780
      %v5782 = vsel %vm843, %v5773, %v5781
      %v5784 = vshrl.u32 %v5687, 16
      %v5786 = vrot.slane %v5784, 5
      %v5787 = vshll.u32 %v5687, 16
      %v5789 = vrot.slane %v5787, 6
      %v5790 = vor.u32 %v5786, %v5789
      %v5791 = vrot.slane %v5790, 4
      %v5793 = vshrl.u32 %v5688, 16
      %v5795 = vrot.slane %v5793, 5
      %v5796 = vshll.u32 %v5688, 16
      %v5798 = vrot.slane %v5796, 6
      %v5799 = vor.u32 %v5795, %v5798
      %v5800 = vsel %vm843, %v5791, %v5799
      %v5802 = vshrl.u32 %v5689, 16
      %v5804 = vrot.slane %v5802, 5
      %v5805 = vshll.u32 %v5689, 16
      %v5807 = vrot.slane %v5805, 6
      %v5808 = vor.u32 %v5804, %v5807
      %v5809 = vrot.slane %v5808, 4
      %v5811 = vshrl.u32 %v5690, 16
      %v5813 = vrot.slane %v5811, 5
      %v5814 = vshll.u32 %v5690, 16
      %v5816 = vrot.slane %v5814, 6
      %v5817 = vor.u32 %v5813, %v5816
      %v5818 = vsel %vm843, %v5809, %v5817
      %v5820 = vshrl.u32 %v5691, 16
      %v5822 = vrot.slane %v5820, 5
      %v5823 = vshll.u32 %v5691, 16
      %v5825 = vrot.slane %v5823, 6
      %v5826 = vor.u32 %v5822, %v5825
      %v5827 = vrot.slane %v5826, 4
      %v5829 = vshrl.u32 %v5692, 16
      %v5831 = vrot.slane %v5829, 5
      %v5832 = vshll.u32 %v5692, 16
      %v5834 = vrot.slane %v5832, 6
      %v5835 = vor.u32 %v5831, %v5834
      %v5836 = vsel %vm843, %v5827, %v5835
      %5837 = vrot.lane.b32.xlu0 %v5710, 64
      %v5838 = vpop.permute.xlu0 %5837
      %5839 = vrot.lane.b32.xlu0 %v5728, 64
      %v5840 = vpop.permute.xlu0 %5839
      %5841 = vrot.lane.b32.xlu0 %v5746, 64
      %v5842 = vpop.permute.xlu0 %5841
      %5843 = vrot.lane.b32.xlu0 %v5764, 64
      %v5844 = vpop.permute.xlu0 %5843
      %5845 = vrot.lane.b32.xlu0 %v5782, 64
      %v5846 = vpop.permute.xlu0 %5845
      %5847 = vrot.lane.b32.xlu0 %v5800, 64
      %v5848 = vpop.permute.xlu0 %5847
      %5849 = vrot.lane.b32.xlu0 %v5818, 64
      %v5850 = vpop.permute.xlu0 %5849
      %5851 = vrot.lane.b32.xlu0 %v5836, 64
      %v5852 = vpop.permute.xlu0 %5851
      %5861 = vst.msk [vmem:[#allocation2 + $0x4] sm:$0xf] %vm2091, %v5838
      %5862 = vst.msk [vmem:[#allocation2 + $0xc] sm:$0xf] %vm2091, %v5840
      %5863 = vst.msk [vmem:[#allocation2 + $0x14] sm:$0xf] %vm2091, %v5842
      %5864 = vst.msk [vmem:[#allocation2 + $0x1c] sm:$0xf] %vm2091, %v5844
      %5865 = vst.msk [vmem:[#allocation2 + $0x24] sm:$0xf] %vm2091, %v5846
      %5866 = vst.msk [vmem:[#allocation2 + $0x2c] sm:$0xf] %vm2091, %v5848
      %5867 = vst.msk [vmem:[#allocation2 + $0x34] sm:$0xf] %vm2091, %v5850
      %5868 = vst.msk [vmem:[#allocation2 + $0x3c] sm:$0xf] %vm2091, %v5852
      %v5869 = vld [vmem:[#allocation2] sm:$0xff]
      %v5870 = vld [vmem:[#allocation2 + $0x8] sm:$0xff]
      %v5871 = vld [vmem:[#allocation2 + $0x10] sm:$0xff]
      %v5872 = vld [vmem:[#allocation2 + $0x18] sm:$0xff]
      %v5873 = vld [vmem:[#allocation2 + $0x20] sm:$0xff]
      %v5874 = vld [vmem:[#allocation2 + $0x28] sm:$0xff]
      %v5875 = vld [vmem:[#allocation2 + $0x30] sm:$0xff]
      %v5876 = vld [vmem:[#allocation2 + $0x38] sm:$0xff]
      %v5877 = vld [vmem:[%s1] sm:$0xf]
      %v5878 = vld [vmem:[%s1 + $0x4] sm:$0xf]
      %v5879 = vld [vmem:[%s1 + $0x8] sm:$0xf]
      %v5880 = vld [vmem:[%s1 + $0xc] sm:$0xf]
      %v5881 = vld [vmem:[%s1 + $0x10] sm:$0xf]
      %v5882 = vld [vmem:[%s1 + $0x14] sm:$0xf]
      %v5883 = vld [vmem:[%s1 + $0x18] sm:$0xf]
      %v5884 = vld [vmem:[%s1 + $0x1c] sm:$0xf]
      %v5885 = vld [vmem:[%s1 + $0x20] sm:$0xf]
      %v5886 = vld [vmem:[%s1 + $0x24] sm:$0xf]
      %v5887 = vld [vmem:[%s1 + $0x28] sm:$0xf]
      %v5888 = vld [vmem:[%s1 + $0x2c] sm:$0xf]
      %v5889 = vld [vmem:[%s1 + $0x30] sm:$0xf]
      %v5890 = vld [vmem:[%s1 + $0x34] sm:$0xf]
      %v5891 = vld [vmem:[%s1 + $0x38] sm:$0xf]
      %v5892 = vld [vmem:[%s1 + $0x3c] sm:$0xf]
      %v5893 = vld [vmem:[%s1 + $0x40] sm:$0xf]
      %v5894 = vld [vmem:[%s1 + $0x44] sm:$0xf]
      %v5895 = vld [vmem:[%s1 + $0x48] sm:$0xf]
      %v5896 = vld [vmem:[%s1 + $0x4c] sm:$0xf]
      %v5897 = vld [vmem:[%s1 + $0x50] sm:$0xf]
      %v5898 = vld [vmem:[%s1 + $0x54] sm:$0xf]
      %v5899 = vld [vmem:[%s1 + $0x58] sm:$0xf]
      %v5900 = vld [vmem:[%s1 + $0x5c] sm:$0xf]
      %v5901 = vld [vmem:[%s1 + $0x60] sm:$0xf]
      %v5902 = vld [vmem:[%s1 + $0x64] sm:$0xf]
      %v5903 = vld [vmem:[%s1 + $0x68] sm:$0xf]
      %v5904 = vld [vmem:[%s1 + $0x6c] sm:$0xf]
      %v5905 = vld [vmem:[%s1 + $0x70] sm:$0xf]
      %v5906 = vld [vmem:[%s1 + $0x74] sm:$0xf]
      %v5907 = vld [vmem:[%s1 + $0x78] sm:$0xf]
      %v5908 = vld [vmem:[%s1 + $0x7c] sm:$0xf]
      %v5917 = vunpack.c.l.b16 %v5869
      %v5918 = vunpack.c.h.b16 %v5869
      %v5919 = vunpack.c.l.b16 %v5870
      %v5920 = vunpack.c.h.b16 %v5870
      %v5921 = vunpack.c.l.b16 %v5871
      %v5922 = vunpack.c.h.b16 %v5871
      %v5923 = vunpack.c.l.b16 %v5872
      %v5924 = vunpack.c.h.b16 %v5872
      %v5925 = vunpack.c.l.b16 %v5873
      %v5926 = vunpack.c.h.b16 %v5873
      %v5927 = vunpack.c.l.b16 %v5874
      %v5928 = vunpack.c.h.b16 %v5874
      %v5929 = vunpack.c.l.b16 %v5875
      %v5930 = vunpack.c.h.b16 %v5875
      %v5931 = vunpack.c.l.b16 %v5876
      %v5932 = vunpack.c.h.b16 %v5876
      %v5933 = vpack.c.b16 %v5919, %v5917
      %v5934 = vpack.c.b16 %v5920, %v5918
      %v5935 = vpack.c.b16 %v5923, %v5921
      %v5936 = vpack.c.b16 %v5924, %v5922
      %v5937 = vpack.c.b16 %v5927, %v5925
      %v5938 = vpack.c.b16 %v5928, %v5926
      %v5939 = vpack.c.b16 %v5931, %v5929
      %v5940 = vpack.c.b16 %v5932, %v5930
      %v5981 = vunpack.c.l.b16 %v5877
      %v5982 = vunpack.c.l.b16 %v5878
      %v5983 = vunpack.c.l.b16 %v5879
      %v5984 = vunpack.c.l.b16 %v5880
      %v5985 = vunpack.c.l.b16 %v5881
      %v5986 = vunpack.c.l.b16 %v5882
      %v5987 = vunpack.c.l.b16 %v5883
      %v5988 = vunpack.c.l.b16 %v5884
      %v5989 = vunpack.c.l.b16 %v5885
      %v5990 = vunpack.c.l.b16 %v5886
      %v5991 = vunpack.c.l.b16 %v5887
      %v5992 = vunpack.c.l.b16 %v5888
      %v5993 = vunpack.c.l.b16 %v5889
      %v5994 = vunpack.c.l.b16 %v5890
      %v5995 = vunpack.c.l.b16 %v5891
      %v5996 = vunpack.c.l.b16 %v5892
      %v5997 = vunpack.c.l.b16 %v5893
      %v5998 = vunpack.c.l.b16 %v5894
      %v5999 = vunpack.c.l.b16 %v5895
      %v6000 = vunpack.c.l.b16 %v5896
      %v6001 = vunpack.c.l.b16 %v5897
      %v6002 = vunpack.c.l.b16 %v5898
      %v6003 = vunpack.c.l.b16 %v5899
      %v6004 = vunpack.c.l.b16 %v5900
      %v6005 = vunpack.c.l.b16 %v5901
      %v6006 = vunpack.c.l.b16 %v5902
      %v6007 = vunpack.c.l.b16 %v5903
      %v6008 = vunpack.c.l.b16 %v5904
      %v6009 = vunpack.c.l.b16 %v5905
      %v6010 = vunpack.c.l.b16 %v5906
      %v6011 = vunpack.c.l.b16 %v5907
      %v6012 = vunpack.c.l.b16 %v5908
      %v6013 = vpack.c.b16 %v5982, %v5981
      %v6014 = vpack.c.b16 %v5984, %v5983
      %v6015 = vpack.c.b16 %v5986, %v5985
      %v6016 = vpack.c.b16 %v5988, %v5987
      %v6017 = vpack.c.b16 %v5990, %v5989
      %v6018 = vpack.c.b16 %v5992, %v5991
      %v6019 = vpack.c.b16 %v5994, %v5993
      %v6020 = vpack.c.b16 %v5996, %v5995
      %v6021 = vpack.c.b16 %v5998, %v5997
      %v6022 = vpack.c.b16 %v6000, %v5999
      %v6023 = vpack.c.b16 %v6002, %v6001
      %v6024 = vpack.c.b16 %v6004, %v6003
      %v6025 = vpack.c.b16 %v6006, %v6005
      %v6026 = vpack.c.b16 %v6008, %v6007
      %v6027 = vpack.c.b16 %v6010, %v6009
      %v6028 = vpack.c.b16 %v6012, %v6011
      %6045 = vmatprep.subr.bf16.mxu0 0
      %6046 = vmatpush1.bf16.msra.mxu0 %v6013
      %6047 = vmatprep.subr.bf16.mxu0 0
      %6048 = vmatpush1.bf16.msra.mxu0 %v6014
      %6049 = vmatprep.subr.bf16.mxu0 0
      %6050 = vmatpush1.bf16.msra.mxu0 %v6015
      %6051 = vmatprep.subr.bf16.mxu0 0
      %6052 = vmatpush1.bf16.msra.mxu0 %v6016
      %6053 = vmatprep.subr.bf16.mxu0 0
      %6054 = vmatpush1.bf16.msra.mxu0 %v6017
      %6055 = vmatprep.subr.bf16.mxu0 0
      %6056 = vmatpush1.bf16.msra.mxu0 %v6018
      %6057 = vmatprep.subr.bf16.mxu0 0
      %6058 = vmatpush1.bf16.msra.mxu0 %v6019
      %6059 = vmatprep.subr.bf16.mxu0 0
      %6060 = vmatpush1.bf16.msra.mxu0 %v6020
      %6061 = vmatprep.subr.bf16.mxu0 0
      %6062 = vmatpush1.bf16.msra.mxu0 %v6021
      %6063 = vmatprep.subr.bf16.mxu0 0
      %6064 = vmatpush1.bf16.msra.mxu0 %v6022
      %6065 = vmatprep.subr.bf16.mxu0 0
      %6066 = vmatpush1.bf16.msra.mxu0 %v6023
      %6067 = vmatprep.subr.bf16.mxu0 0
      %6068 = vmatpush1.bf16.msra.mxu0 %v6024
      %6069 = vmatprep.subr.bf16.mxu0 0
      %6070 = vmatpush1.bf16.msra.mxu0 %v6025
      %6071 = vmatprep.subr.bf16.mxu0 0
      %6072 = vmatpush1.bf16.msra.mxu0 %v6026
      %6073 = vmatprep.subr.bf16.mxu0 0
      %6074 = vmatpush1.bf16.msra.mxu0 %v6027
      %6075 = vmatprep.subr.bf16.mxu0 0
      %6076 = vmatpush1.bf16.msra.mxu0 %v6028
      %6077 = vmatprep.mubr.bf16.mxu0 %v5934
      %6078 = vmatmul.mubr.bf16.gmra.mrb[0].mxu0 %v5933
      %v6079 = vpop.f32.mrb[0].mxu0
      %v6080 = vadd.f32 0.0, %v6079
      %v6081 = vpop.f32.mrb[0].mxu0
      %v6082 = vpop.f32.mrb[0].mxu0
      %v6083 = vadd.f32 0.0, %v6082
      %v6084 = vpop.f32.mrb[0].mxu0
      %6085 = vmatprep.mubr.bf16.mxu0 %v5936
      %6086 = vmatmul.mubr.bf16.gmra.mrb[0].mxu0 %v5935
      %v6087 = vpop.f32.mrb[0].mxu0
      %v6088 = vadd.f32 0.0, %v6087
      %v6089 = vpop.f32.mrb[0].mxu0
      %v6090 = vpop.f32.mrb[0].mxu0
      %v6091 = vadd.f32 0.0, %v6090
      %v6092 = vpop.f32.mrb[0].mxu0
      %6093 = vmatprep.mubr.bf16.mxu0 %v5938
      %6094 = vmatmul.mubr.bf16.gmra.mrb[0].mxu0 %v5937
      %v6095 = vpop.f32.mrb[0].mxu0
      %v6096 = vadd.f32 0.0, %v6095
      %v6097 = vpop.f32.mrb[0].mxu0
      %v6098 = vpop.f32.mrb[0].mxu0
      %v6099 = vadd.f32 0.0, %v6098
      %v6100 = vpop.f32.mrb[0].mxu0
      %6101 = vmatprep.mubr.bf16.mxu0 %v5940
      %6102 = vmatmul.mubr.bf16.gmra.mrb[0].mxu0 %v5939
      %v6103 = vpop.f32.mrb[0].mxu0
      %v6104 = vadd.f32 0.0, %v6103
      %v6105 = vpop.f32.mrb[0].mxu0
      %v6106 = vpop.f32.mrb[0].mxu0
      %v6107 = vadd.f32 0.0, %v6106
      %v6108 = vpop.f32.mrb[0].mxu0
      %6109 = vdwg.mxu0
      %v6110 = vmax.f32 %v6080, 0.0
      %v6111 = vmax.f32 %v6083, 0.0
      %v6112 = vmax.f32 %v6088, 0.0
      %v6113 = vmax.f32 %v6091, 0.0
      %v6114 = vmax.f32 %v6096, 0.0
      %v6115 = vmax.f32 %v6099, 0.0
      %v6116 = vmax.f32 %v6104, 0.0
      %v6117 = vmax.f32 %v6107, 0.0
      %v6118 = vpack.c.bf16 %v6111, %v6110
      %v6119 = vpack.c.bf16 %v6113, %v6112
      %v6120 = vpack.c.bf16 %v6115, %v6114
      %v6121 = vpack.c.bf16 %v6117, %v6116
      %v6122 = vld [vmem:[%s2] sm:$0xf]
      %v6123 = vld [vmem:[%s2 + $0x4] sm:$0xf]
      %v6124 = vld [vmem:[%s2 + $0x8] sm:$0xf]
      %v6125 = vld [vmem:[%s2 + $0xc] sm:$0xf]
      %v6126 = vld [vmem:[%s2 + $0x10] sm:$0xf]
      %v6127 = vld [vmem:[%s2 + $0x14] sm:$0xf]
      %v6128 = vld [vmem:[%s2 + $0x18] sm:$0xf]
      %v6129 = vld [vmem:[%s2 + $0x1c] sm:$0xf]
      %v6130 = vld [vmem:[%s3] sm:$0x1]
      %v6132 = vlaneseq
      %v6133 = vshrl.u32 %v6132, 7
      %v6134 = vsub.s32 0, %v6133
      %v6135 = vrot.slane %v6130, %v6134
      %v6145 = vunpack.c.l.b16 %v6122
      %v6146 = vunpack.c.l.b16 %v6123
      %v6147 = vunpack.c.l.b16 %v6124
      %v6148 = vunpack.c.l.b16 %v6125
      %v6149 = vunpack.c.l.b16 %v6126
      %v6150 = vunpack.c.l.b16 %v6127
      %v6151 = vunpack.c.l.b16 %v6128
      %v6152 = vunpack.c.l.b16 %v6129
      %v6153 = vpack.c.b16 %v6146, %v6145
      %v6154 = vpack.c.b16 %v6148, %v6147
      %v6155 = vpack.c.b16 %v6150, %v6149
      %v6156 = vpack.c.b16 %v6152, %v6151
      %vm6161 = vcmask 523264
      %v6163 = vsel %vm6161, %v6118, 0
      %v6166 = vsel %vm6161, %v6119, 0
      %v6169 = vsel %vm6161, %v6120, 0
      %v6172 = vsel %vm6161, %v6121, 0
      %6174 = vmatprep.subr.bf16.mxu0 0
      %6175 = vmatpush1.bf16.msra.mxu0 %v6153
      %6176 = vmatprep.subr.bf16.mxu0 0
      %6177 = vmatpush1.bf16.msra.mxu0 %v6154
      %6178 = vmatprep.subr.bf16.mxu0 0
      %6179 = vmatpush1.bf16.msra.mxu0 %v6155
      %6180 = vmatprep.subr.bf16.mxu0 0
      %6181 = vmatpush1.bf16.msra.mxu0 %v6156
      %6182 = vmatprep.subr.bf16.mxu0 0
      %6183 = vmatpush1.bf16.msra.mxu0 0
      %6184 = vmatprep.subr.bf16.mxu0 0
      %6185 = vmatpush1.bf16.msra.mxu0 0
      %6186 = vmatprep.subr.bf16.mxu0 0
      %6187 = vmatpush1.bf16.msra.mxu0 0
      %6188 = vmatprep.subr.bf16.mxu0 0
      %6189 = vmatpush1.bf16.msra.mxu0 0
      %6190 = vmatprep.subr.bf16.mxu0 0
      %6191 = vmatpush1.bf16.msra.mxu0 0
      %6192 = vmatprep.subr.bf16.mxu0 0
      %6193 = vmatpush1.bf16.msra.mxu0 0
      %6194 = vmatprep.subr.bf16.mxu0 0
      %6195 = vmatpush1.bf16.msra.mxu0 0
      %6196 = vmatprep.subr.bf16.mxu0 0
      %6197 = vmatpush1.bf16.msra.mxu0 0
      %6198 = vmatprep.subr.bf16.mxu0 0
      %6199 = vmatpush1.bf16.msra.mxu0 0
      %6200 = vmatprep.subr.bf16.mxu0 0
      %6201 = vmatpush1.bf16.msra.mxu0 0
      %6202 = vmatprep.subr.bf16.mxu0 0
      %6203 = vmatpush1.bf16.msra.mxu0 0
      %6204 = vmatprep.subr.bf16.mxu0 0
      %6205 = vmatpush1.bf16.msra.mxu0 0
      %6206 = vmatprep.mubr.bf16.mxu0 0
      %6207 = vmatmul.mubr.bf16.gmra.mrb[0].mxu0 %v6163
      %v6208 = vpop.f32.mrb[0].mxu0
      %v6209 = vadd.f32 %v6135, %v6208
      %v6210 = vpop.f32.mrb[0].mxu0
      %v6211 = vpop.f32.mrb[0].mxu0
      %v6212 = vadd.f32 %v6135, %v6211
      %v6213 = vpop.f32.mrb[0].mxu0
      %6214 = vmatprep.mubr.bf16.mxu0 0
      %6215 = vmatmul.mubr.bf16.gmra.mrb[0].mxu0 %v6166
      %v6216 = vpop.f32.mrb[0].mxu0
      %v6217 = vadd.f32 %v6135, %v6216
      %v6218 = vpop.f32.mrb[0].mxu0
      %v6219 = vpop.f32.mrb[0].mxu0
      %v6220 = vadd.f32 %v6135, %v6219
      %v6221 = vpop.f32.mrb[0].mxu0
      %6222 = vmatprep.mubr.bf16.mxu0 0
      %6223 = vmatmul.mubr.bf16.gmra.mrb[0].mxu0 %v6169
      %v6224 = vpop.f32.mrb[0].mxu0
      %v6225 = vadd.f32 %v6135, %v6224
      %v6226 = vpop.f32.mrb[0].mxu0
      %v6227 = vpop.f32.mrb[0].mxu0
      %v6228 = vadd.f32 %v6135, %v6227
      %v6229 = vpop.f32.mrb[0].mxu0
      %6230 = vmatprep.mubr.bf16.mxu0 0
      %6231 = vmatmul.mubr.bf16.gmra.mrb[0].mxu0 %v6172
      %v6232 = vpop.f32.mrb[0].mxu0
      %v6233 = vadd.f32 %v6135, %v6232
      %v6234 = vpop.f32.mrb[0].mxu0
      %v6235 = vpop.f32.mrb[0].mxu0
      %v6236 = vadd.f32 %v6135, %v6235
      %v6237 = vpop.f32.mrb[0].mxu0
      %6238 = vdwg.mxu0
      %6239 = vst [vmem:[%s219] sm:$0xff] %v6209
      %6240 = vst [vmem:[%s219 + $0x8] sm:$0xff] %v6212
      %6241 = vst [vmem:[%s219 + $0x10] sm:$0xff] %v6217
      %6242 = vst [vmem:[%s219 + $0x18] sm:$0xff] %v6220
      %6243 = vst [vmem:[%s219 + $0x20] sm:$0xff] %v6225
      %6244 = vst [vmem:[%s219 + $0x28] sm:$0xff] %v6228
      %6245 = vst [vmem:[%s219 + $0x30] sm:$0xff] %v6233
      %6246 = vst [vmem:[%s219 + $0x38] sm:$0xff] %v6236
      %s6247 = smul.u32 8, %s20
      %p6248 = scmp.lt.s32.totalorder %s19, 1
      %s6249 = scalar_select %p6248, %s19, 1
      %p6250 = scmp.lt.s32.totalorder %s6247, 7
      %s6251 = scalar_select %p6250, %s6247, 7
      %s6252 = smul.addr %s6249, 8
      %s6253 = sadd.s32 %s6251, %s6252
      %s6254 = smul.addr %s6253, 8
      %s6255 = scalar_lea.vmem %s4, %s6254
      // Predicated region
      $region37: #{deeplab_wrapper_forward.3} parent=35 // pred_check
        %p6256 = pneg %p136
      $region38: #{deeplab_wrapper_forward.3} parent=35 // pred_check_branch
        %6258 = sbr.rel (%p6256) target = $region40
      $region39: #{deeplab_wrapper_forward.3} parent=35 // pred_region
        %s6259 = smul.u32 8, %s20
      $region40: #{deeplab_wrapper_forward.3} parent=35 // pred_fallthru
        _
    $region36: #{deeplab_wrapper_forward.3} parent=5 // pred_fallthru
      _
    %p6260 = scmp.le.s32.totalorder 2, %s10
    // Predicated region
    $region41: #{deeplab_wrapper_forward.3} parent=5 // pred_check
      %p6261 = pneg %p6260
    $region42: #{deeplab_wrapper_forward.3} parent=5 // pred_check_branch
      %6263 = sbr.rel (%p6261) target = $region44
    $region43: #{deeplab_wrapper_forward.3} parent=5 // pred_region
      %s6264 = ssub.s32 %s10, 2
      // Predicated region
      $region45: #{deeplab_wrapper_forward.3} parent=43 // pred_check
        %p6265 = pneg %p142
      $region46: #{deeplab_wrapper_forward.3} parent=43 // pred_check_branch
        %6267 = sbr.rel (%p6265) target = $region48
      $region47: #{deeplab_wrapper_forward.3} parent=43 // pred_region
        %s6268 = smul.u32 8, %s22
        %p6269 = scmp.lt.s32.totalorder %s21, 1
        %s6270 = scalar_select %p6269, %s21, 1
        %p6271 = scmp.lt.s32.totalorder %s6268, 7
        %s6272 = scalar_select %p6271, %s6268, 7
        %s6273 = smul.addr %s6270, 8
        %s6274 = sadd.s32 %s6272, %s6273
        %s6275 = smul.addr %s6274, 8
        %s6276 = scalar_lea.vmem %s4, %s6275
      $region48: #{deeplab_wrapper_forward.3} parent=43 // pred_fallthru
        _
    $region44: #{deeplab_wrapper_forward.3} parent=5 // pred_fallthru
      _
  $region6: #{deeplab_wrapper_forward.3} parent=0 // loop_footer
    %s14 = sadd.s32 1, %s10
  $region7: #{deeplab_wrapper_forward.3} parent=0 // loop_footer_branch
    %9 = sbr.rel target = $region3
  $region8: #{deeplab_wrapper_forward.3} parent=0 // loop_exit
    _

</llo_original>
